<compile_context>
chip_gen: v6e
topology: v6e:2x2x1
jax: 0.10.0
libtpu: 0.0.40
codegen_flags: <defaults>
</compile_context>

<pallas_src>
import math
import jax
import jax.numpy as jnp
from jax import lax
from jax.experimental import pallas as pl
from jax.experimental.pallas import tpu as pltpu

VPAD = 32  # joints padded 25 -> 32 (sublane aligned; free in-kernel reshapes)


# ----------------------------------------------------------------------------
# Kernel 1: fused projection + joint attention + gcn + bn/relu + tem residual + pool
# ----------------------------------------------------------------------------

def gcn_attn_call(xb, wx, jb, tem3, bn_s, bn_b, *, v_real, tt):
    """xb: (N, T, Vp, Cin) bf16.  Returns pooled h: (N, T//2, Vp, D) bf16."""
    N, T, Vp, Cin = xb.shape
    D = bn_s.shape[-1]
    assert T % tt == 0 and tt % 2 == 0, (T, tt)

    def kernel(x_ref, wx_ref, jb_ref, tem_ref, s_ref, b_ref, o_ref):
        x = x_ref[0]                                           # (tt, Vp, Cin) bf16
        # Fused projection [g1 | g2 | w1(x) | x@Ww]: one MXU pass, 128-lane output.
        # jb already holds spa_embed @ Wproj[Cin:] + conv biases (per joint).
        proj = jnp.dot(x.reshape(tt * Vp, Cin), wx_ref[...],
                       preferred_element_type=jnp.float32)
        proj = proj.reshape(tt, Vp, 4 * D) + jb_ref[...]
        g1 = proj[..., 0 * D:1 * D].astype(jnp.bfloat16)
        g2 = proj[..., 1 * D:2 * D].astype(jnp.bfloat16)
        w1x = proj[..., 2 * D:3 * D]
        xw = proj[..., 3 * D:4 * D].astype(jnp.bfloat16)       # x @ Ww (folded)

        # compute_g_spa: per-time joint-joint attention, softmax over real joints only.
        sc = jnp.einsum('tvd,twd->tvw', g1, g2,
                        preferred_element_type=jnp.float32)    # (tt, Vp, Vp)
        if v_real < Vp:
            col = lax.broadcasted_iota(jnp.int32, sc.shape, 2)
            sc = jnp.where(col < v_real, sc, -1e30)
        sc = sc - jnp.max(sc, axis=-1, keepdims=True)
        e = jnp.exp(sc)
        att = e * pl.reciprocal(jnp.sum(e, axis=-1, keepdims=True), approx=True)

        # gcn_spa (Ww folded): att @ (x @ Ww) + w1(x), then bn, relu, + tem1.
        y = jnp.einsum('tvw,twd->tvd', att.astype(jnp.bfloat16), xw,
                       preferred_element_type=jnp.float32)     # (tt, Vp, D)
        h = jnp.maximum((y + w1x) * s_ref[...] + b_ref[...], 0.0) + tem_ref[...]

        # Fused AdaptiveMaxPool2d((V, T//2)): pairwise max over time (tt even).
        h2 = h.reshape(tt // 2, 2, Vp, D)
        o_ref[0] = jnp.maximum(h2[:, 0], h2[:, 1]).astype(jnp.bfloat16)

    def full(a):
        return pl.BlockSpec(a.shape, lambda n, t, _r=a.ndim: (0,) * _r)

    return pl.pallas_call(
        kernel,
        out_shape=jax.ShapeDtypeStruct((N, T // 2, Vp, D), jnp.bfloat16),
        grid=(N, T // tt),
        in_specs=[pl.BlockSpec((1, tt, Vp, Cin), lambda n, t: (n, t, 0, 0)),
                  full(wx), full(jb),
                  pl.BlockSpec((tt, 1, D), lambda n, t: (t, 0, 0)),
                  full(bn_s), full(bn_b)],
        out_specs=pl.BlockSpec((1, tt // 2, Vp, D), lambda n, t: (n, t, 0, 0)),
        compiler_params=pltpu.CompilerParams(
            dimension_semantics=("parallel", "parallel")),
    )(xb, wx, jb, tem3, bn_s, bn_b)


# ----------------------------------------------------------------------------
# Kernel 2: local() — (1,3) temporal conv + bn + relu + 1x1 conv + bn + relu
# ----------------------------------------------------------------------------

def local_call(hp, wc1p, wc1m, wc1n, bc1, s1, b1, wc2, bc2, s2, b2):
    """hp: (N, T2, Vp, D) bf16 (already max-pooled).  Returns (N, T2, Vp, D) f32."""
    N, T2, Vp, D = hp.shape

    def kernel(h_ref, wp_ref, wm_ref, wn_ref, bc1_ref, s1_ref, b1_ref,
               wc2_ref, bc2_ref, s2_ref, b2_ref, o_ref, c_ref):
        p2 = h_ref[0].reshape(T2 * Vp, D)                      # bf16, free (Vp=32)
        # (1,3) temporal conv (zero padded) as three shifted matmuls accumulated in a
        # VMEM scratch — no (T2, V, 3D) lane-concat, no zero-row concats.
        c_ref[...] = jnp.dot(p2, wm_ref[...], preferred_element_type=jnp.float32)
        lo = pl.ds(0, (T2 - 1) * Vp)
        hi = pl.ds(Vp, (T2 - 1) * Vp)
        c_ref[hi, :] = c_ref[hi, :] + jnp.dot(
            p2[:(T2 - 1) * Vp], wp_ref[...], preferred_element_type=jnp.float32)
        c_ref[lo, :] = c_ref[lo, :] + jnp.dot(
            p2[Vp:], wn_ref[...], preferred_element_type=jnp.float32)

        c = jnp.maximum((c_ref[...] + bc1_ref[...]) * s1_ref[...] + b1_ref[...], 0.0)
        # Dropout2d(0.2): identity at inference.
        c2 = (jnp.dot(c.astype(jnp.bfloat16), wc2_ref[...],
                      preferred_element_type=jnp.float32) + bc2_ref[...])
        o_ref[0] = jnp.maximum(c2 * s2_ref[...] + b2_ref[...], 0.0).reshape(T2, Vp, D)

    def full(a):
        return pl.BlockSpec(a.shape, lambda n, _r=a.ndim: (0,) * _r)

    # TODO(synk): add a time-chunk grid axis (with ±1 pooled-step halo) to feed both
    # v7x TensorCores when N is small; per-n blocks are tiny post bf16+pool fusion.
    return pl.pallas_call(
        kernel,
        out_shape=jax.ShapeDtypeStruct((N, T2, Vp, D), jnp.float32),
        grid=(N,),
        in_specs=[pl.BlockSpec((1, T2, Vp, D), lambda n: (n, 0, 0, 0)),
                  full(wc1p), full(wc1m), full(wc1n), full(bc1), full(s1), full(b1),
                  full(wc2), full(bc2), full(s2), full(b2)],
        out_specs=pl.BlockSpec((1, T2, Vp, D), lambda n: (n, 0, 0, 0)),
        scratch_shapes=[pltpu.VMEM((T2 * Vp, D), jnp.float32)],
        compiler_params=pltpu.CompilerParams(dimension_semantics=("parallel",)),
    )(hp, wc1p, wc1m, wc1n, bc1, s1, b1, wc2, bc2, s2, b2)


# ----------------------------------------------------------------------------
# Parameters / glue
# ----------------------------------------------------------------------------

def bn_init(key, c):
    k1, k2, k3, k4 = jax.random.split(key, 4)
    return dict(
        gamma=1.0 + 0.1 * jax.random.normal(k1, (c,), jnp.float32),
        beta=0.1 * jax.random.normal(k2, (c,), jnp.float32),
        mean=0.1 * jax.random.normal(k3, (c,), jnp.float32),
        var=1.0 + 0.1 * jax.random.uniform(k4, (c,), jnp.float32),
    )


def bn_fold(bn, eps=1e-5):
    s = bn['gamma'] / jnp.sqrt(bn['var'] + eps)
    b = bn['beta'] - bn['mean'] * s
    return s.reshape(1, -1), b.reshape(1, -1)


def init_params(key, D_in, D, T, V):
    ks = list(jax.random.split(key, 24))

    def u(k, shape, fan_in):
        bound = 1.0 / math.sqrt(fan_in)
        return jax.random.uniform(k, shape, jnp.float32, -bound, bound)

    p = {}
    # spa_embed: cnn1x1(V, 64, bias) -> ReLU -> cnn1x1(64, inchannel, bias) -> ReLU
    p['Ws1'] = u(ks[0], (V, 64), V);      p['bs1'] = u(ks[1], (1, 64), V)
    p['Ws2'] = u(ks[2], (64, D_in), 64);  p['bs2'] = u(ks[3], (1, D_in), 64)
    # tem_embed: cnn1x1(T, 64, bias) -> ReLU -> cnn1x1(64, outchannel, bias) -> ReLU
    p['Wt1'] = u(ks[4], (T, 64), T);      p['bt1'] = u(ks[5], (1, 64), T)
    p['Wt2'] = u(ks[6], (64, D), 64);     p['bt2'] = u(ks[7], (1, D), 64)
    # compute_g_spa: g1, g2 = cnn1x1(D, D, bias=True)
    p['Wg1'] = u(ks[8], (D, D), D);       p['bg1'] = u(ks[9], (1, D), D)
    p['Wg2'] = u(ks[10], (D, D), D);      p['bg2'] = u(ks[11], (1, D), D)
    # gcn_spa: w (no bias), w1 (bias), bn
    p['Ww'] = u(ks[12], (D, D), D)
    p['Ww1'] = u(ks[13], (D, D), D);      p['bw1'] = u(ks[14], (1, D), D)
    p['bn_g'] = bn_init(ks[15], D)
    # local: conv (1,3) pad (0,1), bn1, conv 1x1, bn2
    p['Wc1'] = u(ks[16], (3, D, D), 3 * D);  p['bc1'] = u(ks[17], (1, D), 3 * D)
    p['bn1'] = bn_init(ks[18], D)
    p['Wc2'] = u(ks[19], (D, D), D);         p['bc2'] = u(ks[20], (1, D), D)
    p['bn2'] = bn_init(ks[21], D)
    return p


def _pick_time_tile(T, cap=128):
    # Largest EVEN divisor of T <= cap (the pool fused in the epilogue needs even tt).
    # T=32 -> 32; the module's real seg=500 -> 100.
    # TODO(synk): for awkward T with only tiny even divisors, pad T / mask a last tile.
    best = 2
    for d in range(2, min(cap, T) + 1, 2):
        if T % d == 0:
            best = d
    return best


def gtcn_forward(x, p, tt=None):
    """x: (N, C_in, T, V) f32 (PyTorch NCHW input).  Returns (N, D, T//2, V) f32."""
    N, C_in, T, V = x.shape
    assert T % 2 == 0 and T >= 4   # AdaptiveMaxPool2d((V, T//2)) == pairwise time max
    assert V <= VPAD
    if tt is None:
        tt = _pick_time_tile(T)
    bf = jnp.bfloat16

    # Tiny embeds in plain JAX (one-hot input only selects weight rows) — no launches.
    spa1 = jnp.maximum(
        jnp.maximum(p['Ws1'] + p['bs1'], 0.0) @ p['Ws2'] + p['bs2'], 0.0)   # (V, D_in)
    tem1 = jnp.maximum(
        jnp.maximum(p['Wt1'] + p['bt1'], 0.0) @ p['Wt2'] + p['bt2'], 0.0)   # (T, D)
    D = tem1.shape[-1]
    assert C_in + spa1.shape[-1] == D

    # channels-last x, joints padded to 32, bf16 (halves activation DMA, feeds MXU).
    x_cl = jnp.transpose(x, (0, 2, 3, 1))                                   # (N,T,V,C)
    xb = jnp.pad(x_cl, ((0, 0), (0, 0), (0, VPAD - V), (0, 0))).astype(bf)

    # Fused projection [Wg1 | Wg2 | Ww1 | Ww]: (D, 4D) = one full 128-lane tile.
    # xcat never materializes: xcat @ Wproj = x_cl @ Wproj[:C_in] + spa1 @ Wproj[C_in:];
    # the spa term (+ conv biases) is folded into a (Vp, 4D) per-joint bias.
    Wproj = jnp.concatenate([p['Wg1'], p['Wg2'], p['Ww1'], p['Ww']], axis=1)   # (D, 4D)
    bproj = jnp.concatenate(
        [p['bg1'], p['bg2'], p['bw1'], jnp.zeros((1, D), jnp.float32)], axis=1)
    wx = Wproj[:C_in].astype(bf)                                            # (C_in, 4D)
    jb = jnp.dot(spa1.astype(bf), Wproj[C_in:].astype(bf),
                 preferred_element_type=jnp.float32) + bproj                # (V, 4D)
    jb = jnp.pad(jb, ((0, VPAD - V), (0, 0)))                               # (Vp, 4D)

    s0, b0 = bn_fold(p['bn_g'])
    hp = gcn_attn_call(xb, wx, jb, tem1.reshape(T, 1, D), s0, b0,
                       v_real=V, tt=tt)                                     # (N,T2,Vp,D)

    s1, b1 = bn_fold(p['bn1'])
    s2, b2 = bn_fold(p['bn2'])
    out_cl = local_call(hp, p['Wc1'][0].astype(bf), p['Wc1'][1].astype(bf),
                        p['Wc1'][2].astype(bf), p['bc1'], s1, b1,
                        p['Wc2'].astype(bf), p['bc2'], s2, b2)              # (N,T2,Vp,D)
    out_cl = out_cl[:, :, :V, :]
    # local output NCHW (N, D, V, T//2); GTCN final permute(0,1,3,2) -> (N, D, T//2, V)
    return jnp.transpose(out_cl, (0, 3, 1, 2))


# ----------------------------------------------------------------------------
# Pure-JAX reference with the same inference precision policy as the kernels
# (bf16 MXU operands, f32 accumulation, bf16 pooled intermediate).
# ----------------------------------------------------------------------------

def reference_forward(x, p):
    bf = jnp.bfloat16
    N, C_in, T, V = x.shape
    spa1 = jnp.maximum(
        jnp.maximum(p['Ws1'] + p['bs1'], 0.0) @ p['Ws2'] + p['bs2'], 0.0)
    tem1 = jnp.maximum(
        jnp.maximum(p['Wt1'] + p['bt1'], 0.0) @ p['Wt2'] + p['bt2'], 0.0)
    D = tem1.shape[-1]

    x_cl = jnp.transpose(x, (0, 2, 3, 1))
    xcat = jnp.concatenate(
        [x_cl, jnp.broadcast_to(spa1[None, None], (N, T, V, spa1.shape[-1]))], axis=-1)
    Wproj = jnp.concatenate([p['Wg1'], p['Wg2'], p['Ww1'], p['Ww']], axis=1)
    bproj = jnp.concatenate(
        [p['bg1'], p['bg2'], p['bw1'], jnp.zeros((1, D), jnp.float32)], axis=1)
    proj = jnp.einsum('ntvc,cd->ntvd', xcat.astype(bf), Wproj.astype(bf),
                      preferred_element_type=jnp.float32) + bproj
    g1, g2 = proj[..., :D], proj[..., D:2 * D]
    w1x, xw = proj[..., 2 * D:3 * D], proj[..., 3 * D:]
    sc = jnp.einsum('ntvd,ntwd->ntvw', g1.astype(bf), g2.astype(bf),
                    preferred_element_type=jnp.float32)
    g = jax.nn.softmax(sc, axis=-1)
    y = jnp.einsum('ntvw,ntwd->ntvd', g.astype(bf), xw.astype(bf),
                   preferred_element_type=jnp.float32)
    s0, b0 = bn_fold(p['bn_g'])
    h = jnp.maximum((y + w1x) * s0 + b0, 0.0) + tem1[None, :, None, :]

    T2 = T // 2
    h4 = h.reshape(N, T2, 2, V, D)
    pooled = jnp.maximum(h4[:, :, 0], h4[:, :, 1]).astype(bf)
    zero = jnp.zeros_like(pooled[:, :1])
    prev = jnp.concatenate([zero, pooled[:, :-1]], axis=1)
    nxt = jnp.concatenate([pooled[:, 1:], zero], axis=1)
    Wc1 = p['Wc1'].astype(bf)
    c = (jnp.einsum('ntvc,cd->ntvd', prev, Wc1[0], preferred_element_type=jnp.float32)
         + jnp.einsum('ntvc,cd->ntvd', pooled, Wc1[1], preferred_element_type=jnp.float32)
         + jnp.einsum('ntvc,cd->ntvd', nxt, Wc1[2], preferred_element_type=jnp.float32)
         + p['bc1'])
    s1, b1 = bn_fold(p['bn1'])
    c = jnp.maximum(c * s1 + b1, 0.0)
    c2 = jnp.einsum('ntvc,cd->ntvd', c.astype(bf), p['Wc2'].astype(bf),
                    preferred_element_type=jnp.float32) + p['bc2']
    s2, b2 = bn_fold(p['bn2'])
    out_cl = jnp.maximum(c2 * s2 + b2, 0.0)
    return jnp.transpose(out_cl, (0, 3, 1, 2))


# ----------------------------------------------------------------------------

if __name__ == "__main__":
    N, V = 2, 25          # num_joint fixed at 25 by the module
    T = 32                # "seg" (500 in the module), kept small and even
    C_in, D_in, D = 16, 16, 32   # x channels + spa-embed channels == outchannel

    key = jax.random.PRNGKey(0)
    kx, kp = jax.random.split(key)
    x = jax.random.normal(kx, (N, C_in, T, V), jnp.float32)
    params = init_params(kp, D_in, D, T, V)

    fwd = jax.jit(lambda xx, pp: gtcn_forward(xx, pp))
    out = jax.block_until_ready(fwd(x, params))

    ref = jax.block_until_ready(reference_forward(x, params))
    assert out.shape == (N, D, T // 2, V), out.shape
    assert bool(jnp.allclose(out, ref, atol=1e-2, rtol=1e-2)), \
        float(jnp.max(jnp.abs(out - ref)))

    print("KERNEL_OK")
</pallas_src>

<mosaic_0001>
module attributes {stable_mosaic.version = 11 : i64} {
  func.func @kernel(%arg0: i32, %arg1: i32, %arg2: memref<1x32x32x16xbf16, #tpu.memory_space<vmem>>, %arg3: memref<16x128xbf16, #tpu.memory_space<vmem>>, %arg4: memref<32x128xf32, #tpu.memory_space<vmem>>, %arg5: memref<32x1x32xf32, #tpu.memory_space<vmem>>, %arg6: memref<1x32xf32, #tpu.memory_space<vmem>>, %arg7: memref<1x32xf32, #tpu.memory_space<vmem>>, %arg8: memref<1x16x32x32xbf16, #tpu.memory_space<vmem>>) attributes {dimension_semantics = [#tpu.dimension_semantics<parallel>, #tpu.dimension_semantics<parallel>], iteration_bounds = array<i64: 2, 1>, scalar_prefetch = 0 : i64, scratch_operands = 0 : i64, tpu.core_type = #tpu.core_type<tc>, window_params = [{transform_indices = @transform_0, window_bounds = array<i64: 1, 32, 32, 16>}, {pipeline_mode = #tpu.pipeline_mode<synchronous>, transform_indices = @transform_1, window_bounds = array<i64: 16, 128>}, {pipeline_mode = #tpu.pipeline_mode<synchronous>, transform_indices = @transform_2, window_bounds = array<i64: 32, 128>}, {transform_indices = @transform_3, window_bounds = array<i64: 32, 1, 32>}, {pipeline_mode = #tpu.pipeline_mode<synchronous>, transform_indices = @transform_4, window_bounds = array<i64: 1, 32>}, {pipeline_mode = #tpu.pipeline_mode<synchronous>, transform_indices = @transform_5, window_bounds = array<i64: 1, 32>}, {transform_indices = @transform_6, window_bounds = array<i64: 1, 16, 32, 32>}]} {
    %c0 = arith.constant 0 : index
    %c0_0 = arith.constant 0 : index
    %c0_1 = arith.constant 0 : index
    %c0_2 = arith.constant 0 : index
    %0 = vector.load %arg2[%c0, %c0_0, %c0_1, %c0_2] : memref<1x32x32x16xbf16, #tpu.memory_space<vmem>>, vector<1x32x32x16xbf16>
    %1 = vector.shape_cast %0 : vector<1x32x32x16xbf16> to vector<32x32x16xbf16>
    %2 = vector.shape_cast %1 : vector<32x32x16xbf16> to vector<1024x16xbf16>
    %c0_3 = arith.constant 0 : index
    %c0_4 = arith.constant 0 : index
    %3 = vector.load %arg3[%c0_3, %c0_4] : memref<16x128xbf16, #tpu.memory_space<vmem>>, vector<16x128xbf16>
    %cst = arith.constant dense<0.000000e+00> : vector<1024x128xf32>
    %4 = tpu.matmul %2, %3, %cst {dimension_numbers = #tpu.dot_dimension_numbers<[1], [0], [0], [1], [0, 0, 1, 1], [], []>} : vector<1024x16xbf16>, vector<16x128xbf16>, vector<1024x128xf32> -> vector<1024x128xf32>
    %5 = vector.shape_cast %4 : vector<1024x128xf32> to vector<32x32x128xf32>
    %c0_5 = arith.constant 0 : index
    %c0_6 = arith.constant 0 : index
    %6 = vector.load %arg4[%c0_5, %c0_6] : memref<32x128xf32, #tpu.memory_space<vmem>>, vector<32x128xf32>
    %7 = vector.shape_cast %6 : vector<32x128xf32> to vector<1x32x128xf32>
    %8 = vector.broadcast %7 : vector<1x32x128xf32> to vector<32x32x128xf32>
    %9 = arith.addf %5, %8 : vector<32x32x128xf32>
    %10 = vector.extract_strided_slice %9 {offsets = [0, 0, 0], sizes = [32, 32, 32], strides = [1, 1, 1]} : vector<32x32x128xf32> to vector<32x32x32xf32>
    %11 = arith.truncf %10 : vector<32x32x32xf32> to vector<32x32x32xbf16>
    %12 = vector.extract_strided_slice %9 {offsets = [0, 0, 32], sizes = [32, 32, 32], strides = [1, 1, 1]} : vector<32x32x128xf32> to vector<32x32x32xf32>
    %13 = arith.truncf %12 : vector<32x32x32xf32> to vector<32x32x32xbf16>
    %14 = vector.extract_strided_slice %9 {offsets = [0, 0, 64], sizes = [32, 32, 32], strides = [1, 1, 1]} : vector<32x32x128xf32> to vector<32x32x32xf32>
    %15 = vector.extract_strided_slice %9 {offsets = [0, 0, 96], sizes = [32, 32, 32], strides = [1, 1, 1]} : vector<32x32x128xf32> to vector<32x32x32xf32>
    %16 = arith.truncf %15 : vector<32x32x32xf32> to vector<32x32x32xbf16>
    "tpu.trace_start"() <{level = 10 : i32, message = "tvd,twd->tvw"}> : () -> ()
    %cst_7 = arith.constant dense<0.000000e+00> : vector<32x32x32xf32>
    %17 = tpu.matmul %11, %13, %cst_7 {dimension_numbers = #tpu.dot_dimension_numbers<[2], [2], [1], [1], [0, 0, 0, 1, 1, 1], [0], [0]>} : vector<32x32x32xbf16>, vector<32x32x32xbf16>, vector<32x32x32xf32> -> vector<32x32x32xf32>
    "tpu.trace_stop"() : () -> ()
    %18 = tpu.iota {dimensions = array<i32: 2>} : vector<32x32x32xi32>
    %c25_i32 = arith.constant 25 : i32
    %19 = vector.broadcast %c25_i32 : i32 to vector<32x32x32xi32>
    %20 = arith.cmpi slt, %18, %19 : vector<32x32x32xi32>
    %cst_8 = arith.constant -1.000000e+30 : f32
    %21 = vector.broadcast %cst_8 : f32 to vector<32x32x32xf32>
    %22 = arith.select %20, %17, %21 : vector<32x32x32xi1>, vector<32x32x32xf32>
    %cst_9 = arith.constant dense<0xFF800000> : vector<32x32xf32>
    %23 = vector.multi_reduction <maximumf>, %22, %cst_9 [2] : vector<32x32x32xf32> to vector<32x32xf32>
    %24 = vector.shape_cast %23 : vector<32x32xf32> to vector<32x32x1xf32>
    %25 = vector.broadcast %24 : vector<32x32x1xf32> to vector<32x32x32xf32>
    %26 = arith.subf %22, %25 : vector<32x32x32xf32>
    %27 = math.exp %26 : vector<32x32x32xf32>
    %cst_10 = arith.constant dense<0.000000e+00> : vector<32x32xf32>
    %28 = vector.multi_reduction <add>, %27, %cst_10 [2] : vector<32x32x32xf32> to vector<32x32xf32>
    %29 = vector.shape_cast %28 : vector<32x32xf32> to vector<32x32x1xf32>
    %30 = tpu.reciprocal %29 {approx = true} : vector<32x32x1xf32> -> vector<32x32x1xf32>
    %31 = vector.broadcast %30 : vector<32x32x1xf32> to vector<32x32x32xf32>
    %32 = arith.mulf %27, %31 : vector<32x32x32xf32>
    %33 = arith.truncf %32 : vector<32x32x32xf32> to vector<32x32x32xbf16>
    "tpu.trace_start"() <{level = 10 : i32, message = "tvw,twd->tvd"}> : () -> ()
    %cst_11 = arith.constant dense<0.000000e+00> : vector<32x32x32xf32>
    %34 = tpu.matmul %33, %16, %cst_11 {dimension_numbers = #tpu.dot_dimension_numbers<[2], [1], [1], [2], [0, 0, 0, 1, 1, 2], [0], [0]>} : vector<32x32x32xbf16>, vector<32x32x32xbf16>, vector<32x32x32xf32> -> vector<32x32x32xf32>
    "tpu.trace_stop"() : () -> ()
    %35 = arith.addf %34, %14 : vector<32x32x32xf32>
    %c0_12 = arith.constant 0 : index
    %c0_13 = arith.constant 0 : index
    %36 = vector.load %arg6[%c0_12, %c0_13] : memref<1x32xf32, #tpu.memory_space<vmem>>, vector<1x32xf32>
    %37 = vector.shape_cast %36 : vector<1x32xf32> to vector<1x1x32xf32>
    %38 = vector.broadcast %37 : vector<1x1x32xf32> to vector<32x32x32xf32>
    %39 = arith.mulf %35, %38 : vector<32x32x32xf32>
    %c0_14 = arith.constant 0 : index
    %c0_15 = arith.constant 0 : index
    %40 = vector.load %arg7[%c0_14, %c0_15] : memref<1x32xf32, #tpu.memory_space<vmem>>, vector<1x32xf32>
    %41 = vector.shape_cast %40 : vector<1x32xf32> to vector<1x1x32xf32>
    %42 = vector.broadcast %41 : vector<1x1x32xf32> to vector<32x32x32xf32>
    %43 = arith.addf %39, %42 : vector<32x32x32xf32>
    %cst_16 = arith.constant 0.000000e+00 : f32
    %44 = vector.broadcast %cst_16 : f32 to vector<32x32x32xf32>
    %45 = arith.maximumf %43, %44 : vector<32x32x32xf32>
    %c0_17 = arith.constant 0 : index
    %c0_18 = arith.constant 0 : index
    %c0_19 = arith.constant 0 : index
    %46 = vector.load %arg5[%c0_17, %c0_18, %c0_19] : memref<32x1x32xf32, #tpu.memory_space<vmem>>, vector<32x1x32xf32>
    %47 = vector.broadcast %46 : vector<32x1x32xf32> to vector<32x32x32xf32>
    %48 = arith.addf %45, %47 : vector<32x32x32xf32>
    %49 = vector.shape_cast %48 : vector<32x32x32xf32> to vector<16x2x32x32xf32>
    %50 = vector.extract_strided_slice %49 {offsets = [0, 0, 0, 0], sizes = [16, 1, 32, 32], strides = [1, 1, 1, 1]} : vector<16x2x32x32xf32> to vector<16x1x32x32xf32>
    %51 = vector.shape_cast %50 : vector<16x1x32x32xf32> to vector<16x32x32xf32>
    %52 = vector.extract_strided_slice %49 {offsets = [0, 1, 0, 0], sizes = [16, 1, 32, 32], strides = [1, 1, 1, 1]} : vector<16x2x32x32xf32> to vector<16x1x32x32xf32>
    %53 = vector.shape_cast %52 : vector<16x1x32x32xf32> to vector<16x32x32xf32>
    %54 = arith.maximumf %51, %53 : vector<16x32x32xf32>
    %55 = arith.truncf %54 : vector<16x32x32xf32> to vector<16x32x32xbf16>
    %c0_20 = arith.constant 0 : index
    %c0_21 = arith.constant 0 : index
    %c0_22 = arith.constant 0 : index
    %c0_23 = arith.constant 0 : index
    %56 = vector.load %arg8[%c0_20, %c0_21, %c0_22, %c0_23] : memref<1x16x32x32xbf16, #tpu.memory_space<vmem>>, vector<1x16x32x32xbf16>
    %57 = vector.shape_cast %56 : vector<1x16x32x32xbf16> to vector<16x32x32xbf16>
    %58 = vector.shape_cast %55 : vector<16x32x32xbf16> to vector<1x16x32x32xbf16>
    tpu.vector_store %arg8[%c0_20, %c0_21, %c0_22, %c0_23], %58 {strides = array<i32>} : memref<1x16x32x32xbf16, #tpu.memory_space<vmem>>, vector<1x16x32x32xbf16>,
    return
  }
  func.func @transform_0(%arg0: i32, %arg1: i32) -> (i32, i32, i32, i32) {
    %c0_i32 = arith.constant 0 : i32
    %c0_i32_0 = arith.constant 0 : i32
    %c0_i32_1 = arith.constant 0 : i32
    return %arg0, %arg1, %c0_i32, %c0_i32_0 : i32, i32, i32, i32
  }
  func.func @transform_1(%arg0: i32, %arg1: i32) -> (i32, i32) {
    %c0_i32 = arith.constant 0 : i32
    %c0_i32_0 = arith.constant 0 : i32
    %c0_i32_1 = arith.constant 0 : i32
    return %c0_i32, %c0_i32_0 : i32, i32
  }
  func.func @transform_2(%arg0: i32, %arg1: i32) -> (i32, i32) {
    %c0_i32 = arith.constant 0 : i32
    %c0_i32_0 = arith.constant 0 : i32
    %c0_i32_1 = arith.constant 0 : i32
    return %c0_i32, %c0_i32_0 : i32, i32
  }
  func.func @transform_3(%arg0: i32, %arg1: i32) -> (i32, i32, i32) {
    %c0_i32 = arith.constant 0 : i32
    %c0_i32_0 = arith.constant 0 : i32
    %c0_i32_1 = arith.constant 0 : i32
    return %arg1, %c0_i32, %c0_i32_0 : i32, i32, i32
  }
  func.func @transform_4(%arg0: i32, %arg1: i32) -> (i32, i32) {
    %c0_i32 = arith.constant 0 : i32
    %c0_i32_0 = arith.constant 0 : i32
    %c0_i32_1 = arith.constant 0 : i32
    return %c0_i32, %c0_i32_0 : i32, i32
  }
  func.func @transform_5(%arg0: i32, %arg1: i32) -> (i32, i32) {
    %c0_i32 = arith.constant 0 : i32
    %c0_i32_0 = arith.constant 0 : i32
    %c0_i32_1 = arith.constant 0 : i32
    return %c0_i32, %c0_i32_0 : i32, i32
  }
  func.func @transform_6(%arg0: i32, %arg1: i32) -> (i32, i32, i32, i32) {
    %c0_i32 = arith.constant 0 : i32
    %c0_i32_0 = arith.constant 0 : i32
    %c0_i32_1 = arith.constant 0 : i32
    return %arg0, %arg1, %c0_i32, %c0_i32_0 : i32, i32, i32, i32
  }
}

module attributes {stable_mosaic.version = 11 : i64} {
  func.func @kernel(%arg0: i32, %arg1: memref<1x16x32x32xbf16, #tpu.memory_space<vmem>>, %arg2: memref<32x32xbf16, #tpu.memory_space<vmem>>, %arg3: memref<32x32xbf16, #tpu.memory_space<vmem>>, %arg4: memref<32x32xbf16, #tpu.memory_space<vmem>>, %arg5: memref<1x32xf32, #tpu.memory_space<vmem>>, %arg6: memref<1x32xf32, #tpu.memory_space<vmem>>, %arg7: memref<1x32xf32, #tpu.memory_space<vmem>>, %arg8: memref<32x32xbf16, #tpu.memory_space<vmem>>, %arg9: memref<1x32xf32, #tpu.memory_space<vmem>>, %arg10: memref<1x32xf32, #tpu.memory_space<vmem>>, %arg11: memref<1x32xf32, #tpu.memory_space<vmem>>, %arg12: memref<1x16x32x32xf32, #tpu.memory_space<vmem>>, %arg13: memref<512x32xf32, #tpu.memory_space<vmem>>) attributes {dimension_semantics = [#tpu.dimension_semantics<parallel>], iteration_bounds = array<i64: 2>, scalar_prefetch = 0 : i64, scratch_operands = 1 : i64, tpu.core_type = #tpu.core_type<tc>, window_params = [{transform_indices = @transform_0, window_bounds = array<i64: 1, 16, 32, 32>}, {pipeline_mode = #tpu.pipeline_mode<synchronous>, transform_indices = @transform_1, window_bounds = array<i64: 32, 32>}, {pipeline_mode = #tpu.pipeline_mode<synchronous>, transform_indices = @transform_2, window_bounds = array<i64: 32, 32>}, {pipeline_mode = #tpu.pipeline_mode<synchronous>, transform_indices = @transform_3, window_bounds = array<i64: 32, 32>}, {pipeline_mode = #tpu.pipeline_mode<synchronous>, transform_indices = @transform_4, window_bounds = array<i64: 1, 32>}, {pipeline_mode = #tpu.pipeline_mode<synchronous>, transform_indices = @transform_5, window_bounds = array<i64: 1, 32>}, {pipeline_mode = #tpu.pipeline_mode<synchronous>, transform_indices = @transform_6, window_bounds = array<i64: 1, 32>}, {pipeline_mode = #tpu.pipeline_mode<synchronous>, transform_indices = @transform_7, window_bounds = array<i64: 32, 32>}, {pipeline_mode = #tpu.pipeline_mode<synchronous>, transform_indices = @transform_8, window_bounds = array<i64: 1, 32>}, {pipeline_mode = #tpu.pipeline_mode<synchronous>, transform_indices = @transform_9, window_bounds = array<i64: 1, 32>}, {pipeline_mode = #tpu.pipeline_mode<synchronous>, transform_indices = @transform_10, window_bounds = array<i64: 1, 32>}, {transform_indices = @transform_11, window_bounds = array<i64: 1, 16, 32, 32>}]} {
    %c0 = arith.constant 0 : index
    %c0_0 = arith.constant 0 : index
    %c0_1 = arith.constant 0 : index
    %c0_2 = arith.constant 0 : index
    %0 = vector.load %arg1[%c0, %c0_0, %c0_1, %c0_2] : memref<1x16x32x32xbf16, #tpu.memory_space<vmem>>, vector<1x16x32x32xbf16>
    %1 = vector.shape_cast %0 : vector<1x16x32x32xbf16> to vector<16x32x32xbf16>
    %2 = vector.shape_cast %1 : vector<16x32x32xbf16> to vector<512x32xbf16>
    %c0_3 = arith.constant 0 : index
    %c0_4 = arith.constant 0 : index
    %3 = vector.load %arg3[%c0_3, %c0_4] : memref<32x32xbf16, #tpu.memory_space<vmem>>, vector<32x32xbf16>
    %cst = arith.constant dense<0.000000e+00> : vector<512x32xf32>
    %4 = tpu.matmul %2, %3, %cst {dimension_numbers = #tpu.dot_dimension_numbers<[1], [0], [0], [1], [0, 0, 1, 1], [], []>} : vector<512x32xbf16>, vector<32x32xbf16>, vector<512x32xf32> -> vector<512x32xf32>
    %c0_5 = arith.constant 0 : index
    %c0_6 = arith.constant 0 : index
    %5 = vector.load %arg13[%c0_5, %c0_6] : memref<512x32xf32, #tpu.memory_space<vmem>>, vector<512x32xf32>
    tpu.vector_store %arg13[%c0_5, %c0_6], %4 {strides = array<i32>} : memref<512x32xf32, #tpu.memory_space<vmem>>, vector<512x32xf32>,
    %c32 = arith.constant 32 : index
    %c0_7 = arith.constant 0 : index
    %6 = vector.load %arg13[%c32, %c0_7] : memref<512x32xf32, #tpu.memory_space<vmem>>, vector<480x32xf32>
    %7 = vector.extract_strided_slice %2 {offsets = [0, 0], sizes = [480, 32], strides = [1, 1]} : vector<512x32xbf16> to vector<480x32xbf16>
    %c0_8 = arith.constant 0 : index
    %c0_9 = arith.constant 0 : index
    %8 = vector.load %arg2[%c0_8, %c0_9] : memref<32x32xbf16, #tpu.memory_space<vmem>>, vector<32x32xbf16>
    %cst_10 = arith.constant dense<0.000000e+00> : vector<480x32xf32>
    %9 = tpu.matmul %7, %8, %cst_10 {dimension_numbers = #tpu.dot_dimension_numbers<[1], [0], [0], [1], [0, 0, 1, 1], [], []>} : vector<480x32xbf16>, vector<32x32xbf16>, vector<480x32xf32> -> vector<480x32xf32>
    %10 = arith.addf %6, %9 : vector<480x32xf32>
    %c32_11 = arith.constant 32 : index
    %c0_12 = arith.constant 0 : index
    %11 = vector.load %arg13[%c32_11, %c0_12] : memref<512x32xf32, #tpu.memory_space<vmem>>, vector<480x32xf32>
    tpu.vector_store %arg13[%c32_11, %c0_12], %10 {strides = array<i32>} : memref<512x32xf32, #tpu.memory_space<vmem>>, vector<480x32xf32>,
    %c0_13 = arith.constant 0 : index
    %c0_14 = arith.constant 0 : index
    %12 = vector.load %arg13[%c0_13, %c0_14] : memref<512x32xf32, #tpu.memory_space<vmem>>, vector<480x32xf32>
    %13 = vector.extract_strided_slice %2 {offsets = [32, 0], sizes = [480, 32], strides = [1, 1]} : vector<512x32xbf16> to vector<480x32xbf16>
    %c0_15 = arith.constant 0 : index
    %c0_16 = arith.constant 0 : index
    %14 = vector.load %arg4[%c0_15, %c0_16] : memref<32x32xbf16, #tpu.memory_space<vmem>>, vector<32x32xbf16>
    %cst_17 = arith.constant dense<0.000000e+00> : vector<480x32xf32>
    %15 = tpu.matmul %13, %14, %cst_17 {dimension_numbers = #tpu.dot_dimension_numbers<[1], [0], [0], [1], [0, 0, 1, 1], [], []>} : vector<480x32xbf16>, vector<32x32xbf16>, vector<480x32xf32> -> vector<480x32xf32>
    %16 = arith.addf %12, %15 : vector<480x32xf32>
    %c0_18 = arith.constant 0 : index
    %c0_19 = arith.constant 0 : index
    %17 = vector.load %arg13[%c0_18, %c0_19] : memref<512x32xf32, #tpu.memory_space<vmem>>, vector<480x32xf32>
    tpu.vector_store %arg13[%c0_18, %c0_19], %16 {strides = array<i32>} : memref<512x32xf32, #tpu.memory_space<vmem>>, vector<480x32xf32>,
    %c0_20 = arith.constant 0 : index
    %c0_21 = arith.constant 0 : index
    %18 = vector.load %arg13[%c0_20, %c0_21] : memref<512x32xf32, #tpu.memory_space<vmem>>, vector<512x32xf32>
    %c0_22 = arith.constant 0 : index
    %c0_23 = arith.constant 0 : index
    %19 = vector.load %arg5[%c0_22, %c0_23] : memref<1x32xf32, #tpu.memory_space<vmem>>, vector<1x32xf32>
    %20 = vector.broadcast %19 : vector<1x32xf32> to vector<512x32xf32>
    %21 = arith.addf %18, %20 : vector<512x32xf32>
    %c0_24 = arith.constant 0 : index
    %c0_25 = arith.constant 0 : index
    %22 = vector.load %arg6[%c0_24, %c0_25] : memref<1x32xf32, #tpu.memory_space<vmem>>, vector<1x32xf32>
    %23 = vector.broadcast %22 : vector<1x32xf32> to vector<512x32xf32>
    %24 = arith.mulf %21, %23 : vector<512x32xf32>
    %c0_26 = arith.constant 0 : index
    %c0_27 = arith.constant 0 : index
    %25 = vector.load %arg7[%c0_26, %c0_27] : memref<1x32xf32, #tpu.memory_space<vmem>>, vector<1x32xf32>
    %26 = vector.broadcast %25 : vector<1x32xf32> to vector<512x32xf32>
    %27 = arith.addf %24, %26 : vector<512x32xf32>
    %cst_28 = arith.constant 0.000000e+00 : f32
    %28 = vector.broadcast %cst_28 : f32 to vector<512x32xf32>
    %29 = arith.maximumf %27, %28 : vector<512x32xf32>
    %30 = arith.truncf %29 : vector<512x32xf32> to vector<512x32xbf16>
    %c0_29 = arith.constant 0 : index
    %c0_30 = arith.constant 0 : index
    %31 = vector.load %arg8[%c0_29, %c0_30] : memref<32x32xbf16, #tpu.memory_space<vmem>>, vector<32x32xbf16>
    %cst_31 = arith.constant dense<0.000000e+00> : vector<512x32xf32>
    %32 = tpu.matmul %30, %31, %cst_31 {dimension_numbers = #tpu.dot_dimension_numbers<[1], [0], [0], [1], [0, 0, 1, 1], [], []>} : vector<512x32xbf16>, vector<32x32xbf16>, vector<512x32xf32> -> vector<512x32xf32>
    %c0_32 = arith.constant 0 : index
    %c0_33 = arith.constant 0 : index
    %33 = vector.load %arg9[%c0_32, %c0_33] : memref<1x32xf32, #tpu.memory_space<vmem>>, vector<1x32xf32>
    %34 = vector.broadcast %33 : vector<1x32xf32> to vector<512x32xf32>
    %35 = arith.addf %32, %34 : vector<512x32xf32>
    %c0_34 = arith.constant 0 : index
    %c0_35 = arith.constant 0 : index
    %36 = vector.load %arg10[%c0_34, %c0_35] : memref<1x32xf32, #tpu.memory_space<vmem>>, vector<1x32xf32>
    %37 = vector.broadcast %36 : vector<1x32xf32> to vector<512x32xf32>
    %38 = arith.mulf %35, %37 : vector<512x32xf32>
    %c0_36 = arith.constant 0 : index
    %c0_37 = arith.constant 0 : index
    %39 = vector.load %arg11[%c0_36, %c0_37] : memref<1x32xf32, #tpu.memory_space<vmem>>, vector<1x32xf32>
    %40 = vector.broadcast %39 : vector<1x32xf32> to vector<512x32xf32>
    %41 = arith.addf %38, %40 : vector<512x32xf32>
    %cst_38 = arith.constant 0.000000e+00 : f32
    %42 = vector.broadcast %cst_38 : f32 to vector<512x32xf32>
    %43 = arith.maximumf %41, %42 : vector<512x32xf32>
    %44 = vector.shape_cast %43 : vector<512x32xf32> to vector<16x32x32xf32>
    %c0_39 = arith.constant 0 : index
    %c0_40 = arith.constant 0 : index
    %c0_41 = arith.constant 0 : index
    %c0_42 = arith.constant 0 : index
    %45 = vector.load %arg12[%c0_39, %c0_40, %c0_41, %c0_42] : memref<1x16x32x32xf32, #tpu.memory_space<vmem>>, vector<1x16x32x32xf32>
    %46 = vector.shape_cast %45 : vector<1x16x32x32xf32> to vector<16x32x32xf32>
    %47 = vector.shape_cast %44 : vector<16x32x32xf32> to vector<1x16x32x32xf32>
    tpu.vector_store %arg12[%c0_39, %c0_40, %c0_41, %c0_42], %47 {strides = array<i32>} : memref<1x16x32x32xf32, #tpu.memory_space<vmem>>, vector<1x16x32x32xf32>,
    return
  }
  func.func @transform_0(%arg0: i32) -> (i32, i32, i32, i32) {
    %c0_i32 = arith.constant 0 : i32
    %c0_i32_0 = arith.constant 0 : i32
    %c0_i32_1 = arith.constant 0 : i32
    %c0_i32_2 = arith.constant 0 : i32
    return %arg0, %c0_i32, %c0_i32_0, %c0_i32_1 : i32, i32, i32, i32
  }
  func.func @transform_1(%arg0: i32) -> (i32, i32) {
    %c0_i32 = arith.constant 0 : i32
    %c0_i32_0 = arith.constant 0 : i32
    %c0_i32_1 = arith.constant 0 : i32
    return %c0_i32, %c0_i32_0 : i32, i32
  }
  func.func @transform_2(%arg0: i32) -> (i32, i32) {
    %c0_i32 = arith.constant 0 : i32
    %c0_i32_0 = arith.constant 0 : i32
    %c0_i32_1 = arith.constant 0 : i32
    return %c0_i32, %c0_i32_0 : i32, i32
  }
  func.func @transform_3(%arg0: i32) -> (i32, i32) {
    %c0_i32 = arith.constant 0 : i32
    %c0_i32_0 = arith.constant 0 : i32
    %c0_i32_1 = arith.constant 0 : i32
    return %c0_i32, %c0_i32_0 : i32, i32
  }
  func.func @transform_4(%arg0: i32) -> (i32, i32) {
    %c0_i32 = arith.constant 0 : i32
    %c0_i32_0 = arith.constant 0 : i32
    %c0_i32_1 = arith.constant 0 : i32
    return %c0_i32, %c0_i32_0 : i32, i32
  }
  func.func @transform_5(%arg0: i32) -> (i32, i32) {
    %c0_i32 = arith.constant 0 : i32
    %c0_i32_0 = arith.constant 0 : i32
    %c0_i32_1 = arith.constant 0 : i32
    return %c0_i32, %c0_i32_0 : i32, i32
  }
  func.func @transform_6(%arg0: i32) -> (i32, i32) {
    %c0_i32 = arith.constant 0 : i32
    %c0_i32_0 = arith.constant 0 : i32
    %c0_i32_1 = arith.constant 0 : i32
    return %c0_i32, %c0_i32_0 : i32, i32
  }
  func.func @transform_7(%arg0: i32) -> (i32, i32) {
    %c0_i32 = arith.constant 0 : i32
    %c0_i32_0 = arith.constant 0 : i32
    %c0_i32_1 = arith.constant 0 : i32
    return %c0_i32, %c0_i32_0 : i32, i32
  }
  func.func @transform_8(%arg0: i32) -> (i32, i32) {
    %c0_i32 = arith.constant 0 : i32
    %c0_i32_0 = arith.constant 0 : i32
    %c0_i32_1 = arith.constant 0 : i32
    return %c0_i32, %c0_i32_0 : i32, i32
  }
  func.func @transform_9(%arg0: i32) -> (i32, i32) {
    %c0_i32 = arith.constant 0 : i32
    %c0_i32_0 = arith.constant 0 : i32
    %c0_i32_1 = arith.constant 0 : i32
    return %c0_i32, %c0_i32_0 : i32, i32
  }
  func.func @transform_10(%arg0: i32) -> (i32, i32) {
    %c0_i32 = arith.constant 0 : i32
    %c0_i32_0 = arith.constant 0 : i32
    %c0_i32_1 = arith.constant 0 : i32
    return %c0_i32, %c0_i32_0 : i32, i32
  }
  func.func @transform_11(%arg0: i32) -> (i32, i32, i32, i32) {
    %c0_i32 = arith.constant 0 : i32
    %c0_i32_0 = arith.constant 0 : i32
    %c0_i32_1 = arith.constant 0 : i32
    %c0_i32_2 = arith.constant 0 : i32
    return %arg0, %c0_i32, %c0_i32_0, %c0_i32_1 : i32, i32, i32, i32
  }
}

</mosaic_0001>

<llo_original>
// kernel: _lambda_.3
$region0: #{_lambda_.3}
  #allocation0 [shape = 'u32[]', space=smem, size = 0x4, offset = 0x4, fixed_abs, tag = 'smem constant byte address 0x4 - core index']
  #allocation1 [shape = 'u32[144,128]{1,0:T(1,128)}', space=vmem, size = 0x12000, scoped, tag = 'internal scratch']
  #allocation2 [shape = 'f32[512,32]{1,0:T(8,128)}', space=vmem, size = 0x40000, scoped, tag = 'scratch operand']
  %s0 = inlined_call_operand.vmem [shape: bf16[2,16,32,32], index: 0, kind: input, shape index: {}]
  %s1 = inlined_call_operand.vmem [shape: bf16[32,32], index: 1, kind: input, shape index: {}]
  %s2 = inlined_call_operand.vmem [shape: bf16[32,32], index: 2, kind: input, shape index: {}]
  %s3 = inlined_call_operand.vmem [shape: bf16[32,32], index: 3, kind: input, shape index: {}]
  %s4 = inlined_call_operand.vmem [shape: f32[1,32], index: 4, kind: input, shape index: {}]
  %s5 = inlined_call_operand.vmem [shape: f32[1,32], index: 5, kind: input, shape index: {}]
  %s6 = inlined_call_operand.vmem [shape: f32[1,32], index: 6, kind: input, shape index: {}]
  %s7 = inlined_call_operand.vmem [shape: bf16[32,32], index: 7, kind: input, shape index: {}]
  %s8 = inlined_call_operand.vmem [shape: f32[1,32], index: 8, kind: input, shape index: {}]
  %s9 = inlined_call_operand.vmem [shape: f32[1,32], index: 9, kind: input, shape index: {}]
  %s10 = inlined_call_operand.vmem [shape: f32[1,32], index: 10, kind: input, shape index: {}]
  %s11 = inlined_call_operand.vmem [shape: f32[2,16,32,32], index: 11, kind: output, shape index: {}]
  %s12 = sld [smem:[#allocation0]]
  $region77: #{_lambda_.3} parent=0
    _
  %s14 = ssub.s32 1, %s12
  %s15 = scalar_select 0, %s14, %s12
  loop: start=0, step=1, limit=4
  $region2: #{_lambda_.3} parent=0 // loop_pre_header
    _
  $region3: #{_lambda_.3} parent=0 // loop_header
    %s17 = sphi 0, %s21
    %p18 = scmp.ge.s32.totalorder %s17, 4
    %s27 = sphi 0, %s29
    %s30 = sphi 0, %s27
    %s31 = sphi 0, %s30
    %s47 = sphi 0, %s31
    %s51 = sphi 0, %s51
    %s53 = sphi 0, %s51
    %s54 = sphi 0, %s53
    %s68 = sphi 0, %s54
    %s72 = sphi 0, %s72
    %s74 = sphi 0, %s72
    %s75 = sphi 0, %s74
    %s89 = sphi 0, %s75
    %s93 = sphi 0, %s93
    %s95 = sphi 0, %s93
    %s96 = sphi 0, %s95
    %s110 = sphi 0, %s96
    %s114 = sphi 0, %s114
    %s116 = sphi 0, %s114
    %s117 = sphi 0, %s116
    %s131 = sphi 0, %s117
    %s135 = sphi 0, %s135
    %s137 = sphi 0, %s135
    %s138 = sphi 0, %s137
    %s152 = sphi 0, %s138
    %s156 = sphi 0, %s156
    %s158 = sphi 0, %s156
    %s159 = sphi 0, %s158
    %s173 = sphi 0, %s159
    %s177 = sphi 0, %s177
    %s179 = sphi 0, %s177
    %s180 = sphi 0, %s179
    %s194 = sphi 0, %s180
    %s198 = sphi 0, %s198
    %s200 = sphi 0, %s198
    %s201 = sphi 0, %s200
    %s215 = sphi 0, %s201
    %s219 = sphi 0, %s219
    %s221 = sphi 0, %s219
    %s222 = sphi 0, %s221
    %s236 = sphi 0, %s222
    %s240 = sphi 0, %s240
    %s242 = sphi 0, %s240
    %s243 = sphi 0, %s242
    %s257 = sphi 0, %s243
    %s263 = sphi 0, %s265
    %s266 = sphi 0, %s263
    %s267 = sphi 0, %s266
    %s283 = sphi 0, %s267
  $region4: #{_lambda_.3} parent=0 // loop_header_branch
    %20 = sbr.rel (%p18) target = $region8
  $region5: #{_lambda_.3} parent=0 // loop_body
    %s22 = ssub.s32 %s17, 1
    %s23 = ssub.s32 %s17, 2
    %s24 = sadd.s32 %s17, 1
    %s25 = ssub.s32 %s17, %s24
    %p26 = scmp.eq.s32.totalorder %s25, 0
    %s28 = sadd.s32 %s27, 1
    %s29 = scalar_select %p26, %s27, %s28
    %p32 = pneg %p26
    %p33 = scmp.eq.s32.totalorder %s17, 1
    %p34 = por %p32, %p33
    %p35 = scmp.ne.s32.totalorder %s27, %s30
    %p36 = scmp.eq.s32.totalorder %s17, 0
    %p37 = por %p35, %p36
    %p38 = scmp.ne.s32.totalorder %s27, %s30
    %p39 = scmp.eq.s32.totalorder %s22, 1
    %p40 = por %p38, %p39
    %p41 = scmp.ne.s32.totalorder %s30, %s31
    %p42 = scmp.eq.s32.totalorder %s22, 0
    %p43 = por %p41, %p42
    %p44 = scmp.ne.s32.totalorder %s30, %s31
    %p45 = scmp.eq.s32.totalorder %s23, 1
    %p46 = por %p44, %p45
    %p48 = scmp.ne.s32.totalorder %s31, %s47
    %p49 = scmp.eq.s32.totalorder %s23, 0
    %p50 = por %p48, %p49
    %s52 = sadd.s32 %s51, 1
    %p55 = scmp.eq.s32.totalorder %s17, 1
    %p56 = scmp.ne.s32.totalorder %s51, %s53
    %p57 = scmp.eq.s32.totalorder %s17, 0
    %p58 = por %p56, %p57
    %p59 = scmp.ne.s32.totalorder %s51, %s53
    %p60 = scmp.eq.s32.totalorder %s22, 1
    %p61 = por %p59, %p60
    %p62 = scmp.ne.s32.totalorder %s53, %s54
    %p63 = scmp.eq.s32.totalorder %s22, 0
    %p64 = por %p62, %p63
    %p65 = scmp.ne.s32.totalorder %s53, %s54
    %p66 = scmp.eq.s32.totalorder %s23, 1
    %p67 = por %p65, %p66
    %p69 = scmp.ne.s32.totalorder %s54, %s68
    %p70 = scmp.eq.s32.totalorder %s23, 0
    %p71 = por %p69, %p70
    %s73 = sadd.s32 %s72, 1
    %p76 = scmp.eq.s32.totalorder %s17, 1
    %p77 = scmp.ne.s32.totalorder %s72, %s74
    %p78 = scmp.eq.s32.totalorder %s17, 0
    %p79 = por %p77, %p78
    %p80 = scmp.ne.s32.totalorder %s72, %s74
    %p81 = scmp.eq.s32.totalorder %s22, 1
    %p82 = por %p80, %p81
    %p83 = scmp.ne.s32.totalorder %s74, %s75
    %p84 = scmp.eq.s32.totalorder %s22, 0
    %p85 = por %p83, %p84
    %p86 = scmp.ne.s32.totalorder %s74, %s75
    %p87 = scmp.eq.s32.totalorder %s23, 1
    %p88 = por %p86, %p87
    %p90 = scmp.ne.s32.totalorder %s75, %s89
    %p91 = scmp.eq.s32.totalorder %s23, 0
    %p92 = por %p90, %p91
    %s94 = sadd.s32 %s93, 1
    %p97 = scmp.eq.s32.totalorder %s17, 1
    %p98 = scmp.ne.s32.totalorder %s93, %s95
    %p99 = scmp.eq.s32.totalorder %s17, 0
    %p100 = por %p98, %p99
    %p101 = scmp.ne.s32.totalorder %s93, %s95
    %p102 = scmp.eq.s32.totalorder %s22, 1
    %p103 = por %p101, %p102
    %p104 = scmp.ne.s32.totalorder %s95, %s96
    %p105 = scmp.eq.s32.totalorder %s22, 0
    %p106 = por %p104, %p105
    %p107 = scmp.ne.s32.totalorder %s95, %s96
    %p108 = scmp.eq.s32.totalorder %s23, 1
    %p109 = por %p107, %p108
    %p111 = scmp.ne.s32.totalorder %s96, %s110
    %p112 = scmp.eq.s32.totalorder %s23, 0
    %p113 = por %p111, %p112
    %s115 = sadd.s32 %s114, 1
    %p118 = scmp.eq.s32.totalorder %s17, 1
    %p119 = scmp.ne.s32.totalorder %s114, %s116
    %p120 = scmp.eq.s32.totalorder %s17, 0
    %p121 = por %p119, %p120
    %p122 = scmp.ne.s32.totalorder %s114, %s116
    %p123 = scmp.eq.s32.totalorder %s22, 1
    %p124 = por %p122, %p123
    %p125 = scmp.ne.s32.totalorder %s116, %s117
    %p126 = scmp.eq.s32.totalorder %s22, 0
    %p127 = por %p125, %p126
    %p128 = scmp.ne.s32.totalorder %s116, %s117
    %p129 = scmp.eq.s32.totalorder %s23, 1
    %p130 = por %p128, %p129
    %p132 = scmp.ne.s32.totalorder %s117, %s131
    %p133 = scmp.eq.s32.totalorder %s23, 0
    %p134 = por %p132, %p133
    %s136 = sadd.s32 %s135, 1
    %p139 = scmp.eq.s32.totalorder %s17, 1
    %p140 = scmp.ne.s32.totalorder %s135, %s137
    %p141 = scmp.eq.s32.totalorder %s17, 0
    %p142 = por %p140, %p141
    %p143 = scmp.ne.s32.totalorder %s135, %s137
    %p144 = scmp.eq.s32.totalorder %s22, 1
    %p145 = por %p143, %p144
    %p146 = scmp.ne.s32.totalorder %s137, %s138
    %p147 = scmp.eq.s32.totalorder %s22, 0
    %p148 = por %p146, %p147
    %p149 = scmp.ne.s32.totalorder %s137, %s138
    %p150 = scmp.eq.s32.totalorder %s23, 1
    %p151 = por %p149, %p150
    %p153 = scmp.ne.s32.totalorder %s138, %s152
    %p154 = scmp.eq.s32.totalorder %s23, 0
    %p155 = por %p153, %p154
    %s157 = sadd.s32 %s156, 1
    %p160 = scmp.eq.s32.totalorder %s17, 1
    %p161 = scmp.ne.s32.totalorder %s156, %s158
    %p162 = scmp.eq.s32.totalorder %s17, 0
    %p163 = por %p161, %p162
    %p164 = scmp.ne.s32.totalorder %s156, %s158
    %p165 = scmp.eq.s32.totalorder %s22, 1
    %p166 = por %p164, %p165
    %p167 = scmp.ne.s32.totalorder %s158, %s159
    %p168 = scmp.eq.s32.totalorder %s22, 0
    %p169 = por %p167, %p168
    %p170 = scmp.ne.s32.totalorder %s158, %s159
    %p171 = scmp.eq.s32.totalorder %s23, 1
    %p172 = por %p170, %p171
    %p174 = scmp.ne.s32.totalorder %s159, %s173
    %p175 = scmp.eq.s32.totalorder %s23, 0
    %p176 = por %p174, %p175
    %s178 = sadd.s32 %s177, 1
    %p181 = scmp.eq.s32.totalorder %s17, 1
    %p182 = scmp.ne.s32.totalorder %s177, %s179
    %p183 = scmp.eq.s32.totalorder %s17, 0
    %p184 = por %p182, %p183
    %p185 = scmp.ne.s32.totalorder %s177, %s179
    %p186 = scmp.eq.s32.totalorder %s22, 1
    %p187 = por %p185, %p186
    %p188 = scmp.ne.s32.totalorder %s179, %s180
    %p189 = scmp.eq.s32.totalorder %s22, 0
    %p190 = por %p188, %p189
    %p191 = scmp.ne.s32.totalorder %s179, %s180
    %p192 = scmp.eq.s32.totalorder %s23, 1
    %p193 = por %p191, %p192
    %p195 = scmp.ne.s32.totalorder %s180, %s194
    %p196 = scmp.eq.s32.totalorder %s23, 0
    %p197 = por %p195, %p196
    %s199 = sadd.s32 %s198, 1
    %p202 = scmp.eq.s32.totalorder %s17, 1
    %p203 = scmp.ne.s32.totalorder %s198, %s200
    %p204 = scmp.eq.s32.totalorder %s17, 0
    %p205 = por %p203, %p204
    %p206 = scmp.ne.s32.totalorder %s198, %s200
    %p207 = scmp.eq.s32.totalorder %s22, 1
    %p208 = por %p206, %p207
    %p209 = scmp.ne.s32.totalorder %s200, %s201
    %p210 = scmp.eq.s32.totalorder %s22, 0
    %p211 = por %p209, %p210
    %p212 = scmp.ne.s32.totalorder %s200, %s201
    %p213 = scmp.eq.s32.totalorder %s23, 1
    %p214 = por %p212, %p213
    %p216 = scmp.ne.s32.totalorder %s201, %s215
    %p217 = scmp.eq.s32.totalorder %s23, 0
    %p218 = por %p216, %p217
    %s220 = sadd.s32 %s219, 1
    %p223 = scmp.eq.s32.totalorder %s17, 1
    %p224 = scmp.ne.s32.totalorder %s219, %s221
    %p225 = scmp.eq.s32.totalorder %s17, 0
    %p226 = por %p224, %p225
    %p227 = scmp.ne.s32.totalorder %s219, %s221
    %p228 = scmp.eq.s32.totalorder %s22, 1
    %p229 = por %p227, %p228
    %p230 = scmp.ne.s32.totalorder %s221, %s222
    %p231 = scmp.eq.s32.totalorder %s22, 0
    %p232 = por %p230, %p231
    %p233 = scmp.ne.s32.totalorder %s221, %s222
    %p234 = scmp.eq.s32.totalorder %s23, 1
    %p235 = por %p233, %p234
    %p237 = scmp.ne.s32.totalorder %s222, %s236
    %p238 = scmp.eq.s32.totalorder %s23, 0
    %p239 = por %p237, %p238
    %s241 = sadd.s32 %s240, 1
    %p244 = scmp.eq.s32.totalorder %s17, 1
    %p245 = scmp.ne.s32.totalorder %s240, %s242
    %p246 = scmp.eq.s32.totalorder %s17, 0
    %p247 = por %p245, %p246
    %p248 = scmp.ne.s32.totalorder %s240, %s242
    %p249 = scmp.eq.s32.totalorder %s22, 1
    %p250 = por %p248, %p249
    %p251 = scmp.ne.s32.totalorder %s242, %s243
    %p252 = scmp.eq.s32.totalorder %s22, 0
    %p253 = por %p251, %p252
    %p254 = scmp.ne.s32.totalorder %s242, %s243
    %p255 = scmp.eq.s32.totalorder %s23, 1
    %p256 = por %p254, %p255
    %p258 = scmp.ne.s32.totalorder %s243, %s257
    %p259 = scmp.eq.s32.totalorder %s23, 0
    %p260 = por %p258, %p259
    %s261 = ssub.s32 %s17, %s24
    %p262 = scmp.eq.s32.totalorder %s261, 0
    %s264 = sadd.s32 %s263, 1
    %s265 = scalar_select %p262, %s263, %s264
    %p268 = pneg %p262
    %p269 = scmp.eq.s32.totalorder %s17, 1
    %p270 = por %p268, %p269
    %p271 = scmp.ne.s32.totalorder %s263, %s266
    %p272 = scmp.eq.s32.totalorder %s17, 0
    %p273 = por %p271, %p272
    %p274 = scmp.ne.s32.totalorder %s263, %s266
    %p275 = scmp.eq.s32.totalorder %s22, 1
    %p276 = por %p274, %p275
    %p277 = scmp.ne.s32.totalorder %s266, %s267
    %p278 = scmp.eq.s32.totalorder %s22, 0
    %p279 = por %p277, %p278
    %p280 = scmp.ne.s32.totalorder %s266, %s267
    %p281 = scmp.eq.s32.totalorder %s23, 1
    %p282 = por %p280, %p281
    %p284 = scmp.ne.s32.totalorder %s267, %s283
    %p285 = scmp.eq.s32.totalorder %s23, 0
    %p286 = por %p284, %p285
    %p287 = scmp.le.s32.totalorder 1, %s17
    %p288 = scmp.lt.s32.totalorder %s17, 3
    %p289 = pnand %p287, %p288
    %p290 = pneg %p289
    // Predicated region
    $region9: #{_lambda_.3} parent=5 // pred_check
      _
    $region10: #{_lambda_.3} parent=5 // pred_check_branch
      %292 = sbr.rel (%p289) target = $region12
    $region11: #{_lambda_.3} parent=5 // pred_region
      %s293 = ssub.s32 %s17, 1
      // Predicated region
      $region13: #{_lambda_.3} parent=11 // pred_check
        %p294 = pneg %p64
      $region14: #{_lambda_.3} parent=11 // pred_check_branch
        %296 = sbr.rel (%p294) target = $region16
      $region15: #{_lambda_.3} parent=11 // pred_region
        _
      $region16: #{_lambda_.3} parent=11 // pred_fallthru
        _
      // Predicated region
      $region17: #{_lambda_.3} parent=11 // pred_check
        %p297 = pneg %p85
      $region18: #{_lambda_.3} parent=11 // pred_check_branch
        %299 = sbr.rel (%p297) target = $region20
      $region19: #{_lambda_.3} parent=11 // pred_region
        _
      $region20: #{_lambda_.3} parent=11 // pred_fallthru
        _
      // Predicated region
      $region21: #{_lambda_.3} parent=11 // pred_check
        %p300 = pneg %p106
      $region22: #{_lambda_.3} parent=11 // pred_check_branch
        %302 = sbr.rel (%p300) target = $region24
      $region23: #{_lambda_.3} parent=11 // pred_region
        _
      $region24: #{_lambda_.3} parent=11 // pred_fallthru
        _
      // Predicated region
      $region25: #{_lambda_.3} parent=11 // pred_check
        %p303 = pneg %p127
      $region26: #{_lambda_.3} parent=11 // pred_check_branch
        %305 = sbr.rel (%p303) target = $region28
      $region27: #{_lambda_.3} parent=11 // pred_region
        _
      $region28: #{_lambda_.3} parent=11 // pred_fallthru
        _
      // Predicated region
      $region29: #{_lambda_.3} parent=11 // pred_check
        %p306 = pneg %p148
      $region30: #{_lambda_.3} parent=11 // pred_check_branch
        %308 = sbr.rel (%p306) target = $region32
      $region31: #{_lambda_.3} parent=11 // pred_region
        _
      $region32: #{_lambda_.3} parent=11 // pred_fallthru
        _
      // Predicated region
      $region33: #{_lambda_.3} parent=11 // pred_check
        %p309 = pneg %p169
      $region34: #{_lambda_.3} parent=11 // pred_check_branch
        %311 = sbr.rel (%p309) target = $region36
      $region35: #{_lambda_.3} parent=11 // pred_region
        _
      $region36: #{_lambda_.3} parent=11 // pred_fallthru
        _
      // Predicated region
      $region37: #{_lambda_.3} parent=11 // pred_check
        %p312 = pneg %p190
      $region38: #{_lambda_.3} parent=11 // pred_check_branch
        %314 = sbr.rel (%p312) target = $region40
      $region39: #{_lambda_.3} parent=11 // pred_region
        _
      $region40: #{_lambda_.3} parent=11 // pred_fallthru
        _
      // Predicated region
      $region41: #{_lambda_.3} parent=11 // pred_check
        %p315 = pneg %p211
      $region42: #{_lambda_.3} parent=11 // pred_check_branch
        %317 = sbr.rel (%p315) target = $region44
      $region43: #{_lambda_.3} parent=11 // pred_region
        _
      $region44: #{_lambda_.3} parent=11 // pred_fallthru
        _
      // Predicated region
      $region45: #{_lambda_.3} parent=11 // pred_check
        %p318 = pneg %p232
      $region46: #{_lambda_.3} parent=11 // pred_check_branch
        %320 = sbr.rel (%p318) target = $region48
      $region47: #{_lambda_.3} parent=11 // pred_region
        _
      $region48: #{_lambda_.3} parent=11 // pred_fallthru
        _
      // Predicated region
      $region49: #{_lambda_.3} parent=11 // pred_check
        %p321 = pneg %p253
      $region50: #{_lambda_.3} parent=11 // pred_check_branch
        %323 = sbr.rel (%p321) target = $region52
      $region51: #{_lambda_.3} parent=11 // pred_region
        _
      $region52: #{_lambda_.3} parent=11 // pred_fallthru
        _
    $region12: #{_lambda_.3} parent=5 // pred_fallthru
      _
    %p324 = scmp.lt.s32.totalorder %s17, 2
    // Predicated region
    $region53: #{_lambda_.3} parent=5 // pred_check
      %p325 = pneg %p324
    $region54: #{_lambda_.3} parent=5 // pred_check_branch
      %327 = sbr.rel (%p325) target = $region56
    $region55: #{_lambda_.3} parent=5 // pred_region
      // Predicated region
      $region57: #{_lambda_.3} parent=55 // pred_check
        %p328 = pneg %p37
      $region58: #{_lambda_.3} parent=55 // pred_check_branch
        %330 = sbr.rel (%p328) target = $region60
      $region59: #{_lambda_.3} parent=55 // pred_region
        %p331 = scmp.lt.s32.totalorder %s17, 1
        %s332 = scalar_select %p331, %s17, 1
        %s333 = smul.addr %s332, 64
        %s334 = smul.addr %s333, 4
        %s335 = scalar_lea.vmem %s0, %s334
      $region60: #{_lambda_.3} parent=55 // pred_fallthru
        _
    $region56: #{_lambda_.3} parent=5 // pred_fallthru
      _
    %p336 = scmp.le.s32.totalorder 1, %s17
    %p337 = scmp.lt.s32.totalorder %s17, 3
    %p338 = pnand %p336, %p337
    %p339 = pneg %p338
    // Predicated region
    $region61: #{_lambda_.3} parent=5 // pred_check
      _
    $region62: #{_lambda_.3} parent=5 // pred_check_branch
      %341 = sbr.rel (%p338) target = $region64
    $region63: #{_lambda_.3} parent=5 // pred_region
      %s342 = ssub.s32 %s17, 1
      %p343 = scmp.lt.s32.totalorder %s22, 1
      %s344 = scalar_select %p343, %s22, 1
      %s345 = smul.addr %s344, 64
      %s346 = smul.addr %s345, 4
      %s347 = scalar_lea.vmem %s0, %s346
      %p348 = pneg %p43
      %p349 = pneg %p40
      %p350 = pneg %p64
      %p351 = pneg %p61
      %p352 = pneg %p85
      %p353 = pneg %p82
      %p354 = pneg %p106
      %p355 = pneg %p103
      %p356 = pneg %p127
      %p357 = pneg %p124
      %p358 = pneg %p148
      %p359 = pneg %p145
      %p360 = pneg %p169
      %p361 = pneg %p166
      %p362 = pneg %p190
      %p363 = pneg %p187
      %p364 = pneg %p211
      %p365 = pneg %p208
      %p366 = pneg %p232
      %p367 = pneg %p229
      %p368 = pneg %p253
      %p369 = pneg %p250
      %p370 = pneg %p279
      %p371 = pneg %p276
      %p372 = scmp.lt.s32.totalorder %s22, 1
      %s373 = scalar_select %p372, %s22, 1
      %s374 = smul.addr %s373, 64
      %s375 = smul.addr %s374, 8
      %s376 = scalar_lea.vmem %s11, %s375
      %p377 = scmp.lt.s32.totalorder %s22, 1
      %s378 = scalar_select %p377, %s22, 1
      %s379 = smul.addr %s378, 64
      %s380 = smul.addr %s379, 4
      %s381 = scalar_lea.vmem %s0, %s380
      %p382 = scmp.lt.s32.totalorder %s22, 1
      %s383 = scalar_select %p382, %s22, 1
      %s384 = smul.addr %s383, 64
      %s385 = smul.addr %s384, 8
      %s386 = scalar_lea.vmem %s11, %s385
      %v388 = vld [vmem:[%s381] sm:$0xf]
      %v389 = vld [vmem:[%s381 + $0x4] sm:$0xf]
      %v390 = vld [vmem:[%s381 + $0x8] sm:$0xf]
      %v391 = vld [vmem:[%s381 + $0xc] sm:$0xf]
      %v392 = vld [vmem:[%s381 + $0x10] sm:$0xf]
      %v393 = vld [vmem:[%s381 + $0x14] sm:$0xf]
      %v394 = vld [vmem:[%s381 + $0x18] sm:$0xf]
      %v395 = vld [vmem:[%s381 + $0x1c] sm:$0xf]
      %v396 = vld [vmem:[%s381 + $0x20] sm:$0xf]
      %v397 = vld [vmem:[%s381 + $0x24] sm:$0xf]
      %v398 = vld [vmem:[%s381 + $0x28] sm:$0xf]
      %v399 = vld [vmem:[%s381 + $0x2c] sm:$0xf]
      %v400 = vld [vmem:[%s381 + $0x30] sm:$0xf]
      %v401 = vld [vmem:[%s381 + $0x34] sm:$0xf]
      %v402 = vld [vmem:[%s381 + $0x38] sm:$0xf]
      %v403 = vld [vmem:[%s381 + $0x3c] sm:$0xf]
      %v404 = vld [vmem:[%s381 + $0x40] sm:$0xf]
      %v405 = vld [vmem:[%s381 + $0x44] sm:$0xf]
      %v406 = vld [vmem:[%s381 + $0x48] sm:$0xf]
      %v407 = vld [vmem:[%s381 + $0x4c] sm:$0xf]
      %v408 = vld [vmem:[%s381 + $0x50] sm:$0xf]
      %v409 = vld [vmem:[%s381 + $0x54] sm:$0xf]
      %v410 = vld [vmem:[%s381 + $0x58] sm:$0xf]
      %v411 = vld [vmem:[%s381 + $0x5c] sm:$0xf]
      %v412 = vld [vmem:[%s381 + $0x60] sm:$0xf]
      %v413 = vld [vmem:[%s381 + $0x64] sm:$0xf]
      %v414 = vld [vmem:[%s381 + $0x68] sm:$0xf]
      %v415 = vld [vmem:[%s381 + $0x6c] sm:$0xf]
      %v416 = vld [vmem:[%s381 + $0x70] sm:$0xf]
      %v417 = vld [vmem:[%s381 + $0x74] sm:$0xf]
      %v418 = vld [vmem:[%s381 + $0x78] sm:$0xf]
      %v419 = vld [vmem:[%s381 + $0x7c] sm:$0xf]
      %v420 = vld [vmem:[%s381 + $0x80] sm:$0xf]
      %v421 = vld [vmem:[%s381 + $0x84] sm:$0xf]
      %v422 = vld [vmem:[%s381 + $0x88] sm:$0xf]
      %v423 = vld [vmem:[%s381 + $0x8c] sm:$0xf]
      %v424 = vld [vmem:[%s381 + $0x90] sm:$0xf]
      %v425 = vld [vmem:[%s381 + $0x94] sm:$0xf]
      %v426 = vld [vmem:[%s381 + $0x98] sm:$0xf]
      %v427 = vld [vmem:[%s381 + $0x9c] sm:$0xf]
      %v428 = vld [vmem:[%s381 + $0xa0] sm:$0xf]
      %v429 = vld [vmem:[%s381 + $0xa4] sm:$0xf]
      %v430 = vld [vmem:[%s381 + $0xa8] sm:$0xf]
      %v431 = vld [vmem:[%s381 + $0xac] sm:$0xf]
      %v432 = vld [vmem:[%s381 + $0xb0] sm:$0xf]
      %v433 = vld [vmem:[%s381 + $0xb4] sm:$0xf]
      %v434 = vld [vmem:[%s381 + $0xb8] sm:$0xf]
      %v435 = vld [vmem:[%s381 + $0xbc] sm:$0xf]
      %v436 = vld [vmem:[%s381 + $0xc0] sm:$0xf]
      %v437 = vld [vmem:[%s381 + $0xc4] sm:$0xf]
      %v438 = vld [vmem:[%s381 + $0xc8] sm:$0xf]
      %v439 = vld [vmem:[%s381 + $0xcc] sm:$0xf]
      %v440 = vld [vmem:[%s381 + $0xd0] sm:$0xf]
      %v441 = vld [vmem:[%s381 + $0xd4] sm:$0xf]
      %v442 = vld [vmem:[%s381 + $0xd8] sm:$0xf]
      %v443 = vld [vmem:[%s381 + $0xdc] sm:$0xf]
      %v444 = vld [vmem:[%s381 + $0xe0] sm:$0xf]
      %v445 = vld [vmem:[%s381 + $0xe4] sm:$0xf]
      %v446 = vld [vmem:[%s381 + $0xe8] sm:$0xf]
      %v447 = vld [vmem:[%s381 + $0xec] sm:$0xf]
      %v448 = vld [vmem:[%s381 + $0xf0] sm:$0xf]
      %v449 = vld [vmem:[%s381 + $0xf4] sm:$0xf]
      %v450 = vld [vmem:[%s381 + $0xf8] sm:$0xf]
      %v451 = vld [vmem:[%s381 + $0xfc] sm:$0xf]
      %v452 = vld [vmem:[%s2] sm:$0xf]
      %v453 = vld [vmem:[%s2 + $0x4] sm:$0xf]
      %v454 = vld [vmem:[%s2 + $0x8] sm:$0xf]
      %v455 = vld [vmem:[%s2 + $0xc] sm:$0xf]
      %v520 = vunpack.c.l.b16 %v388
      %v521 = vunpack.c.l.b16 %v389
      %v522 = vunpack.c.l.b16 %v390
      %v523 = vunpack.c.l.b16 %v391
      %v524 = vunpack.c.l.b16 %v392
      %v525 = vunpack.c.l.b16 %v393
      %v526 = vunpack.c.l.b16 %v394
      %v527 = vunpack.c.l.b16 %v395
      %v528 = vunpack.c.l.b16 %v396
      %v529 = vunpack.c.l.b16 %v397
      %v530 = vunpack.c.l.b16 %v398
      %v531 = vunpack.c.l.b16 %v399
      %v532 = vunpack.c.l.b16 %v400
      %v533 = vunpack.c.l.b16 %v401
      %v534 = vunpack.c.l.b16 %v402
      %v535 = vunpack.c.l.b16 %v403
      %v536 = vunpack.c.l.b16 %v404
      %v537 = vunpack.c.l.b16 %v405
      %v538 = vunpack.c.l.b16 %v406
      %v539 = vunpack.c.l.b16 %v407
      %v540 = vunpack.c.l.b16 %v408
      %v541 = vunpack.c.l.b16 %v409
      %v542 = vunpack.c.l.b16 %v410
      %v543 = vunpack.c.l.b16 %v411
      %v544 = vunpack.c.l.b16 %v412
      %v545 = vunpack.c.l.b16 %v413
      %v546 = vunpack.c.l.b16 %v414
      %v547 = vunpack.c.l.b16 %v415
      %v548 = vunpack.c.l.b16 %v416
      %v549 = vunpack.c.l.b16 %v417
      %v550 = vunpack.c.l.b16 %v418
      %v551 = vunpack.c.l.b16 %v419
      %v552 = vunpack.c.l.b16 %v420
      %v553 = vunpack.c.l.b16 %v421
      %v554 = vunpack.c.l.b16 %v422
      %v555 = vunpack.c.l.b16 %v423
      %v556 = vunpack.c.l.b16 %v424
      %v557 = vunpack.c.l.b16 %v425
      %v558 = vunpack.c.l.b16 %v426
      %v559 = vunpack.c.l.b16 %v427
      %v560 = vunpack.c.l.b16 %v428
      %v561 = vunpack.c.l.b16 %v429
      %v562 = vunpack.c.l.b16 %v430
      %v563 = vunpack.c.l.b16 %v431
      %v564 = vunpack.c.l.b16 %v432
      %v565 = vunpack.c.l.b16 %v433
      %v566 = vunpack.c.l.b16 %v434
      %v567 = vunpack.c.l.b16 %v435
      %v568 = vunpack.c.l.b16 %v436
      %v569 = vunpack.c.l.b16 %v437
      %v570 = vunpack.c.l.b16 %v438
      %v571 = vunpack.c.l.b16 %v439
      %v572 = vunpack.c.l.b16 %v440
      %v573 = vunpack.c.l.b16 %v441
      %v574 = vunpack.c.l.b16 %v442
      %v575 = vunpack.c.l.b16 %v443
      %v576 = vunpack.c.l.b16 %v444
      %v577 = vunpack.c.l.b16 %v445
      %v578 = vunpack.c.l.b16 %v446
      %v579 = vunpack.c.l.b16 %v447
      %v580 = vunpack.c.l.b16 %v448
      %v581 = vunpack.c.l.b16 %v449
      %v582 = vunpack.c.l.b16 %v450
      %v583 = vunpack.c.l.b16 %v451
      %v584 = vpack.c.b16 %v521, %v520
      %v585 = vpack.c.b16 %v523, %v522
      %v586 = vpack.c.b16 %v525, %v524
      %v587 = vpack.c.b16 %v527, %v526
      %v588 = vpack.c.b16 %v529, %v528
      %v589 = vpack.c.b16 %v531, %v530
      %v590 = vpack.c.b16 %v533, %v532
      %v591 = vpack.c.b16 %v535, %v534
      %v592 = vpack.c.b16 %v537, %v536
      %v593 = vpack.c.b16 %v539, %v538
      %v594 = vpack.c.b16 %v541, %v540
      %v595 = vpack.c.b16 %v543, %v542
      %v596 = vpack.c.b16 %v545, %v544
      %v597 = vpack.c.b16 %v547, %v546
      %v598 = vpack.c.b16 %v549, %v548
      %v599 = vpack.c.b16 %v551, %v550
      %v600 = vpack.c.b16 %v553, %v552
      %v601 = vpack.c.b16 %v555, %v554
      %v602 = vpack.c.b16 %v557, %v556
      %v603 = vpack.c.b16 %v559, %v558
      %v604 = vpack.c.b16 %v561, %v560
      %v605 = vpack.c.b16 %v563, %v562
      %v606 = vpack.c.b16 %v565, %v564
      %v607 = vpack.c.b16 %v567, %v566
      %v608 = vpack.c.b16 %v569, %v568
      %v609 = vpack.c.b16 %v571, %v570
      %v610 = vpack.c.b16 %v573, %v572
      %v611 = vpack.c.b16 %v575, %v574
      %v612 = vpack.c.b16 %v577, %v576
      %v613 = vpack.c.b16 %v579, %v578
      %v614 = vpack.c.b16 %v581, %v580
      %v615 = vpack.c.b16 %v583, %v582
      %v620 = vunpack.c.l.b16 %v452
      %v621 = vunpack.c.l.b16 %v453
      %v622 = vunpack.c.l.b16 %v454
      %v623 = vunpack.c.l.b16 %v455
      %v624 = vpack.c.b16 %v621, %v620
      %v625 = vpack.c.b16 %v623, %v622
      %vm628 = vcmask 261120
      %v630 = vsel %vm628, %v584, 0
      %v633 = vsel %vm628, %v585, 0
      %v636 = vsel %vm628, %v586, 0
      %v639 = vsel %vm628, %v587, 0
      %v642 = vsel %vm628, %v588, 0
      %v645 = vsel %vm628, %v589, 0
      %v648 = vsel %vm628, %v590, 0
      %v651 = vsel %vm628, %v591, 0
      %v654 = vsel %vm628, %v592, 0
      %v657 = vsel %vm628, %v593, 0
      %v660 = vsel %vm628, %v594, 0
      %v663 = vsel %vm628, %v595, 0
      %v666 = vsel %vm628, %v596, 0
      %v669 = vsel %vm628, %v597, 0
      %v672 = vsel %vm628, %v598, 0
      %v675 = vsel %vm628, %v599, 0
      %v678 = vsel %vm628, %v600, 0
      %v681 = vsel %vm628, %v601, 0
      %v684 = vsel %vm628, %v602, 0
      %v687 = vsel %vm628, %v603, 0
      %v690 = vsel %vm628, %v604, 0
      %v693 = vsel %vm628, %v605, 0
      %v696 = vsel %vm628, %v606, 0
      %v699 = vsel %vm628, %v607, 0
      %v702 = vsel %vm628, %v608, 0
      %v705 = vsel %vm628, %v609, 0
      %v708 = vsel %vm628, %v610, 0
      %v711 = vsel %vm628, %v611, 0
      %v714 = vsel %vm628, %v612, 0
      %v717 = vsel %vm628, %v613, 0
      %v720 = vsel %vm628, %v614, 0
      %v723 = vsel %vm628, %v615, 0
      %725 = vmatprep.subr.bf16.mxu0 0
      %726 = vmatpush1.bf16.msra.mxu0 0
      %727 = vmatprep.subr.bf16.mxu0 0
      %728 = vmatpush1.bf16.msra.mxu0 0
      %729 = vmatprep.subr.bf16.mxu0 0
      %730 = vmatpush1.bf16.msra.mxu0 0
      %731 = vmatprep.subr.bf16.mxu0 0
      %732 = vmatpush1.bf16.msra.mxu0 0
      %733 = vmatprep.subr.bf16.mxu0 0
      %734 = vmatpush1.bf16.msra.mxu0 0
      %735 = vmatprep.subr.bf16.mxu0 0
      %736 = vmatpush1.bf16.msra.mxu0 0
      %737 = vmatprep.subr.bf16.mxu0 0
      %738 = vmatpush1.bf16.msra.mxu0 %v625
      %739 = vmatprep.subr.bf16.mxu0 0
      %740 = vmatpush1.bf16.msra.mxu0 %v624
      %741 = vmatprep.subr.bf16.mxu0 0
      %742 = vmatpush2.bf16.msra.mxu0 0
      %743 = vmatprep.subr.bf16.mxu0 0
      %744 = vmatpush2.bf16.msra.mxu0 0
      %745 = vmatprep.subr.bf16.mxu0 0
      %746 = vmatpush2.bf16.msra.mxu0 0
      %747 = vmatprep.subr.bf16.mxu0 0
      %748 = vmatpush2.bf16.msra.mxu0 0
      %749 = vmatprep.subr.bf16.mxu0 0
      %750 = vmatpush2.bf16.msra.mxu0 0
      %751 = vmatprep.subr.bf16.mxu0 0
      %752 = vmatpush2.bf16.msra.mxu0 0
      %753 = vmatprep.subr.bf16.mxu0 0
      %754 = vmatpush2.bf16.msra.mxu0 0
      %755 = vmatprep.subr.bf16.mxu0 0
      %756 = vmatpush2.bf16.msra.mxu0 0
      %757 = vmatprep.mubr.bf16.mxu0 0
      %758 = vmatmul.mubr.bf16.gmra.mxu0 %v630
      %v759 = vpop.f32.mrf.mxu0
      %v760 = vadd.f32 0.0, %v759
      %v761 = vpop.f32.mrf.mxu0
      %v762 = vpop.f32.mrf.mxu0
      %v763 = vadd.f32 0.0, %v762
      %v764 = vpop.f32.mrf.mxu0
      %765 = vmatprep.mubr.bf16.mxu0 0
      %766 = vmatmul.mubr.bf16.gmra.mxu0 %v633
      %v767 = vpop.f32.mrf.mxu0
      %v768 = vadd.f32 0.0, %v767
      %v769 = vpop.f32.mrf.mxu0
      %v770 = vpop.f32.mrf.mxu0
      %v771 = vadd.f32 0.0, %v770
      %v772 = vpop.f32.mrf.mxu0
      %773 = vmatprep.mubr.bf16.mxu0 0
      %774 = vmatmul.mubr.bf16.gmra.mxu0 %v636
      %v775 = vpop.f32.mrf.mxu0
      %v776 = vadd.f32 0.0, %v775
      %v777 = vpop.f32.mrf.mxu0
      %v778 = vpop.f32.mrf.mxu0
      %v779 = vadd.f32 0.0, %v778
      %v780 = vpop.f32.mrf.mxu0
      %781 = vmatprep.mubr.bf16.mxu0 0
      %782 = vmatmul.mubr.bf16.gmra.mxu0 %v639
      %v783 = vpop.f32.mrf.mxu0
      %v784 = vadd.f32 0.0, %v783
      %v785 = vpop.f32.mrf.mxu0
      %v786 = vpop.f32.mrf.mxu0
      %v787 = vadd.f32 0.0, %v786
      %v788 = vpop.f32.mrf.mxu0
      %789 = vmatprep.mubr.bf16.mxu0 0
      %790 = vmatmul.mubr.bf16.gmra.mxu0 %v642
      %v791 = vpop.f32.mrf.mxu0
      %v792 = vadd.f32 0.0, %v791
      %v793 = vpop.f32.mrf.mxu0
      %v794 = vpop.f32.mrf.mxu0
      %v795 = vadd.f32 0.0, %v794
      %v796 = vpop.f32.mrf.mxu0
      %797 = vmatprep.mubr.bf16.mxu0 0
      %798 = vmatmul.mubr.bf16.gmra.mxu0 %v645
      %v799 = vpop.f32.mrf.mxu0
      %v800 = vadd.f32 0.0, %v799
      %v801 = vpop.f32.mrf.mxu0
      %v802 = vpop.f32.mrf.mxu0
      %v803 = vadd.f32 0.0, %v802
      %v804 = vpop.f32.mrf.mxu0
      %805 = vmatprep.mubr.bf16.mxu0 0
      %806 = vmatmul.mubr.bf16.gmra.mxu0 %v648
      %v807 = vpop.f32.mrf.mxu0
      %v808 = vadd.f32 0.0, %v807
      %v809 = vpop.f32.mrf.mxu0
      %v810 = vpop.f32.mrf.mxu0
      %v811 = vadd.f32 0.0, %v810
      %v812 = vpop.f32.mrf.mxu0
      %813 = vmatprep.mubr.bf16.mxu0 0
      %814 = vmatmul.mubr.bf16.gmra.mxu0 %v651
      %v815 = vpop.f32.mrf.mxu0
      %v816 = vadd.f32 0.0, %v815
      %v817 = vpop.f32.mrf.mxu0
      %v818 = vpop.f32.mrf.mxu0
      %v819 = vadd.f32 0.0, %v818
      %v820 = vpop.f32.mrf.mxu0
      %821 = vmatprep.mubr.bf16.mxu0 0
      %822 = vmatmul.mubr.bf16.gmra.mxu0 %v654
      %v823 = vpop.f32.mrf.mxu0
      %v824 = vadd.f32 0.0, %v823
      %v825 = vpop.f32.mrf.mxu0
      %v826 = vpop.f32.mrf.mxu0
      %v827 = vadd.f32 0.0, %v826
      %v828 = vpop.f32.mrf.mxu0
      %829 = vmatprep.mubr.bf16.mxu0 0
      %830 = vmatmul.mubr.bf16.gmra.mxu0 %v657
      %v831 = vpop.f32.mrf.mxu0
      %v832 = vadd.f32 0.0, %v831
      %v833 = vpop.f32.mrf.mxu0
      %v834 = vpop.f32.mrf.mxu0
      %v835 = vadd.f32 0.0, %v834
      %v836 = vpop.f32.mrf.mxu0
      %837 = vmatprep.mubr.bf16.mxu0 0
      %838 = vmatmul.mubr.bf16.gmra.mxu0 %v660
      %v839 = vpop.f32.mrf.mxu0
      %v840 = vadd.f32 0.0, %v839
      %v841 = vpop.f32.mrf.mxu0
      %v842 = vpop.f32.mrf.mxu0
      %v843 = vadd.f32 0.0, %v842
      %v844 = vpop.f32.mrf.mxu0
      %845 = vmatprep.mubr.bf16.mxu0 0
      %846 = vmatmul.mubr.bf16.gmra.mxu0 %v663
      %v847 = vpop.f32.mrf.mxu0
      %v848 = vadd.f32 0.0, %v847
      %v849 = vpop.f32.mrf.mxu0
      %v850 = vpop.f32.mrf.mxu0
      %v851 = vadd.f32 0.0, %v850
      %v852 = vpop.f32.mrf.mxu0
      %853 = vmatprep.mubr.bf16.mxu0 0
      %854 = vmatmul.mubr.bf16.gmra.mxu0 %v666
      %v855 = vpop.f32.mrf.mxu0
      %v856 = vadd.f32 0.0, %v855
      %v857 = vpop.f32.mrf.mxu0
      %v858 = vpop.f32.mrf.mxu0
      %v859 = vadd.f32 0.0, %v858
      %v860 = vpop.f32.mrf.mxu0
      %861 = vmatprep.mubr.bf16.mxu0 0
      %862 = vmatmul.mubr.bf16.gmra.mxu0 %v669
      %v863 = vpop.f32.mrf.mxu0
      %v864 = vadd.f32 0.0, %v863
      %v865 = vpop.f32.mrf.mxu0
      %v866 = vpop.f32.mrf.mxu0
      %v867 = vadd.f32 0.0, %v866
      %v868 = vpop.f32.mrf.mxu0
      %869 = vmatprep.mubr.bf16.mxu0 0
      %870 = vmatmul.mubr.bf16.gmra.mxu0 %v672
      %v871 = vpop.f32.mrf.mxu0
      %v872 = vadd.f32 0.0, %v871
      %v873 = vpop.f32.mrf.mxu0
      %v874 = vpop.f32.mrf.mxu0
      %v875 = vadd.f32 0.0, %v874
      %v876 = vpop.f32.mrf.mxu0
      %877 = vmatprep.mubr.bf16.mxu0 0
      %878 = vmatmul.mubr.bf16.gmra.mxu0 %v675
      %v879 = vpop.f32.mrf.mxu0
      %v880 = vadd.f32 0.0, %v879
      %v881 = vpop.f32.mrf.mxu0
      %v882 = vpop.f32.mrf.mxu0
      %v883 = vadd.f32 0.0, %v882
      %v884 = vpop.f32.mrf.mxu0
      %885 = vmatprep.mubr.bf16.mxu0 0
      %886 = vmatmul.mubr.bf16.gmra.mxu0 %v678
      %v887 = vpop.f32.mrf.mxu0
      %v888 = vadd.f32 0.0, %v887
      %v889 = vpop.f32.mrf.mxu0
      %v890 = vpop.f32.mrf.mxu0
      %v891 = vadd.f32 0.0, %v890
      %v892 = vpop.f32.mrf.mxu0
      %893 = vmatprep.mubr.bf16.mxu0 0
      %894 = vmatmul.mubr.bf16.gmra.mxu0 %v681
      %v895 = vpop.f32.mrf.mxu0
      %v896 = vadd.f32 0.0, %v895
      %v897 = vpop.f32.mrf.mxu0
      %v898 = vpop.f32.mrf.mxu0
      %v899 = vadd.f32 0.0, %v898
      %v900 = vpop.f32.mrf.mxu0
      %901 = vmatprep.mubr.bf16.mxu0 0
      %902 = vmatmul.mubr.bf16.gmra.mxu0 %v684
      %v903 = vpop.f32.mrf.mxu0
      %v904 = vadd.f32 0.0, %v903
      %v905 = vpop.f32.mrf.mxu0
      %v906 = vpop.f32.mrf.mxu0
      %v907 = vadd.f32 0.0, %v906
      %v908 = vpop.f32.mrf.mxu0
      %909 = vmatprep.mubr.bf16.mxu0 0
      %910 = vmatmul.mubr.bf16.gmra.mxu0 %v687
      %v911 = vpop.f32.mrf.mxu0
      %v912 = vadd.f32 0.0, %v911
      %v913 = vpop.f32.mrf.mxu0
      %v914 = vpop.f32.mrf.mxu0
      %v915 = vadd.f32 0.0, %v914
      %v916 = vpop.f32.mrf.mxu0
      %917 = vmatprep.mubr.bf16.mxu0 0
      %918 = vmatmul.mubr.bf16.gmra.mxu0 %v690
      %v919 = vpop.f32.mrf.mxu0
      %v920 = vadd.f32 0.0, %v919
      %v921 = vpop.f32.mrf.mxu0
      %v922 = vpop.f32.mrf.mxu0
      %v923 = vadd.f32 0.0, %v922
      %v924 = vpop.f32.mrf.mxu0
      %925 = vmatprep.mubr.bf16.mxu0 0
      %926 = vmatmul.mubr.bf16.gmra.mxu0 %v693
      %v927 = vpop.f32.mrf.mxu0
      %v928 = vadd.f32 0.0, %v927
      %v929 = vpop.f32.mrf.mxu0
      %v930 = vpop.f32.mrf.mxu0
      %v931 = vadd.f32 0.0, %v930
      %v932 = vpop.f32.mrf.mxu0
      %933 = vmatprep.mubr.bf16.mxu0 0
      %934 = vmatmul.mubr.bf16.gmra.mxu0 %v696
      %v935 = vpop.f32.mrf.mxu0
      %v936 = vadd.f32 0.0, %v935
      %v937 = vpop.f32.mrf.mxu0
      %v938 = vpop.f32.mrf.mxu0
      %v939 = vadd.f32 0.0, %v938
      %v940 = vpop.f32.mrf.mxu0
      %941 = vmatprep.mubr.bf16.mxu0 0
      %942 = vmatmul.mubr.bf16.gmra.mxu0 %v699
      %v943 = vpop.f32.mrf.mxu0
      %v944 = vadd.f32 0.0, %v943
      %v945 = vpop.f32.mrf.mxu0
      %v946 = vpop.f32.mrf.mxu0
      %v947 = vadd.f32 0.0, %v946
      %v948 = vpop.f32.mrf.mxu0
      %949 = vmatprep.mubr.bf16.mxu0 0
      %950 = vmatmul.mubr.bf16.gmra.mxu0 %v702
      %v951 = vpop.f32.mrf.mxu0
      %v952 = vadd.f32 0.0, %v951
      %v953 = vpop.f32.mrf.mxu0
      %v954 = vpop.f32.mrf.mxu0
      %v955 = vadd.f32 0.0, %v954
      %v956 = vpop.f32.mrf.mxu0
      %957 = vmatprep.mubr.bf16.mxu0 0
      %958 = vmatmul.mubr.bf16.gmra.mxu0 %v705
      %v959 = vpop.f32.mrf.mxu0
      %v960 = vadd.f32 0.0, %v959
      %v961 = vpop.f32.mrf.mxu0
      %v962 = vpop.f32.mrf.mxu0
      %v963 = vadd.f32 0.0, %v962
      %v964 = vpop.f32.mrf.mxu0
      %965 = vmatprep.mubr.bf16.mxu0 0
      %966 = vmatmul.mubr.bf16.gmra.mxu0 %v708
      %v967 = vpop.f32.mrf.mxu0
      %v968 = vadd.f32 0.0, %v967
      %v969 = vpop.f32.mrf.mxu0
      %v970 = vpop.f32.mrf.mxu0
      %v971 = vadd.f32 0.0, %v970
      %v972 = vpop.f32.mrf.mxu0
      %973 = vmatprep.mubr.bf16.mxu0 0
      %974 = vmatmul.mubr.bf16.gmra.mxu0 %v711
      %v975 = vpop.f32.mrf.mxu0
      %v976 = vadd.f32 0.0, %v975
      %v977 = vpop.f32.mrf.mxu0
      %v978 = vpop.f32.mrf.mxu0
      %v979 = vadd.f32 0.0, %v978
      %v980 = vpop.f32.mrf.mxu0
      %981 = vmatprep.mubr.bf16.mxu0 0
      %982 = vmatmul.mubr.bf16.gmra.mxu0 %v714
      %v983 = vpop.f32.mrf.mxu0
      %v984 = vadd.f32 0.0, %v983
      %v985 = vpop.f32.mrf.mxu0
      %v986 = vpop.f32.mrf.mxu0
      %v987 = vadd.f32 0.0, %v986
      %v988 = vpop.f32.mrf.mxu0
      %989 = vmatprep.mubr.bf16.mxu0 0
      %990 = vmatmul.mubr.bf16.gmra.mxu0 %v717
      %v991 = vpop.f32.mrf.mxu0
      %v992 = vadd.f32 0.0, %v991
      %v993 = vpop.f32.mrf.mxu0
      %v994 = vpop.f32.mrf.mxu0
      %v995 = vadd.f32 0.0, %v994
      %v996 = vpop.f32.mrf.mxu0
      %997 = vmatprep.mubr.bf16.mxu0 0
      %998 = vmatmul.mubr.bf16.gmra.mxu0 %v720
      %v999 = vpop.f32.mrf.mxu0
      %v1000 = vadd.f32 0.0, %v999
      %v1001 = vpop.f32.mrf.mxu0
      %v1002 = vpop.f32.mrf.mxu0
      %v1003 = vadd.f32 0.0, %v1002
      %v1004 = vpop.f32.mrf.mxu0
      %1005 = vmatprep.mubr.bf16.mxu0 0
      %1006 = vmatmul.mubr.bf16.gmra.mxu0 %v723
      %v1007 = vpop.f32.mrf.mxu0
      %v1008 = vadd.f32 0.0, %v1007
      %v1009 = vpop.f32.mrf.mxu0
      %v1010 = vpop.f32.mrf.mxu0
      %v1011 = vadd.f32 0.0, %v1010
      %v1012 = vpop.f32.mrf.mxu0
      %1013 = vdwg.mxu0
      %1014 = vst.msk [vmem:[#allocation2] sm:$0xff] %vm628, %v760
      %1015 = vst.msk [vmem:[#allocation2 + $0x8] sm:$0xff] %vm628, %v763
      %1016 = vst.msk [vmem:[#allocation2 + $0x10] sm:$0xff] %vm628, %v768
      %1017 = vst.msk [vmem:[#allocation2 + $0x18] sm:$0xff] %vm628, %v771
      %1018 = vst.msk [vmem:[#allocation2 + $0x20] sm:$0xff] %vm628, %v776
      %1019 = vst.msk [vmem:[#allocation2 + $0x28] sm:$0xff] %vm628, %v779
      %1020 = vst.msk [vmem:[#allocation2 + $0x30] sm:$0xff] %vm628, %v784
      %1021 = vst.msk [vmem:[#allocation2 + $0x38] sm:$0xff] %vm628, %v787
      %1022 = vst.msk [vmem:[#allocation2 + $0x40] sm:$0xff] %vm628, %v792
      %1023 = vst.msk [vmem:[#allocation2 + $0x48] sm:$0xff] %vm628, %v795
      %1024 = vst.msk [vmem:[#allocation2 + $0x50] sm:$0xff] %vm628, %v800
      %1025 = vst.msk [vmem:[#allocation2 + $0x58] sm:$0xff] %vm628, %v803
      %1026 = vst.msk [vmem:[#allocation2 + $0x60] sm:$0xff] %vm628, %v808
      %1027 = vst.msk [vmem:[#allocation2 + $0x68] sm:$0xff] %vm628, %v811
      %1028 = vst.msk [vmem:[#allocation2 + $0x70] sm:$0xff] %vm628, %v816
      %1029 = vst.msk [vmem:[#allocation2 + $0x78] sm:$0xff] %vm628, %v819
      %1030 = vst.msk [vmem:[#allocation2 + $0x80] sm:$0xff] %vm628, %v824
      %1031 = vst.msk [vmem:[#allocation2 + $0x88] sm:$0xff] %vm628, %v827
      %1032 = vst.msk [vmem:[#allocation2 + $0x90] sm:$0xff] %vm628, %v832
      %1033 = vst.msk [vmem:[#allocation2 + $0x98] sm:$0xff] %vm628, %v835
      %1034 = vst.msk [vmem:[#allocation2 + $0xa0] sm:$0xff] %vm628, %v840
      %1035 = vst.msk [vmem:[#allocation2 + $0xa8] sm:$0xff] %vm628, %v843
      %1036 = vst.msk [vmem:[#allocation2 + $0xb0] sm:$0xff] %vm628, %v848
      %1037 = vst.msk [vmem:[#allocation2 + $0xb8] sm:$0xff] %vm628, %v851
      %1038 = vst.msk [vmem:[#allocation2 + $0xc0] sm:$0xff] %vm628, %v856
      %1039 = vst.msk [vmem:[#allocation2 + $0xc8] sm:$0xff] %vm628, %v859
      %1040 = vst.msk [vmem:[#allocation2 + $0xd0] sm:$0xff] %vm628, %v864
      %1041 = vst.msk [vmem:[#allocation2 + $0xd8] sm:$0xff] %vm628, %v867
      %1042 = vst.msk [vmem:[#allocation2 + $0xe0] sm:$0xff] %vm628, %v872
      %1043 = vst.msk [vmem:[#allocation2 + $0xe8] sm:$0xff] %vm628, %v875
      %1044 = vst.msk [vmem:[#allocation2 + $0xf0] sm:$0xff] %vm628, %v880
      %1045 = vst.msk [vmem:[#allocation2 + $0xf8] sm:$0xff] %vm628, %v883
      %1046 = vst.msk [vmem:[#allocation2 + $0x100] sm:$0xff] %vm628, %v888
      %1047 = vst.msk [vmem:[#allocation2 + $0x108] sm:$0xff] %vm628, %v891
      %1048 = vst.msk [vmem:[#allocation2 + $0x110] sm:$0xff] %vm628, %v896
      %1049 = vst.msk [vmem:[#allocation2 + $0x118] sm:$0xff] %vm628, %v899
      %1050 = vst.msk [vmem:[#allocation2 + $0x120] sm:$0xff] %vm628, %v904
      %1051 = vst.msk [vmem:[#allocation2 + $0x128] sm:$0xff] %vm628, %v907
      %1052 = vst.msk [vmem:[#allocation2 + $0x130] sm:$0xff] %vm628, %v912
      %1053 = vst.msk [vmem:[#allocation2 + $0x138] sm:$0xff] %vm628, %v915
      %1054 = vst.msk [vmem:[#allocation2 + $0x140] sm:$0xff] %vm628, %v920
      %1055 = vst.msk [vmem:[#allocation2 + $0x148] sm:$0xff] %vm628, %v923
      %1056 = vst.msk [vmem:[#allocation2 + $0x150] sm:$0xff] %vm628, %v928
      %1057 = vst.msk [vmem:[#allocation2 + $0x158] sm:$0xff] %vm628, %v931
      %1058 = vst.msk [vmem:[#allocation2 + $0x160] sm:$0xff] %vm628, %v936
      %1059 = vst.msk [vmem:[#allocation2 + $0x168] sm:$0xff] %vm628, %v939
      %1060 = vst.msk [vmem:[#allocation2 + $0x170] sm:$0xff] %vm628, %v944
      %1061 = vst.msk [vmem:[#allocation2 + $0x178] sm:$0xff] %vm628, %v947
      %1062 = vst.msk [vmem:[#allocation2 + $0x180] sm:$0xff] %vm628, %v952
      %1063 = vst.msk [vmem:[#allocation2 + $0x188] sm:$0xff] %vm628, %v955
      %1064 = vst.msk [vmem:[#allocation2 + $0x190] sm:$0xff] %vm628, %v960
      %1065 = vst.msk [vmem:[#allocation2 + $0x198] sm:$0xff] %vm628, %v963
      %1066 = vst.msk [vmem:[#allocation2 + $0x1a0] sm:$0xff] %vm628, %v968
      %1067 = vst.msk [vmem:[#allocation2 + $0x1a8] sm:$0xff] %vm628, %v971
      %1068 = vst.msk [vmem:[#allocation2 + $0x1b0] sm:$0xff] %vm628, %v976
      %1069 = vst.msk [vmem:[#allocation2 + $0x1b8] sm:$0xff] %vm628, %v979
      %1070 = vst.msk [vmem:[#allocation2 + $0x1c0] sm:$0xff] %vm628, %v984
      %1071 = vst.msk [vmem:[#allocation2 + $0x1c8] sm:$0xff] %vm628, %v987
      %1072 = vst.msk [vmem:[#allocation2 + $0x1d0] sm:$0xff] %vm628, %v992
      %1073 = vst.msk [vmem:[#allocation2 + $0x1d8] sm:$0xff] %vm628, %v995
      %1074 = vst.msk [vmem:[#allocation2 + $0x1e0] sm:$0xff] %vm628, %v1000
      %1075 = vst.msk [vmem:[#allocation2 + $0x1e8] sm:$0xff] %vm628, %v1003
      %1076 = vst.msk [vmem:[#allocation2 + $0x1f0] sm:$0xff] %vm628, %v1008
      %1077 = vst.msk [vmem:[#allocation2 + $0x1f8] sm:$0xff] %vm628, %v1011
      %v1078 = vld [vmem:[#allocation2 + $0x20] sm:$0xff]
      %v1079 = vld [vmem:[#allocation2 + $0x28] sm:$0xff]
      %v1080 = vld [vmem:[#allocation2 + $0x30] sm:$0xff]
      %v1081 = vld [vmem:[#allocation2 + $0x38] sm:$0xff]
      %v1082 = vld [vmem:[#allocation2 + $0x40] sm:$0xff]
      %v1083 = vld [vmem:[#allocation2 + $0x48] sm:$0xff]
      %v1084 = vld [vmem:[#allocation2 + $0x50] sm:$0xff]
      %v1085 = vld [vmem:[#allocation2 + $0x58] sm:$0xff]
      %v1086 = vld [vmem:[#allocation2 + $0x60] sm:$0xff]
      %v1087 = vld [vmem:[#allocation2 + $0x68] sm:$0xff]
      %v1088 = vld [vmem:[#allocation2 + $0x70] sm:$0xff]
      %v1089 = vld [vmem:[#allocation2 + $0x78] sm:$0xff]
      %v1090 = vld [vmem:[#allocation2 + $0x80] sm:$0xff]
      %v1091 = vld [vmem:[#allocation2 + $0x88] sm:$0xff]
      %v1092 = vld [vmem:[#allocation2 + $0x90] sm:$0xff]
      %v1093 = vld [vmem:[#allocation2 + $0x98] sm:$0xff]
      %v1094 = vld [vmem:[#allocation2 + $0xa0] sm:$0xff]
      %v1095 = vld [vmem:[#allocation2 + $0xa8] sm:$0xff]
      %v1096 = vld [vmem:[#allocation2 + $0xb0] sm:$0xff]
      %v1097 = vld [vmem:[#allocation2 + $0xb8] sm:$0xff]
      %v1098 = vld [vmem:[#allocation2 + $0xc0] sm:$0xff]
      %v1099 = vld [vmem:[#allocation2 + $0xc8] sm:$0xff]
      %v1100 = vld [vmem:[#allocation2 + $0xd0] sm:$0xff]
      %v1101 = vld [vmem:[#allocation2 + $0xd8] sm:$0xff]
      %v1102 = vld [vmem:[#allocation2 + $0xe0] sm:$0xff]
      %v1103 = vld [vmem:[#allocation2 + $0xe8] sm:$0xff]
      %v1104 = vld [vmem:[#allocation2 + $0xf0] sm:$0xff]
      %v1105 = vld [vmem:[#allocation2 + $0xf8] sm:$0xff]
      %v1106 = vld [vmem:[#allocation2 + $0x100] sm:$0xff]
      %v1107 = vld [vmem:[#allocation2 + $0x108] sm:$0xff]
      %v1108 = vld [vmem:[#allocation2 + $0x110] sm:$0xff]
      %v1109 = vld [vmem:[#allocation2 + $0x118] sm:$0xff]
      %v1110 = vld [vmem:[#allocation2 + $0x120] sm:$0xff]
      %v1111 = vld [vmem:[#allocation2 + $0x128] sm:$0xff]
      %v1112 = vld [vmem:[#allocation2 + $0x130] sm:$0xff]
      %v1113 = vld [vmem:[#allocation2 + $0x138] sm:$0xff]
      %v1114 = vld [vmem:[#allocation2 + $0x140] sm:$0xff]
      %v1115 = vld [vmem:[#allocation2 + $0x148] sm:$0xff]
      %v1116 = vld [vmem:[#allocation2 + $0x150] sm:$0xff]
      %v1117 = vld [vmem:[#allocation2 + $0x158] sm:$0xff]
      %v1118 = vld [vmem:[#allocation2 + $0x160] sm:$0xff]
      %v1119 = vld [vmem:[#allocation2 + $0x168] sm:$0xff]
      %v1120 = vld [vmem:[#allocation2 + $0x170] sm:$0xff]
      %v1121 = vld [vmem:[#allocation2 + $0x178] sm:$0xff]
      %v1122 = vld [vmem:[#allocation2 + $0x180] sm:$0xff]
      %v1123 = vld [vmem:[#allocation2 + $0x188] sm:$0xff]
      %v1124 = vld [vmem:[#allocation2 + $0x190] sm:$0xff]
      %v1125 = vld [vmem:[#allocation2 + $0x198] sm:$0xff]
      %v1126 = vld [vmem:[#allocation2 + $0x1a0] sm:$0xff]
      %v1127 = vld [vmem:[#allocation2 + $0x1a8] sm:$0xff]
      %v1128 = vld [vmem:[#allocation2 + $0x1b0] sm:$0xff]
      %v1129 = vld [vmem:[#allocation2 + $0x1b8] sm:$0xff]
      %v1130 = vld [vmem:[#allocation2 + $0x1c0] sm:$0xff]
      %v1131 = vld [vmem:[#allocation2 + $0x1c8] sm:$0xff]
      %v1132 = vld [vmem:[#allocation2 + $0x1d0] sm:$0xff]
      %v1133 = vld [vmem:[#allocation2 + $0x1d8] sm:$0xff]
      %v1134 = vld [vmem:[#allocation2 + $0x1e0] sm:$0xff]
      %v1135 = vld [vmem:[#allocation2 + $0x1e8] sm:$0xff]
      %v1136 = vld [vmem:[#allocation2 + $0x1f0] sm:$0xff]
      %v1137 = vld [vmem:[#allocation2 + $0x1f8] sm:$0xff]
      %v1138 = vld [vmem:[%s1] sm:$0xf]
      %v1139 = vld [vmem:[%s1 + $0x4] sm:$0xf]
      %v1140 = vld [vmem:[%s1 + $0x8] sm:$0xf]
      %v1141 = vld [vmem:[%s1 + $0xc] sm:$0xf]
      %v1146 = vunpack.c.l.b16 %v1138
      %v1147 = vunpack.c.l.b16 %v1139
      %v1148 = vunpack.c.l.b16 %v1140
      %v1149 = vunpack.c.l.b16 %v1141
      %v1150 = vpack.c.b16 %v1147, %v1146
      %v1151 = vpack.c.b16 %v1149, %v1148
      %1154 = vmatprep.subr.bf16.mxu0 0
      %1155 = vmatpush1.bf16.msra.mxu0 0
      %1156 = vmatprep.subr.bf16.mxu0 0
      %1157 = vmatpush1.bf16.msra.mxu0 0
      %1158 = vmatprep.subr.bf16.mxu0 0
      %1159 = vmatpush1.bf16.msra.mxu0 0
      %1160 = vmatprep.subr.bf16.mxu0 0
      %1161 = vmatpush1.bf16.msra.mxu0 0
      %1162 = vmatprep.subr.bf16.mxu0 0
      %1163 = vmatpush1.bf16.msra.mxu0 0
      %1164 = vmatprep.subr.bf16.mxu0 0
      %1165 = vmatpush1.bf16.msra.mxu0 0
      %1166 = vmatprep.subr.bf16.mxu0 0
      %1167 = vmatpush1.bf16.msra.mxu0 %v1151
      %1168 = vmatprep.subr.bf16.mxu0 0
      %1169 = vmatpush1.bf16.msra.mxu0 %v1150
      %1170 = vmatprep.subr.bf16.mxu0 0
      %1171 = vmatpush2.bf16.msra.mxu0 0
      %1172 = vmatprep.subr.bf16.mxu0 0
      %1173 = vmatpush2.bf16.msra.mxu0 0
      %1174 = vmatprep.subr.bf16.mxu0 0
      %1175 = vmatpush2.bf16.msra.mxu0 0
      %1176 = vmatprep.subr.bf16.mxu0 0
      %1177 = vmatpush2.bf16.msra.mxu0 0
      %1178 = vmatprep.subr.bf16.mxu0 0
      %1179 = vmatpush2.bf16.msra.mxu0 0
      %1180 = vmatprep.subr.bf16.mxu0 0
      %1181 = vmatpush2.bf16.msra.mxu0 0
      %1182 = vmatprep.subr.bf16.mxu0 0
      %1183 = vmatpush2.bf16.msra.mxu0 0
      %1184 = vmatprep.subr.bf16.mxu0 0
      %1185 = vmatpush2.bf16.msra.mxu0 0
      %1186 = vmatprep.mubr.bf16.mxu0 0
      %1187 = vmatmul.mubr.bf16.gmra.mxu0 %v630
      %v1188 = vpop.f32.mrf.mxu0
      %v1189 = vadd.f32 0.0, %v1188
      %v1190 = vpop.f32.mrf.mxu0
      %v1191 = vpop.f32.mrf.mxu0
      %v1192 = vadd.f32 0.0, %v1191
      %v1193 = vpop.f32.mrf.mxu0
      %1194 = vmatprep.mubr.bf16.mxu0 0
      %1195 = vmatmul.mubr.bf16.gmra.mxu0 %v633
      %v1196 = vpop.f32.mrf.mxu0
      %v1197 = vadd.f32 0.0, %v1196
      %v1198 = vpop.f32.mrf.mxu0
      %v1199 = vpop.f32.mrf.mxu0
      %v1200 = vadd.f32 0.0, %v1199
      %v1201 = vpop.f32.mrf.mxu0
      %1202 = vmatprep.mubr.bf16.mxu0 0
      %1203 = vmatmul.mubr.bf16.gmra.mxu0 %v636
      %v1204 = vpop.f32.mrf.mxu0
      %v1205 = vadd.f32 0.0, %v1204
      %v1206 = vpop.f32.mrf.mxu0
      %v1207 = vpop.f32.mrf.mxu0
      %v1208 = vadd.f32 0.0, %v1207
      %v1209 = vpop.f32.mrf.mxu0
      %1210 = vmatprep.mubr.bf16.mxu0 0
      %1211 = vmatmul.mubr.bf16.gmra.mxu0 %v639
      %v1212 = vpop.f32.mrf.mxu0
      %v1213 = vadd.f32 0.0, %v1212
      %v1214 = vpop.f32.mrf.mxu0
      %v1215 = vpop.f32.mrf.mxu0
      %v1216 = vadd.f32 0.0, %v1215
      %v1217 = vpop.f32.mrf.mxu0
      %1218 = vmatprep.mubr.bf16.mxu0 0
      %1219 = vmatmul.mubr.bf16.gmra.mxu0 %v642
      %v1220 = vpop.f32.mrf.mxu0
      %v1221 = vadd.f32 0.0, %v1220
      %v1222 = vpop.f32.mrf.mxu0
      %v1223 = vpop.f32.mrf.mxu0
      %v1224 = vadd.f32 0.0, %v1223
      %v1225 = vpop.f32.mrf.mxu0
      %1226 = vmatprep.mubr.bf16.mxu0 0
      %1227 = vmatmul.mubr.bf16.gmra.mxu0 %v645
      %v1228 = vpop.f32.mrf.mxu0
      %v1229 = vadd.f32 0.0, %v1228
      %v1230 = vpop.f32.mrf.mxu0
      %v1231 = vpop.f32.mrf.mxu0
      %v1232 = vadd.f32 0.0, %v1231
      %v1233 = vpop.f32.mrf.mxu0
      %1234 = vmatprep.mubr.bf16.mxu0 0
      %1235 = vmatmul.mubr.bf16.gmra.mxu0 %v648
      %v1236 = vpop.f32.mrf.mxu0
      %v1237 = vadd.f32 0.0, %v1236
      %v1238 = vpop.f32.mrf.mxu0
      %v1239 = vpop.f32.mrf.mxu0
      %v1240 = vadd.f32 0.0, %v1239
      %v1241 = vpop.f32.mrf.mxu0
      %1242 = vmatprep.mubr.bf16.mxu0 0
      %1243 = vmatmul.mubr.bf16.gmra.mxu0 %v651
      %v1244 = vpop.f32.mrf.mxu0
      %v1245 = vadd.f32 0.0, %v1244
      %v1246 = vpop.f32.mrf.mxu0
      %v1247 = vpop.f32.mrf.mxu0
      %v1248 = vadd.f32 0.0, %v1247
      %v1249 = vpop.f32.mrf.mxu0
      %1250 = vmatprep.mubr.bf16.mxu0 0
      %1251 = vmatmul.mubr.bf16.gmra.mxu0 %v654
      %v1252 = vpop.f32.mrf.mxu0
      %v1253 = vadd.f32 0.0, %v1252
      %v1254 = vpop.f32.mrf.mxu0
      %v1255 = vpop.f32.mrf.mxu0
      %v1256 = vadd.f32 0.0, %v1255
      %v1257 = vpop.f32.mrf.mxu0
      %1258 = vmatprep.mubr.bf16.mxu0 0
      %1259 = vmatmul.mubr.bf16.gmra.mxu0 %v657
      %v1260 = vpop.f32.mrf.mxu0
      %v1261 = vadd.f32 0.0, %v1260
      %v1262 = vpop.f32.mrf.mxu0
      %v1263 = vpop.f32.mrf.mxu0
      %v1264 = vadd.f32 0.0, %v1263
      %v1265 = vpop.f32.mrf.mxu0
      %1266 = vmatprep.mubr.bf16.mxu0 0
      %1267 = vmatmul.mubr.bf16.gmra.mxu0 %v660
      %v1268 = vpop.f32.mrf.mxu0
      %v1269 = vadd.f32 0.0, %v1268
      %v1270 = vpop.f32.mrf.mxu0
      %v1271 = vpop.f32.mrf.mxu0
      %v1272 = vadd.f32 0.0, %v1271
      %v1273 = vpop.f32.mrf.mxu0
      %1274 = vmatprep.mubr.bf16.mxu0 0
      %1275 = vmatmul.mubr.bf16.gmra.mxu0 %v663
      %v1276 = vpop.f32.mrf.mxu0
      %v1277 = vadd.f32 0.0, %v1276
      %v1278 = vpop.f32.mrf.mxu0
      %v1279 = vpop.f32.mrf.mxu0
      %v1280 = vadd.f32 0.0, %v1279
      %v1281 = vpop.f32.mrf.mxu0
      %1282 = vmatprep.mubr.bf16.mxu0 0
      %1283 = vmatmul.mubr.bf16.gmra.mxu0 %v666
      %v1284 = vpop.f32.mrf.mxu0
      %v1285 = vadd.f32 0.0, %v1284
      %v1286 = vpop.f32.mrf.mxu0
      %v1287 = vpop.f32.mrf.mxu0
      %v1288 = vadd.f32 0.0, %v1287
      %v1289 = vpop.f32.mrf.mxu0
      %1290 = vmatprep.mubr.bf16.mxu0 0
      %1291 = vmatmul.mubr.bf16.gmra.mxu0 %v669
      %v1292 = vpop.f32.mrf.mxu0
      %v1293 = vadd.f32 0.0, %v1292
      %v1294 = vpop.f32.mrf.mxu0
      %v1295 = vpop.f32.mrf.mxu0
      %v1296 = vadd.f32 0.0, %v1295
      %v1297 = vpop.f32.mrf.mxu0
      %1298 = vmatprep.mubr.bf16.mxu0 0
      %1299 = vmatmul.mubr.bf16.gmra.mxu0 %v672
      %v1300 = vpop.f32.mrf.mxu0
      %v1301 = vadd.f32 0.0, %v1300
      %v1302 = vpop.f32.mrf.mxu0
      %v1303 = vpop.f32.mrf.mxu0
      %v1304 = vadd.f32 0.0, %v1303
      %v1305 = vpop.f32.mrf.mxu0
      %1306 = vmatprep.mubr.bf16.mxu0 0
      %1307 = vmatmul.mubr.bf16.gmra.mxu0 %v675
      %v1308 = vpop.f32.mrf.mxu0
      %v1309 = vadd.f32 0.0, %v1308
      %v1310 = vpop.f32.mrf.mxu0
      %v1311 = vpop.f32.mrf.mxu0
      %v1312 = vadd.f32 0.0, %v1311
      %v1313 = vpop.f32.mrf.mxu0
      %1314 = vmatprep.mubr.bf16.mxu0 0
      %1315 = vmatmul.mubr.bf16.gmra.mxu0 %v678
      %v1316 = vpop.f32.mrf.mxu0
      %v1317 = vadd.f32 0.0, %v1316
      %v1318 = vpop.f32.mrf.mxu0
      %v1319 = vpop.f32.mrf.mxu0
      %v1320 = vadd.f32 0.0, %v1319
      %v1321 = vpop.f32.mrf.mxu0
      %1322 = vmatprep.mubr.bf16.mxu0 0
      %1323 = vmatmul.mubr.bf16.gmra.mxu0 %v681
      %v1324 = vpop.f32.mrf.mxu0
      %v1325 = vadd.f32 0.0, %v1324
      %v1326 = vpop.f32.mrf.mxu0
      %v1327 = vpop.f32.mrf.mxu0
      %v1328 = vadd.f32 0.0, %v1327
      %v1329 = vpop.f32.mrf.mxu0
      %1330 = vmatprep.mubr.bf16.mxu0 0
      %1331 = vmatmul.mubr.bf16.gmra.mxu0 %v684
      %v1332 = vpop.f32.mrf.mxu0
      %v1333 = vadd.f32 0.0, %v1332
      %v1334 = vpop.f32.mrf.mxu0
      %v1335 = vpop.f32.mrf.mxu0
      %v1336 = vadd.f32 0.0, %v1335
      %v1337 = vpop.f32.mrf.mxu0
      %1338 = vmatprep.mubr.bf16.mxu0 0
      %1339 = vmatmul.mubr.bf16.gmra.mxu0 %v687
      %v1340 = vpop.f32.mrf.mxu0
      %v1341 = vadd.f32 0.0, %v1340
      %v1342 = vpop.f32.mrf.mxu0
      %v1343 = vpop.f32.mrf.mxu0
      %v1344 = vadd.f32 0.0, %v1343
      %v1345 = vpop.f32.mrf.mxu0
      %1346 = vmatprep.mubr.bf16.mxu0 0
      %1347 = vmatmul.mubr.bf16.gmra.mxu0 %v690
      %v1348 = vpop.f32.mrf.mxu0
      %v1349 = vadd.f32 0.0, %v1348
      %v1350 = vpop.f32.mrf.mxu0
      %v1351 = vpop.f32.mrf.mxu0
      %v1352 = vadd.f32 0.0, %v1351
      %v1353 = vpop.f32.mrf.mxu0
      %1354 = vmatprep.mubr.bf16.mxu0 0
      %1355 = vmatmul.mubr.bf16.gmra.mxu0 %v693
      %v1356 = vpop.f32.mrf.mxu0
      %v1357 = vadd.f32 0.0, %v1356
      %v1358 = vpop.f32.mrf.mxu0
      %v1359 = vpop.f32.mrf.mxu0
      %v1360 = vadd.f32 0.0, %v1359
      %v1361 = vpop.f32.mrf.mxu0
      %1362 = vmatprep.mubr.bf16.mxu0 0
      %1363 = vmatmul.mubr.bf16.gmra.mxu0 %v696
      %v1364 = vpop.f32.mrf.mxu0
      %v1365 = vadd.f32 0.0, %v1364
      %v1366 = vpop.f32.mrf.mxu0
      %v1367 = vpop.f32.mrf.mxu0
      %v1368 = vadd.f32 0.0, %v1367
      %v1369 = vpop.f32.mrf.mxu0
      %1370 = vmatprep.mubr.bf16.mxu0 0
      %1371 = vmatmul.mubr.bf16.gmra.mxu0 %v699
      %v1372 = vpop.f32.mrf.mxu0
      %v1373 = vadd.f32 0.0, %v1372
      %v1374 = vpop.f32.mrf.mxu0
      %v1375 = vpop.f32.mrf.mxu0
      %v1376 = vadd.f32 0.0, %v1375
      %v1377 = vpop.f32.mrf.mxu0
      %1378 = vmatprep.mubr.bf16.mxu0 0
      %1379 = vmatmul.mubr.bf16.gmra.mxu0 %v702
      %v1380 = vpop.f32.mrf.mxu0
      %v1381 = vadd.f32 0.0, %v1380
      %v1382 = vpop.f32.mrf.mxu0
      %v1383 = vpop.f32.mrf.mxu0
      %v1384 = vadd.f32 0.0, %v1383
      %v1385 = vpop.f32.mrf.mxu0
      %1386 = vmatprep.mubr.bf16.mxu0 0
      %1387 = vmatmul.mubr.bf16.gmra.mxu0 %v705
      %v1388 = vpop.f32.mrf.mxu0
      %v1389 = vadd.f32 0.0, %v1388
      %v1390 = vpop.f32.mrf.mxu0
      %v1391 = vpop.f32.mrf.mxu0
      %v1392 = vadd.f32 0.0, %v1391
      %v1393 = vpop.f32.mrf.mxu0
      %1394 = vmatprep.mubr.bf16.mxu0 0
      %1395 = vmatmul.mubr.bf16.gmra.mxu0 %v708
      %v1396 = vpop.f32.mrf.mxu0
      %v1397 = vadd.f32 0.0, %v1396
      %v1398 = vpop.f32.mrf.mxu0
      %v1399 = vpop.f32.mrf.mxu0
      %v1400 = vadd.f32 0.0, %v1399
      %v1401 = vpop.f32.mrf.mxu0
      %1402 = vmatprep.mubr.bf16.mxu0 0
      %1403 = vmatmul.mubr.bf16.gmra.mxu0 %v711
      %v1404 = vpop.f32.mrf.mxu0
      %v1405 = vadd.f32 0.0, %v1404
      %v1406 = vpop.f32.mrf.mxu0
      %v1407 = vpop.f32.mrf.mxu0
      %v1408 = vadd.f32 0.0, %v1407
      %v1409 = vpop.f32.mrf.mxu0
      %1410 = vmatprep.mubr.bf16.mxu0 0
      %1411 = vmatmul.mubr.bf16.gmra.mxu0 %v714
      %v1412 = vpop.f32.mrf.mxu0
      %v1413 = vadd.f32 0.0, %v1412
      %v1414 = vpop.f32.mrf.mxu0
      %v1415 = vpop.f32.mrf.mxu0
      %v1416 = vadd.f32 0.0, %v1415
      %v1417 = vpop.f32.mrf.mxu0
      %1418 = vmatprep.mubr.bf16.mxu0 0
      %1419 = vmatmul.mubr.bf16.gmra.mxu0 %v717
      %v1420 = vpop.f32.mrf.mxu0
      %v1421 = vadd.f32 0.0, %v1420
      %v1422 = vpop.f32.mrf.mxu0
      %v1423 = vpop.f32.mrf.mxu0
      %v1424 = vadd.f32 0.0, %v1423
      %v1425 = vpop.f32.mrf.mxu0
      %1426 = vdwg.mxu0
      %v1427 = vadd.f32 %v1078, %v1189
      %v1428 = vadd.f32 %v1079, %v1192
      %v1429 = vadd.f32 %v1080, %v1197
      %v1430 = vadd.f32 %v1081, %v1200
      %v1431 = vadd.f32 %v1082, %v1205
      %v1432 = vadd.f32 %v1083, %v1208
      %v1433 = vadd.f32 %v1084, %v1213
      %v1434 = vadd.f32 %v1085, %v1216
      %v1435 = vadd.f32 %v1086, %v1221
      %v1436 = vadd.f32 %v1087, %v1224
      %v1437 = vadd.f32 %v1088, %v1229
      %v1438 = vadd.f32 %v1089, %v1232
      %v1439 = vadd.f32 %v1090, %v1237
      %v1440 = vadd.f32 %v1091, %v1240
      %v1441 = vadd.f32 %v1092, %v1245
      %v1442 = vadd.f32 %v1093, %v1248
      %v1443 = vadd.f32 %v1094, %v1253
      %v1444 = vadd.f32 %v1095, %v1256
      %v1445 = vadd.f32 %v1096, %v1261
      %v1446 = vadd.f32 %v1097, %v1264
      %v1447 = vadd.f32 %v1098, %v1269
      %v1448 = vadd.f32 %v1099, %v1272
      %v1449 = vadd.f32 %v1100, %v1277
      %v1450 = vadd.f32 %v1101, %v1280
      %v1451 = vadd.f32 %v1102, %v1285
      %v1452 = vadd.f32 %v1103, %v1288
      %v1453 = vadd.f32 %v1104, %v1293
      %v1454 = vadd.f32 %v1105, %v1296
      %v1455 = vadd.f32 %v1106, %v1301
      %v1456 = vadd.f32 %v1107, %v1304
      %v1457 = vadd.f32 %v1108, %v1309
      %v1458 = vadd.f32 %v1109, %v1312
      %v1459 = vadd.f32 %v1110, %v1317
      %v1460 = vadd.f32 %v1111, %v1320
      %v1461 = vadd.f32 %v1112, %v1325
      %v1462 = vadd.f32 %v1113, %v1328
      %v1463 = vadd.f32 %v1114, %v1333
      %v1464 = vadd.f32 %v1115, %v1336
      %v1465 = vadd.f32 %v1116, %v1341
      %v1466 = vadd.f32 %v1117, %v1344
      %v1467 = vadd.f32 %v1118, %v1349
      %v1468 = vadd.f32 %v1119, %v1352
      %v1469 = vadd.f32 %v1120, %v1357
      %v1470 = vadd.f32 %v1121, %v1360
      %v1471 = vadd.f32 %v1122, %v1365
      %v1472 = vadd.f32 %v1123, %v1368
      %v1473 = vadd.f32 %v1124, %v1373
      %v1474 = vadd.f32 %v1125, %v1376
      %v1475 = vadd.f32 %v1126, %v1381
      %v1476 = vadd.f32 %v1127, %v1384
      %v1477 = vadd.f32 %v1128, %v1389
      %v1478 = vadd.f32 %v1129, %v1392
      %v1479 = vadd.f32 %v1130, %v1397
      %v1480 = vadd.f32 %v1131, %v1400
      %v1481 = vadd.f32 %v1132, %v1405
      %v1482 = vadd.f32 %v1133, %v1408
      %v1483 = vadd.f32 %v1134, %v1413
      %v1484 = vadd.f32 %v1135, %v1416
      %v1485 = vadd.f32 %v1136, %v1421
      %v1486 = vadd.f32 %v1137, %v1424
      %1487 = vst.msk [vmem:[#allocation2 + $0x20] sm:$0xff] %vm628, %v1427
      %1488 = vst.msk [vmem:[#allocation2 + $0x28] sm:$0xff] %vm628, %v1428
      %1489 = vst.msk [vmem:[#allocation2 + $0x30] sm:$0xff] %vm628, %v1429
      %1490 = vst.msk [vmem:[#allocation2 + $0x38] sm:$0xff] %vm628, %v1430
      %1491 = vst.msk [vmem:[#allocation2 + $0x40] sm:$0xff] %vm628, %v1431
      %1492 = vst.msk [vmem:[#allocation2 + $0x48] sm:$0xff] %vm628, %v1432
      %1493 = vst.msk [vmem:[#allocation2 + $0x50] sm:$0xff] %vm628, %v1433
      %1494 = vst.msk [vmem:[#allocation2 + $0x58] sm:$0xff] %vm628, %v1434
      %1495 = vst.msk [vmem:[#allocation2 + $0x60] sm:$0xff] %vm628, %v1435
      %1496 = vst.msk [vmem:[#allocation2 + $0x68] sm:$0xff] %vm628, %v1436
      %1497 = vst.msk [vmem:[#allocation2 + $0x70] sm:$0xff] %vm628, %v1437
      %1498 = vst.msk [vmem:[#allocation2 + $0x78] sm:$0xff] %vm628, %v1438
      %1499 = vst.msk [vmem:[#allocation2 + $0x80] sm:$0xff] %vm628, %v1439
      %1500 = vst.msk [vmem:[#allocation2 + $0x88] sm:$0xff] %vm628, %v1440
      %1501 = vst.msk [vmem:[#allocation2 + $0x90] sm:$0xff] %vm628, %v1441
      %1502 = vst.msk [vmem:[#allocation2 + $0x98] sm:$0xff] %vm628, %v1442
      %1503 = vst.msk [vmem:[#allocation2 + $0xa0] sm:$0xff] %vm628, %v1443
      %1504 = vst.msk [vmem:[#allocation2 + $0xa8] sm:$0xff] %vm628, %v1444
      %1505 = vst.msk [vmem:[#allocation2 + $0xb0] sm:$0xff] %vm628, %v1445
      %1506 = vst.msk [vmem:[#allocation2 + $0xb8] sm:$0xff] %vm628, %v1446
      %1507 = vst.msk [vmem:[#allocation2 + $0xc0] sm:$0xff] %vm628, %v1447
      %1508 = vst.msk [vmem:[#allocation2 + $0xc8] sm:$0xff] %vm628, %v1448
      %1509 = vst.msk [vmem:[#allocation2 + $0xd0] sm:$0xff] %vm628, %v1449
      %1510 = vst.msk [vmem:[#allocation2 + $0xd8] sm:$0xff] %vm628, %v1450
      %1511 = vst.msk [vmem:[#allocation2 + $0xe0] sm:$0xff] %vm628, %v1451
      %1512 = vst.msk [vmem:[#allocation2 + $0xe8] sm:$0xff] %vm628, %v1452
      %1513 = vst.msk [vmem:[#allocation2 + $0xf0] sm:$0xff] %vm628, %v1453
      %1514 = vst.msk [vmem:[#allocation2 + $0xf8] sm:$0xff] %vm628, %v1454
      %1515 = vst.msk [vmem:[#allocation2 + $0x100] sm:$0xff] %vm628, %v1455
      %1516 = vst.msk [vmem:[#allocation2 + $0x108] sm:$0xff] %vm628, %v1456
      %1517 = vst.msk [vmem:[#allocation2 + $0x110] sm:$0xff] %vm628, %v1457
      %1518 = vst.msk [vmem:[#allocation2 + $0x118] sm:$0xff] %vm628, %v1458
      %1519 = vst.msk [vmem:[#allocation2 + $0x120] sm:$0xff] %vm628, %v1459
      %1520 = vst.msk [vmem:[#allocation2 + $0x128] sm:$0xff] %vm628, %v1460
      %1521 = vst.msk [vmem:[#allocation2 + $0x130] sm:$0xff] %vm628, %v1461
      %1522 = vst.msk [vmem:[#allocation2 + $0x138] sm:$0xff] %vm628, %v1462
      %1523 = vst.msk [vmem:[#allocation2 + $0x140] sm:$0xff] %vm628, %v1463
      %1524 = vst.msk [vmem:[#allocation2 + $0x148] sm:$0xff] %vm628, %v1464
      %1525 = vst.msk [vmem:[#allocation2 + $0x150] sm:$0xff] %vm628, %v1465
      %1526 = vst.msk [vmem:[#allocation2 + $0x158] sm:$0xff] %vm628, %v1466
      %1527 = vst.msk [vmem:[#allocation2 + $0x160] sm:$0xff] %vm628, %v1467
      %1528 = vst.msk [vmem:[#allocation2 + $0x168] sm:$0xff] %vm628, %v1468
      %1529 = vst.msk [vmem:[#allocation2 + $0x170] sm:$0xff] %vm628, %v1469
      %1530 = vst.msk [vmem:[#allocation2 + $0x178] sm:$0xff] %vm628, %v1470
      %1531 = vst.msk [vmem:[#allocation2 + $0x180] sm:$0xff] %vm628, %v1471
      %1532 = vst.msk [vmem:[#allocation2 + $0x188] sm:$0xff] %vm628, %v1472
      %1533 = vst.msk [vmem:[#allocation2 + $0x190] sm:$0xff] %vm628, %v1473
      %1534 = vst.msk [vmem:[#allocation2 + $0x198] sm:$0xff] %vm628, %v1474
      %1535 = vst.msk [vmem:[#allocation2 + $0x1a0] sm:$0xff] %vm628, %v1475
      %1536 = vst.msk [vmem:[#allocation2 + $0x1a8] sm:$0xff] %vm628, %v1476
      %1537 = vst.msk [vmem:[#allocation2 + $0x1b0] sm:$0xff] %vm628, %v1477
      %1538 = vst.msk [vmem:[#allocation2 + $0x1b8] sm:$0xff] %vm628, %v1478
      %1539 = vst.msk [vmem:[#allocation2 + $0x1c0] sm:$0xff] %vm628, %v1479
      %1540 = vst.msk [vmem:[#allocation2 + $0x1c8] sm:$0xff] %vm628, %v1480
      %1541 = vst.msk [vmem:[#allocation2 + $0x1d0] sm:$0xff] %vm628, %v1481
      %1542 = vst.msk [vmem:[#allocation2 + $0x1d8] sm:$0xff] %vm628, %v1482
      %1543 = vst.msk [vmem:[#allocation2 + $0x1e0] sm:$0xff] %vm628, %v1483
      %1544 = vst.msk [vmem:[#allocation2 + $0x1e8] sm:$0xff] %vm628, %v1484
      %1545 = vst.msk [vmem:[#allocation2 + $0x1f0] sm:$0xff] %vm628, %v1485
      %1546 = vst.msk [vmem:[#allocation2 + $0x1f8] sm:$0xff] %vm628, %v1486
      %v1547 = vld [vmem:[#allocation2] sm:$0xff]
      %v1548 = vld [vmem:[#allocation2 + $0x8] sm:$0xff]
      %v1549 = vld [vmem:[#allocation2 + $0x10] sm:$0xff]
      %v1550 = vld [vmem:[#allocation2 + $0x18] sm:$0xff]
      %v1551 = vld [vmem:[#allocation2 + $0x20] sm:$0xff]
      %v1552 = vld [vmem:[#allocation2 + $0x28] sm:$0xff]
      %v1553 = vld [vmem:[#allocation2 + $0x30] sm:$0xff]
      %v1554 = vld [vmem:[#allocation2 + $0x38] sm:$0xff]
      %v1555 = vld [vmem:[#allocation2 + $0x40] sm:$0xff]
      %v1556 = vld [vmem:[#allocation2 + $0x48] sm:$0xff]
      %v1557 = vld [vmem:[#allocation2 + $0x50] sm:$0xff]
      %v1558 = vld [vmem:[#allocation2 + $0x58] sm:$0xff]
      %v1559 = vld [vmem:[#allocation2 + $0x60] sm:$0xff]
      %v1560 = vld [vmem:[#allocation2 + $0x68] sm:$0xff]
      %v1561 = vld [vmem:[#allocation2 + $0x70] sm:$0xff]
      %v1562 = vld [vmem:[#allocation2 + $0x78] sm:$0xff]
      %v1563 = vld [vmem:[#allocation2 + $0x80] sm:$0xff]
      %v1564 = vld [vmem:[#allocation2 + $0x88] sm:$0xff]
      %v1565 = vld [vmem:[#allocation2 + $0x90] sm:$0xff]
      %v1566 = vld [vmem:[#allocation2 + $0x98] sm:$0xff]
      %v1567 = vld [vmem:[#allocation2 + $0xa0] sm:$0xff]
      %v1568 = vld [vmem:[#allocation2 + $0xa8] sm:$0xff]
      %v1569 = vld [vmem:[#allocation2 + $0xb0] sm:$0xff]
      %v1570 = vld [vmem:[#allocation2 + $0xb8] sm:$0xff]
      %v1571 = vld [vmem:[#allocation2 + $0xc0] sm:$0xff]
      %v1572 = vld [vmem:[#allocation2 + $0xc8] sm:$0xff]
      %v1573 = vld [vmem:[#allocation2 + $0xd0] sm:$0xff]
      %v1574 = vld [vmem:[#allocation2 + $0xd8] sm:$0xff]
      %v1575 = vld [vmem:[#allocation2 + $0xe0] sm:$0xff]
      %v1576 = vld [vmem:[#allocation2 + $0xe8] sm:$0xff]
      %v1577 = vld [vmem:[#allocation2 + $0xf0] sm:$0xff]
      %v1578 = vld [vmem:[#allocation2 + $0xf8] sm:$0xff]
      %v1579 = vld [vmem:[#allocation2 + $0x100] sm:$0xff]
      %v1580 = vld [vmem:[#allocation2 + $0x108] sm:$0xff]
      %v1581 = vld [vmem:[#allocation2 + $0x110] sm:$0xff]
      %v1582 = vld [vmem:[#allocation2 + $0x118] sm:$0xff]
      %v1583 = vld [vmem:[#allocation2 + $0x120] sm:$0xff]
      %v1584 = vld [vmem:[#allocation2 + $0x128] sm:$0xff]
      %v1585 = vld [vmem:[#allocation2 + $0x130] sm:$0xff]
      %v1586 = vld [vmem:[#allocation2 + $0x138] sm:$0xff]
      %v1587 = vld [vmem:[#allocation2 + $0x140] sm:$0xff]
      %v1588 = vld [vmem:[#allocation2 + $0x148] sm:$0xff]
      %v1589 = vld [vmem:[#allocation2 + $0x150] sm:$0xff]
      %v1590 = vld [vmem:[#allocation2 + $0x158] sm:$0xff]
      %v1591 = vld [vmem:[#allocation2 + $0x160] sm:$0xff]
      %v1592 = vld [vmem:[#allocation2 + $0x168] sm:$0xff]
      %v1593 = vld [vmem:[#allocation2 + $0x170] sm:$0xff]
      %v1594 = vld [vmem:[#allocation2 + $0x178] sm:$0xff]
      %v1595 = vld [vmem:[#allocation2 + $0x180] sm:$0xff]
      %v1596 = vld [vmem:[#allocation2 + $0x188] sm:$0xff]
      %v1597 = vld [vmem:[#allocation2 + $0x190] sm:$0xff]
      %v1598 = vld [vmem:[#allocation2 + $0x198] sm:$0xff]
      %v1599 = vld [vmem:[#allocation2 + $0x1a0] sm:$0xff]
      %v1600 = vld [vmem:[#allocation2 + $0x1a8] sm:$0xff]
      %v1601 = vld [vmem:[#allocation2 + $0x1b0] sm:$0xff]
      %v1602 = vld [vmem:[#allocation2 + $0x1b8] sm:$0xff]
      %v1603 = vld [vmem:[#allocation2 + $0x1c0] sm:$0xff]
      %v1604 = vld [vmem:[#allocation2 + $0x1c8] sm:$0xff]
      %v1605 = vld [vmem:[#allocation2 + $0x1d0] sm:$0xff]
      %v1606 = vld [vmem:[#allocation2 + $0x1d8] sm:$0xff]
      %v1607 = vld [vmem:[%s3] sm:$0xf]
      %v1608 = vld [vmem:[%s3 + $0x4] sm:$0xf]
      %v1609 = vld [vmem:[%s3 + $0x8] sm:$0xf]
      %v1610 = vld [vmem:[%s3 + $0xc] sm:$0xf]
      %v1615 = vunpack.c.l.b16 %v1607
      %v1616 = vunpack.c.l.b16 %v1608
      %v1617 = vunpack.c.l.b16 %v1609
      %v1618 = vunpack.c.l.b16 %v1610
      %v1619 = vpack.c.b16 %v1616, %v1615
      %v1620 = vpack.c.b16 %v1618, %v1617
      %1623 = vmatprep.subr.bf16.mxu0 0
      %1624 = vmatpush1.bf16.msra.mxu0 0
      %1625 = vmatprep.subr.bf16.mxu0 0
      %1626 = vmatpush1.bf16.msra.mxu0 0
      %1627 = vmatprep.subr.bf16.mxu0 0
      %1628 = vmatpush1.bf16.msra.mxu0 0
      %1629 = vmatprep.subr.bf16.mxu0 0
      %1630 = vmatpush1.bf16.msra.mxu0 0
      %1631 = vmatprep.subr.bf16.mxu0 0
      %1632 = vmatpush1.bf16.msra.mxu0 0
      %1633 = vmatprep.subr.bf16.mxu0 0
      %1634 = vmatpush1.bf16.msra.mxu0 0
      %1635 = vmatprep.subr.bf16.mxu0 0
      %1636 = vmatpush1.bf16.msra.mxu0 %v1620
      %1637 = vmatprep.subr.bf16.mxu0 0
      %1638 = vmatpush1.bf16.msra.mxu0 %v1619
      %1639 = vmatprep.subr.bf16.mxu0 0
      %1640 = vmatpush2.bf16.msra.mxu0 0
      %1641 = vmatprep.subr.bf16.mxu0 0
      %1642 = vmatpush2.bf16.msra.mxu0 0
      %1643 = vmatprep.subr.bf16.mxu0 0
      %1644 = vmatpush2.bf16.msra.mxu0 0
      %1645 = vmatprep.subr.bf16.mxu0 0
      %1646 = vmatpush2.bf16.msra.mxu0 0
      %1647 = vmatprep.subr.bf16.mxu0 0
      %1648 = vmatpush2.bf16.msra.mxu0 0
      %1649 = vmatprep.subr.bf16.mxu0 0
      %1650 = vmatpush2.bf16.msra.mxu0 0
      %1651 = vmatprep.subr.bf16.mxu0 0
      %1652 = vmatpush2.bf16.msra.mxu0 0
      %1653 = vmatprep.subr.bf16.mxu0 0
      %1654 = vmatpush2.bf16.msra.mxu0 0
      %1655 = vmatprep.mubr.bf16.mxu0 0
      %1656 = vmatmul.mubr.bf16.gmra.mxu0 %v636
      %v1657 = vpop.f32.mrf.mxu0
      %v1658 = vadd.f32 0.0, %v1657
      %v1659 = vpop.f32.mrf.mxu0
      %v1660 = vpop.f32.mrf.mxu0
      %v1661 = vadd.f32 0.0, %v1660
      %v1662 = vpop.f32.mrf.mxu0
      %1663 = vmatprep.mubr.bf16.mxu0 0
      %1664 = vmatmul.mubr.bf16.gmra.mxu0 %v639
      %v1665 = vpop.f32.mrf.mxu0
      %v1666 = vadd.f32 0.0, %v1665
      %v1667 = vpop.f32.mrf.mxu0
      %v1668 = vpop.f32.mrf.mxu0
      %v1669 = vadd.f32 0.0, %v1668
      %v1670 = vpop.f32.mrf.mxu0
      %1671 = vmatprep.mubr.bf16.mxu0 0
      %1672 = vmatmul.mubr.bf16.gmra.mxu0 %v642
      %v1673 = vpop.f32.mrf.mxu0
      %v1674 = vadd.f32 0.0, %v1673
      %v1675 = vpop.f32.mrf.mxu0
      %v1676 = vpop.f32.mrf.mxu0
      %v1677 = vadd.f32 0.0, %v1676
      %v1678 = vpop.f32.mrf.mxu0
      %1679 = vmatprep.mubr.bf16.mxu0 0
      %1680 = vmatmul.mubr.bf16.gmra.mxu0 %v645
      %v1681 = vpop.f32.mrf.mxu0
      %v1682 = vadd.f32 0.0, %v1681
      %v1683 = vpop.f32.mrf.mxu0
      %v1684 = vpop.f32.mrf.mxu0
      %v1685 = vadd.f32 0.0, %v1684
      %v1686 = vpop.f32.mrf.mxu0
      %1687 = vmatprep.mubr.bf16.mxu0 0
      %1688 = vmatmul.mubr.bf16.gmra.mxu0 %v648
      %v1689 = vpop.f32.mrf.mxu0
      %v1690 = vadd.f32 0.0, %v1689
      %v1691 = vpop.f32.mrf.mxu0
      %v1692 = vpop.f32.mrf.mxu0
      %v1693 = vadd.f32 0.0, %v1692
      %v1694 = vpop.f32.mrf.mxu0
      %1695 = vmatprep.mubr.bf16.mxu0 0
      %1696 = vmatmul.mubr.bf16.gmra.mxu0 %v651
      %v1697 = vpop.f32.mrf.mxu0
      %v1698 = vadd.f32 0.0, %v1697
      %v1699 = vpop.f32.mrf.mxu0
      %v1700 = vpop.f32.mrf.mxu0
      %v1701 = vadd.f32 0.0, %v1700
      %v1702 = vpop.f32.mrf.mxu0
      %1703 = vmatprep.mubr.bf16.mxu0 0
      %1704 = vmatmul.mubr.bf16.gmra.mxu0 %v654
      %v1705 = vpop.f32.mrf.mxu0
      %v1706 = vadd.f32 0.0, %v1705
      %v1707 = vpop.f32.mrf.mxu0
      %v1708 = vpop.f32.mrf.mxu0
      %v1709 = vadd.f32 0.0, %v1708
      %v1710 = vpop.f32.mrf.mxu0
      %1711 = vmatprep.mubr.bf16.mxu0 0
      %1712 = vmatmul.mubr.bf16.gmra.mxu0 %v657
      %v1713 = vpop.f32.mrf.mxu0
      %v1714 = vadd.f32 0.0, %v1713
      %v1715 = vpop.f32.mrf.mxu0
      %v1716 = vpop.f32.mrf.mxu0
      %v1717 = vadd.f32 0.0, %v1716
      %v1718 = vpop.f32.mrf.mxu0
      %1719 = vmatprep.mubr.bf16.mxu0 0
      %1720 = vmatmul.mubr.bf16.gmra.mxu0 %v660
      %v1721 = vpop.f32.mrf.mxu0
      %v1722 = vadd.f32 0.0, %v1721
      %v1723 = vpop.f32.mrf.mxu0
      %v1724 = vpop.f32.mrf.mxu0
      %v1725 = vadd.f32 0.0, %v1724
      %v1726 = vpop.f32.mrf.mxu0
      %1727 = vmatprep.mubr.bf16.mxu0 0
      %1728 = vmatmul.mubr.bf16.gmra.mxu0 %v663
      %v1729 = vpop.f32.mrf.mxu0
      %v1730 = vadd.f32 0.0, %v1729
      %v1731 = vpop.f32.mrf.mxu0
      %v1732 = vpop.f32.mrf.mxu0
      %v1733 = vadd.f32 0.0, %v1732
      %v1734 = vpop.f32.mrf.mxu0
      %1735 = vmatprep.mubr.bf16.mxu0 0
      %1736 = vmatmul.mubr.bf16.gmra.mxu0 %v666
      %v1737 = vpop.f32.mrf.mxu0
      %v1738 = vadd.f32 0.0, %v1737
      %v1739 = vpop.f32.mrf.mxu0
      %v1740 = vpop.f32.mrf.mxu0
      %v1741 = vadd.f32 0.0, %v1740
      %v1742 = vpop.f32.mrf.mxu0
      %1743 = vmatprep.mubr.bf16.mxu0 0
      %1744 = vmatmul.mubr.bf16.gmra.mxu0 %v669
      %v1745 = vpop.f32.mrf.mxu0
      %v1746 = vadd.f32 0.0, %v1745
      %v1747 = vpop.f32.mrf.mxu0
      %v1748 = vpop.f32.mrf.mxu0
      %v1749 = vadd.f32 0.0, %v1748
      %v1750 = vpop.f32.mrf.mxu0
      %1751 = vmatprep.mubr.bf16.mxu0 0
      %1752 = vmatmul.mubr.bf16.gmra.mxu0 %v672
      %v1753 = vpop.f32.mrf.mxu0
      %v1754 = vadd.f32 0.0, %v1753
      %v1755 = vpop.f32.mrf.mxu0
      %v1756 = vpop.f32.mrf.mxu0
      %v1757 = vadd.f32 0.0, %v1756
      %v1758 = vpop.f32.mrf.mxu0
      %1759 = vmatprep.mubr.bf16.mxu0 0
      %1760 = vmatmul.mubr.bf16.gmra.mxu0 %v675
      %v1761 = vpop.f32.mrf.mxu0
      %v1762 = vadd.f32 0.0, %v1761
      %v1763 = vpop.f32.mrf.mxu0
      %v1764 = vpop.f32.mrf.mxu0
      %v1765 = vadd.f32 0.0, %v1764
      %v1766 = vpop.f32.mrf.mxu0
      %1767 = vmatprep.mubr.bf16.mxu0 0
      %1768 = vmatmul.mubr.bf16.gmra.mxu0 %v678
      %v1769 = vpop.f32.mrf.mxu0
      %v1770 = vadd.f32 0.0, %v1769
      %v1771 = vpop.f32.mrf.mxu0
      %v1772 = vpop.f32.mrf.mxu0
      %v1773 = vadd.f32 0.0, %v1772
      %v1774 = vpop.f32.mrf.mxu0
      %1775 = vmatprep.mubr.bf16.mxu0 0
      %1776 = vmatmul.mubr.bf16.gmra.mxu0 %v681
      %v1777 = vpop.f32.mrf.mxu0
      %v1778 = vadd.f32 0.0, %v1777
      %v1779 = vpop.f32.mrf.mxu0
      %v1780 = vpop.f32.mrf.mxu0
      %v1781 = vadd.f32 0.0, %v1780
      %v1782 = vpop.f32.mrf.mxu0
      %1783 = vmatprep.mubr.bf16.mxu0 0
      %1784 = vmatmul.mubr.bf16.gmra.mxu0 %v684
      %v1785 = vpop.f32.mrf.mxu0
      %v1786 = vadd.f32 0.0, %v1785
      %v1787 = vpop.f32.mrf.mxu0
      %v1788 = vpop.f32.mrf.mxu0
      %v1789 = vadd.f32 0.0, %v1788
      %v1790 = vpop.f32.mrf.mxu0
      %1791 = vmatprep.mubr.bf16.mxu0 0
      %1792 = vmatmul.mubr.bf16.gmra.mxu0 %v687
      %v1793 = vpop.f32.mrf.mxu0
      %v1794 = vadd.f32 0.0, %v1793
      %v1795 = vpop.f32.mrf.mxu0
      %v1796 = vpop.f32.mrf.mxu0
      %v1797 = vadd.f32 0.0, %v1796
      %v1798 = vpop.f32.mrf.mxu0
      %1799 = vmatprep.mubr.bf16.mxu0 0
      %1800 = vmatmul.mubr.bf16.gmra.mxu0 %v690
      %v1801 = vpop.f32.mrf.mxu0
      %v1802 = vadd.f32 0.0, %v1801
      %v1803 = vpop.f32.mrf.mxu0
      %v1804 = vpop.f32.mrf.mxu0
      %v1805 = vadd.f32 0.0, %v1804
      %v1806 = vpop.f32.mrf.mxu0
      %1807 = vmatprep.mubr.bf16.mxu0 0
      %1808 = vmatmul.mubr.bf16.gmra.mxu0 %v693
      %v1809 = vpop.f32.mrf.mxu0
      %v1810 = vadd.f32 0.0, %v1809
      %v1811 = vpop.f32.mrf.mxu0
      %v1812 = vpop.f32.mrf.mxu0
      %v1813 = vadd.f32 0.0, %v1812
      %v1814 = vpop.f32.mrf.mxu0
      %1815 = vmatprep.mubr.bf16.mxu0 0
      %1816 = vmatmul.mubr.bf16.gmra.mxu0 %v696
      %v1817 = vpop.f32.mrf.mxu0
      %v1818 = vadd.f32 0.0, %v1817
      %v1819 = vpop.f32.mrf.mxu0
      %v1820 = vpop.f32.mrf.mxu0
      %v1821 = vadd.f32 0.0, %v1820
      %v1822 = vpop.f32.mrf.mxu0
      %1823 = vmatprep.mubr.bf16.mxu0 0
      %1824 = vmatmul.mubr.bf16.gmra.mxu0 %v699
      %v1825 = vpop.f32.mrf.mxu0
      %v1826 = vadd.f32 0.0, %v1825
      %v1827 = vpop.f32.mrf.mxu0
      %v1828 = vpop.f32.mrf.mxu0
      %v1829 = vadd.f32 0.0, %v1828
      %v1830 = vpop.f32.mrf.mxu0
      %1831 = vmatprep.mubr.bf16.mxu0 0
      %1832 = vmatmul.mubr.bf16.gmra.mxu0 %v702
      %v1833 = vpop.f32.mrf.mxu0
      %v1834 = vadd.f32 0.0, %v1833
      %v1835 = vpop.f32.mrf.mxu0
      %v1836 = vpop.f32.mrf.mxu0
      %v1837 = vadd.f32 0.0, %v1836
      %v1838 = vpop.f32.mrf.mxu0
      %1839 = vmatprep.mubr.bf16.mxu0 0
      %1840 = vmatmul.mubr.bf16.gmra.mxu0 %v705
      %v1841 = vpop.f32.mrf.mxu0
      %v1842 = vadd.f32 0.0, %v1841
      %v1843 = vpop.f32.mrf.mxu0
      %v1844 = vpop.f32.mrf.mxu0
      %v1845 = vadd.f32 0.0, %v1844
      %v1846 = vpop.f32.mrf.mxu0
      %1847 = vmatprep.mubr.bf16.mxu0 0
      %1848 = vmatmul.mubr.bf16.gmra.mxu0 %v708
      %v1849 = vpop.f32.mrf.mxu0
      %v1850 = vadd.f32 0.0, %v1849
      %v1851 = vpop.f32.mrf.mxu0
      %v1852 = vpop.f32.mrf.mxu0
      %v1853 = vadd.f32 0.0, %v1852
      %v1854 = vpop.f32.mrf.mxu0
      %1855 = vmatprep.mubr.bf16.mxu0 0
      %1856 = vmatmul.mubr.bf16.gmra.mxu0 %v711
      %v1857 = vpop.f32.mrf.mxu0
      %v1858 = vadd.f32 0.0, %v1857
      %v1859 = vpop.f32.mrf.mxu0
      %v1860 = vpop.f32.mrf.mxu0
      %v1861 = vadd.f32 0.0, %v1860
      %v1862 = vpop.f32.mrf.mxu0
      %1863 = vmatprep.mubr.bf16.mxu0 0
      %1864 = vmatmul.mubr.bf16.gmra.mxu0 %v714
      %v1865 = vpop.f32.mrf.mxu0
      %v1866 = vadd.f32 0.0, %v1865
      %v1867 = vpop.f32.mrf.mxu0
      %v1868 = vpop.f32.mrf.mxu0
      %v1869 = vadd.f32 0.0, %v1868
      %v1870 = vpop.f32.mrf.mxu0
      %1871 = vmatprep.mubr.bf16.mxu0 0
      %1872 = vmatmul.mubr.bf16.gmra.mxu0 %v717
      %v1873 = vpop.f32.mrf.mxu0
      %v1874 = vadd.f32 0.0, %v1873
      %v1875 = vpop.f32.mrf.mxu0
      %v1876 = vpop.f32.mrf.mxu0
      %v1877 = vadd.f32 0.0, %v1876
      %v1878 = vpop.f32.mrf.mxu0
      %1879 = vmatprep.mubr.bf16.mxu0 0
      %1880 = vmatmul.mubr.bf16.gmra.mxu0 %v720
      %v1881 = vpop.f32.mrf.mxu0
      %v1882 = vadd.f32 0.0, %v1881
      %v1883 = vpop.f32.mrf.mxu0
      %v1884 = vpop.f32.mrf.mxu0
      %v1885 = vadd.f32 0.0, %v1884
      %v1886 = vpop.f32.mrf.mxu0
      %1887 = vmatprep.mubr.bf16.mxu0 0
      %1888 = vmatmul.mubr.bf16.gmra.mxu0 %v723
      %v1889 = vpop.f32.mrf.mxu0
      %v1890 = vadd.f32 0.0, %v1889
      %v1891 = vpop.f32.mrf.mxu0
      %v1892 = vpop.f32.mrf.mxu0
      %v1893 = vadd.f32 0.0, %v1892
      %v1894 = vpop.f32.mrf.mxu0
      %1895 = vdwg.mxu0
      %v1896 = vadd.f32 %v1547, %v1658
      %v1897 = vadd.f32 %v1548, %v1661
      %v1898 = vadd.f32 %v1549, %v1666
      %v1899 = vadd.f32 %v1550, %v1669
      %v1900 = vadd.f32 %v1551, %v1674
      %v1901 = vadd.f32 %v1552, %v1677
      %v1902 = vadd.f32 %v1553, %v1682
      %v1903 = vadd.f32 %v1554, %v1685
      %v1904 = vadd.f32 %v1555, %v1690
      %v1905 = vadd.f32 %v1556, %v1693
      %v1906 = vadd.f32 %v1557, %v1698
      %v1907 = vadd.f32 %v1558, %v1701
      %v1908 = vadd.f32 %v1559, %v1706
      %v1909 = vadd.f32 %v1560, %v1709
      %v1910 = vadd.f32 %v1561, %v1714
      %v1911 = vadd.f32 %v1562, %v1717
      %v1912 = vadd.f32 %v1563, %v1722
      %v1913 = vadd.f32 %v1564, %v1725
      %v1914 = vadd.f32 %v1565, %v1730
      %v1915 = vadd.f32 %v1566, %v1733
      %v1916 = vadd.f32 %v1567, %v1738
      %v1917 = vadd.f32 %v1568, %v1741
      %v1918 = vadd.f32 %v1569, %v1746
      %v1919 = vadd.f32 %v1570, %v1749
      %v1920 = vadd.f32 %v1571, %v1754
      %v1921 = vadd.f32 %v1572, %v1757
      %v1922 = vadd.f32 %v1573, %v1762
      %v1923 = vadd.f32 %v1574, %v1765
      %v1924 = vadd.f32 %v1575, %v1770
      %v1925 = vadd.f32 %v1576, %v1773
      %v1926 = vadd.f32 %v1577, %v1778
      %v1927 = vadd.f32 %v1578, %v1781
      %v1928 = vadd.f32 %v1579, %v1786
      %v1929 = vadd.f32 %v1580, %v1789
      %v1930 = vadd.f32 %v1581, %v1794
      %v1931 = vadd.f32 %v1582, %v1797
      %v1932 = vadd.f32 %v1583, %v1802
      %v1933 = vadd.f32 %v1584, %v1805
      %v1934 = vadd.f32 %v1585, %v1810
      %v1935 = vadd.f32 %v1586, %v1813
      %v1936 = vadd.f32 %v1587, %v1818
      %v1937 = vadd.f32 %v1588, %v1821
      %v1938 = vadd.f32 %v1589, %v1826
      %v1939 = vadd.f32 %v1590, %v1829
      %v1940 = vadd.f32 %v1591, %v1834
      %v1941 = vadd.f32 %v1592, %v1837
      %v1942 = vadd.f32 %v1593, %v1842
      %v1943 = vadd.f32 %v1594, %v1845
      %v1944 = vadd.f32 %v1595, %v1850
      %v1945 = vadd.f32 %v1596, %v1853
      %v1946 = vadd.f32 %v1597, %v1858
      %v1947 = vadd.f32 %v1598, %v1861
      %v1948 = vadd.f32 %v1599, %v1866
      %v1949 = vadd.f32 %v1600, %v1869
      %v1950 = vadd.f32 %v1601, %v1874
      %v1951 = vadd.f32 %v1602, %v1877
      %v1952 = vadd.f32 %v1603, %v1882
      %v1953 = vadd.f32 %v1604, %v1885
      %v1954 = vadd.f32 %v1605, %v1890
      %v1955 = vadd.f32 %v1606, %v1893
      %1956 = vst.msk [vmem:[#allocation2] sm:$0xff] %vm628, %v1896
      %1957 = vst.msk [vmem:[#allocation2 + $0x8] sm:$0xff] %vm628, %v1897
      %1958 = vst.msk [vmem:[#allocation2 + $0x10] sm:$0xff] %vm628, %v1898
      %1959 = vst.msk [vmem:[#allocation2 + $0x18] sm:$0xff] %vm628, %v1899
      %1960 = vst.msk [vmem:[#allocation2 + $0x20] sm:$0xff] %vm628, %v1900
      %1961 = vst.msk [vmem:[#allocation2 + $0x28] sm:$0xff] %vm628, %v1901
      %1962 = vst.msk [vmem:[#allocation2 + $0x30] sm:$0xff] %vm628, %v1902
      %1963 = vst.msk [vmem:[#allocation2 + $0x38] sm:$0xff] %vm628, %v1903
      %1964 = vst.msk [vmem:[#allocation2 + $0x40] sm:$0xff] %vm628, %v1904
      %1965 = vst.msk [vmem:[#allocation2 + $0x48] sm:$0xff] %vm628, %v1905
      %1966 = vst.msk [vmem:[#allocation2 + $0x50] sm:$0xff] %vm628, %v1906
      %1967 = vst.msk [vmem:[#allocation2 + $0x58] sm:$0xff] %vm628, %v1907
      %1968 = vst.msk [vmem:[#allocation2 + $0x60] sm:$0xff] %vm628, %v1908
      %1969 = vst.msk [vmem:[#allocation2 + $0x68] sm:$0xff] %vm628, %v1909
      %1970 = vst.msk [vmem:[#allocation2 + $0x70] sm:$0xff] %vm628, %v1910
      %1971 = vst.msk [vmem:[#allocation2 + $0x78] sm:$0xff] %vm628, %v1911
      %1972 = vst.msk [vmem:[#allocation2 + $0x80] sm:$0xff] %vm628, %v1912
      %1973 = vst.msk [vmem:[#allocation2 + $0x88] sm:$0xff] %vm628, %v1913
      %1974 = vst.msk [vmem:[#allocation2 + $0x90] sm:$0xff] %vm628, %v1914
      %1975 = vst.msk [vmem:[#allocation2 + $0x98] sm:$0xff] %vm628, %v1915
      %1976 = vst.msk [vmem:[#allocation2 + $0xa0] sm:$0xff] %vm628, %v1916
      %1977 = vst.msk [vmem:[#allocation2 + $0xa8] sm:$0xff] %vm628, %v1917
      %1978 = vst.msk [vmem:[#allocation2 + $0xb0] sm:$0xff] %vm628, %v1918
      %1979 = vst.msk [vmem:[#allocation2 + $0xb8] sm:$0xff] %vm628, %v1919
      %1980 = vst.msk [vmem:[#allocation2 + $0xc0] sm:$0xff] %vm628, %v1920
      %1981 = vst.msk [vmem:[#allocation2 + $0xc8] sm:$0xff] %vm628, %v1921
      %1982 = vst.msk [vmem:[#allocation2 + $0xd0] sm:$0xff] %vm628, %v1922
      %1983 = vst.msk [vmem:[#allocation2 + $0xd8] sm:$0xff] %vm628, %v1923
      %1984 = vst.msk [vmem:[#allocation2 + $0xe0] sm:$0xff] %vm628, %v1924
      %1985 = vst.msk [vmem:[#allocation2 + $0xe8] sm:$0xff] %vm628, %v1925
      %1986 = vst.msk [vmem:[#allocation2 + $0xf0] sm:$0xff] %vm628, %v1926
      %1987 = vst.msk [vmem:[#allocation2 + $0xf8] sm:$0xff] %vm628, %v1927
      %1988 = vst.msk [vmem:[#allocation2 + $0x100] sm:$0xff] %vm628, %v1928
      %1989 = vst.msk [vmem:[#allocation2 + $0x108] sm:$0xff] %vm628, %v1929
      %1990 = vst.msk [vmem:[#allocation2 + $0x110] sm:$0xff] %vm628, %v1930
      %1991 = vst.msk [vmem:[#allocation2 + $0x118] sm:$0xff] %vm628, %v1931
      %1992 = vst.msk [vmem:[#allocation2 + $0x120] sm:$0xff] %vm628, %v1932
      %1993 = vst.msk [vmem:[#allocation2 + $0x128] sm:$0xff] %vm628, %v1933
      %1994 = vst.msk [vmem:[#allocation2 + $0x130] sm:$0xff] %vm628, %v1934
      %1995 = vst.msk [vmem:[#allocation2 + $0x138] sm:$0xff] %vm628, %v1935
      %1996 = vst.msk [vmem:[#allocation2 + $0x140] sm:$0xff] %vm628, %v1936
      %1997 = vst.msk [vmem:[#allocation2 + $0x148] sm:$0xff] %vm628, %v1937
      %1998 = vst.msk [vmem:[#allocation2 + $0x150] sm:$0xff] %vm628, %v1938
      %1999 = vst.msk [vmem:[#allocation2 + $0x158] sm:$0xff] %vm628, %v1939
      %2000 = vst.msk [vmem:[#allocation2 + $0x160] sm:$0xff] %vm628, %v1940
      %2001 = vst.msk [vmem:[#allocation2 + $0x168] sm:$0xff] %vm628, %v1941
      %2002 = vst.msk [vmem:[#allocation2 + $0x170] sm:$0xff] %vm628, %v1942
      %2003 = vst.msk [vmem:[#allocation2 + $0x178] sm:$0xff] %vm628, %v1943
      %2004 = vst.msk [vmem:[#allocation2 + $0x180] sm:$0xff] %vm628, %v1944
      %2005 = vst.msk [vmem:[#allocation2 + $0x188] sm:$0xff] %vm628, %v1945
      %2006 = vst.msk [vmem:[#allocation2 + $0x190] sm:$0xff] %vm628, %v1946
      %2007 = vst.msk [vmem:[#allocation2 + $0x198] sm:$0xff] %vm628, %v1947
      %2008 = vst.msk [vmem:[#allocation2 + $0x1a0] sm:$0xff] %vm628, %v1948
      %2009 = vst.msk [vmem:[#allocation2 + $0x1a8] sm:$0xff] %vm628, %v1949
      %2010 = vst.msk [vmem:[#allocation2 + $0x1b0] sm:$0xff] %vm628, %v1950
      %2011 = vst.msk [vmem:[#allocation2 + $0x1b8] sm:$0xff] %vm628, %v1951
      %2012 = vst.msk [vmem:[#allocation2 + $0x1c0] sm:$0xff] %vm628, %v1952
      %2013 = vst.msk [vmem:[#allocation2 + $0x1c8] sm:$0xff] %vm628, %v1953
      %2014 = vst.msk [vmem:[#allocation2 + $0x1d0] sm:$0xff] %vm628, %v1954
      %2015 = vst.msk [vmem:[#allocation2 + $0x1d8] sm:$0xff] %vm628, %v1955
      %v2016 = vld [vmem:[#allocation2] sm:$0xff]
      %v2017 = vld [vmem:[#allocation2 + $0x8] sm:$0xff]
      %v2018 = vld [vmem:[#allocation2 + $0x10] sm:$0xff]
      %v2019 = vld [vmem:[#allocation2 + $0x18] sm:$0xff]
      %v2020 = vld [vmem:[#allocation2 + $0x20] sm:$0xff]
      %v2021 = vld [vmem:[#allocation2 + $0x28] sm:$0xff]
      %v2022 = vld [vmem:[#allocation2 + $0x30] sm:$0xff]
      %v2023 = vld [vmem:[#allocation2 + $0x38] sm:$0xff]
      %v2024 = vld [vmem:[#allocation2 + $0x40] sm:$0xff]
      %v2025 = vld [vmem:[#allocation2 + $0x48] sm:$0xff]
      %v2026 = vld [vmem:[#allocation2 + $0x50] sm:$0xff]
      %v2027 = vld [vmem:[#allocation2 + $0x58] sm:$0xff]
      %v2028 = vld [vmem:[#allocation2 + $0x60] sm:$0xff]
      %v2029 = vld [vmem:[#allocation2 + $0x68] sm:$0xff]
      %v2030 = vld [vmem:[#allocation2 + $0x70] sm:$0xff]
      %v2031 = vld [vmem:[#allocation2 + $0x78] sm:$0xff]
      %v2032 = vld [vmem:[#allocation2 + $0x80] sm:$0xff]
      %v2033 = vld [vmem:[#allocation2 + $0x88] sm:$0xff]
      %v2034 = vld [vmem:[#allocation2 + $0x90] sm:$0xff]
      %v2035 = vld [vmem:[#allocation2 + $0x98] sm:$0xff]
      %v2036 = vld [vmem:[#allocation2 + $0xa0] sm:$0xff]
      %v2037 = vld [vmem:[#allocation2 + $0xa8] sm:$0xff]
      %v2038 = vld [vmem:[#allocation2 + $0xb0] sm:$0xff]
      %v2039 = vld [vmem:[#allocation2 + $0xb8] sm:$0xff]
      %v2040 = vld [vmem:[#allocation2 + $0xc0] sm:$0xff]
      %v2041 = vld [vmem:[#allocation2 + $0xc8] sm:$0xff]
      %v2042 = vld [vmem:[#allocation2 + $0xd0] sm:$0xff]
      %v2043 = vld [vmem:[#allocation2 + $0xd8] sm:$0xff]
      %v2044 = vld [vmem:[#allocation2 + $0xe0] sm:$0xff]
      %v2045 = vld [vmem:[#allocation2 + $0xe8] sm:$0xff]
      %v2046 = vld [vmem:[#allocation2 + $0xf0] sm:$0xff]
      %v2047 = vld [vmem:[#allocation2 + $0xf8] sm:$0xff]
      %v2048 = vld [vmem:[#allocation2 + $0x100] sm:$0xff]
      %v2049 = vld [vmem:[#allocation2 + $0x108] sm:$0xff]
      %v2050 = vld [vmem:[#allocation2 + $0x110] sm:$0xff]
      %v2051 = vld [vmem:[#allocation2 + $0x118] sm:$0xff]
      %v2052 = vld [vmem:[#allocation2 + $0x120] sm:$0xff]
      %v2053 = vld [vmem:[#allocation2 + $0x128] sm:$0xff]
      %v2054 = vld [vmem:[#allocation2 + $0x130] sm:$0xff]
      %v2055 = vld [vmem:[#allocation2 + $0x138] sm:$0xff]
      %v2056 = vld [vmem:[#allocation2 + $0x140] sm:$0xff]
      %v2057 = vld [vmem:[#allocation2 + $0x148] sm:$0xff]
      %v2058 = vld [vmem:[#allocation2 + $0x150] sm:$0xff]
      %v2059 = vld [vmem:[#allocation2 + $0x158] sm:$0xff]
      %v2060 = vld [vmem:[#allocation2 + $0x160] sm:$0xff]
      %v2061 = vld [vmem:[#allocation2 + $0x168] sm:$0xff]
      %v2062 = vld [vmem:[#allocation2 + $0x170] sm:$0xff]
      %v2063 = vld [vmem:[#allocation2 + $0x178] sm:$0xff]
      %v2064 = vld [vmem:[#allocation2 + $0x180] sm:$0xff]
      %v2065 = vld [vmem:[#allocation2 + $0x188] sm:$0xff]
      %v2066 = vld [vmem:[#allocation2 + $0x190] sm:$0xff]
      %v2067 = vld [vmem:[#allocation2 + $0x198] sm:$0xff]
      %v2068 = vld [vmem:[#allocation2 + $0x1a0] sm:$0xff]
      %v2069 = vld [vmem:[#allocation2 + $0x1a8] sm:$0xff]
      %v2070 = vld [vmem:[#allocation2 + $0x1b0] sm:$0xff]
      %v2071 = vld [vmem:[#allocation2 + $0x1b8] sm:$0xff]
      %v2072 = vld [vmem:[#allocation2 + $0x1c0] sm:$0xff]
      %v2073 = vld [vmem:[#allocation2 + $0x1c8] sm:$0xff]
      %v2074 = vld [vmem:[#allocation2 + $0x1d0] sm:$0xff]
      %v2075 = vld [vmem:[#allocation2 + $0x1d8] sm:$0xff]
      %v2076 = vld [vmem:[#allocation2 + $0x1e0] sm:$0xff]
      %v2077 = vld [vmem:[#allocation2 + $0x1e8] sm:$0xff]
      %v2078 = vld [vmem:[#allocation2 + $0x1f0] sm:$0xff]
      %v2079 = vld [vmem:[#allocation2 + $0x1f8] sm:$0xff]
      %v2080 = vld [vmem:[%s4] sm:$0x1]
      %v2082 = vlaneseq
      %v2083 = vshrl.u32 %v2082, 7
      %v2084 = vsub.s32 0, %v2083
      %v2085 = vrot.slane %v2080, %v2084
      %v2087 = vadd.f32 %v2016, %v2085
      %v2088 = vadd.f32 %v2017, %v2085
      %v2089 = vadd.f32 %v2018, %v2085
      %v2090 = vadd.f32 %v2019, %v2085
      %v2091 = vadd.f32 %v2020, %v2085
      %v2092 = vadd.f32 %v2021, %v2085
      %v2093 = vadd.f32 %v2022, %v2085
      %v2094 = vadd.f32 %v2023, %v2085
      %v2095 = vadd.f32 %v2024, %v2085
      %v2096 = vadd.f32 %v2025, %v2085
      %v2097 = vadd.f32 %v2026, %v2085
      %v2098 = vadd.f32 %v2027, %v2085
      %v2099 = vadd.f32 %v2028, %v2085
      %v2100 = vadd.f32 %v2029, %v2085
      %v2101 = vadd.f32 %v2030, %v2085
      %v2102 = vadd.f32 %v2031, %v2085
      %v2103 = vadd.f32 %v2032, %v2085
      %v2104 = vadd.f32 %v2033, %v2085
      %v2105 = vadd.f32 %v2034, %v2085
      %v2106 = vadd.f32 %v2035, %v2085
      %v2107 = vadd.f32 %v2036, %v2085
      %v2108 = vadd.f32 %v2037, %v2085
      %v2109 = vadd.f32 %v2038, %v2085
      %v2110 = vadd.f32 %v2039, %v2085
      %v2111 = vadd.f32 %v2040, %v2085
      %v2112 = vadd.f32 %v2041, %v2085
      %v2113 = vadd.f32 %v2042, %v2085
      %v2114 = vadd.f32 %v2043, %v2085
      %v2115 = vadd.f32 %v2044, %v2085
      %v2116 = vadd.f32 %v2045, %v2085
      %v2117 = vadd.f32 %v2046, %v2085
      %v2118 = vadd.f32 %v2047, %v2085
      %v2119 = vadd.f32 %v2048, %v2085
      %v2120 = vadd.f32 %v2049, %v2085
      %v2121 = vadd.f32 %v2050, %v2085
      %v2122 = vadd.f32 %v2051, %v2085
      %v2123 = vadd.f32 %v2052, %v2085
      %v2124 = vadd.f32 %v2053, %v2085
      %v2125 = vadd.f32 %v2054, %v2085
      %v2126 = vadd.f32 %v2055, %v2085
      %v2127 = vadd.f32 %v2056, %v2085
      %v2128 = vadd.f32 %v2057, %v2085
      %v2129 = vadd.f32 %v2058, %v2085
      %v2130 = vadd.f32 %v2059, %v2085
      %v2131 = vadd.f32 %v2060, %v2085
      %v2132 = vadd.f32 %v2061, %v2085
      %v2133 = vadd.f32 %v2062, %v2085
      %v2134 = vadd.f32 %v2063, %v2085
      %v2135 = vadd.f32 %v2064, %v2085
      %v2136 = vadd.f32 %v2065, %v2085
      %v2137 = vadd.f32 %v2066, %v2085
      %v2138 = vadd.f32 %v2067, %v2085
      %v2139 = vadd.f32 %v2068, %v2085
      %v2140 = vadd.f32 %v2069, %v2085
      %v2141 = vadd.f32 %v2070, %v2085
      %v2142 = vadd.f32 %v2071, %v2085
      %v2143 = vadd.f32 %v2072, %v2085
      %v2144 = vadd.f32 %v2073, %v2085
      %v2145 = vadd.f32 %v2074, %v2085
      %v2146 = vadd.f32 %v2075, %v2085
      %v2147 = vadd.f32 %v2076, %v2085
      %v2148 = vadd.f32 %v2077, %v2085
      %v2149 = vadd.f32 %v2078, %v2085
      %v2150 = vadd.f32 %v2079, %v2085
      %v2151 = vld [vmem:[%s5] sm:$0x1]
      %v2153 = vlaneseq
      %v2154 = vshrl.u32 %v2153, 7
      %v2155 = vsub.s32 0, %v2154
      %v2156 = vrot.slane %v2151, %v2155
      %v2158 = vmul.f32 %v2087, %v2156
      %v2159 = vmul.f32 %v2088, %v2156
      %v2160 = vmul.f32 %v2089, %v2156
      %v2161 = vmul.f32 %v2090, %v2156
      %v2162 = vmul.f32 %v2091, %v2156
      %v2163 = vmul.f32 %v2092, %v2156
      %v2164 = vmul.f32 %v2093, %v2156
      %v2165 = vmul.f32 %v2094, %v2156
      %v2166 = vmul.f32 %v2095, %v2156
      %v2167 = vmul.f32 %v2096, %v2156
      %v2168 = vmul.f32 %v2097, %v2156
      %v2169 = vmul.f32 %v2098, %v2156
      %v2170 = vmul.f32 %v2099, %v2156
      %v2171 = vmul.f32 %v2100, %v2156
      %v2172 = vmul.f32 %v2101, %v2156
      %v2173 = vmul.f32 %v2102, %v2156
      %v2174 = vmul.f32 %v2103, %v2156
      %v2175 = vmul.f32 %v2104, %v2156
      %v2176 = vmul.f32 %v2105, %v2156
      %v2177 = vmul.f32 %v2106, %v2156
      %v2178 = vmul.f32 %v2107, %v2156
      %v2179 = vmul.f32 %v2108, %v2156
      %v2180 = vmul.f32 %v2109, %v2156
      %v2181 = vmul.f32 %v2110, %v2156
      %v2182 = vmul.f32 %v2111, %v2156
      %v2183 = vmul.f32 %v2112, %v2156
      %v2184 = vmul.f32 %v2113, %v2156
      %v2185 = vmul.f32 %v2114, %v2156
      %v2186 = vmul.f32 %v2115, %v2156
      %v2187 = vmul.f32 %v2116, %v2156
      %v2188 = vmul.f32 %v2117, %v2156
      %v2189 = vmul.f32 %v2118, %v2156
      %v2190 = vmul.f32 %v2119, %v2156
      %v2191 = vmul.f32 %v2120, %v2156
      %v2192 = vmul.f32 %v2121, %v2156
      %v2193 = vmul.f32 %v2122, %v2156
      %v2194 = vmul.f32 %v2123, %v2156
      %v2195 = vmul.f32 %v2124, %v2156
      %v2196 = vmul.f32 %v2125, %v2156
      %v2197 = vmul.f32 %v2126, %v2156
      %v2198 = vmul.f32 %v2127, %v2156
      %v2199 = vmul.f32 %v2128, %v2156
      %v2200 = vmul.f32 %v2129, %v2156
      %v2201 = vmul.f32 %v2130, %v2156
      %v2202 = vmul.f32 %v2131, %v2156
      %v2203 = vmul.f32 %v2132, %v2156
      %v2204 = vmul.f32 %v2133, %v2156
      %v2205 = vmul.f32 %v2134, %v2156
      %v2206 = vmul.f32 %v2135, %v2156
      %v2207 = vmul.f32 %v2136, %v2156
      %v2208 = vmul.f32 %v2137, %v2156
      %v2209 = vmul.f32 %v2138, %v2156
      %v2210 = vmul.f32 %v2139, %v2156
      %v2211 = vmul.f32 %v2140, %v2156
      %v2212 = vmul.f32 %v2141, %v2156
      %v2213 = vmul.f32 %v2142, %v2156
      %v2214 = vmul.f32 %v2143, %v2156
      %v2215 = vmul.f32 %v2144, %v2156
      %v2216 = vmul.f32 %v2145, %v2156
      %v2217 = vmul.f32 %v2146, %v2156
      %v2218 = vmul.f32 %v2147, %v2156
      %v2219 = vmul.f32 %v2148, %v2156
      %v2220 = vmul.f32 %v2149, %v2156
      %v2221 = vmul.f32 %v2150, %v2156
      %v2222 = vld [vmem:[%s6] sm:$0x1]
      %v2224 = vlaneseq
      %v2225 = vshrl.u32 %v2224, 7
      %v2226 = vsub.s32 0, %v2225
      %v2227 = vrot.slane %v2222, %v2226
      %v2229 = vadd.f32 %v2158, %v2227
      %v2230 = vadd.f32 %v2159, %v2227
      %v2231 = vadd.f32 %v2160, %v2227
      %v2232 = vadd.f32 %v2161, %v2227
      %v2233 = vadd.f32 %v2162, %v2227
      %v2234 = vadd.f32 %v2163, %v2227
      %v2235 = vadd.f32 %v2164, %v2227
      %v2236 = vadd.f32 %v2165, %v2227
      %v2237 = vadd.f32 %v2166, %v2227
      %v2238 = vadd.f32 %v2167, %v2227
      %v2239 = vadd.f32 %v2168, %v2227
      %v2240 = vadd.f32 %v2169, %v2227
      %v2241 = vadd.f32 %v2170, %v2227
      %v2242 = vadd.f32 %v2171, %v2227
      %v2243 = vadd.f32 %v2172, %v2227
      %v2244 = vadd.f32 %v2173, %v2227
      %v2245 = vadd.f32 %v2174, %v2227
      %v2246 = vadd.f32 %v2175, %v2227
      %v2247 = vadd.f32 %v2176, %v2227
      %v2248 = vadd.f32 %v2177, %v2227
      %v2249 = vadd.f32 %v2178, %v2227
      %v2250 = vadd.f32 %v2179, %v2227
      %v2251 = vadd.f32 %v2180, %v2227
      %v2252 = vadd.f32 %v2181, %v2227
      %v2253 = vadd.f32 %v2182, %v2227
      %v2254 = vadd.f32 %v2183, %v2227
      %v2255 = vadd.f32 %v2184, %v2227
      %v2256 = vadd.f32 %v2185, %v2227
      %v2257 = vadd.f32 %v2186, %v2227
      %v2258 = vadd.f32 %v2187, %v2227
      %v2259 = vadd.f32 %v2188, %v2227
      %v2260 = vadd.f32 %v2189, %v2227
      %v2261 = vadd.f32 %v2190, %v2227
      %v2262 = vadd.f32 %v2191, %v2227
      %v2263 = vadd.f32 %v2192, %v2227
      %v2264 = vadd.f32 %v2193, %v2227
      %v2265 = vadd.f32 %v2194, %v2227
      %v2266 = vadd.f32 %v2195, %v2227
      %v2267 = vadd.f32 %v2196, %v2227
      %v2268 = vadd.f32 %v2197, %v2227
      %v2269 = vadd.f32 %v2198, %v2227
      %v2270 = vadd.f32 %v2199, %v2227
      %v2271 = vadd.f32 %v2200, %v2227
      %v2272 = vadd.f32 %v2201, %v2227
      %v2273 = vadd.f32 %v2202, %v2227
      %v2274 = vadd.f32 %v2203, %v2227
      %v2275 = vadd.f32 %v2204, %v2227
      %v2276 = vadd.f32 %v2205, %v2227
      %v2277 = vadd.f32 %v2206, %v2227
      %v2278 = vadd.f32 %v2207, %v2227
      %v2279 = vadd.f32 %v2208, %v2227
      %v2280 = vadd.f32 %v2209, %v2227
      %v2281 = vadd.f32 %v2210, %v2227
      %v2282 = vadd.f32 %v2211, %v2227
      %v2283 = vadd.f32 %v2212, %v2227
      %v2284 = vadd.f32 %v2213, %v2227
      %v2285 = vadd.f32 %v2214, %v2227
      %v2286 = vadd.f32 %v2215, %v2227
      %v2287 = vadd.f32 %v2216, %v2227
      %v2288 = vadd.f32 %v2217, %v2227
      %v2289 = vadd.f32 %v2218, %v2227
      %v2290 = vadd.f32 %v2219, %v2227
      %v2291 = vadd.f32 %v2220, %v2227
      %v2292 = vadd.f32 %v2221, %v2227
      %v2293 = vmax.f32 %v2229, 0.0
      %v2294 = vmax.f32 %v2230, 0.0
      %v2295 = vmax.f32 %v2231, 0.0
      %v2296 = vmax.f32 %v2232, 0.0
      %v2297 = vmax.f32 %v2233, 0.0
      %v2298 = vmax.f32 %v2234, 0.0
      %v2299 = vmax.f32 %v2235, 0.0
      %v2300 = vmax.f32 %v2236, 0.0
      %v2301 = vmax.f32 %v2237, 0.0
      %v2302 = vmax.f32 %v2238, 0.0
      %v2303 = vmax.f32 %v2239, 0.0
      %v2304 = vmax.f32 %v2240, 0.0
      %v2305 = vmax.f32 %v2241, 0.0
      %v2306 = vmax.f32 %v2242, 0.0
      %v2307 = vmax.f32 %v2243, 0.0
      %v2308 = vmax.f32 %v2244, 0.0
      %v2309 = vmax.f32 %v2245, 0.0
      %v2310 = vmax.f32 %v2246, 0.0
      %v2311 = vmax.f32 %v2247, 0.0
      %v2312 = vmax.f32 %v2248, 0.0
      %v2313 = vmax.f32 %v2249, 0.0
      %v2314 = vmax.f32 %v2250, 0.0
      %v2315 = vmax.f32 %v2251, 0.0
      %v2316 = vmax.f32 %v2252, 0.0
      %v2317 = vmax.f32 %v2253, 0.0
      %v2318 = vmax.f32 %v2254, 0.0
      %v2319 = vmax.f32 %v2255, 0.0
      %v2320 = vmax.f32 %v2256, 0.0
      %v2321 = vmax.f32 %v2257, 0.0
      %v2322 = vmax.f32 %v2258, 0.0
      %v2323 = vmax.f32 %v2259, 0.0
      %v2324 = vmax.f32 %v2260, 0.0
      %v2325 = vmax.f32 %v2261, 0.0
      %v2326 = vmax.f32 %v2262, 0.0
      %v2327 = vmax.f32 %v2263, 0.0
      %v2328 = vmax.f32 %v2264, 0.0
      %v2329 = vmax.f32 %v2265, 0.0
      %v2330 = vmax.f32 %v2266, 0.0
      %v2331 = vmax.f32 %v2267, 0.0
      %v2332 = vmax.f32 %v2268, 0.0
      %v2333 = vmax.f32 %v2269, 0.0
      %v2334 = vmax.f32 %v2270, 0.0
      %v2335 = vmax.f32 %v2271, 0.0
      %v2336 = vmax.f32 %v2272, 0.0
      %v2337 = vmax.f32 %v2273, 0.0
      %v2338 = vmax.f32 %v2274, 0.0
      %v2339 = vmax.f32 %v2275, 0.0
      %v2340 = vmax.f32 %v2276, 0.0
      %v2341 = vmax.f32 %v2277, 0.0
      %v2342 = vmax.f32 %v2278, 0.0
      %v2343 = vmax.f32 %v2279, 0.0
      %v2344 = vmax.f32 %v2280, 0.0
      %v2345 = vmax.f32 %v2281, 0.0
      %v2346 = vmax.f32 %v2282, 0.0
      %v2347 = vmax.f32 %v2283, 0.0
      %v2348 = vmax.f32 %v2284, 0.0
      %v2349 = vmax.f32 %v2285, 0.0
      %v2350 = vmax.f32 %v2286, 0.0
      %v2351 = vmax.f32 %v2287, 0.0
      %v2352 = vmax.f32 %v2288, 0.0
      %v2353 = vmax.f32 %v2289, 0.0
      %v2354 = vmax.f32 %v2290, 0.0
      %v2355 = vmax.f32 %v2291, 0.0
      %v2356 = vmax.f32 %v2292, 0.0
      %v2357 = vpack.c.bf16 %v2294, %v2293
      %v2358 = vpack.c.bf16 %v2296, %v2295
      %v2359 = vpack.c.bf16 %v2298, %v2297
      %v2360 = vpack.c.bf16 %v2300, %v2299
      %v2361 = vpack.c.bf16 %v2302, %v2301
      %v2362 = vpack.c.bf16 %v2304, %v2303
      %v2363 = vpack.c.bf16 %v2306, %v2305
      %v2364 = vpack.c.bf16 %v2308, %v2307
      %v2365 = vpack.c.bf16 %v2310, %v2309
      %v2366 = vpack.c.bf16 %v2312, %v2311
      %v2367 = vpack.c.bf16 %v2314, %v2313
      %v2368 = vpack.c.bf16 %v2316, %v2315
      %v2369 = vpack.c.bf16 %v2318, %v2317
      %v2370 = vpack.c.bf16 %v2320, %v2319
      %v2371 = vpack.c.bf16 %v2322, %v2321
      %v2372 = vpack.c.bf16 %v2324, %v2323
      %v2373 = vpack.c.bf16 %v2326, %v2325
      %v2374 = vpack.c.bf16 %v2328, %v2327
      %v2375 = vpack.c.bf16 %v2330, %v2329
      %v2376 = vpack.c.bf16 %v2332, %v2331
      %v2377 = vpack.c.bf16 %v2334, %v2333
      %v2378 = vpack.c.bf16 %v2336, %v2335
      %v2379 = vpack.c.bf16 %v2338, %v2337
      %v2380 = vpack.c.bf16 %v2340, %v2339
      %v2381 = vpack.c.bf16 %v2342, %v2341
      %v2382 = vpack.c.bf16 %v2344, %v2343
      %v2383 = vpack.c.bf16 %v2346, %v2345
      %v2384 = vpack.c.bf16 %v2348, %v2347
      %v2385 = vpack.c.bf16 %v2350, %v2349
      %v2386 = vpack.c.bf16 %v2352, %v2351
      %v2387 = vpack.c.bf16 %v2354, %v2353
      %v2388 = vpack.c.bf16 %v2356, %v2355
      %v2389 = vld [vmem:[%s7] sm:$0xf]
      %v2390 = vld [vmem:[%s7 + $0x4] sm:$0xf]
      %v2391 = vld [vmem:[%s7 + $0x8] sm:$0xf]
      %v2392 = vld [vmem:[%s7 + $0xc] sm:$0xf]
      %v2393 = vld [vmem:[%s8] sm:$0x1]
      %v2395 = vlaneseq
      %v2396 = vshrl.u32 %v2395, 7
      %v2397 = vsub.s32 0, %v2396
      %v2398 = vrot.slane %v2393, %v2397
      %v2404 = vunpack.c.l.b16 %v2389
      %v2405 = vunpack.c.l.b16 %v2390
      %v2406 = vunpack.c.l.b16 %v2391
      %v2407 = vunpack.c.l.b16 %v2392
      %v2408 = vpack.c.b16 %v2405, %v2404
      %v2409 = vpack.c.b16 %v2407, %v2406
      %v2413 = vsel %vm628, %v2357, 0
      %v2416 = vsel %vm628, %v2358, 0
      %v2419 = vsel %vm628, %v2359, 0
      %v2422 = vsel %vm628, %v2360, 0
      %v2425 = vsel %vm628, %v2361, 0
      %v2428 = vsel %vm628, %v2362, 0
      %v2431 = vsel %vm628, %v2363, 0
      %v2434 = vsel %vm628, %v2364, 0
      %v2437 = vsel %vm628, %v2365, 0
      %v2440 = vsel %vm628, %v2366, 0
      %v2443 = vsel %vm628, %v2367, 0
      %v2446 = vsel %vm628, %v2368, 0
      %v2449 = vsel %vm628, %v2369, 0
      %v2452 = vsel %vm628, %v2370, 0
      %v2455 = vsel %vm628, %v2371, 0
      %v2458 = vsel %vm628, %v2372, 0
      %v2461 = vsel %vm628, %v2373, 0
      %v2464 = vsel %vm628, %v2374, 0
      %v2467 = vsel %vm628, %v2375, 0
      %v2470 = vsel %vm628, %v2376, 0
      %v2473 = vsel %vm628, %v2377, 0
      %v2476 = vsel %vm628, %v2378, 0
      %v2479 = vsel %vm628, %v2379, 0
      %v2482 = vsel %vm628, %v2380, 0
      %v2485 = vsel %vm628, %v2381, 0
      %v2488 = vsel %vm628, %v2382, 0
      %v2491 = vsel %vm628, %v2383, 0
      %v2494 = vsel %vm628, %v2384, 0
      %v2497 = vsel %vm628, %v2385, 0
      %v2500 = vsel %vm628, %v2386, 0
      %v2503 = vsel %vm628, %v2387, 0
      %v2506 = vsel %vm628, %v2388, 0
      %2508 = vmatprep.subr.bf16.mxu0 0
      %2509 = vmatpush1.bf16.msra.mxu0 0
      %2510 = vmatprep.subr.bf16.mxu0 0
      %2511 = vmatpush1.bf16.msra.mxu0 0
      %2512 = vmatprep.subr.bf16.mxu0 0
      %2513 = vmatpush1.bf16.msra.mxu0 0
      %2514 = vmatprep.subr.bf16.mxu0 0
      %2515 = vmatpush1.bf16.msra.mxu0 0
      %2516 = vmatprep.subr.bf16.mxu0 0
      %2517 = vmatpush1.bf16.msra.mxu0 0
      %2518 = vmatprep.subr.bf16.mxu0 0
      %2519 = vmatpush1.bf16.msra.mxu0 0
      %2520 = vmatprep.subr.bf16.mxu0 0
      %2521 = vmatpush1.bf16.msra.mxu0 %v2409
      %2522 = vmatprep.subr.bf16.mxu0 0
      %2523 = vmatpush1.bf16.msra.mxu0 %v2408
      %2524 = vmatprep.subr.bf16.mxu0 0
      %2525 = vmatpush2.bf16.msra.mxu0 0
      %2526 = vmatprep.subr.bf16.mxu0 0
      %2527 = vmatpush2.bf16.msra.mxu0 0
      %2528 = vmatprep.subr.bf16.mxu0 0
      %2529 = vmatpush2.bf16.msra.mxu0 0
      %2530 = vmatprep.subr.bf16.mxu0 0
      %2531 = vmatpush2.bf16.msra.mxu0 0
      %2532 = vmatprep.subr.bf16.mxu0 0
      %2533 = vmatpush2.bf16.msra.mxu0 0
      %2534 = vmatprep.subr.bf16.mxu0 0
      %2535 = vmatpush2.bf16.msra.mxu0 0
      %2536 = vmatprep.subr.bf16.mxu0 0
      %2537 = vmatpush2.bf16.msra.mxu0 0
      %2538 = vmatprep.subr.bf16.mxu0 0
      %2539 = vmatpush2.bf16.msra.mxu0 0
      %2540 = vmatprep.mubr.bf16.mxu0 0
      %2541 = vmatmul.mubr.bf16.gmra.mxu0 %v2413
      %v2542 = vpop.f32.mrf.mxu0
      %v2543 = vadd.f32 %v2398, %v2542
      %v2544 = vpop.f32.mrf.mxu0
      %v2545 = vpop.f32.mrf.mxu0
      %v2546 = vadd.f32 %v2398, %v2545
      %v2547 = vpop.f32.mrf.mxu0
      %2548 = vmatprep.mubr.bf16.mxu0 0
      %2549 = vmatmul.mubr.bf16.gmra.mxu0 %v2416
      %v2550 = vpop.f32.mrf.mxu0
      %v2551 = vadd.f32 %v2398, %v2550
      %v2552 = vpop.f32.mrf.mxu0
      %v2553 = vpop.f32.mrf.mxu0
      %v2554 = vadd.f32 %v2398, %v2553
      %v2555 = vpop.f32.mrf.mxu0
      %2556 = vmatprep.mubr.bf16.mxu0 0
      %2557 = vmatmul.mubr.bf16.gmra.mxu0 %v2419
      %v2558 = vpop.f32.mrf.mxu0
      %v2559 = vadd.f32 %v2398, %v2558
      %v2560 = vpop.f32.mrf.mxu0
      %v2561 = vpop.f32.mrf.mxu0
      %v2562 = vadd.f32 %v2398, %v2561
      %v2563 = vpop.f32.mrf.mxu0
      %2564 = vmatprep.mubr.bf16.mxu0 0
      %2565 = vmatmul.mubr.bf16.gmra.mxu0 %v2422
      %v2566 = vpop.f32.mrf.mxu0
      %v2567 = vadd.f32 %v2398, %v2566
      %v2568 = vpop.f32.mrf.mxu0
      %v2569 = vpop.f32.mrf.mxu0
      %v2570 = vadd.f32 %v2398, %v2569
      %v2571 = vpop.f32.mrf.mxu0
      %2572 = vmatprep.mubr.bf16.mxu0 0
      %2573 = vmatmul.mubr.bf16.gmra.mxu0 %v2425
      %v2574 = vpop.f32.mrf.mxu0
      %v2575 = vadd.f32 %v2398, %v2574
      %v2576 = vpop.f32.mrf.mxu0
      %v2577 = vpop.f32.mrf.mxu0
      %v2578 = vadd.f32 %v2398, %v2577
      %v2579 = vpop.f32.mrf.mxu0
      %2580 = vmatprep.mubr.bf16.mxu0 0
      %2581 = vmatmul.mubr.bf16.gmra.mxu0 %v2428
      %v2582 = vpop.f32.mrf.mxu0
      %v2583 = vadd.f32 %v2398, %v2582
      %v2584 = vpop.f32.mrf.mxu0
      %v2585 = vpop.f32.mrf.mxu0
      %v2586 = vadd.f32 %v2398, %v2585
      %v2587 = vpop.f32.mrf.mxu0
      %2588 = vmatprep.mubr.bf16.mxu0 0
      %2589 = vmatmul.mubr.bf16.gmra.mxu0 %v2431
      %v2590 = vpop.f32.mrf.mxu0
      %v2591 = vadd.f32 %v2398, %v2590
      %v2592 = vpop.f32.mrf.mxu0
      %v2593 = vpop.f32.mrf.mxu0
      %v2594 = vadd.f32 %v2398, %v2593
      %v2595 = vpop.f32.mrf.mxu0
      %2596 = vmatprep.mubr.bf16.mxu0 0
      %2597 = vmatmul.mubr.bf16.gmra.mxu0 %v2434
      %v2598 = vpop.f32.mrf.mxu0
      %v2599 = vadd.f32 %v2398, %v2598
      %v2600 = vpop.f32.mrf.mxu0
      %v2601 = vpop.f32.mrf.mxu0
      %v2602 = vadd.f32 %v2398, %v2601
      %v2603 = vpop.f32.mrf.mxu0
      %2604 = vmatprep.mubr.bf16.mxu0 0
      %2605 = vmatmul.mubr.bf16.gmra.mxu0 %v2437
      %v2606 = vpop.f32.mrf.mxu0
      %v2607 = vadd.f32 %v2398, %v2606
      %v2608 = vpop.f32.mrf.mxu0
      %v2609 = vpop.f32.mrf.mxu0
      %v2610 = vadd.f32 %v2398, %v2609
      %v2611 = vpop.f32.mrf.mxu0
      %2612 = vmatprep.mubr.bf16.mxu0 0
      %2613 = vmatmul.mubr.bf16.gmra.mxu0 %v2440
      %v2614 = vpop.f32.mrf.mxu0
      %v2615 = vadd.f32 %v2398, %v2614
      %v2616 = vpop.f32.mrf.mxu0
      %v2617 = vpop.f32.mrf.mxu0
      %v2618 = vadd.f32 %v2398, %v2617
      %v2619 = vpop.f32.mrf.mxu0
      %2620 = vmatprep.mubr.bf16.mxu0 0
      %2621 = vmatmul.mubr.bf16.gmra.mxu0 %v2443
      %v2622 = vpop.f32.mrf.mxu0
      %v2623 = vadd.f32 %v2398, %v2622
      %v2624 = vpop.f32.mrf.mxu0
      %v2625 = vpop.f32.mrf.mxu0
      %v2626 = vadd.f32 %v2398, %v2625
      %v2627 = vpop.f32.mrf.mxu0
      %2628 = vmatprep.mubr.bf16.mxu0 0
      %2629 = vmatmul.mubr.bf16.gmra.mxu0 %v2446
      %v2630 = vpop.f32.mrf.mxu0
      %v2631 = vadd.f32 %v2398, %v2630
      %v2632 = vpop.f32.mrf.mxu0
      %v2633 = vpop.f32.mrf.mxu0
      %v2634 = vadd.f32 %v2398, %v2633
      %v2635 = vpop.f32.mrf.mxu0
      %2636 = vmatprep.mubr.bf16.mxu0 0
      %2637 = vmatmul.mubr.bf16.gmra.mxu0 %v2449
      %v2638 = vpop.f32.mrf.mxu0
      %v2639 = vadd.f32 %v2398, %v2638
      %v2640 = vpop.f32.mrf.mxu0
      %v2641 = vpop.f32.mrf.mxu0
      %v2642 = vadd.f32 %v2398, %v2641
      %v2643 = vpop.f32.mrf.mxu0
      %2644 = vmatprep.mubr.bf16.mxu0 0
      %2645 = vmatmul.mubr.bf16.gmra.mxu0 %v2452
      %v2646 = vpop.f32.mrf.mxu0
      %v2647 = vadd.f32 %v2398, %v2646
      %v2648 = vpop.f32.mrf.mxu0
      %v2649 = vpop.f32.mrf.mxu0
      %v2650 = vadd.f32 %v2398, %v2649
      %v2651 = vpop.f32.mrf.mxu0
      %2652 = vmatprep.mubr.bf16.mxu0 0
      %2653 = vmatmul.mubr.bf16.gmra.mxu0 %v2455
      %v2654 = vpop.f32.mrf.mxu0
      %v2655 = vadd.f32 %v2398, %v2654
      %v2656 = vpop.f32.mrf.mxu0
      %v2657 = vpop.f32.mrf.mxu0
      %v2658 = vadd.f32 %v2398, %v2657
      %v2659 = vpop.f32.mrf.mxu0
      %2660 = vmatprep.mubr.bf16.mxu0 0
      %2661 = vmatmul.mubr.bf16.gmra.mxu0 %v2458
      %v2662 = vpop.f32.mrf.mxu0
      %v2663 = vadd.f32 %v2398, %v2662
      %v2664 = vpop.f32.mrf.mxu0
      %v2665 = vpop.f32.mrf.mxu0
      %v2666 = vadd.f32 %v2398, %v2665
      %v2667 = vpop.f32.mrf.mxu0
      %2668 = vmatprep.mubr.bf16.mxu0 0
      %2669 = vmatmul.mubr.bf16.gmra.mxu0 %v2461
      %v2670 = vpop.f32.mrf.mxu0
      %v2671 = vadd.f32 %v2398, %v2670
      %v2672 = vpop.f32.mrf.mxu0
      %v2673 = vpop.f32.mrf.mxu0
      %v2674 = vadd.f32 %v2398, %v2673
      %v2675 = vpop.f32.mrf.mxu0
      %2676 = vmatprep.mubr.bf16.mxu0 0
      %2677 = vmatmul.mubr.bf16.gmra.mxu0 %v2464
      %v2678 = vpop.f32.mrf.mxu0
      %v2679 = vadd.f32 %v2398, %v2678
      %v2680 = vpop.f32.mrf.mxu0
      %v2681 = vpop.f32.mrf.mxu0
      %v2682 = vadd.f32 %v2398, %v2681
      %v2683 = vpop.f32.mrf.mxu0
      %2684 = vmatprep.mubr.bf16.mxu0 0
      %2685 = vmatmul.mubr.bf16.gmra.mxu0 %v2467
      %v2686 = vpop.f32.mrf.mxu0
      %v2687 = vadd.f32 %v2398, %v2686
      %v2688 = vpop.f32.mrf.mxu0
      %v2689 = vpop.f32.mrf.mxu0
      %v2690 = vadd.f32 %v2398, %v2689
      %v2691 = vpop.f32.mrf.mxu0
      %2692 = vmatprep.mubr.bf16.mxu0 0
      %2693 = vmatmul.mubr.bf16.gmra.mxu0 %v2470
      %v2694 = vpop.f32.mrf.mxu0
      %v2695 = vadd.f32 %v2398, %v2694
      %v2696 = vpop.f32.mrf.mxu0
      %v2697 = vpop.f32.mrf.mxu0
      %v2698 = vadd.f32 %v2398, %v2697
      %v2699 = vpop.f32.mrf.mxu0
      %2700 = vmatprep.mubr.bf16.mxu0 0
      %2701 = vmatmul.mubr.bf16.gmra.mxu0 %v2473
      %v2702 = vpop.f32.mrf.mxu0
      %v2703 = vadd.f32 %v2398, %v2702
      %v2704 = vpop.f32.mrf.mxu0
      %v2705 = vpop.f32.mrf.mxu0
      %v2706 = vadd.f32 %v2398, %v2705
      %v2707 = vpop.f32.mrf.mxu0
      %2708 = vmatprep.mubr.bf16.mxu0 0
      %2709 = vmatmul.mubr.bf16.gmra.mxu0 %v2476
      %v2710 = vpop.f32.mrf.mxu0
      %v2711 = vadd.f32 %v2398, %v2710
      %v2712 = vpop.f32.mrf.mxu0
      %v2713 = vpop.f32.mrf.mxu0
      %v2714 = vadd.f32 %v2398, %v2713
      %v2715 = vpop.f32.mrf.mxu0
      %2716 = vmatprep.mubr.bf16.mxu0 0
      %2717 = vmatmul.mubr.bf16.gmra.mxu0 %v2479
      %v2718 = vpop.f32.mrf.mxu0
      %v2719 = vadd.f32 %v2398, %v2718
      %v2720 = vpop.f32.mrf.mxu0
      %v2721 = vpop.f32.mrf.mxu0
      %v2722 = vadd.f32 %v2398, %v2721
      %v2723 = vpop.f32.mrf.mxu0
      %2724 = vmatprep.mubr.bf16.mxu0 0
      %2725 = vmatmul.mubr.bf16.gmra.mxu0 %v2482
      %v2726 = vpop.f32.mrf.mxu0
      %v2727 = vadd.f32 %v2398, %v2726
      %v2728 = vpop.f32.mrf.mxu0
      %v2729 = vpop.f32.mrf.mxu0
      %v2730 = vadd.f32 %v2398, %v2729
      %v2731 = vpop.f32.mrf.mxu0
      %2732 = vmatprep.mubr.bf16.mxu0 0
      %2733 = vmatmul.mubr.bf16.gmra.mxu0 %v2485
      %v2734 = vpop.f32.mrf.mxu0
      %v2735 = vadd.f32 %v2398, %v2734
      %v2736 = vpop.f32.mrf.mxu0
      %v2737 = vpop.f32.mrf.mxu0
      %v2738 = vadd.f32 %v2398, %v2737
      %v2739 = vpop.f32.mrf.mxu0
      %2740 = vmatprep.mubr.bf16.mxu0 0
      %2741 = vmatmul.mubr.bf16.gmra.mxu0 %v2488
      %v2742 = vpop.f32.mrf.mxu0
      %v2743 = vadd.f32 %v2398, %v2742
      %v2744 = vpop.f32.mrf.mxu0
      %v2745 = vpop.f32.mrf.mxu0
      %v2746 = vadd.f32 %v2398, %v2745
      %v2747 = vpop.f32.mrf.mxu0
      %2748 = vmatprep.mubr.bf16.mxu0 0
      %2749 = vmatmul.mubr.bf16.gmra.mxu0 %v2491
      %v2750 = vpop.f32.mrf.mxu0
      %v2751 = vadd.f32 %v2398, %v2750
      %v2752 = vpop.f32.mrf.mxu0
      %v2753 = vpop.f32.mrf.mxu0
      %v2754 = vadd.f32 %v2398, %v2753
      %v2755 = vpop.f32.mrf.mxu0
      %2756 = vmatprep.mubr.bf16.mxu0 0
      %2757 = vmatmul.mubr.bf16.gmra.mxu0 %v2494
      %v2758 = vpop.f32.mrf.mxu0
      %v2759 = vadd.f32 %v2398, %v2758
      %v2760 = vpop.f32.mrf.mxu0
      %v2761 = vpop.f32.mrf.mxu0
      %v2762 = vadd.f32 %v2398, %v2761
      %v2763 = vpop.f32.mrf.mxu0
      %2764 = vmatprep.mubr.bf16.mxu0 0
      %2765 = vmatmul.mubr.bf16.gmra.mxu0 %v2497
      %v2766 = vpop.f32.mrf.mxu0
      %v2767 = vadd.f32 %v2398, %v2766
      %v2768 = vpop.f32.mrf.mxu0
      %v2769 = vpop.f32.mrf.mxu0
      %v2770 = vadd.f32 %v2398, %v2769
      %v2771 = vpop.f32.mrf.mxu0
      %2772 = vmatprep.mubr.bf16.mxu0 0
      %2773 = vmatmul.mubr.bf16.gmra.mxu0 %v2500
      %v2774 = vpop.f32.mrf.mxu0
      %v2775 = vadd.f32 %v2398, %v2774
      %v2776 = vpop.f32.mrf.mxu0
      %v2777 = vpop.f32.mrf.mxu0
      %v2778 = vadd.f32 %v2398, %v2777
      %v2779 = vpop.f32.mrf.mxu0
      %2780 = vmatprep.mubr.bf16.mxu0 0
      %2781 = vmatmul.mubr.bf16.gmra.mxu0 %v2503
      %v2782 = vpop.f32.mrf.mxu0
      %v2783 = vadd.f32 %v2398, %v2782
      %v2784 = vpop.f32.mrf.mxu0
      %v2785 = vpop.f32.mrf.mxu0
      %v2786 = vadd.f32 %v2398, %v2785
      %v2787 = vpop.f32.mrf.mxu0
      %2788 = vmatprep.mubr.bf16.mxu0 0
      %2789 = vmatmul.mubr.bf16.gmra.mxu0 %v2506
      %v2790 = vpop.f32.mrf.mxu0
      %v2791 = vadd.f32 %v2398, %v2790
      %v2792 = vpop.f32.mrf.mxu0
      %v2793 = vpop.f32.mrf.mxu0
      %v2794 = vadd.f32 %v2398, %v2793
      %v2795 = vpop.f32.mrf.mxu0
      %2796 = vdwg.mxu0
      %v2797 = vld [vmem:[%s9] sm:$0x1]
      %v2799 = vlaneseq
      %v2800 = vshrl.u32 %v2799, 7
      %v2801 = vsub.s32 0, %v2800
      %v2802 = vrot.slane %v2797, %v2801
      %v2804 = vmul.f32 %v2543, %v2802
      %v2805 = vmul.f32 %v2546, %v2802
      %v2806 = vmul.f32 %v2551, %v2802
      %v2807 = vmul.f32 %v2554, %v2802
      %v2808 = vmul.f32 %v2559, %v2802
      %v2809 = vmul.f32 %v2562, %v2802
      %v2810 = vmul.f32 %v2567, %v2802
      %v2811 = vmul.f32 %v2570, %v2802
      %v2812 = vmul.f32 %v2575, %v2802
      %v2813 = vmul.f32 %v2578, %v2802
      %v2814 = vmul.f32 %v2583, %v2802
      %v2815 = vmul.f32 %v2586, %v2802
      %v2816 = vmul.f32 %v2591, %v2802
      %v2817 = vmul.f32 %v2594, %v2802
      %v2818 = vmul.f32 %v2599, %v2802
      %v2819 = vmul.f32 %v2602, %v2802
      %v2820 = vmul.f32 %v2607, %v2802
      %v2821 = vmul.f32 %v2610, %v2802
      %v2822 = vmul.f32 %v2615, %v2802
      %v2823 = vmul.f32 %v2618, %v2802
      %v2824 = vmul.f32 %v2623, %v2802
      %v2825 = vmul.f32 %v2626, %v2802
      %v2826 = vmul.f32 %v2631, %v2802
      %v2827 = vmul.f32 %v2634, %v2802
      %v2828 = vmul.f32 %v2639, %v2802
      %v2829 = vmul.f32 %v2642, %v2802
      %v2830 = vmul.f32 %v2647, %v2802
      %v2831 = vmul.f32 %v2650, %v2802
      %v2832 = vmul.f32 %v2655, %v2802
      %v2833 = vmul.f32 %v2658, %v2802
      %v2834 = vmul.f32 %v2663, %v2802
      %v2835 = vmul.f32 %v2666, %v2802
      %v2836 = vmul.f32 %v2671, %v2802
      %v2837 = vmul.f32 %v2674, %v2802
      %v2838 = vmul.f32 %v2679, %v2802
      %v2839 = vmul.f32 %v2682, %v2802
      %v2840 = vmul.f32 %v2687, %v2802
      %v2841 = vmul.f32 %v2690, %v2802
      %v2842 = vmul.f32 %v2695, %v2802
      %v2843 = vmul.f32 %v2698, %v2802
      %v2844 = vmul.f32 %v2703, %v2802
      %v2845 = vmul.f32 %v2706, %v2802
      %v2846 = vmul.f32 %v2711, %v2802
      %v2847 = vmul.f32 %v2714, %v2802
      %v2848 = vmul.f32 %v2719, %v2802
      %v2849 = vmul.f32 %v2722, %v2802
      %v2850 = vmul.f32 %v2727, %v2802
      %v2851 = vmul.f32 %v2730, %v2802
      %v2852 = vmul.f32 %v2735, %v2802
      %v2853 = vmul.f32 %v2738, %v2802
      %v2854 = vmul.f32 %v2743, %v2802
      %v2855 = vmul.f32 %v2746, %v2802
      %v2856 = vmul.f32 %v2751, %v2802
      %v2857 = vmul.f32 %v2754, %v2802
      %v2858 = vmul.f32 %v2759, %v2802
      %v2859 = vmul.f32 %v2762, %v2802
      %v2860 = vmul.f32 %v2767, %v2802
      %v2861 = vmul.f32 %v2770, %v2802
      %v2862 = vmul.f32 %v2775, %v2802
      %v2863 = vmul.f32 %v2778, %v2802
      %v2864 = vmul.f32 %v2783, %v2802
      %v2865 = vmul.f32 %v2786, %v2802
      %v2866 = vmul.f32 %v2791, %v2802
      %v2867 = vmul.f32 %v2794, %v2802
      %v2868 = vld [vmem:[%s10] sm:$0x1]
      %v2870 = vlaneseq
      %v2871 = vshrl.u32 %v2870, 7
      %v2872 = vsub.s32 0, %v2871
      %v2873 = vrot.slane %v2868, %v2872
      %v2875 = vadd.f32 %v2804, %v2873
      %v2876 = vadd.f32 %v2805, %v2873
      %v2877 = vadd.f32 %v2806, %v2873
      %v2878 = vadd.f32 %v2807, %v2873
      %v2879 = vadd.f32 %v2808, %v2873
      %v2880 = vadd.f32 %v2809, %v2873
      %v2881 = vadd.f32 %v2810, %v2873
      %v2882 = vadd.f32 %v2811, %v2873
      %v2883 = vadd.f32 %v2812, %v2873
      %v2884 = vadd.f32 %v2813, %v2873
      %v2885 = vadd.f32 %v2814, %v2873
      %v2886 = vadd.f32 %v2815, %v2873
      %v2887 = vadd.f32 %v2816, %v2873
      %v2888 = vadd.f32 %v2817, %v2873
      %v2889 = vadd.f32 %v2818, %v2873
      %v2890 = vadd.f32 %v2819, %v2873
      %v2891 = vadd.f32 %v2820, %v2873
      %v2892 = vadd.f32 %v2821, %v2873
      %v2893 = vadd.f32 %v2822, %v2873
      %v2894 = vadd.f32 %v2823, %v2873
      %v2895 = vadd.f32 %v2824, %v2873
      %v2896 = vadd.f32 %v2825, %v2873
      %v2897 = vadd.f32 %v2826, %v2873
      %v2898 = vadd.f32 %v2827, %v2873
      %v2899 = vadd.f32 %v2828, %v2873
      %v2900 = vadd.f32 %v2829, %v2873
      %v2901 = vadd.f32 %v2830, %v2873
      %v2902 = vadd.f32 %v2831, %v2873
      %v2903 = vadd.f32 %v2832, %v2873
      %v2904 = vadd.f32 %v2833, %v2873
      %v2905 = vadd.f32 %v2834, %v2873
      %v2906 = vadd.f32 %v2835, %v2873
      %v2907 = vadd.f32 %v2836, %v2873
      %v2908 = vadd.f32 %v2837, %v2873
      %v2909 = vadd.f32 %v2838, %v2873
      %v2910 = vadd.f32 %v2839, %v2873
      %v2911 = vadd.f32 %v2840, %v2873
      %v2912 = vadd.f32 %v2841, %v2873
      %v2913 = vadd.f32 %v2842, %v2873
      %v2914 = vadd.f32 %v2843, %v2873
      %v2915 = vadd.f32 %v2844, %v2873
      %v2916 = vadd.f32 %v2845, %v2873
      %v2917 = vadd.f32 %v2846, %v2873
      %v2918 = vadd.f32 %v2847, %v2873
      %v2919 = vadd.f32 %v2848, %v2873
      %v2920 = vadd.f32 %v2849, %v2873
      %v2921 = vadd.f32 %v2850, %v2873
      %v2922 = vadd.f32 %v2851, %v2873
      %v2923 = vadd.f32 %v2852, %v2873
      %v2924 = vadd.f32 %v2853, %v2873
      %v2925 = vadd.f32 %v2854, %v2873
      %v2926 = vadd.f32 %v2855, %v2873
      %v2927 = vadd.f32 %v2856, %v2873
      %v2928 = vadd.f32 %v2857, %v2873
      %v2929 = vadd.f32 %v2858, %v2873
      %v2930 = vadd.f32 %v2859, %v2873
      %v2931 = vadd.f32 %v2860, %v2873
      %v2932 = vadd.f32 %v2861, %v2873
      %v2933 = vadd.f32 %v2862, %v2873
      %v2934 = vadd.f32 %v2863, %v2873
      %v2935 = vadd.f32 %v2864, %v2873
      %v2936 = vadd.f32 %v2865, %v2873
      %v2937 = vadd.f32 %v2866, %v2873
      %v2938 = vadd.f32 %v2867, %v2873
      %v2939 = vmax.f32 %v2875, 0.0
      %v2940 = vmax.f32 %v2876, 0.0
      %v2941 = vmax.f32 %v2877, 0.0
      %v2942 = vmax.f32 %v2878, 0.0
      %v2943 = vmax.f32 %v2879, 0.0
      %v2944 = vmax.f32 %v2880, 0.0
      %v2945 = vmax.f32 %v2881, 0.0
      %v2946 = vmax.f32 %v2882, 0.0
      %v2947 = vmax.f32 %v2883, 0.0
      %v2948 = vmax.f32 %v2884, 0.0
      %v2949 = vmax.f32 %v2885, 0.0
      %v2950 = vmax.f32 %v2886, 0.0
      %v2951 = vmax.f32 %v2887, 0.0
      %v2952 = vmax.f32 %v2888, 0.0
      %v2953 = vmax.f32 %v2889, 0.0
      %v2954 = vmax.f32 %v2890, 0.0
      %v2955 = vmax.f32 %v2891, 0.0
      %v2956 = vmax.f32 %v2892, 0.0
      %v2957 = vmax.f32 %v2893, 0.0
      %v2958 = vmax.f32 %v2894, 0.0
      %v2959 = vmax.f32 %v2895, 0.0
      %v2960 = vmax.f32 %v2896, 0.0
      %v2961 = vmax.f32 %v2897, 0.0
      %v2962 = vmax.f32 %v2898, 0.0
      %v2963 = vmax.f32 %v2899, 0.0
      %v2964 = vmax.f32 %v2900, 0.0
      %v2965 = vmax.f32 %v2901, 0.0
      %v2966 = vmax.f32 %v2902, 0.0
      %v2967 = vmax.f32 %v2903, 0.0
      %v2968 = vmax.f32 %v2904, 0.0
      %v2969 = vmax.f32 %v2905, 0.0
      %v2970 = vmax.f32 %v2906, 0.0
      %v2971 = vmax.f32 %v2907, 0.0
      %v2972 = vmax.f32 %v2908, 0.0
      %v2973 = vmax.f32 %v2909, 0.0
      %v2974 = vmax.f32 %v2910, 0.0
      %v2975 = vmax.f32 %v2911, 0.0
      %v2976 = vmax.f32 %v2912, 0.0
      %v2977 = vmax.f32 %v2913, 0.0
      %v2978 = vmax.f32 %v2914, 0.0
      %v2979 = vmax.f32 %v2915, 0.0
      %v2980 = vmax.f32 %v2916, 0.0
      %v2981 = vmax.f32 %v2917, 0.0
      %v2982 = vmax.f32 %v2918, 0.0
      %v2983 = vmax.f32 %v2919, 0.0
      %v2984 = vmax.f32 %v2920, 0.0
      %v2985 = vmax.f32 %v2921, 0.0
      %v2986 = vmax.f32 %v2922, 0.0
      %v2987 = vmax.f32 %v2923, 0.0
      %v2988 = vmax.f32 %v2924, 0.0
      %v2989 = vmax.f32 %v2925, 0.0
      %v2990 = vmax.f32 %v2926, 0.0
      %v2991 = vmax.f32 %v2927, 0.0
      %v2992 = vmax.f32 %v2928, 0.0
      %v2993 = vmax.f32 %v2929, 0.0
      %v2994 = vmax.f32 %v2930, 0.0
      %v2995 = vmax.f32 %v2931, 0.0
      %v2996 = vmax.f32 %v2932, 0.0
      %v2997 = vmax.f32 %v2933, 0.0
      %v2998 = vmax.f32 %v2934, 0.0
      %v2999 = vmax.f32 %v2935, 0.0
      %v3000 = vmax.f32 %v2936, 0.0
      %v3001 = vmax.f32 %v2937, 0.0
      %v3002 = vmax.f32 %v2938, 0.0
      %3003 = vst.msk [vmem:[%s386] sm:$0xff] %vm628, %v2939
      %3004 = vst.msk [vmem:[%s386 + $0x8] sm:$0xff] %vm628, %v2940
      %3005 = vst.msk [vmem:[%s386 + $0x10] sm:$0xff] %vm628, %v2941
      %3006 = vst.msk [vmem:[%s386 + $0x18] sm:$0xff] %vm628, %v2942
      %3007 = vst.msk [vmem:[%s386 + $0x20] sm:$0xff] %vm628, %v2943
      %3008 = vst.msk [vmem:[%s386 + $0x28] sm:$0xff] %vm628, %v2944
      %3009 = vst.msk [vmem:[%s386 + $0x30] sm:$0xff] %vm628, %v2945
      %3010 = vst.msk [vmem:[%s386 + $0x38] sm:$0xff] %vm628, %v2946
      %3011 = vst.msk [vmem:[%s386 + $0x40] sm:$0xff] %vm628, %v2947
      %3012 = vst.msk [vmem:[%s386 + $0x48] sm:$0xff] %vm628, %v2948
      %3013 = vst.msk [vmem:[%s386 + $0x50] sm:$0xff] %vm628, %v2949
      %3014 = vst.msk [vmem:[%s386 + $0x58] sm:$0xff] %vm628, %v2950
      %3015 = vst.msk [vmem:[%s386 + $0x60] sm:$0xff] %vm628, %v2951
      %3016 = vst.msk [vmem:[%s386 + $0x68] sm:$0xff] %vm628, %v2952
      %3017 = vst.msk [vmem:[%s386 + $0x70] sm:$0xff] %vm628, %v2953
      %3018 = vst.msk [vmem:[%s386 + $0x78] sm:$0xff] %vm628, %v2954
      %3019 = vst.msk [vmem:[%s386 + $0x80] sm:$0xff] %vm628, %v2955
      %3020 = vst.msk [vmem:[%s386 + $0x88] sm:$0xff] %vm628, %v2956
      %3021 = vst.msk [vmem:[%s386 + $0x90] sm:$0xff] %vm628, %v2957
      %3022 = vst.msk [vmem:[%s386 + $0x98] sm:$0xff] %vm628, %v2958
      %3023 = vst.msk [vmem:[%s386 + $0xa0] sm:$0xff] %vm628, %v2959
      %3024 = vst.msk [vmem:[%s386 + $0xa8] sm:$0xff] %vm628, %v2960
      %3025 = vst.msk [vmem:[%s386 + $0xb0] sm:$0xff] %vm628, %v2961
      %3026 = vst.msk [vmem:[%s386 + $0xb8] sm:$0xff] %vm628, %v2962
      %3027 = vst.msk [vmem:[%s386 + $0xc0] sm:$0xff] %vm628, %v2963
      %3028 = vst.msk [vmem:[%s386 + $0xc8] sm:$0xff] %vm628, %v2964
      %3029 = vst.msk [vmem:[%s386 + $0xd0] sm:$0xff] %vm628, %v2965
      %3030 = vst.msk [vmem:[%s386 + $0xd8] sm:$0xff] %vm628, %v2966
      %3031 = vst.msk [vmem:[%s386 + $0xe0] sm:$0xff] %vm628, %v2967
      %3032 = vst.msk [vmem:[%s386 + $0xe8] sm:$0xff] %vm628, %v2968
      %3033 = vst.msk [vmem:[%s386 + $0xf0] sm:$0xff] %vm628, %v2969
      %3034 = vst.msk [vmem:[%s386 + $0xf8] sm:$0xff] %vm628, %v2970
      %3035 = vst.msk [vmem:[%s386 + $0x100] sm:$0xff] %vm628, %v2971
      %3036 = vst.msk [vmem:[%s386 + $0x108] sm:$0xff] %vm628, %v2972
      %3037 = vst.msk [vmem:[%s386 + $0x110] sm:$0xff] %vm628, %v2973
      %3038 = vst.msk [vmem:[%s386 + $0x118] sm:$0xff] %vm628, %v2974
      %3039 = vst.msk [vmem:[%s386 + $0x120] sm:$0xff] %vm628, %v2975
      %3040 = vst.msk [vmem:[%s386 + $0x128] sm:$0xff] %vm628, %v2976
      %3041 = vst.msk [vmem:[%s386 + $0x130] sm:$0xff] %vm628, %v2977
      %3042 = vst.msk [vmem:[%s386 + $0x138] sm:$0xff] %vm628, %v2978
      %3043 = vst.msk [vmem:[%s386 + $0x140] sm:$0xff] %vm628, %v2979
      %3044 = vst.msk [vmem:[%s386 + $0x148] sm:$0xff] %vm628, %v2980
      %3045 = vst.msk [vmem:[%s386 + $0x150] sm:$0xff] %vm628, %v2981
      %3046 = vst.msk [vmem:[%s386 + $0x158] sm:$0xff] %vm628, %v2982
      %3047 = vst.msk [vmem:[%s386 + $0x160] sm:$0xff] %vm628, %v2983
      %3048 = vst.msk [vmem:[%s386 + $0x168] sm:$0xff] %vm628, %v2984
      %3049 = vst.msk [vmem:[%s386 + $0x170] sm:$0xff] %vm628, %v2985
      %3050 = vst.msk [vmem:[%s386 + $0x178] sm:$0xff] %vm628, %v2986
      %3051 = vst.msk [vmem:[%s386 + $0x180] sm:$0xff] %vm628, %v2987
      %3052 = vst.msk [vmem:[%s386 + $0x188] sm:$0xff] %vm628, %v2988
      %3053 = vst.msk [vmem:[%s386 + $0x190] sm:$0xff] %vm628, %v2989
      %3054 = vst.msk [vmem:[%s386 + $0x198] sm:$0xff] %vm628, %v2990
      %3055 = vst.msk [vmem:[%s386 + $0x1a0] sm:$0xff] %vm628, %v2991
      %3056 = vst.msk [vmem:[%s386 + $0x1a8] sm:$0xff] %vm628, %v2992
      %3057 = vst.msk [vmem:[%s386 + $0x1b0] sm:$0xff] %vm628, %v2993
      %3058 = vst.msk [vmem:[%s386 + $0x1b8] sm:$0xff] %vm628, %v2994
      %3059 = vst.msk [vmem:[%s386 + $0x1c0] sm:$0xff] %vm628, %v2995
      %3060 = vst.msk [vmem:[%s386 + $0x1c8] sm:$0xff] %vm628, %v2996
      %3061 = vst.msk [vmem:[%s386 + $0x1d0] sm:$0xff] %vm628, %v2997
      %3062 = vst.msk [vmem:[%s386 + $0x1d8] sm:$0xff] %vm628, %v2998
      %3063 = vst.msk [vmem:[%s386 + $0x1e0] sm:$0xff] %vm628, %v2999
      %3064 = vst.msk [vmem:[%s386 + $0x1e8] sm:$0xff] %vm628, %v3000
      %3065 = vst.msk [vmem:[%s386 + $0x1f0] sm:$0xff] %vm628, %v3001
      %3066 = vst.msk [vmem:[%s386 + $0x1f8] sm:$0xff] %vm628, %v3002
      %p3067 = scmp.lt.s32.totalorder %s22, 1
      %s3068 = scalar_select %p3067, %s22, 1
      %s3069 = smul.addr %s3068, 64
      %s3070 = smul.addr %s3069, 8
      %s3071 = scalar_lea.vmem %s11, %s3070
      // Predicated region
      $region65: #{_lambda_.3} parent=63 // pred_check
        %p3072 = pneg %p276
      $region66: #{_lambda_.3} parent=63 // pred_check_branch
        %3074 = sbr.rel (%p3072) target = $region68
      $region67: #{_lambda_.3} parent=63 // pred_region
        _
      $region68: #{_lambda_.3} parent=63 // pred_fallthru
        _
    $region64: #{_lambda_.3} parent=5 // pred_fallthru
      _
    %p3075 = scmp.le.s32.totalorder 2, %s17
    // Predicated region
    $region69: #{_lambda_.3} parent=5 // pred_check
      %p3076 = pneg %p3075
    $region70: #{_lambda_.3} parent=5 // pred_check_branch
      %3078 = sbr.rel (%p3076) target = $region72
    $region71: #{_lambda_.3} parent=5 // pred_region
      %s3079 = ssub.s32 %s17, 2
      // Predicated region
      $region73: #{_lambda_.3} parent=71 // pred_check
        %p3080 = pneg %p282
      $region74: #{_lambda_.3} parent=71 // pred_check_branch
        %3082 = sbr.rel (%p3080) target = $region76
      $region75: #{_lambda_.3} parent=71 // pred_region
        %p3083 = scmp.lt.s32.totalorder %s23, 1
        %s3084 = scalar_select %p3083, %s23, 1
        %s3085 = smul.addr %s3084, 64
        %s3086 = smul.addr %s3085, 8
        %s3087 = scalar_lea.vmem %s11, %s3086
      $region76: #{_lambda_.3} parent=71 // pred_fallthru
        _
    $region72: #{_lambda_.3} parent=5 // pred_fallthru
      _
  $region6: #{_lambda_.3} parent=0 // loop_footer
    %s21 = sadd.s32 1, %s17
  $region7: #{_lambda_.3} parent=0 // loop_footer_branch
    %16 = sbr.rel target = $region3
  $region8: #{_lambda_.3} parent=0 // loop_exit
    _

// kernel: _lambda_.2
$region0: #{_lambda_.2}
  #allocation0 [shape = 'u32[]', space=smem, size = 0x4, offset = 0x4, fixed_abs, tag = 'smem constant byte address 0x4 - core index']
  #allocation1 [shape = 'u32[144,128]{1,0:T(1,128)}', space=vmem, size = 0x12000, scoped, tag = 'internal scratch']
  %s0 = inlined_call_operand.vmem [shape: bf16[2,32,32,16], index: 0, kind: input, shape index: {}]
  %s1 = inlined_call_operand.vmem [shape: bf16[16,128], index: 1, kind: input, shape index: {}]
  %s2 = inlined_call_operand.vmem [shape: f32[32,128], index: 2, kind: input, shape index: {}]
  %s3 = inlined_call_operand.vmem [shape: f32[32,1,32], index: 3, kind: input, shape index: {}]
  %s4 = inlined_call_operand.vmem [shape: f32[1,32], index: 4, kind: input, shape index: {}]
  %s5 = inlined_call_operand.vmem [shape: f32[1,32], index: 5, kind: input, shape index: {}]
  %s6 = inlined_call_operand.vmem [shape: bf16[2,16,32,32], index: 6, kind: output, shape index: {}]
  %s7 = sld [smem:[#allocation0]]
  $region57: #{_lambda_.2} parent=0
    _
  %s9 = ssub.s32 1, %s7
  %s10 = scalar_select 0, %s9, %s7
  loop: start=0, step=1, limit=4
  $region2: #{_lambda_.2} parent=0 // loop_pre_header
    _
  $region3: #{_lambda_.2} parent=0 // loop_header
    %s12 = sphi 0, %s16
    %p13 = scmp.ge.s32.totalorder %s12, 4
    %s19 = sphi 0, %s31
    %s20 = sphi 0, %s27
    %s21 = sphi 0, %s19
    %s22 = sphi 0, %s20
    %s23 = sphi 0, %s21
    %s24 = sphi 0, %s22
    %s36 = sphi 0, %s38
    %s39 = sphi 0, %s36
    %s40 = sphi 0, %s39
    %s56 = sphi 0, %s40
    %s60 = sphi 0, %s60
    %s62 = sphi 0, %s60
    %s63 = sphi 0, %s62
    %s77 = sphi 0, %s63
    %s81 = sphi 0, %s81
    %s83 = sphi 0, %s81
    %s84 = sphi 0, %s83
    %s98 = sphi 0, %s84
    %s104 = sphi 0, %s106
    %s107 = sphi 0, %s104
    %s108 = sphi 0, %s107
    %s124 = sphi 0, %s108
    %s128 = sphi 0, %s128
    %s130 = sphi 0, %s128
    %s131 = sphi 0, %s130
    %s145 = sphi 0, %s131
    %s149 = sphi 0, %s149
    %s151 = sphi 0, %s149
    %s152 = sphi 0, %s151
    %s166 = sphi 0, %s152
    %s174 = sphi 0, %s176
    %s177 = sphi 0, %s174
    %s178 = sphi 0, %s177
    %s194 = sphi 0, %s178
  $region4: #{_lambda_.2} parent=0 // loop_header_branch
    %15 = sbr.rel (%p13) target = $region8
  $region5: #{_lambda_.2} parent=0 // loop_body
    %s17 = ssub.s32 %s12, 1
    %s18 = ssub.s32 %s12, 2
    %s25 = sadd.s32 1, %s20
    %p26 = scmp.ge.s32.totalorder %s25, 1
    %s27 = scalar_select %p26, 0, %s25
    %s28 = sadd.s32 1, %s19
    %s29 = scalar_select %p26, %s28, %s19
    %p30 = scmp.ge.s32.totalorder %s29, 2
    %s31 = scalar_select %p30, 0, %s29
    %s32 = ssub.s32 %s19, %s31
    %s33 = ssub.s32 %s20, %s27
    %s34 = sor.u32 %s32, %s33
    %p35 = scmp.eq.s32.totalorder %s34, 0
    %s37 = sadd.s32 %s36, 1
    %s38 = scalar_select %p35, %s36, %s37
    %p41 = pneg %p35
    %p42 = scmp.eq.s32.totalorder %s12, 1
    %p43 = por %p41, %p42
    %p44 = scmp.ne.s32.totalorder %s36, %s39
    %p45 = scmp.eq.s32.totalorder %s12, 0
    %p46 = por %p44, %p45
    %p47 = scmp.ne.s32.totalorder %s36, %s39
    %p48 = scmp.eq.s32.totalorder %s17, 1
    %p49 = por %p47, %p48
    %p50 = scmp.ne.s32.totalorder %s39, %s40
    %p51 = scmp.eq.s32.totalorder %s17, 0
    %p52 = por %p50, %p51
    %p53 = scmp.ne.s32.totalorder %s39, %s40
    %p54 = scmp.eq.s32.totalorder %s18, 1
    %p55 = por %p53, %p54
    %p57 = scmp.ne.s32.totalorder %s40, %s56
    %p58 = scmp.eq.s32.totalorder %s18, 0
    %p59 = por %p57, %p58
    %s61 = sadd.s32 %s60, 1
    %p64 = scmp.eq.s32.totalorder %s12, 1
    %p65 = scmp.ne.s32.totalorder %s60, %s62
    %p66 = scmp.eq.s32.totalorder %s12, 0
    %p67 = por %p65, %p66
    %p68 = scmp.ne.s32.totalorder %s60, %s62
    %p69 = scmp.eq.s32.totalorder %s17, 1
    %p70 = por %p68, %p69
    %p71 = scmp.ne.s32.totalorder %s62, %s63
    %p72 = scmp.eq.s32.totalorder %s17, 0
    %p73 = por %p71, %p72
    %p74 = scmp.ne.s32.totalorder %s62, %s63
    %p75 = scmp.eq.s32.totalorder %s18, 1
    %p76 = por %p74, %p75
    %p78 = scmp.ne.s32.totalorder %s63, %s77
    %p79 = scmp.eq.s32.totalorder %s18, 0
    %p80 = por %p78, %p79
    %s82 = sadd.s32 %s81, 1
    %p85 = scmp.eq.s32.totalorder %s12, 1
    %p86 = scmp.ne.s32.totalorder %s81, %s83
    %p87 = scmp.eq.s32.totalorder %s12, 0
    %p88 = por %p86, %p87
    %p89 = scmp.ne.s32.totalorder %s81, %s83
    %p90 = scmp.eq.s32.totalorder %s17, 1
    %p91 = por %p89, %p90
    %p92 = scmp.ne.s32.totalorder %s83, %s84
    %p93 = scmp.eq.s32.totalorder %s17, 0
    %p94 = por %p92, %p93
    %p95 = scmp.ne.s32.totalorder %s83, %s84
    %p96 = scmp.eq.s32.totalorder %s18, 1
    %p97 = por %p95, %p96
    %p99 = scmp.ne.s32.totalorder %s84, %s98
    %p100 = scmp.eq.s32.totalorder %s18, 0
    %p101 = por %p99, %p100
    %s102 = ssub.s32 %s20, %s27
    %p103 = scmp.eq.s32.totalorder %s102, 0
    %s105 = sadd.s32 %s104, 1
    %s106 = scalar_select %p103, %s104, %s105
    %p109 = pneg %p103
    %p110 = scmp.eq.s32.totalorder %s12, 1
    %p111 = por %p109, %p110
    %p112 = scmp.ne.s32.totalorder %s104, %s107
    %p113 = scmp.eq.s32.totalorder %s12, 0
    %p114 = por %p112, %p113
    %p115 = scmp.ne.s32.totalorder %s104, %s107
    %p116 = scmp.eq.s32.totalorder %s17, 1
    %p117 = por %p115, %p116
    %p118 = scmp.ne.s32.totalorder %s107, %s108
    %p119 = scmp.eq.s32.totalorder %s17, 0
    %p120 = por %p118, %p119
    %p121 = scmp.ne.s32.totalorder %s107, %s108
    %p122 = scmp.eq.s32.totalorder %s18, 1
    %p123 = por %p121, %p122
    %p125 = scmp.ne.s32.totalorder %s108, %s124
    %p126 = scmp.eq.s32.totalorder %s18, 0
    %p127 = por %p125, %p126
    %s129 = sadd.s32 %s128, 1
    %p132 = scmp.eq.s32.totalorder %s12, 1
    %p133 = scmp.ne.s32.totalorder %s128, %s130
    %p134 = scmp.eq.s32.totalorder %s12, 0
    %p135 = por %p133, %p134
    %p136 = scmp.ne.s32.totalorder %s128, %s130
    %p137 = scmp.eq.s32.totalorder %s17, 1
    %p138 = por %p136, %p137
    %p139 = scmp.ne.s32.totalorder %s130, %s131
    %p140 = scmp.eq.s32.totalorder %s17, 0
    %p141 = por %p139, %p140
    %p142 = scmp.ne.s32.totalorder %s130, %s131
    %p143 = scmp.eq.s32.totalorder %s18, 1
    %p144 = por %p142, %p143
    %p146 = scmp.ne.s32.totalorder %s131, %s145
    %p147 = scmp.eq.s32.totalorder %s18, 0
    %p148 = por %p146, %p147
    %s150 = sadd.s32 %s149, 1
    %p153 = scmp.eq.s32.totalorder %s12, 1
    %p154 = scmp.ne.s32.totalorder %s149, %s151
    %p155 = scmp.eq.s32.totalorder %s12, 0
    %p156 = por %p154, %p155
    %p157 = scmp.ne.s32.totalorder %s149, %s151
    %p158 = scmp.eq.s32.totalorder %s17, 1
    %p159 = por %p157, %p158
    %p160 = scmp.ne.s32.totalorder %s151, %s152
    %p161 = scmp.eq.s32.totalorder %s17, 0
    %p162 = por %p160, %p161
    %p163 = scmp.ne.s32.totalorder %s151, %s152
    %p164 = scmp.eq.s32.totalorder %s18, 1
    %p165 = por %p163, %p164
    %p167 = scmp.ne.s32.totalorder %s152, %s166
    %p168 = scmp.eq.s32.totalorder %s18, 0
    %p169 = por %p167, %p168
    %s170 = ssub.s32 %s19, %s31
    %s171 = ssub.s32 %s20, %s27
    %s172 = sor.u32 %s170, %s171
    %p173 = scmp.eq.s32.totalorder %s172, 0
    %s175 = sadd.s32 %s174, 1
    %s176 = scalar_select %p173, %s174, %s175
    %p179 = pneg %p173
    %p180 = scmp.eq.s32.totalorder %s12, 1
    %p181 = por %p179, %p180
    %p182 = scmp.ne.s32.totalorder %s174, %s177
    %p183 = scmp.eq.s32.totalorder %s12, 0
    %p184 = por %p182, %p183
    %p185 = scmp.ne.s32.totalorder %s174, %s177
    %p186 = scmp.eq.s32.totalorder %s17, 1
    %p187 = por %p185, %p186
    %p188 = scmp.ne.s32.totalorder %s177, %s178
    %p189 = scmp.eq.s32.totalorder %s17, 0
    %p190 = por %p188, %p189
    %p191 = scmp.ne.s32.totalorder %s177, %s178
    %p192 = scmp.eq.s32.totalorder %s18, 1
    %p193 = por %p191, %p192
    %p195 = scmp.ne.s32.totalorder %s178, %s194
    %p196 = scmp.eq.s32.totalorder %s18, 0
    %p197 = por %p195, %p196
    %p198 = scmp.le.s32.totalorder 1, %s12
    %p199 = scmp.lt.s32.totalorder %s12, 3
    %p200 = pnand %p198, %p199
    %p201 = pneg %p200
    // Predicated region
    $region9: #{_lambda_.2} parent=5 // pred_check
      _
    $region10: #{_lambda_.2} parent=5 // pred_check_branch
      %203 = sbr.rel (%p200) target = $region12
    $region11: #{_lambda_.2} parent=5 // pred_region
      %s204 = ssub.s32 %s12, 1
      // Predicated region
      $region13: #{_lambda_.2} parent=11 // pred_check
        %p205 = pneg %p73
      $region14: #{_lambda_.2} parent=11 // pred_check_branch
        %207 = sbr.rel (%p205) target = $region16
      $region15: #{_lambda_.2} parent=11 // pred_region
        _
      $region16: #{_lambda_.2} parent=11 // pred_fallthru
        _
      // Predicated region
      $region17: #{_lambda_.2} parent=11 // pred_check
        %p208 = pneg %p94
      $region18: #{_lambda_.2} parent=11 // pred_check_branch
        %210 = sbr.rel (%p208) target = $region20
      $region19: #{_lambda_.2} parent=11 // pred_region
        _
      $region20: #{_lambda_.2} parent=11 // pred_fallthru
        _
      // Predicated region
      $region21: #{_lambda_.2} parent=11 // pred_check
        %p211 = pneg %p120
      $region22: #{_lambda_.2} parent=11 // pred_check_branch
        %213 = sbr.rel (%p211) target = $region24
      $region23: #{_lambda_.2} parent=11 // pred_region
        %s214 = smul.u32 32, %s22
        %p215 = scmp.lt.s32.totalorder %s214, 31
        %s216 = scalar_select %p215, %s214, 31
        %s217 = scalar_lea.vmem %s3, %s216
        %s218 = smul.u32 32, %s22
      $region24: #{_lambda_.2} parent=11 // pred_fallthru
        _
      // Predicated region
      $region25: #{_lambda_.2} parent=11 // pred_check
        %p219 = pneg %p141
      $region26: #{_lambda_.2} parent=11 // pred_check_branch
        %221 = sbr.rel (%p219) target = $region28
      $region27: #{_lambda_.2} parent=11 // pred_region
        _
      $region28: #{_lambda_.2} parent=11 // pred_fallthru
        _
      // Predicated region
      $region29: #{_lambda_.2} parent=11 // pred_check
        %p222 = pneg %p162
      $region30: #{_lambda_.2} parent=11 // pred_check_branch
        %224 = sbr.rel (%p222) target = $region32
      $region31: #{_lambda_.2} parent=11 // pred_region
        _
      $region32: #{_lambda_.2} parent=11 // pred_fallthru
        _
    $region12: #{_lambda_.2} parent=5 // pred_fallthru
      _
    %p225 = scmp.lt.s32.totalorder %s12, 2
    // Predicated region
    $region33: #{_lambda_.2} parent=5 // pred_check
      %p226 = pneg %p225
    $region34: #{_lambda_.2} parent=5 // pred_check_branch
      %228 = sbr.rel (%p226) target = $region36
    $region35: #{_lambda_.2} parent=5 // pred_region
      // Predicated region
      $region37: #{_lambda_.2} parent=35 // pred_check
        %p229 = pneg %p46
      $region38: #{_lambda_.2} parent=35 // pred_check_branch
        %231 = sbr.rel (%p229) target = $region40
      $region39: #{_lambda_.2} parent=35 // pred_region
        %s232 = smul.u32 32, %s20
        %p233 = scmp.lt.s32.totalorder %s19, 1
        %s234 = scalar_select %p233, %s19, 1
        %p235 = scmp.lt.s32.totalorder %s232, 31
        %s236 = scalar_select %p235, %s232, 31
        %s237 = smul.addr %s236, 4
        %s238 = smul.addr %s234, 128
        %s239 = sadd.s32 %s237, %s238
        %s240 = smul.addr %s239, 4
        %s241 = scalar_lea.vmem %s0, %s240
        %s242 = smul.u32 32, %s20
      $region40: #{_lambda_.2} parent=35 // pred_fallthru
        _
    $region36: #{_lambda_.2} parent=5 // pred_fallthru
      _
    %p243 = scmp.le.s32.totalorder 1, %s12
    %p244 = scmp.lt.s32.totalorder %s12, 3
    %p245 = pnand %p243, %p244
    %p246 = pneg %p245
    // Predicated region
    $region41: #{_lambda_.2} parent=5 // pred_check
      _
    $region42: #{_lambda_.2} parent=5 // pred_check_branch
      %248 = sbr.rel (%p245) target = $region44
    $region43: #{_lambda_.2} parent=5 // pred_region
      %s249 = ssub.s32 %s12, 1
      %s250 = smul.u32 32, %s22
      %p251 = scmp.lt.s32.totalorder %s21, 1
      %s252 = scalar_select %p251, %s21, 1
      %p253 = scmp.lt.s32.totalorder %s250, 31
      %s254 = scalar_select %p253, %s250, 31
      %s255 = smul.addr %s254, 4
      %s256 = smul.addr %s252, 128
      %s257 = sadd.s32 %s255, %s256
      %s258 = smul.addr %s257, 4
      %s259 = scalar_lea.vmem %s0, %s258
      %p260 = pneg %p52
      %p261 = pneg %p49
      %p262 = pneg %p73
      %p263 = pneg %p70
      %p264 = pneg %p94
      %p265 = pneg %p91
      %s266 = smul.u32 32, %s22
      %p267 = scmp.lt.s32.totalorder %s266, 31
      %s268 = scalar_select %p267, %s266, 31
      %s269 = scalar_lea.vmem %s3, %s268
      %p270 = pneg %p120
      %p271 = pneg %p117
      %p272 = pneg %p141
      %p273 = pneg %p138
      %p274 = pneg %p162
      %p275 = pneg %p159
      %p276 = pneg %p190
      %p277 = pneg %p187
      %s278 = smul.u32 16, %s22
      %p279 = scmp.lt.s32.totalorder %s21, 1
      %s280 = scalar_select %p279, %s21, 1
      %p281 = scmp.lt.s32.totalorder %s278, 15
      %s282 = scalar_select %p281, %s278, 15
      %s283 = smul.addr %s282, 4
      %s284 = smul.addr %s280, 64
      %s285 = sadd.s32 %s283, %s284
      %s286 = smul.addr %s285, 4
      %s287 = scalar_lea.vmem %s6, %s286
      %s288 = smul.u32 32, %s22
      %p289 = scmp.lt.s32.totalorder %s21, 1
      %s290 = scalar_select %p289, %s21, 1
      %p291 = scmp.lt.s32.totalorder %s288, 31
      %s292 = scalar_select %p291, %s288, 31
      %s293 = smul.addr %s292, 4
      %s294 = smul.addr %s290, 128
      %s295 = sadd.s32 %s293, %s294
      %s296 = smul.addr %s295, 4
      %s297 = scalar_lea.vmem %s0, %s296
      %s298 = smul.u32 32, %s22
      %s299 = smul.u32 32, %s22
      %p300 = scmp.lt.s32.totalorder %s299, 31
      %s301 = scalar_select %p300, %s299, 31
      %s302 = scalar_lea.vmem %s3, %s301
      %s303 = smul.u32 32, %s22
      %s304 = smul.u32 16, %s22
      %p305 = scmp.lt.s32.totalorder %s21, 1
      %s306 = scalar_select %p305, %s21, 1
      %p307 = scmp.lt.s32.totalorder %s304, 15
      %s308 = scalar_select %p307, %s304, 15
      %s309 = smul.addr %s308, 4
      %s310 = smul.addr %s306, 64
      %s311 = sadd.s32 %s309, %s310
      %s312 = smul.addr %s311, 4
      %s313 = scalar_lea.vmem %s6, %s312
      %s314 = smul.u32 16, %s22
      %v316 = vld [vmem:[%s297] sm:$0xf]
      %v317 = vld [vmem:[%s297 + $0x4] sm:$0xf]
      %v318 = vld [vmem:[%s297 + $0x8] sm:$0xf]
      %v319 = vld [vmem:[%s297 + $0xc] sm:$0xf]
      %v320 = vld [vmem:[%s297 + $0x10] sm:$0xf]
      %v321 = vld [vmem:[%s297 + $0x14] sm:$0xf]
      %v322 = vld [vmem:[%s297 + $0x18] sm:$0xf]
      %v323 = vld [vmem:[%s297 + $0x1c] sm:$0xf]
      %v324 = vld [vmem:[%s297 + $0x20] sm:$0xf]
      %v325 = vld [vmem:[%s297 + $0x24] sm:$0xf]
      %v326 = vld [vmem:[%s297 + $0x28] sm:$0xf]
      %v327 = vld [vmem:[%s297 + $0x2c] sm:$0xf]
      %v328 = vld [vmem:[%s297 + $0x30] sm:$0xf]
      %v329 = vld [vmem:[%s297 + $0x34] sm:$0xf]
      %v330 = vld [vmem:[%s297 + $0x38] sm:$0xf]
      %v331 = vld [vmem:[%s297 + $0x3c] sm:$0xf]
      %v332 = vld [vmem:[%s297 + $0x40] sm:$0xf]
      %v333 = vld [vmem:[%s297 + $0x44] sm:$0xf]
      %v334 = vld [vmem:[%s297 + $0x48] sm:$0xf]
      %v335 = vld [vmem:[%s297 + $0x4c] sm:$0xf]
      %v336 = vld [vmem:[%s297 + $0x50] sm:$0xf]
      %v337 = vld [vmem:[%s297 + $0x54] sm:$0xf]
      %v338 = vld [vmem:[%s297 + $0x58] sm:$0xf]
      %v339 = vld [vmem:[%s297 + $0x5c] sm:$0xf]
      %v340 = vld [vmem:[%s297 + $0x60] sm:$0xf]
      %v341 = vld [vmem:[%s297 + $0x64] sm:$0xf]
      %v342 = vld [vmem:[%s297 + $0x68] sm:$0xf]
      %v343 = vld [vmem:[%s297 + $0x6c] sm:$0xf]
      %v344 = vld [vmem:[%s297 + $0x70] sm:$0xf]
      %v345 = vld [vmem:[%s297 + $0x74] sm:$0xf]
      %v346 = vld [vmem:[%s297 + $0x78] sm:$0xf]
      %v347 = vld [vmem:[%s297 + $0x7c] sm:$0xf]
      %v348 = vld [vmem:[%s297 + $0x80] sm:$0xf]
      %v349 = vld [vmem:[%s297 + $0x84] sm:$0xf]
      %v350 = vld [vmem:[%s297 + $0x88] sm:$0xf]
      %v351 = vld [vmem:[%s297 + $0x8c] sm:$0xf]
      %v352 = vld [vmem:[%s297 + $0x90] sm:$0xf]
      %v353 = vld [vmem:[%s297 + $0x94] sm:$0xf]
      %v354 = vld [vmem:[%s297 + $0x98] sm:$0xf]
      %v355 = vld [vmem:[%s297 + $0x9c] sm:$0xf]
      %v356 = vld [vmem:[%s297 + $0xa0] sm:$0xf]
      %v357 = vld [vmem:[%s297 + $0xa4] sm:$0xf]
      %v358 = vld [vmem:[%s297 + $0xa8] sm:$0xf]
      %v359 = vld [vmem:[%s297 + $0xac] sm:$0xf]
      %v360 = vld [vmem:[%s297 + $0xb0] sm:$0xf]
      %v361 = vld [vmem:[%s297 + $0xb4] sm:$0xf]
      %v362 = vld [vmem:[%s297 + $0xb8] sm:$0xf]
      %v363 = vld [vmem:[%s297 + $0xbc] sm:$0xf]
      %v364 = vld [vmem:[%s297 + $0xc0] sm:$0xf]
      %v365 = vld [vmem:[%s297 + $0xc4] sm:$0xf]
      %v366 = vld [vmem:[%s297 + $0xc8] sm:$0xf]
      %v367 = vld [vmem:[%s297 + $0xcc] sm:$0xf]
      %v368 = vld [vmem:[%s297 + $0xd0] sm:$0xf]
      %v369 = vld [vmem:[%s297 + $0xd4] sm:$0xf]
      %v370 = vld [vmem:[%s297 + $0xd8] sm:$0xf]
      %v371 = vld [vmem:[%s297 + $0xdc] sm:$0xf]
      %v372 = vld [vmem:[%s297 + $0xe0] sm:$0xf]
      %v373 = vld [vmem:[%s297 + $0xe4] sm:$0xf]
      %v374 = vld [vmem:[%s297 + $0xe8] sm:$0xf]
      %v375 = vld [vmem:[%s297 + $0xec] sm:$0xf]
      %v376 = vld [vmem:[%s297 + $0xf0] sm:$0xf]
      %v377 = vld [vmem:[%s297 + $0xf4] sm:$0xf]
      %v378 = vld [vmem:[%s297 + $0xf8] sm:$0xf]
      %v379 = vld [vmem:[%s297 + $0xfc] sm:$0xf]
      %v380 = vld [vmem:[%s297 + $0x100] sm:$0xf]
      %v381 = vld [vmem:[%s297 + $0x104] sm:$0xf]
      %v382 = vld [vmem:[%s297 + $0x108] sm:$0xf]
      %v383 = vld [vmem:[%s297 + $0x10c] sm:$0xf]
      %v384 = vld [vmem:[%s297 + $0x110] sm:$0xf]
      %v385 = vld [vmem:[%s297 + $0x114] sm:$0xf]
      %v386 = vld [vmem:[%s297 + $0x118] sm:$0xf]
      %v387 = vld [vmem:[%s297 + $0x11c] sm:$0xf]
      %v388 = vld [vmem:[%s297 + $0x120] sm:$0xf]
      %v389 = vld [vmem:[%s297 + $0x124] sm:$0xf]
      %v390 = vld [vmem:[%s297 + $0x128] sm:$0xf]
      %v391 = vld [vmem:[%s297 + $0x12c] sm:$0xf]
      %v392 = vld [vmem:[%s297 + $0x130] sm:$0xf]
      %v393 = vld [vmem:[%s297 + $0x134] sm:$0xf]
      %v394 = vld [vmem:[%s297 + $0x138] sm:$0xf]
      %v395 = vld [vmem:[%s297 + $0x13c] sm:$0xf]
      %v396 = vld [vmem:[%s297 + $0x140] sm:$0xf]
      %v397 = vld [vmem:[%s297 + $0x144] sm:$0xf]
      %v398 = vld [vmem:[%s297 + $0x148] sm:$0xf]
      %v399 = vld [vmem:[%s297 + $0x14c] sm:$0xf]
      %v400 = vld [vmem:[%s297 + $0x150] sm:$0xf]
      %v401 = vld [vmem:[%s297 + $0x154] sm:$0xf]
      %v402 = vld [vmem:[%s297 + $0x158] sm:$0xf]
      %v403 = vld [vmem:[%s297 + $0x15c] sm:$0xf]
      %v404 = vld [vmem:[%s297 + $0x160] sm:$0xf]
      %v405 = vld [vmem:[%s297 + $0x164] sm:$0xf]
      %v406 = vld [vmem:[%s297 + $0x168] sm:$0xf]
      %v407 = vld [vmem:[%s297 + $0x16c] sm:$0xf]
      %v408 = vld [vmem:[%s297 + $0x170] sm:$0xf]
      %v409 = vld [vmem:[%s297 + $0x174] sm:$0xf]
      %v410 = vld [vmem:[%s297 + $0x178] sm:$0xf]
      %v411 = vld [vmem:[%s297 + $0x17c] sm:$0xf]
      %v412 = vld [vmem:[%s297 + $0x180] sm:$0xf]
      %v413 = vld [vmem:[%s297 + $0x184] sm:$0xf]
      %v414 = vld [vmem:[%s297 + $0x188] sm:$0xf]
      %v415 = vld [vmem:[%s297 + $0x18c] sm:$0xf]
      %v416 = vld [vmem:[%s297 + $0x190] sm:$0xf]
      %v417 = vld [vmem:[%s297 + $0x194] sm:$0xf]
      %v418 = vld [vmem:[%s297 + $0x198] sm:$0xf]
      %v419 = vld [vmem:[%s297 + $0x19c] sm:$0xf]
      %v420 = vld [vmem:[%s297 + $0x1a0] sm:$0xf]
      %v421 = vld [vmem:[%s297 + $0x1a4] sm:$0xf]
      %v422 = vld [vmem:[%s297 + $0x1a8] sm:$0xf]
      %v423 = vld [vmem:[%s297 + $0x1ac] sm:$0xf]
      %v424 = vld [vmem:[%s297 + $0x1b0] sm:$0xf]
      %v425 = vld [vmem:[%s297 + $0x1b4] sm:$0xf]
      %v426 = vld [vmem:[%s297 + $0x1b8] sm:$0xf]
      %v427 = vld [vmem:[%s297 + $0x1bc] sm:$0xf]
      %v428 = vld [vmem:[%s297 + $0x1c0] sm:$0xf]
      %v429 = vld [vmem:[%s297 + $0x1c4] sm:$0xf]
      %v430 = vld [vmem:[%s297 + $0x1c8] sm:$0xf]
      %v431 = vld [vmem:[%s297 + $0x1cc] sm:$0xf]
      %v432 = vld [vmem:[%s297 + $0x1d0] sm:$0xf]
      %v433 = vld [vmem:[%s297 + $0x1d4] sm:$0xf]
      %v434 = vld [vmem:[%s297 + $0x1d8] sm:$0xf]
      %v435 = vld [vmem:[%s297 + $0x1dc] sm:$0xf]
      %v436 = vld [vmem:[%s297 + $0x1e0] sm:$0xf]
      %v437 = vld [vmem:[%s297 + $0x1e4] sm:$0xf]
      %v438 = vld [vmem:[%s297 + $0x1e8] sm:$0xf]
      %v439 = vld [vmem:[%s297 + $0x1ec] sm:$0xf]
      %v440 = vld [vmem:[%s297 + $0x1f0] sm:$0xf]
      %v441 = vld [vmem:[%s297 + $0x1f4] sm:$0xf]
      %v442 = vld [vmem:[%s297 + $0x1f8] sm:$0xf]
      %v443 = vld [vmem:[%s297 + $0x1fc] sm:$0xf]
      %v444 = vld [vmem:[%s1] sm:$0xf]
      %v445 = vld [vmem:[%s1 + $0x4] sm:$0xf]
      %v574 = vunpack.c.l.b16 %v316
      %v575 = vunpack.c.l.b16 %v317
      %v576 = vunpack.c.l.b16 %v318
      %v577 = vunpack.c.l.b16 %v319
      %v578 = vunpack.c.l.b16 %v320
      %v579 = vunpack.c.l.b16 %v321
      %v580 = vunpack.c.l.b16 %v322
      %v581 = vunpack.c.l.b16 %v323
      %v582 = vunpack.c.l.b16 %v324
      %v583 = vunpack.c.l.b16 %v325
      %v584 = vunpack.c.l.b16 %v326
      %v585 = vunpack.c.l.b16 %v327
      %v586 = vunpack.c.l.b16 %v328
      %v587 = vunpack.c.l.b16 %v329
      %v588 = vunpack.c.l.b16 %v330
      %v589 = vunpack.c.l.b16 %v331
      %v590 = vunpack.c.l.b16 %v332
      %v591 = vunpack.c.l.b16 %v333
      %v592 = vunpack.c.l.b16 %v334
      %v593 = vunpack.c.l.b16 %v335
      %v594 = vunpack.c.l.b16 %v336
      %v595 = vunpack.c.l.b16 %v337
      %v596 = vunpack.c.l.b16 %v338
      %v597 = vunpack.c.l.b16 %v339
      %v598 = vunpack.c.l.b16 %v340
      %v599 = vunpack.c.l.b16 %v341
      %v600 = vunpack.c.l.b16 %v342
      %v601 = vunpack.c.l.b16 %v343
      %v602 = vunpack.c.l.b16 %v344
      %v603 = vunpack.c.l.b16 %v345
      %v604 = vunpack.c.l.b16 %v346
      %v605 = vunpack.c.l.b16 %v347
      %v606 = vunpack.c.l.b16 %v348
      %v607 = vunpack.c.l.b16 %v349
      %v608 = vunpack.c.l.b16 %v350
      %v609 = vunpack.c.l.b16 %v351
      %v610 = vunpack.c.l.b16 %v352
      %v611 = vunpack.c.l.b16 %v353
      %v612 = vunpack.c.l.b16 %v354
      %v613 = vunpack.c.l.b16 %v355
      %v614 = vunpack.c.l.b16 %v356
      %v615 = vunpack.c.l.b16 %v357
      %v616 = vunpack.c.l.b16 %v358
      %v617 = vunpack.c.l.b16 %v359
      %v618 = vunpack.c.l.b16 %v360
      %v619 = vunpack.c.l.b16 %v361
      %v620 = vunpack.c.l.b16 %v362
      %v621 = vunpack.c.l.b16 %v363
      %v622 = vunpack.c.l.b16 %v364
      %v623 = vunpack.c.l.b16 %v365
      %v624 = vunpack.c.l.b16 %v366
      %v625 = vunpack.c.l.b16 %v367
      %v626 = vunpack.c.l.b16 %v368
      %v627 = vunpack.c.l.b16 %v369
      %v628 = vunpack.c.l.b16 %v370
      %v629 = vunpack.c.l.b16 %v371
      %v630 = vunpack.c.l.b16 %v372
      %v631 = vunpack.c.l.b16 %v373
      %v632 = vunpack.c.l.b16 %v374
      %v633 = vunpack.c.l.b16 %v375
      %v634 = vunpack.c.l.b16 %v376
      %v635 = vunpack.c.l.b16 %v377
      %v636 = vunpack.c.l.b16 %v378
      %v637 = vunpack.c.l.b16 %v379
      %v638 = vunpack.c.l.b16 %v380
      %v639 = vunpack.c.l.b16 %v381
      %v640 = vunpack.c.l.b16 %v382
      %v641 = vunpack.c.l.b16 %v383
      %v642 = vunpack.c.l.b16 %v384
      %v643 = vunpack.c.l.b16 %v385
      %v644 = vunpack.c.l.b16 %v386
      %v645 = vunpack.c.l.b16 %v387
      %v646 = vunpack.c.l.b16 %v388
      %v647 = vunpack.c.l.b16 %v389
      %v648 = vunpack.c.l.b16 %v390
      %v649 = vunpack.c.l.b16 %v391
      %v650 = vunpack.c.l.b16 %v392
      %v651 = vunpack.c.l.b16 %v393
      %v652 = vunpack.c.l.b16 %v394
      %v653 = vunpack.c.l.b16 %v395
      %v654 = vunpack.c.l.b16 %v396
      %v655 = vunpack.c.l.b16 %v397
      %v656 = vunpack.c.l.b16 %v398
      %v657 = vunpack.c.l.b16 %v399
      %v658 = vunpack.c.l.b16 %v400
      %v659 = vunpack.c.l.b16 %v401
      %v660 = vunpack.c.l.b16 %v402
      %v661 = vunpack.c.l.b16 %v403
      %v662 = vunpack.c.l.b16 %v404
      %v663 = vunpack.c.l.b16 %v405
      %v664 = vunpack.c.l.b16 %v406
      %v665 = vunpack.c.l.b16 %v407
      %v666 = vunpack.c.l.b16 %v408
      %v667 = vunpack.c.l.b16 %v409
      %v668 = vunpack.c.l.b16 %v410
      %v669 = vunpack.c.l.b16 %v411
      %v670 = vunpack.c.l.b16 %v412
      %v671 = vunpack.c.l.b16 %v413
      %v672 = vunpack.c.l.b16 %v414
      %v673 = vunpack.c.l.b16 %v415
      %v674 = vunpack.c.l.b16 %v416
      %v675 = vunpack.c.l.b16 %v417
      %v676 = vunpack.c.l.b16 %v418
      %v677 = vunpack.c.l.b16 %v419
      %v678 = vunpack.c.l.b16 %v420
      %v679 = vunpack.c.l.b16 %v421
      %v680 = vunpack.c.l.b16 %v422
      %v681 = vunpack.c.l.b16 %v423
      %v682 = vunpack.c.l.b16 %v424
      %v683 = vunpack.c.l.b16 %v425
      %v684 = vunpack.c.l.b16 %v426
      %v685 = vunpack.c.l.b16 %v427
      %v686 = vunpack.c.l.b16 %v428
      %v687 = vunpack.c.l.b16 %v429
      %v688 = vunpack.c.l.b16 %v430
      %v689 = vunpack.c.l.b16 %v431
      %v690 = vunpack.c.l.b16 %v432
      %v691 = vunpack.c.l.b16 %v433
      %v692 = vunpack.c.l.b16 %v434
      %v693 = vunpack.c.l.b16 %v435
      %v694 = vunpack.c.l.b16 %v436
      %v695 = vunpack.c.l.b16 %v437
      %v696 = vunpack.c.l.b16 %v438
      %v697 = vunpack.c.l.b16 %v439
      %v698 = vunpack.c.l.b16 %v440
      %v699 = vunpack.c.l.b16 %v441
      %v700 = vunpack.c.l.b16 %v442
      %v701 = vunpack.c.l.b16 %v443
      %v702 = vpack.c.b16 %v575, %v574
      %v703 = vpack.c.b16 %v577, %v576
      %v704 = vpack.c.b16 %v579, %v578
      %v705 = vpack.c.b16 %v581, %v580
      %v706 = vpack.c.b16 %v583, %v582
      %v707 = vpack.c.b16 %v585, %v584
      %v708 = vpack.c.b16 %v587, %v586
      %v709 = vpack.c.b16 %v589, %v588
      %v710 = vpack.c.b16 %v591, %v590
      %v711 = vpack.c.b16 %v593, %v592
      %v712 = vpack.c.b16 %v595, %v594
      %v713 = vpack.c.b16 %v597, %v596
      %v714 = vpack.c.b16 %v599, %v598
      %v715 = vpack.c.b16 %v601, %v600
      %v716 = vpack.c.b16 %v603, %v602
      %v717 = vpack.c.b16 %v605, %v604
      %v718 = vpack.c.b16 %v607, %v606
      %v719 = vpack.c.b16 %v609, %v608
      %v720 = vpack.c.b16 %v611, %v610
      %v721 = vpack.c.b16 %v613, %v612
      %v722 = vpack.c.b16 %v615, %v614
      %v723 = vpack.c.b16 %v617, %v616
      %v724 = vpack.c.b16 %v619, %v618
      %v725 = vpack.c.b16 %v621, %v620
      %v726 = vpack.c.b16 %v623, %v622
      %v727 = vpack.c.b16 %v625, %v624
      %v728 = vpack.c.b16 %v627, %v626
      %v729 = vpack.c.b16 %v629, %v628
      %v730 = vpack.c.b16 %v631, %v630
      %v731 = vpack.c.b16 %v633, %v632
      %v732 = vpack.c.b16 %v635, %v634
      %v733 = vpack.c.b16 %v637, %v636
      %v734 = vpack.c.b16 %v639, %v638
      %v735 = vpack.c.b16 %v641, %v640
      %v736 = vpack.c.b16 %v643, %v642
      %v737 = vpack.c.b16 %v645, %v644
      %v738 = vpack.c.b16 %v647, %v646
      %v739 = vpack.c.b16 %v649, %v648
      %v740 = vpack.c.b16 %v651, %v650
      %v741 = vpack.c.b16 %v653, %v652
      %v742 = vpack.c.b16 %v655, %v654
      %v743 = vpack.c.b16 %v657, %v656
      %v744 = vpack.c.b16 %v659, %v658
      %v745 = vpack.c.b16 %v661, %v660
      %v746 = vpack.c.b16 %v663, %v662
      %v747 = vpack.c.b16 %v665, %v664
      %v748 = vpack.c.b16 %v667, %v666
      %v749 = vpack.c.b16 %v669, %v668
      %v750 = vpack.c.b16 %v671, %v670
      %v751 = vpack.c.b16 %v673, %v672
      %v752 = vpack.c.b16 %v675, %v674
      %v753 = vpack.c.b16 %v677, %v676
      %v754 = vpack.c.b16 %v679, %v678
      %v755 = vpack.c.b16 %v681, %v680
      %v756 = vpack.c.b16 %v683, %v682
      %v757 = vpack.c.b16 %v685, %v684
      %v758 = vpack.c.b16 %v687, %v686
      %v759 = vpack.c.b16 %v689, %v688
      %v760 = vpack.c.b16 %v691, %v690
      %v761 = vpack.c.b16 %v693, %v692
      %v762 = vpack.c.b16 %v695, %v694
      %v763 = vpack.c.b16 %v697, %v696
      %v764 = vpack.c.b16 %v699, %v698
      %v765 = vpack.c.b16 %v701, %v700
      %v768 = vunpack.c.l.b16 %v444
      %v769 = vunpack.c.l.b16 %v445
      %v770 = vpack.c.b16 %v769, %v768
      %vm772 = vcmask 130048
      %v774 = vsel %vm772, %v702, 0
      %v777 = vsel %vm772, %v703, 0
      %v780 = vsel %vm772, %v704, 0
      %v783 = vsel %vm772, %v705, 0
      %v786 = vsel %vm772, %v706, 0
      %v789 = vsel %vm772, %v707, 0
      %v792 = vsel %vm772, %v708, 0
      %v795 = vsel %vm772, %v709, 0
      %v798 = vsel %vm772, %v710, 0
      %v801 = vsel %vm772, %v711, 0
      %v804 = vsel %vm772, %v712, 0
      %v807 = vsel %vm772, %v713, 0
      %v810 = vsel %vm772, %v714, 0
      %v813 = vsel %vm772, %v715, 0
      %v816 = vsel %vm772, %v716, 0
      %v819 = vsel %vm772, %v717, 0
      %v822 = vsel %vm772, %v718, 0
      %v825 = vsel %vm772, %v719, 0
      %v828 = vsel %vm772, %v720, 0
      %v831 = vsel %vm772, %v721, 0
      %v834 = vsel %vm772, %v722, 0
      %v837 = vsel %vm772, %v723, 0
      %v840 = vsel %vm772, %v724, 0
      %v843 = vsel %vm772, %v725, 0
      %v846 = vsel %vm772, %v726, 0
      %v849 = vsel %vm772, %v727, 0
      %v852 = vsel %vm772, %v728, 0
      %v855 = vsel %vm772, %v729, 0
      %v858 = vsel %vm772, %v730, 0
      %v861 = vsel %vm772, %v731, 0
      %v864 = vsel %vm772, %v732, 0
      %v867 = vsel %vm772, %v733, 0
      %v870 = vsel %vm772, %v734, 0
      %v873 = vsel %vm772, %v735, 0
      %v876 = vsel %vm772, %v736, 0
      %v879 = vsel %vm772, %v737, 0
      %v882 = vsel %vm772, %v738, 0
      %v885 = vsel %vm772, %v739, 0
      %v888 = vsel %vm772, %v740, 0
      %v891 = vsel %vm772, %v741, 0
      %v894 = vsel %vm772, %v742, 0
      %v897 = vsel %vm772, %v743, 0
      %v900 = vsel %vm772, %v744, 0
      %v903 = vsel %vm772, %v745, 0
      %v906 = vsel %vm772, %v746, 0
      %v909 = vsel %vm772, %v747, 0
      %v912 = vsel %vm772, %v748, 0
      %v915 = vsel %vm772, %v749, 0
      %v918 = vsel %vm772, %v750, 0
      %v921 = vsel %vm772, %v751, 0
      %v924 = vsel %vm772, %v752, 0
      %v927 = vsel %vm772, %v753, 0
      %v930 = vsel %vm772, %v754, 0
      %v933 = vsel %vm772, %v755, 0
      %v936 = vsel %vm772, %v756, 0
      %v939 = vsel %vm772, %v757, 0
      %v942 = vsel %vm772, %v758, 0
      %v945 = vsel %vm772, %v759, 0
      %v948 = vsel %vm772, %v760, 0
      %v951 = vsel %vm772, %v761, 0
      %v954 = vsel %vm772, %v762, 0
      %v957 = vsel %vm772, %v763, 0
      %v960 = vsel %vm772, %v764, 0
      %v963 = vsel %vm772, %v765, 0
      %965 = vmatprep.subr.bf16.mxu0 0
      %966 = vmatpush1.bf16.msra.mxu0 0
      %967 = vmatprep.subr.bf16.mxu0 0
      %968 = vmatpush1.bf16.msra.mxu0 0
      %969 = vmatprep.subr.bf16.mxu0 0
      %970 = vmatpush1.bf16.msra.mxu0 0
      %971 = vmatprep.subr.bf16.mxu0 0
      %972 = vmatpush1.bf16.msra.mxu0 0
      %973 = vmatprep.subr.bf16.mxu0 0
      %974 = vmatpush1.bf16.msra.mxu0 0
      %975 = vmatprep.subr.bf16.mxu0 0
      %976 = vmatpush1.bf16.msra.mxu0 0
      %977 = vmatprep.subr.bf16.mxu0 0
      %978 = vmatpush1.bf16.msra.mxu0 0
      %979 = vmatprep.subr.bf16.mxu0 0
      %980 = vmatpush1.bf16.msra.mxu0 %v770
      %981 = vmatprep.subr.bf16.mxu0 0
      %982 = vmatpush2.bf16.msra.mxu0 0
      %983 = vmatprep.subr.bf16.mxu0 0
      %984 = vmatpush2.bf16.msra.mxu0 0
      %985 = vmatprep.subr.bf16.mxu0 0
      %986 = vmatpush2.bf16.msra.mxu0 0
      %987 = vmatprep.subr.bf16.mxu0 0
      %988 = vmatpush2.bf16.msra.mxu0 0
      %989 = vmatprep.subr.bf16.mxu0 0
      %990 = vmatpush2.bf16.msra.mxu0 0
      %991 = vmatprep.subr.bf16.mxu0 0
      %992 = vmatpush2.bf16.msra.mxu0 0
      %993 = vmatprep.subr.bf16.mxu0 0
      %994 = vmatpush2.bf16.msra.mxu0 0
      %995 = vmatprep.subr.bf16.mxu0 0
      %996 = vmatpush2.bf16.msra.mxu0 0
      %997 = vmatprep.mubr.bf16.mxu0 0
      %998 = vmatmul.mubr.bf16.gmra.mxu0 %v774
      %v999 = vpop.f32.mrf.mxu0
      %v1000 = vadd.f32 0.0, %v999
      %v1001 = vpop.f32.mrf.mxu0
      %v1002 = vpop.f32.mrf.mxu0
      %v1003 = vadd.f32 0.0, %v1002
      %v1004 = vpop.f32.mrf.mxu0
      %1005 = vmatprep.mubr.bf16.mxu0 0
      %1006 = vmatmul.mubr.bf16.gmra.mxu0 %v777
      %v1007 = vpop.f32.mrf.mxu0
      %v1008 = vadd.f32 0.0, %v1007
      %v1009 = vpop.f32.mrf.mxu0
      %v1010 = vpop.f32.mrf.mxu0
      %v1011 = vadd.f32 0.0, %v1010
      %v1012 = vpop.f32.mrf.mxu0
      %1013 = vmatprep.mubr.bf16.mxu0 0
      %1014 = vmatmul.mubr.bf16.gmra.mxu0 %v780
      %v1015 = vpop.f32.mrf.mxu0
      %v1016 = vadd.f32 0.0, %v1015
      %v1017 = vpop.f32.mrf.mxu0
      %v1018 = vpop.f32.mrf.mxu0
      %v1019 = vadd.f32 0.0, %v1018
      %v1020 = vpop.f32.mrf.mxu0
      %1021 = vmatprep.mubr.bf16.mxu0 0
      %1022 = vmatmul.mubr.bf16.gmra.mxu0 %v783
      %v1023 = vpop.f32.mrf.mxu0
      %v1024 = vadd.f32 0.0, %v1023
      %v1025 = vpop.f32.mrf.mxu0
      %v1026 = vpop.f32.mrf.mxu0
      %v1027 = vadd.f32 0.0, %v1026
      %v1028 = vpop.f32.mrf.mxu0
      %1029 = vmatprep.mubr.bf16.mxu0 0
      %1030 = vmatmul.mubr.bf16.gmra.mxu0 %v786
      %v1031 = vpop.f32.mrf.mxu0
      %v1032 = vadd.f32 0.0, %v1031
      %v1033 = vpop.f32.mrf.mxu0
      %v1034 = vpop.f32.mrf.mxu0
      %v1035 = vadd.f32 0.0, %v1034
      %v1036 = vpop.f32.mrf.mxu0
      %1037 = vmatprep.mubr.bf16.mxu0 0
      %1038 = vmatmul.mubr.bf16.gmra.mxu0 %v789
      %v1039 = vpop.f32.mrf.mxu0
      %v1040 = vadd.f32 0.0, %v1039
      %v1041 = vpop.f32.mrf.mxu0
      %v1042 = vpop.f32.mrf.mxu0
      %v1043 = vadd.f32 0.0, %v1042
      %v1044 = vpop.f32.mrf.mxu0
      %1045 = vmatprep.mubr.bf16.mxu0 0
      %1046 = vmatmul.mubr.bf16.gmra.mxu0 %v792
      %v1047 = vpop.f32.mrf.mxu0
      %v1048 = vadd.f32 0.0, %v1047
      %v1049 = vpop.f32.mrf.mxu0
      %v1050 = vpop.f32.mrf.mxu0
      %v1051 = vadd.f32 0.0, %v1050
      %v1052 = vpop.f32.mrf.mxu0
      %1053 = vmatprep.mubr.bf16.mxu0 0
      %1054 = vmatmul.mubr.bf16.gmra.mxu0 %v795
      %v1055 = vpop.f32.mrf.mxu0
      %v1056 = vadd.f32 0.0, %v1055
      %v1057 = vpop.f32.mrf.mxu0
      %v1058 = vpop.f32.mrf.mxu0
      %v1059 = vadd.f32 0.0, %v1058
      %v1060 = vpop.f32.mrf.mxu0
      %1061 = vmatprep.mubr.bf16.mxu0 0
      %1062 = vmatmul.mubr.bf16.gmra.mxu0 %v798
      %v1063 = vpop.f32.mrf.mxu0
      %v1064 = vadd.f32 0.0, %v1063
      %v1065 = vpop.f32.mrf.mxu0
      %v1066 = vpop.f32.mrf.mxu0
      %v1067 = vadd.f32 0.0, %v1066
      %v1068 = vpop.f32.mrf.mxu0
      %1069 = vmatprep.mubr.bf16.mxu0 0
      %1070 = vmatmul.mubr.bf16.gmra.mxu0 %v801
      %v1071 = vpop.f32.mrf.mxu0
      %v1072 = vadd.f32 0.0, %v1071
      %v1073 = vpop.f32.mrf.mxu0
      %v1074 = vpop.f32.mrf.mxu0
      %v1075 = vadd.f32 0.0, %v1074
      %v1076 = vpop.f32.mrf.mxu0
      %1077 = vmatprep.mubr.bf16.mxu0 0
      %1078 = vmatmul.mubr.bf16.gmra.mxu0 %v804
      %v1079 = vpop.f32.mrf.mxu0
      %v1080 = vadd.f32 0.0, %v1079
      %v1081 = vpop.f32.mrf.mxu0
      %v1082 = vpop.f32.mrf.mxu0
      %v1083 = vadd.f32 0.0, %v1082
      %v1084 = vpop.f32.mrf.mxu0
      %1085 = vmatprep.mubr.bf16.mxu0 0
      %1086 = vmatmul.mubr.bf16.gmra.mxu0 %v807
      %v1087 = vpop.f32.mrf.mxu0
      %v1088 = vadd.f32 0.0, %v1087
      %v1089 = vpop.f32.mrf.mxu0
      %v1090 = vpop.f32.mrf.mxu0
      %v1091 = vadd.f32 0.0, %v1090
      %v1092 = vpop.f32.mrf.mxu0
      %1093 = vmatprep.mubr.bf16.mxu0 0
      %1094 = vmatmul.mubr.bf16.gmra.mxu0 %v810
      %v1095 = vpop.f32.mrf.mxu0
      %v1096 = vadd.f32 0.0, %v1095
      %v1097 = vpop.f32.mrf.mxu0
      %v1098 = vpop.f32.mrf.mxu0
      %v1099 = vadd.f32 0.0, %v1098
      %v1100 = vpop.f32.mrf.mxu0
      %1101 = vmatprep.mubr.bf16.mxu0 0
      %1102 = vmatmul.mubr.bf16.gmra.mxu0 %v813
      %v1103 = vpop.f32.mrf.mxu0
      %v1104 = vadd.f32 0.0, %v1103
      %v1105 = vpop.f32.mrf.mxu0
      %v1106 = vpop.f32.mrf.mxu0
      %v1107 = vadd.f32 0.0, %v1106
      %v1108 = vpop.f32.mrf.mxu0
      %1109 = vmatprep.mubr.bf16.mxu0 0
      %1110 = vmatmul.mubr.bf16.gmra.mxu0 %v816
      %v1111 = vpop.f32.mrf.mxu0
      %v1112 = vadd.f32 0.0, %v1111
      %v1113 = vpop.f32.mrf.mxu0
      %v1114 = vpop.f32.mrf.mxu0
      %v1115 = vadd.f32 0.0, %v1114
      %v1116 = vpop.f32.mrf.mxu0
      %1117 = vmatprep.mubr.bf16.mxu0 0
      %1118 = vmatmul.mubr.bf16.gmra.mxu0 %v819
      %v1119 = vpop.f32.mrf.mxu0
      %v1120 = vadd.f32 0.0, %v1119
      %v1121 = vpop.f32.mrf.mxu0
      %v1122 = vpop.f32.mrf.mxu0
      %v1123 = vadd.f32 0.0, %v1122
      %v1124 = vpop.f32.mrf.mxu0
      %1125 = vmatprep.mubr.bf16.mxu0 0
      %1126 = vmatmul.mubr.bf16.gmra.mxu0 %v822
      %v1127 = vpop.f32.mrf.mxu0
      %v1128 = vadd.f32 0.0, %v1127
      %v1129 = vpop.f32.mrf.mxu0
      %v1130 = vpop.f32.mrf.mxu0
      %v1131 = vadd.f32 0.0, %v1130
      %v1132 = vpop.f32.mrf.mxu0
      %1133 = vmatprep.mubr.bf16.mxu0 0
      %1134 = vmatmul.mubr.bf16.gmra.mxu0 %v825
      %v1135 = vpop.f32.mrf.mxu0
      %v1136 = vadd.f32 0.0, %v1135
      %v1137 = vpop.f32.mrf.mxu0
      %v1138 = vpop.f32.mrf.mxu0
      %v1139 = vadd.f32 0.0, %v1138
      %v1140 = vpop.f32.mrf.mxu0
      %1141 = vmatprep.mubr.bf16.mxu0 0
      %1142 = vmatmul.mubr.bf16.gmra.mxu0 %v828
      %v1143 = vpop.f32.mrf.mxu0
      %v1144 = vadd.f32 0.0, %v1143
      %v1145 = vpop.f32.mrf.mxu0
      %v1146 = vpop.f32.mrf.mxu0
      %v1147 = vadd.f32 0.0, %v1146
      %v1148 = vpop.f32.mrf.mxu0
      %1149 = vmatprep.mubr.bf16.mxu0 0
      %1150 = vmatmul.mubr.bf16.gmra.mxu0 %v831
      %v1151 = vpop.f32.mrf.mxu0
      %v1152 = vadd.f32 0.0, %v1151
      %v1153 = vpop.f32.mrf.mxu0
      %v1154 = vpop.f32.mrf.mxu0
      %v1155 = vadd.f32 0.0, %v1154
      %v1156 = vpop.f32.mrf.mxu0
      %1157 = vmatprep.mubr.bf16.mxu0 0
      %1158 = vmatmul.mubr.bf16.gmra.mxu0 %v834
      %v1159 = vpop.f32.mrf.mxu0
      %v1160 = vadd.f32 0.0, %v1159
      %v1161 = vpop.f32.mrf.mxu0
      %v1162 = vpop.f32.mrf.mxu0
      %v1163 = vadd.f32 0.0, %v1162
      %v1164 = vpop.f32.mrf.mxu0
      %1165 = vmatprep.mubr.bf16.mxu0 0
      %1166 = vmatmul.mubr.bf16.gmra.mxu0 %v837
      %v1167 = vpop.f32.mrf.mxu0
      %v1168 = vadd.f32 0.0, %v1167
      %v1169 = vpop.f32.mrf.mxu0
      %v1170 = vpop.f32.mrf.mxu0
      %v1171 = vadd.f32 0.0, %v1170
      %v1172 = vpop.f32.mrf.mxu0
      %1173 = vmatprep.mubr.bf16.mxu0 0
      %1174 = vmatmul.mubr.bf16.gmra.mxu0 %v840
      %v1175 = vpop.f32.mrf.mxu0
      %v1176 = vadd.f32 0.0, %v1175
      %v1177 = vpop.f32.mrf.mxu0
      %v1178 = vpop.f32.mrf.mxu0
      %v1179 = vadd.f32 0.0, %v1178
      %v1180 = vpop.f32.mrf.mxu0
      %1181 = vmatprep.mubr.bf16.mxu0 0
      %1182 = vmatmul.mubr.bf16.gmra.mxu0 %v843
      %v1183 = vpop.f32.mrf.mxu0
      %v1184 = vadd.f32 0.0, %v1183
      %v1185 = vpop.f32.mrf.mxu0
      %v1186 = vpop.f32.mrf.mxu0
      %v1187 = vadd.f32 0.0, %v1186
      %v1188 = vpop.f32.mrf.mxu0
      %1189 = vmatprep.mubr.bf16.mxu0 0
      %1190 = vmatmul.mubr.bf16.gmra.mxu0 %v846
      %v1191 = vpop.f32.mrf.mxu0
      %v1192 = vadd.f32 0.0, %v1191
      %v1193 = vpop.f32.mrf.mxu0
      %v1194 = vpop.f32.mrf.mxu0
      %v1195 = vadd.f32 0.0, %v1194
      %v1196 = vpop.f32.mrf.mxu0
      %1197 = vmatprep.mubr.bf16.mxu0 0
      %1198 = vmatmul.mubr.bf16.gmra.mxu0 %v849
      %v1199 = vpop.f32.mrf.mxu0
      %v1200 = vadd.f32 0.0, %v1199
      %v1201 = vpop.f32.mrf.mxu0
      %v1202 = vpop.f32.mrf.mxu0
      %v1203 = vadd.f32 0.0, %v1202
      %v1204 = vpop.f32.mrf.mxu0
      %1205 = vmatprep.mubr.bf16.mxu0 0
      %1206 = vmatmul.mubr.bf16.gmra.mxu0 %v852
      %v1207 = vpop.f32.mrf.mxu0
      %v1208 = vadd.f32 0.0, %v1207
      %v1209 = vpop.f32.mrf.mxu0
      %v1210 = vpop.f32.mrf.mxu0
      %v1211 = vadd.f32 0.0, %v1210
      %v1212 = vpop.f32.mrf.mxu0
      %1213 = vmatprep.mubr.bf16.mxu0 0
      %1214 = vmatmul.mubr.bf16.gmra.mxu0 %v855
      %v1215 = vpop.f32.mrf.mxu0
      %v1216 = vadd.f32 0.0, %v1215
      %v1217 = vpop.f32.mrf.mxu0
      %v1218 = vpop.f32.mrf.mxu0
      %v1219 = vadd.f32 0.0, %v1218
      %v1220 = vpop.f32.mrf.mxu0
      %1221 = vmatprep.mubr.bf16.mxu0 0
      %1222 = vmatmul.mubr.bf16.gmra.mxu0 %v858
      %v1223 = vpop.f32.mrf.mxu0
      %v1224 = vadd.f32 0.0, %v1223
      %v1225 = vpop.f32.mrf.mxu0
      %v1226 = vpop.f32.mrf.mxu0
      %v1227 = vadd.f32 0.0, %v1226
      %v1228 = vpop.f32.mrf.mxu0
      %1229 = vmatprep.mubr.bf16.mxu0 0
      %1230 = vmatmul.mubr.bf16.gmra.mxu0 %v861
      %v1231 = vpop.f32.mrf.mxu0
      %v1232 = vadd.f32 0.0, %v1231
      %v1233 = vpop.f32.mrf.mxu0
      %v1234 = vpop.f32.mrf.mxu0
      %v1235 = vadd.f32 0.0, %v1234
      %v1236 = vpop.f32.mrf.mxu0
      %1237 = vmatprep.mubr.bf16.mxu0 0
      %1238 = vmatmul.mubr.bf16.gmra.mxu0 %v864
      %v1239 = vpop.f32.mrf.mxu0
      %v1240 = vadd.f32 0.0, %v1239
      %v1241 = vpop.f32.mrf.mxu0
      %v1242 = vpop.f32.mrf.mxu0
      %v1243 = vadd.f32 0.0, %v1242
      %v1244 = vpop.f32.mrf.mxu0
      %1245 = vmatprep.mubr.bf16.mxu0 0
      %1246 = vmatmul.mubr.bf16.gmra.mxu0 %v867
      %v1247 = vpop.f32.mrf.mxu0
      %v1248 = vadd.f32 0.0, %v1247
      %v1249 = vpop.f32.mrf.mxu0
      %v1250 = vpop.f32.mrf.mxu0
      %v1251 = vadd.f32 0.0, %v1250
      %v1252 = vpop.f32.mrf.mxu0
      %1253 = vmatprep.mubr.bf16.mxu0 0
      %1254 = vmatmul.mubr.bf16.gmra.mxu0 %v870
      %v1255 = vpop.f32.mrf.mxu0
      %v1256 = vadd.f32 0.0, %v1255
      %v1257 = vpop.f32.mrf.mxu0
      %v1258 = vpop.f32.mrf.mxu0
      %v1259 = vadd.f32 0.0, %v1258
      %v1260 = vpop.f32.mrf.mxu0
      %1261 = vmatprep.mubr.bf16.mxu0 0
      %1262 = vmatmul.mubr.bf16.gmra.mxu0 %v873
      %v1263 = vpop.f32.mrf.mxu0
      %v1264 = vadd.f32 0.0, %v1263
      %v1265 = vpop.f32.mrf.mxu0
      %v1266 = vpop.f32.mrf.mxu0
      %v1267 = vadd.f32 0.0, %v1266
      %v1268 = vpop.f32.mrf.mxu0
      %1269 = vmatprep.mubr.bf16.mxu0 0
      %1270 = vmatmul.mubr.bf16.gmra.mxu0 %v876
      %v1271 = vpop.f32.mrf.mxu0
      %v1272 = vadd.f32 0.0, %v1271
      %v1273 = vpop.f32.mrf.mxu0
      %v1274 = vpop.f32.mrf.mxu0
      %v1275 = vadd.f32 0.0, %v1274
      %v1276 = vpop.f32.mrf.mxu0
      %1277 = vmatprep.mubr.bf16.mxu0 0
      %1278 = vmatmul.mubr.bf16.gmra.mxu0 %v879
      %v1279 = vpop.f32.mrf.mxu0
      %v1280 = vadd.f32 0.0, %v1279
      %v1281 = vpop.f32.mrf.mxu0
      %v1282 = vpop.f32.mrf.mxu0
      %v1283 = vadd.f32 0.0, %v1282
      %v1284 = vpop.f32.mrf.mxu0
      %1285 = vmatprep.mubr.bf16.mxu0 0
      %1286 = vmatmul.mubr.bf16.gmra.mxu0 %v882
      %v1287 = vpop.f32.mrf.mxu0
      %v1288 = vadd.f32 0.0, %v1287
      %v1289 = vpop.f32.mrf.mxu0
      %v1290 = vpop.f32.mrf.mxu0
      %v1291 = vadd.f32 0.0, %v1290
      %v1292 = vpop.f32.mrf.mxu0
      %1293 = vmatprep.mubr.bf16.mxu0 0
      %1294 = vmatmul.mubr.bf16.gmra.mxu0 %v885
      %v1295 = vpop.f32.mrf.mxu0
      %v1296 = vadd.f32 0.0, %v1295
      %v1297 = vpop.f32.mrf.mxu0
      %v1298 = vpop.f32.mrf.mxu0
      %v1299 = vadd.f32 0.0, %v1298
      %v1300 = vpop.f32.mrf.mxu0
      %1301 = vmatprep.mubr.bf16.mxu0 0
      %1302 = vmatmul.mubr.bf16.gmra.mxu0 %v888
      %v1303 = vpop.f32.mrf.mxu0
      %v1304 = vadd.f32 0.0, %v1303
      %v1305 = vpop.f32.mrf.mxu0
      %v1306 = vpop.f32.mrf.mxu0
      %v1307 = vadd.f32 0.0, %v1306
      %v1308 = vpop.f32.mrf.mxu0
      %1309 = vmatprep.mubr.bf16.mxu0 0
      %1310 = vmatmul.mubr.bf16.gmra.mxu0 %v891
      %v1311 = vpop.f32.mrf.mxu0
      %v1312 = vadd.f32 0.0, %v1311
      %v1313 = vpop.f32.mrf.mxu0
      %v1314 = vpop.f32.mrf.mxu0
      %v1315 = vadd.f32 0.0, %v1314
      %v1316 = vpop.f32.mrf.mxu0
      %1317 = vmatprep.mubr.bf16.mxu0 0
      %1318 = vmatmul.mubr.bf16.gmra.mxu0 %v894
      %v1319 = vpop.f32.mrf.mxu0
      %v1320 = vadd.f32 0.0, %v1319
      %v1321 = vpop.f32.mrf.mxu0
      %v1322 = vpop.f32.mrf.mxu0
      %v1323 = vadd.f32 0.0, %v1322
      %v1324 = vpop.f32.mrf.mxu0
      %1325 = vmatprep.mubr.bf16.mxu0 0
      %1326 = vmatmul.mubr.bf16.gmra.mxu0 %v897
      %v1327 = vpop.f32.mrf.mxu0
      %v1328 = vadd.f32 0.0, %v1327
      %v1329 = vpop.f32.mrf.mxu0
      %v1330 = vpop.f32.mrf.mxu0
      %v1331 = vadd.f32 0.0, %v1330
      %v1332 = vpop.f32.mrf.mxu0
      %1333 = vmatprep.mubr.bf16.mxu0 0
      %1334 = vmatmul.mubr.bf16.gmra.mxu0 %v900
      %v1335 = vpop.f32.mrf.mxu0
      %v1336 = vadd.f32 0.0, %v1335
      %v1337 = vpop.f32.mrf.mxu0
      %v1338 = vpop.f32.mrf.mxu0
      %v1339 = vadd.f32 0.0, %v1338
      %v1340 = vpop.f32.mrf.mxu0
      %1341 = vmatprep.mubr.bf16.mxu0 0
      %1342 = vmatmul.mubr.bf16.gmra.mxu0 %v903
      %v1343 = vpop.f32.mrf.mxu0
      %v1344 = vadd.f32 0.0, %v1343
      %v1345 = vpop.f32.mrf.mxu0
      %v1346 = vpop.f32.mrf.mxu0
      %v1347 = vadd.f32 0.0, %v1346
      %v1348 = vpop.f32.mrf.mxu0
      %1349 = vmatprep.mubr.bf16.mxu0 0
      %1350 = vmatmul.mubr.bf16.gmra.mxu0 %v906
      %v1351 = vpop.f32.mrf.mxu0
      %v1352 = vadd.f32 0.0, %v1351
      %v1353 = vpop.f32.mrf.mxu0
      %v1354 = vpop.f32.mrf.mxu0
      %v1355 = vadd.f32 0.0, %v1354
      %v1356 = vpop.f32.mrf.mxu0
      %1357 = vmatprep.mubr.bf16.mxu0 0
      %1358 = vmatmul.mubr.bf16.gmra.mxu0 %v909
      %v1359 = vpop.f32.mrf.mxu0
      %v1360 = vadd.f32 0.0, %v1359
      %v1361 = vpop.f32.mrf.mxu0
      %v1362 = vpop.f32.mrf.mxu0
      %v1363 = vadd.f32 0.0, %v1362
      %v1364 = vpop.f32.mrf.mxu0
      %1365 = vmatprep.mubr.bf16.mxu0 0
      %1366 = vmatmul.mubr.bf16.gmra.mxu0 %v912
      %v1367 = vpop.f32.mrf.mxu0
      %v1368 = vadd.f32 0.0, %v1367
      %v1369 = vpop.f32.mrf.mxu0
      %v1370 = vpop.f32.mrf.mxu0
      %v1371 = vadd.f32 0.0, %v1370
      %v1372 = vpop.f32.mrf.mxu0
      %1373 = vmatprep.mubr.bf16.mxu0 0
      %1374 = vmatmul.mubr.bf16.gmra.mxu0 %v915
      %v1375 = vpop.f32.mrf.mxu0
      %v1376 = vadd.f32 0.0, %v1375
      %v1377 = vpop.f32.mrf.mxu0
      %v1378 = vpop.f32.mrf.mxu0
      %v1379 = vadd.f32 0.0, %v1378
      %v1380 = vpop.f32.mrf.mxu0
      %1381 = vmatprep.mubr.bf16.mxu0 0
      %1382 = vmatmul.mubr.bf16.gmra.mxu0 %v918
      %v1383 = vpop.f32.mrf.mxu0
      %v1384 = vadd.f32 0.0, %v1383
      %v1385 = vpop.f32.mrf.mxu0
      %v1386 = vpop.f32.mrf.mxu0
      %v1387 = vadd.f32 0.0, %v1386
      %v1388 = vpop.f32.mrf.mxu0
      %1389 = vmatprep.mubr.bf16.mxu0 0
      %1390 = vmatmul.mubr.bf16.gmra.mxu0 %v921
      %v1391 = vpop.f32.mrf.mxu0
      %v1392 = vadd.f32 0.0, %v1391
      %v1393 = vpop.f32.mrf.mxu0
      %v1394 = vpop.f32.mrf.mxu0
      %v1395 = vadd.f32 0.0, %v1394
      %v1396 = vpop.f32.mrf.mxu0
      %1397 = vmatprep.mubr.bf16.mxu0 0
      %1398 = vmatmul.mubr.bf16.gmra.mxu0 %v924
      %v1399 = vpop.f32.mrf.mxu0
      %v1400 = vadd.f32 0.0, %v1399
      %v1401 = vpop.f32.mrf.mxu0
      %v1402 = vpop.f32.mrf.mxu0
      %v1403 = vadd.f32 0.0, %v1402
      %v1404 = vpop.f32.mrf.mxu0
      %1405 = vmatprep.mubr.bf16.mxu0 0
      %1406 = vmatmul.mubr.bf16.gmra.mxu0 %v927
      %v1407 = vpop.f32.mrf.mxu0
      %v1408 = vadd.f32 0.0, %v1407
      %v1409 = vpop.f32.mrf.mxu0
      %v1410 = vpop.f32.mrf.mxu0
      %v1411 = vadd.f32 0.0, %v1410
      %v1412 = vpop.f32.mrf.mxu0
      %1413 = vmatprep.mubr.bf16.mxu0 0
      %1414 = vmatmul.mubr.bf16.gmra.mxu0 %v930
      %v1415 = vpop.f32.mrf.mxu0
      %v1416 = vadd.f32 0.0, %v1415
      %v1417 = vpop.f32.mrf.mxu0
      %v1418 = vpop.f32.mrf.mxu0
      %v1419 = vadd.f32 0.0, %v1418
      %v1420 = vpop.f32.mrf.mxu0
      %1421 = vmatprep.mubr.bf16.mxu0 0
      %1422 = vmatmul.mubr.bf16.gmra.mxu0 %v933
      %v1423 = vpop.f32.mrf.mxu0
      %v1424 = vadd.f32 0.0, %v1423
      %v1425 = vpop.f32.mrf.mxu0
      %v1426 = vpop.f32.mrf.mxu0
      %v1427 = vadd.f32 0.0, %v1426
      %v1428 = vpop.f32.mrf.mxu0
      %1429 = vmatprep.mubr.bf16.mxu0 0
      %1430 = vmatmul.mubr.bf16.gmra.mxu0 %v936
      %v1431 = vpop.f32.mrf.mxu0
      %v1432 = vadd.f32 0.0, %v1431
      %v1433 = vpop.f32.mrf.mxu0
      %v1434 = vpop.f32.mrf.mxu0
      %v1435 = vadd.f32 0.0, %v1434
      %v1436 = vpop.f32.mrf.mxu0
      %1437 = vmatprep.mubr.bf16.mxu0 0
      %1438 = vmatmul.mubr.bf16.gmra.mxu0 %v939
      %v1439 = vpop.f32.mrf.mxu0
      %v1440 = vadd.f32 0.0, %v1439
      %v1441 = vpop.f32.mrf.mxu0
      %v1442 = vpop.f32.mrf.mxu0
      %v1443 = vadd.f32 0.0, %v1442
      %v1444 = vpop.f32.mrf.mxu0
      %1445 = vmatprep.mubr.bf16.mxu0 0
      %1446 = vmatmul.mubr.bf16.gmra.mxu0 %v942
      %v1447 = vpop.f32.mrf.mxu0
      %v1448 = vadd.f32 0.0, %v1447
      %v1449 = vpop.f32.mrf.mxu0
      %v1450 = vpop.f32.mrf.mxu0
      %v1451 = vadd.f32 0.0, %v1450
      %v1452 = vpop.f32.mrf.mxu0
      %1453 = vmatprep.mubr.bf16.mxu0 0
      %1454 = vmatmul.mubr.bf16.gmra.mxu0 %v945
      %v1455 = vpop.f32.mrf.mxu0
      %v1456 = vadd.f32 0.0, %v1455
      %v1457 = vpop.f32.mrf.mxu0
      %v1458 = vpop.f32.mrf.mxu0
      %v1459 = vadd.f32 0.0, %v1458
      %v1460 = vpop.f32.mrf.mxu0
      %1461 = vmatprep.mubr.bf16.mxu0 0
      %1462 = vmatmul.mubr.bf16.gmra.mxu0 %v948
      %v1463 = vpop.f32.mrf.mxu0
      %v1464 = vadd.f32 0.0, %v1463
      %v1465 = vpop.f32.mrf.mxu0
      %v1466 = vpop.f32.mrf.mxu0
      %v1467 = vadd.f32 0.0, %v1466
      %v1468 = vpop.f32.mrf.mxu0
      %1469 = vmatprep.mubr.bf16.mxu0 0
      %1470 = vmatmul.mubr.bf16.gmra.mxu0 %v951
      %v1471 = vpop.f32.mrf.mxu0
      %v1472 = vadd.f32 0.0, %v1471
      %v1473 = vpop.f32.mrf.mxu0
      %v1474 = vpop.f32.mrf.mxu0
      %v1475 = vadd.f32 0.0, %v1474
      %v1476 = vpop.f32.mrf.mxu0
      %1477 = vmatprep.mubr.bf16.mxu0 0
      %1478 = vmatmul.mubr.bf16.gmra.mxu0 %v954
      %v1479 = vpop.f32.mrf.mxu0
      %v1480 = vadd.f32 0.0, %v1479
      %v1481 = vpop.f32.mrf.mxu0
      %v1482 = vpop.f32.mrf.mxu0
      %v1483 = vadd.f32 0.0, %v1482
      %v1484 = vpop.f32.mrf.mxu0
      %1485 = vmatprep.mubr.bf16.mxu0 0
      %1486 = vmatmul.mubr.bf16.gmra.mxu0 %v957
      %v1487 = vpop.f32.mrf.mxu0
      %v1488 = vadd.f32 0.0, %v1487
      %v1489 = vpop.f32.mrf.mxu0
      %v1490 = vpop.f32.mrf.mxu0
      %v1491 = vadd.f32 0.0, %v1490
      %v1492 = vpop.f32.mrf.mxu0
      %1493 = vmatprep.mubr.bf16.mxu0 0
      %1494 = vmatmul.mubr.bf16.gmra.mxu0 %v960
      %v1495 = vpop.f32.mrf.mxu0
      %v1496 = vadd.f32 0.0, %v1495
      %v1497 = vpop.f32.mrf.mxu0
      %v1498 = vpop.f32.mrf.mxu0
      %v1499 = vadd.f32 0.0, %v1498
      %v1500 = vpop.f32.mrf.mxu0
      %1501 = vmatprep.mubr.bf16.mxu0 0
      %1502 = vmatmul.mubr.bf16.gmra.mxu0 %v963
      %v1503 = vpop.f32.mrf.mxu0
      %v1504 = vadd.f32 0.0, %v1503
      %v1505 = vpop.f32.mrf.mxu0
      %v1506 = vpop.f32.mrf.mxu0
      %v1507 = vadd.f32 0.0, %v1506
      %v1508 = vpop.f32.mrf.mxu0
      %1509 = vdwg.mxu0
      %v1510 = vld [vmem:[%s2] sm:$0xff]
      %v1511 = vld [vmem:[%s2 + $0x8] sm:$0xff]
      %v1512 = vld [vmem:[%s2 + $0x10] sm:$0xff]
      %v1513 = vld [vmem:[%s2 + $0x18] sm:$0xff]
      %v1514 = vadd.f32 %v1000, %v1510
      %v1515 = vadd.f32 %v1003, %v1511
      %v1516 = vadd.f32 %v1008, %v1512
      %v1517 = vadd.f32 %v1011, %v1513
      %v1518 = vadd.f32 %v1016, %v1510
      %v1519 = vadd.f32 %v1019, %v1511
      %v1520 = vadd.f32 %v1024, %v1512
      %v1521 = vadd.f32 %v1027, %v1513
      %v1522 = vadd.f32 %v1032, %v1510
      %v1523 = vadd.f32 %v1035, %v1511
      %v1524 = vadd.f32 %v1040, %v1512
      %v1525 = vadd.f32 %v1043, %v1513
      %v1526 = vadd.f32 %v1048, %v1510
      %v1527 = vadd.f32 %v1051, %v1511
      %v1528 = vadd.f32 %v1056, %v1512
      %v1529 = vadd.f32 %v1059, %v1513
      %v1530 = vadd.f32 %v1064, %v1510
      %v1531 = vadd.f32 %v1067, %v1511
      %v1532 = vadd.f32 %v1072, %v1512
      %v1533 = vadd.f32 %v1075, %v1513
      %v1534 = vadd.f32 %v1080, %v1510
      %v1535 = vadd.f32 %v1083, %v1511
      %v1536 = vadd.f32 %v1088, %v1512
      %v1537 = vadd.f32 %v1091, %v1513
      %v1538 = vadd.f32 %v1096, %v1510
      %v1539 = vadd.f32 %v1099, %v1511
      %v1540 = vadd.f32 %v1104, %v1512
      %v1541 = vadd.f32 %v1107, %v1513
      %v1542 = vadd.f32 %v1112, %v1510
      %v1543 = vadd.f32 %v1115, %v1511
      %v1544 = vadd.f32 %v1120, %v1512
      %v1545 = vadd.f32 %v1123, %v1513
      %v1546 = vadd.f32 %v1128, %v1510
      %v1547 = vadd.f32 %v1131, %v1511
      %v1548 = vadd.f32 %v1136, %v1512
      %v1549 = vadd.f32 %v1139, %v1513
      %v1550 = vadd.f32 %v1144, %v1510
      %v1551 = vadd.f32 %v1147, %v1511
      %v1552 = vadd.f32 %v1152, %v1512
      %v1553 = vadd.f32 %v1155, %v1513
      %v1554 = vadd.f32 %v1160, %v1510
      %v1555 = vadd.f32 %v1163, %v1511
      %v1556 = vadd.f32 %v1168, %v1512
      %v1557 = vadd.f32 %v1171, %v1513
      %v1558 = vadd.f32 %v1176, %v1510
      %v1559 = vadd.f32 %v1179, %v1511
      %v1560 = vadd.f32 %v1184, %v1512
      %v1561 = vadd.f32 %v1187, %v1513
      %v1562 = vadd.f32 %v1192, %v1510
      %v1563 = vadd.f32 %v1195, %v1511
      %v1564 = vadd.f32 %v1200, %v1512
      %v1565 = vadd.f32 %v1203, %v1513
      %v1566 = vadd.f32 %v1208, %v1510
      %v1567 = vadd.f32 %v1211, %v1511
      %v1568 = vadd.f32 %v1216, %v1512
      %v1569 = vadd.f32 %v1219, %v1513
      %v1570 = vadd.f32 %v1224, %v1510
      %v1571 = vadd.f32 %v1227, %v1511
      %v1572 = vadd.f32 %v1232, %v1512
      %v1573 = vadd.f32 %v1235, %v1513
      %v1574 = vadd.f32 %v1240, %v1510
      %v1575 = vadd.f32 %v1243, %v1511
      %v1576 = vadd.f32 %v1248, %v1512
      %v1577 = vadd.f32 %v1251, %v1513
      %v1578 = vadd.f32 %v1256, %v1510
      %v1579 = vadd.f32 %v1259, %v1511
      %v1580 = vadd.f32 %v1264, %v1512
      %v1581 = vadd.f32 %v1267, %v1513
      %v1582 = vadd.f32 %v1272, %v1510
      %v1583 = vadd.f32 %v1275, %v1511
      %v1584 = vadd.f32 %v1280, %v1512
      %v1585 = vadd.f32 %v1283, %v1513
      %v1586 = vadd.f32 %v1288, %v1510
      %v1587 = vadd.f32 %v1291, %v1511
      %v1588 = vadd.f32 %v1296, %v1512
      %v1589 = vadd.f32 %v1299, %v1513
      %v1590 = vadd.f32 %v1304, %v1510
      %v1591 = vadd.f32 %v1307, %v1511
      %v1592 = vadd.f32 %v1312, %v1512
      %v1593 = vadd.f32 %v1315, %v1513
      %v1594 = vadd.f32 %v1320, %v1510
      %v1595 = vadd.f32 %v1323, %v1511
      %v1596 = vadd.f32 %v1328, %v1512
      %v1597 = vadd.f32 %v1331, %v1513
      %v1598 = vadd.f32 %v1336, %v1510
      %v1599 = vadd.f32 %v1339, %v1511
      %v1600 = vadd.f32 %v1344, %v1512
      %v1601 = vadd.f32 %v1347, %v1513
      %v1602 = vadd.f32 %v1352, %v1510
      %v1603 = vadd.f32 %v1355, %v1511
      %v1604 = vadd.f32 %v1360, %v1512
      %v1605 = vadd.f32 %v1363, %v1513
      %v1606 = vadd.f32 %v1368, %v1510
      %v1607 = vadd.f32 %v1371, %v1511
      %v1608 = vadd.f32 %v1376, %v1512
      %v1609 = vadd.f32 %v1379, %v1513
      %v1610 = vadd.f32 %v1384, %v1510
      %v1611 = vadd.f32 %v1387, %v1511
      %v1612 = vadd.f32 %v1392, %v1512
      %v1613 = vadd.f32 %v1395, %v1513
      %v1614 = vadd.f32 %v1400, %v1510
      %v1615 = vadd.f32 %v1403, %v1511
      %v1616 = vadd.f32 %v1408, %v1512
      %v1617 = vadd.f32 %v1411, %v1513
      %v1618 = vadd.f32 %v1416, %v1510
      %v1619 = vadd.f32 %v1419, %v1511
      %v1620 = vadd.f32 %v1424, %v1512
      %v1621 = vadd.f32 %v1427, %v1513
      %v1622 = vadd.f32 %v1432, %v1510
      %v1623 = vadd.f32 %v1435, %v1511
      %v1624 = vadd.f32 %v1440, %v1512
      %v1625 = vadd.f32 %v1443, %v1513
      %v1626 = vadd.f32 %v1448, %v1510
      %v1627 = vadd.f32 %v1451, %v1511
      %v1628 = vadd.f32 %v1456, %v1512
      %v1629 = vadd.f32 %v1459, %v1513
      %v1630 = vadd.f32 %v1464, %v1510
      %v1631 = vadd.f32 %v1467, %v1511
      %v1632 = vadd.f32 %v1472, %v1512
      %v1633 = vadd.f32 %v1475, %v1513
      %v1634 = vadd.f32 %v1480, %v1510
      %v1635 = vadd.f32 %v1483, %v1511
      %v1636 = vadd.f32 %v1488, %v1512
      %v1637 = vadd.f32 %v1491, %v1513
      %v1638 = vadd.f32 %v1496, %v1510
      %v1639 = vadd.f32 %v1499, %v1511
      %v1640 = vadd.f32 %v1504, %v1512
      %v1641 = vadd.f32 %v1507, %v1513
      %v1642 = vpack.c.bf16 %v1515, %v1514
      %v1643 = vpack.c.bf16 %v1517, %v1516
      %v1644 = vpack.c.bf16 %v1519, %v1518
      %v1645 = vpack.c.bf16 %v1521, %v1520
      %v1646 = vpack.c.bf16 %v1523, %v1522
      %v1647 = vpack.c.bf16 %v1525, %v1524
      %v1648 = vpack.c.bf16 %v1527, %v1526
      %v1649 = vpack.c.bf16 %v1529, %v1528
      %v1650 = vpack.c.bf16 %v1531, %v1530
      %v1651 = vpack.c.bf16 %v1533, %v1532
      %v1652 = vpack.c.bf16 %v1535, %v1534
      %v1653 = vpack.c.bf16 %v1537, %v1536
      %v1654 = vpack.c.bf16 %v1539, %v1538
      %v1655 = vpack.c.bf16 %v1541, %v1540
      %v1656 = vpack.c.bf16 %v1543, %v1542
      %v1657 = vpack.c.bf16 %v1545, %v1544
      %v1658 = vpack.c.bf16 %v1547, %v1546
      %v1659 = vpack.c.bf16 %v1549, %v1548
      %v1660 = vpack.c.bf16 %v1551, %v1550
      %v1661 = vpack.c.bf16 %v1553, %v1552
      %v1662 = vpack.c.bf16 %v1555, %v1554
      %v1663 = vpack.c.bf16 %v1557, %v1556
      %v1664 = vpack.c.bf16 %v1559, %v1558
      %v1665 = vpack.c.bf16 %v1561, %v1560
      %v1666 = vpack.c.bf16 %v1563, %v1562
      %v1667 = vpack.c.bf16 %v1565, %v1564
      %v1668 = vpack.c.bf16 %v1567, %v1566
      %v1669 = vpack.c.bf16 %v1569, %v1568
      %v1670 = vpack.c.bf16 %v1571, %v1570
      %v1671 = vpack.c.bf16 %v1573, %v1572
      %v1672 = vpack.c.bf16 %v1575, %v1574
      %v1673 = vpack.c.bf16 %v1577, %v1576
      %v1674 = vpack.c.bf16 %v1579, %v1578
      %v1675 = vpack.c.bf16 %v1581, %v1580
      %v1676 = vpack.c.bf16 %v1583, %v1582
      %v1677 = vpack.c.bf16 %v1585, %v1584
      %v1678 = vpack.c.bf16 %v1587, %v1586
      %v1679 = vpack.c.bf16 %v1589, %v1588
      %v1680 = vpack.c.bf16 %v1591, %v1590
      %v1681 = vpack.c.bf16 %v1593, %v1592
      %v1682 = vpack.c.bf16 %v1595, %v1594
      %v1683 = vpack.c.bf16 %v1597, %v1596
      %v1684 = vpack.c.bf16 %v1599, %v1598
      %v1685 = vpack.c.bf16 %v1601, %v1600
      %v1686 = vpack.c.bf16 %v1603, %v1602
      %v1687 = vpack.c.bf16 %v1605, %v1604
      %v1688 = vpack.c.bf16 %v1607, %v1606
      %v1689 = vpack.c.bf16 %v1609, %v1608
      %v1690 = vpack.c.bf16 %v1611, %v1610
      %v1691 = vpack.c.bf16 %v1613, %v1612
      %v1692 = vpack.c.bf16 %v1615, %v1614
      %v1693 = vpack.c.bf16 %v1617, %v1616
      %v1694 = vpack.c.bf16 %v1619, %v1618
      %v1695 = vpack.c.bf16 %v1621, %v1620
      %v1696 = vpack.c.bf16 %v1623, %v1622
      %v1697 = vpack.c.bf16 %v1625, %v1624
      %v1698 = vpack.c.bf16 %v1627, %v1626
      %v1699 = vpack.c.bf16 %v1629, %v1628
      %v1700 = vpack.c.bf16 %v1631, %v1630
      %v1701 = vpack.c.bf16 %v1633, %v1632
      %v1702 = vpack.c.bf16 %v1635, %v1634
      %v1703 = vpack.c.bf16 %v1637, %v1636
      %v1704 = vpack.c.bf16 %v1639, %v1638
      %v1705 = vpack.c.bf16 %v1641, %v1640
      %1708 = vrot.lane.b32.xlu0 %v1642, 96
      %v1709 = vpop.permute.xlu0 %1708
      %1710 = vrot.lane.b32.xlu0 %v1643, 96
      %v1711 = vpop.permute.xlu0 %1710
      %vm1712 = vcmask 261120
      %v1714 = vsel %vm1712, %v1642, 0
      %v1717 = vsel %vm1712, %v1643, 0
      %v1720 = vsel %vm1712, %v1709, 0
      %v1723 = vsel %vm1712, %v1711, 0
      %1725 = vmatprep.subr.bf16.mxu0 0
      %1726 = vmatpush1.bf16.xpose.msra.mxu0 0
      %1727 = vmatprep.subr.bf16.mxu0 0
      %1728 = vmatpush1.bf16.xpose.msra.mxu0 0
      %1729 = vmatprep.subr.bf16.mxu0 0
      %1730 = vmatpush1.bf16.xpose.msra.mxu0 0
      %1731 = vmatprep.subr.bf16.mxu0 0
      %1732 = vmatpush1.bf16.xpose.msra.mxu0 0
      %1733 = vmatprep.subr.bf16.mxu0 0
      %1734 = vmatpush1.bf16.xpose.msra.mxu0 0
      %1735 = vmatprep.subr.bf16.mxu0 0
      %1736 = vmatpush1.bf16.xpose.msra.mxu0 0
      %1737 = vmatprep.subr.bf16.mxu0 0
      %1738 = vmatpush1.bf16.xpose.msra.mxu0 %v1723
      %1739 = vmatprep.subr.bf16.mxu0 0
      %1740 = vmatpush1.bf16.xpose.msra.mxu0 %v1720
      %1741 = vmatprep.subr.bf16.mxu0 0
      %1742 = vmatpush2.bf16.xpose.msra.mxu0 0
      %1743 = vmatprep.subr.bf16.mxu0 0
      %1744 = vmatpush2.bf16.xpose.msra.mxu0 0
      %1745 = vmatprep.subr.bf16.mxu0 0
      %1746 = vmatpush2.bf16.xpose.msra.mxu0 0
      %1747 = vmatprep.subr.bf16.mxu0 0
      %1748 = vmatpush2.bf16.xpose.msra.mxu0 0
      %1749 = vmatprep.subr.bf16.mxu0 0
      %1750 = vmatpush2.bf16.xpose.msra.mxu0 0
      %1751 = vmatprep.subr.bf16.mxu0 0
      %1752 = vmatpush2.bf16.xpose.msra.mxu0 0
      %1753 = vmatprep.subr.bf16.mxu0 0
      %1754 = vmatpush2.bf16.xpose.msra.mxu0 0
      %1755 = vmatprep.subr.bf16.mxu0 0
      %1756 = vmatpush2.bf16.xpose.msra.mxu0 0
      %1757 = vmatprep.mubr.bf16.mxu0 0
      %1758 = vmatmul.mubr.bf16.gmra.mxu0 %v1714
      %v1759 = vpop.f32.mrf.mxu0
      %v1760 = vadd.f32 0.0, %v1759
      %v1761 = vpop.f32.mrf.mxu0
      %v1762 = vpop.f32.mrf.mxu0
      %v1763 = vadd.f32 0.0, %v1762
      %v1764 = vpop.f32.mrf.mxu0
      %1765 = vmatprep.mubr.bf16.mxu0 0
      %1766 = vmatmul.mubr.bf16.gmra.mxu0 %v1717
      %v1767 = vpop.f32.mrf.mxu0
      %v1768 = vadd.f32 0.0, %v1767
      %v1769 = vpop.f32.mrf.mxu0
      %v1770 = vpop.f32.mrf.mxu0
      %v1771 = vadd.f32 0.0, %v1770
      %v1772 = vpop.f32.mrf.mxu0
      %1773 = vdwg.mxu0
      %1776 = vrot.lane.b32.xlu0 %v1644, 96
      %v1777 = vpop.permute.xlu0 %1776
      %1778 = vrot.lane.b32.xlu0 %v1645, 96
      %v1779 = vpop.permute.xlu0 %1778
      %v1781 = vsel %vm1712, %v1644, 0
      %v1784 = vsel %vm1712, %v1645, 0
      %v1787 = vsel %vm1712, %v1777, 0
      %v1790 = vsel %vm1712, %v1779, 0
      %1792 = vmatprep.subr.bf16.mxu0 0
      %1793 = vmatpush1.bf16.xpose.msra.mxu0 0
      %1794 = vmatprep.subr.bf16.mxu0 0
      %1795 = vmatpush1.bf16.xpose.msra.mxu0 0
      %1796 = vmatprep.subr.bf16.mxu0 0
      %1797 = vmatpush1.bf16.xpose.msra.mxu0 0
      %1798 = vmatprep.subr.bf16.mxu0 0
      %1799 = vmatpush1.bf16.xpose.msra.mxu0 0
      %1800 = vmatprep.subr.bf16.mxu0 0
      %1801 = vmatpush1.bf16.xpose.msra.mxu0 0
      %1802 = vmatprep.subr.bf16.mxu0 0
      %1803 = vmatpush1.bf16.xpose.msra.mxu0 0
      %1804 = vmatprep.subr.bf16.mxu0 0
      %1805 = vmatpush1.bf16.xpose.msra.mxu0 %v1790
      %1806 = vmatprep.subr.bf16.mxu0 0
      %1807 = vmatpush1.bf16.xpose.msra.mxu0 %v1787
      %1808 = vmatprep.subr.bf16.mxu0 0
      %1809 = vmatpush2.bf16.xpose.msra.mxu0 0
      %1810 = vmatprep.subr.bf16.mxu0 0
      %1811 = vmatpush2.bf16.xpose.msra.mxu0 0
      %1812 = vmatprep.subr.bf16.mxu0 0
      %1813 = vmatpush2.bf16.xpose.msra.mxu0 0
      %1814 = vmatprep.subr.bf16.mxu0 0
      %1815 = vmatpush2.bf16.xpose.msra.mxu0 0
      %1816 = vmatprep.subr.bf16.mxu0 0
      %1817 = vmatpush2.bf16.xpose.msra.mxu0 0
      %1818 = vmatprep.subr.bf16.mxu0 0
      %1819 = vmatpush2.bf16.xpose.msra.mxu0 0
      %1820 = vmatprep.subr.bf16.mxu0 0
      %1821 = vmatpush2.bf16.xpose.msra.mxu0 0
      %1822 = vmatprep.subr.bf16.mxu0 0
      %1823 = vmatpush2.bf16.xpose.msra.mxu0 0
      %1824 = vmatprep.mubr.bf16.mxu0 0
      %1825 = vmatmul.mubr.bf16.gmra.mxu0 %v1781
      %v1826 = vpop.f32.mrf.mxu0
      %v1827 = vadd.f32 0.0, %v1826
      %v1828 = vpop.f32.mrf.mxu0
      %v1829 = vpop.f32.mrf.mxu0
      %v1830 = vadd.f32 0.0, %v1829
      %v1831 = vpop.f32.mrf.mxu0
      %1832 = vmatprep.mubr.bf16.mxu0 0
      %1833 = vmatmul.mubr.bf16.gmra.mxu0 %v1784
      %v1834 = vpop.f32.mrf.mxu0
      %v1835 = vadd.f32 0.0, %v1834
      %v1836 = vpop.f32.mrf.mxu0
      %v1837 = vpop.f32.mrf.mxu0
      %v1838 = vadd.f32 0.0, %v1837
      %v1839 = vpop.f32.mrf.mxu0
      %1840 = vdwg.mxu0
      %1843 = vrot.lane.b32.xlu0 %v1646, 96
      %v1844 = vpop.permute.xlu0 %1843
      %1845 = vrot.lane.b32.xlu0 %v1647, 96
      %v1846 = vpop.permute.xlu0 %1845
      %v1848 = vsel %vm1712, %v1646, 0
      %v1851 = vsel %vm1712, %v1647, 0
      %v1854 = vsel %vm1712, %v1844, 0
      %v1857 = vsel %vm1712, %v1846, 0
      %1859 = vmatprep.subr.bf16.mxu0 0
      %1860 = vmatpush1.bf16.xpose.msra.mxu0 0
      %1861 = vmatprep.subr.bf16.mxu0 0
      %1862 = vmatpush1.bf16.xpose.msra.mxu0 0
      %1863 = vmatprep.subr.bf16.mxu0 0
      %1864 = vmatpush1.bf16.xpose.msra.mxu0 0
      %1865 = vmatprep.subr.bf16.mxu0 0
      %1866 = vmatpush1.bf16.xpose.msra.mxu0 0
      %1867 = vmatprep.subr.bf16.mxu0 0
      %1868 = vmatpush1.bf16.xpose.msra.mxu0 0
      %1869 = vmatprep.subr.bf16.mxu0 0
      %1870 = vmatpush1.bf16.xpose.msra.mxu0 0
      %1871 = vmatprep.subr.bf16.mxu0 0
      %1872 = vmatpush1.bf16.xpose.msra.mxu0 %v1857
      %1873 = vmatprep.subr.bf16.mxu0 0
      %1874 = vmatpush1.bf16.xpose.msra.mxu0 %v1854
      %1875 = vmatprep.subr.bf16.mxu0 0
      %1876 = vmatpush2.bf16.xpose.msra.mxu0 0
      %1877 = vmatprep.subr.bf16.mxu0 0
      %1878 = vmatpush2.bf16.xpose.msra.mxu0 0
      %1879 = vmatprep.subr.bf16.mxu0 0
      %1880 = vmatpush2.bf16.xpose.msra.mxu0 0
      %1881 = vmatprep.subr.bf16.mxu0 0
      %1882 = vmatpush2.bf16.xpose.msra.mxu0 0
      %1883 = vmatprep.subr.bf16.mxu0 0
      %1884 = vmatpush2.bf16.xpose.msra.mxu0 0
      %1885 = vmatprep.subr.bf16.mxu0 0
      %1886 = vmatpush2.bf16.xpose.msra.mxu0 0
      %1887 = vmatprep.subr.bf16.mxu0 0
      %1888 = vmatpush2.bf16.xpose.msra.mxu0 0
      %1889 = vmatprep.subr.bf16.mxu0 0
      %1890 = vmatpush2.bf16.xpose.msra.mxu0 0
      %1891 = vmatprep.mubr.bf16.mxu0 0
      %1892 = vmatmul.mubr.bf16.gmra.mxu0 %v1848
      %v1893 = vpop.f32.mrf.mxu0
      %v1894 = vadd.f32 0.0, %v1893
      %v1895 = vpop.f32.mrf.mxu0
      %v1896 = vpop.f32.mrf.mxu0
      %v1897 = vadd.f32 0.0, %v1896
      %v1898 = vpop.f32.mrf.mxu0
      %1899 = vmatprep.mubr.bf16.mxu0 0
      %1900 = vmatmul.mubr.bf16.gmra.mxu0 %v1851
      %v1901 = vpop.f32.mrf.mxu0
      %v1902 = vadd.f32 0.0, %v1901
      %v1903 = vpop.f32.mrf.mxu0
      %v1904 = vpop.f32.mrf.mxu0
      %v1905 = vadd.f32 0.0, %v1904
      %v1906 = vpop.f32.mrf.mxu0
      %1907 = vdwg.mxu0
      %1910 = vrot.lane.b32.xlu0 %v1648, 96
      %v1911 = vpop.permute.xlu0 %1910
      %1912 = vrot.lane.b32.xlu0 %v1649, 96
      %v1913 = vpop.permute.xlu0 %1912
      %v1915 = vsel %vm1712, %v1648, 0
      %v1918 = vsel %vm1712, %v1649, 0
      %v1921 = vsel %vm1712, %v1911, 0
      %v1924 = vsel %vm1712, %v1913, 0
      %1926 = vmatprep.subr.bf16.mxu0 0
      %1927 = vmatpush1.bf16.xpose.msra.mxu0 0
      %1928 = vmatprep.subr.bf16.mxu0 0
      %1929 = vmatpush1.bf16.xpose.msra.mxu0 0
      %1930 = vmatprep.subr.bf16.mxu0 0
      %1931 = vmatpush1.bf16.xpose.msra.mxu0 0
      %1932 = vmatprep.subr.bf16.mxu0 0
      %1933 = vmatpush1.bf16.xpose.msra.mxu0 0
      %1934 = vmatprep.subr.bf16.mxu0 0
      %1935 = vmatpush1.bf16.xpose.msra.mxu0 0
      %1936 = vmatprep.subr.bf16.mxu0 0
      %1937 = vmatpush1.bf16.xpose.msra.mxu0 0
      %1938 = vmatprep.subr.bf16.mxu0 0
      %1939 = vmatpush1.bf16.xpose.msra.mxu0 %v1924
      %1940 = vmatprep.subr.bf16.mxu0 0
      %1941 = vmatpush1.bf16.xpose.msra.mxu0 %v1921
      %1942 = vmatprep.subr.bf16.mxu0 0
      %1943 = vmatpush2.bf16.xpose.msra.mxu0 0
      %1944 = vmatprep.subr.bf16.mxu0 0
      %1945 = vmatpush2.bf16.xpose.msra.mxu0 0
      %1946 = vmatprep.subr.bf16.mxu0 0
      %1947 = vmatpush2.bf16.xpose.msra.mxu0 0
      %1948 = vmatprep.subr.bf16.mxu0 0
      %1949 = vmatpush2.bf16.xpose.msra.mxu0 0
      %1950 = vmatprep.subr.bf16.mxu0 0
      %1951 = vmatpush2.bf16.xpose.msra.mxu0 0
      %1952 = vmatprep.subr.bf16.mxu0 0
      %1953 = vmatpush2.bf16.xpose.msra.mxu0 0
      %1954 = vmatprep.subr.bf16.mxu0 0
      %1955 = vmatpush2.bf16.xpose.msra.mxu0 0
      %1956 = vmatprep.subr.bf16.mxu0 0
      %1957 = vmatpush2.bf16.xpose.msra.mxu0 0
      %1958 = vmatprep.mubr.bf16.mxu0 0
      %1959 = vmatmul.mubr.bf16.gmra.mxu0 %v1915
      %v1960 = vpop.f32.mrf.mxu0
      %v1961 = vadd.f32 0.0, %v1960
      %v1962 = vpop.f32.mrf.mxu0
      %v1963 = vpop.f32.mrf.mxu0
      %v1964 = vadd.f32 0.0, %v1963
      %v1965 = vpop.f32.mrf.mxu0
      %1966 = vmatprep.mubr.bf16.mxu0 0
      %1967 = vmatmul.mubr.bf16.gmra.mxu0 %v1918
      %v1968 = vpop.f32.mrf.mxu0
      %v1969 = vadd.f32 0.0, %v1968
      %v1970 = vpop.f32.mrf.mxu0
      %v1971 = vpop.f32.mrf.mxu0
      %v1972 = vadd.f32 0.0, %v1971
      %v1973 = vpop.f32.mrf.mxu0
      %1974 = vdwg.mxu0
      %1977 = vrot.lane.b32.xlu0 %v1650, 96
      %v1978 = vpop.permute.xlu0 %1977
      %1979 = vrot.lane.b32.xlu0 %v1651, 96
      %v1980 = vpop.permute.xlu0 %1979
      %v1982 = vsel %vm1712, %v1650, 0
      %v1985 = vsel %vm1712, %v1651, 0
      %v1988 = vsel %vm1712, %v1978, 0
      %v1991 = vsel %vm1712, %v1980, 0
      %1993 = vmatprep.subr.bf16.mxu0 0
      %1994 = vmatpush1.bf16.xpose.msra.mxu0 0
      %1995 = vmatprep.subr.bf16.mxu0 0
      %1996 = vmatpush1.bf16.xpose.msra.mxu0 0
      %1997 = vmatprep.subr.bf16.mxu0 0
      %1998 = vmatpush1.bf16.xpose.msra.mxu0 0
      %1999 = vmatprep.subr.bf16.mxu0 0
      %2000 = vmatpush1.bf16.xpose.msra.mxu0 0
      %2001 = vmatprep.subr.bf16.mxu0 0
      %2002 = vmatpush1.bf16.xpose.msra.mxu0 0
      %2003 = vmatprep.subr.bf16.mxu0 0
      %2004 = vmatpush1.bf16.xpose.msra.mxu0 0
      %2005 = vmatprep.subr.bf16.mxu0 0
      %2006 = vmatpush1.bf16.xpose.msra.mxu0 %v1991
      %2007 = vmatprep.subr.bf16.mxu0 0
      %2008 = vmatpush1.bf16.xpose.msra.mxu0 %v1988
      %2009 = vmatprep.subr.bf16.mxu0 0
      %2010 = vmatpush2.bf16.xpose.msra.mxu0 0
      %2011 = vmatprep.subr.bf16.mxu0 0
      %2012 = vmatpush2.bf16.xpose.msra.mxu0 0
      %2013 = vmatprep.subr.bf16.mxu0 0
      %2014 = vmatpush2.bf16.xpose.msra.mxu0 0
      %2015 = vmatprep.subr.bf16.mxu0 0
      %2016 = vmatpush2.bf16.xpose.msra.mxu0 0
      %2017 = vmatprep.subr.bf16.mxu0 0
      %2018 = vmatpush2.bf16.xpose.msra.mxu0 0
      %2019 = vmatprep.subr.bf16.mxu0 0
      %2020 = vmatpush2.bf16.xpose.msra.mxu0 0
      %2021 = vmatprep.subr.bf16.mxu0 0
      %2022 = vmatpush2.bf16.xpose.msra.mxu0 0
      %2023 = vmatprep.subr.bf16.mxu0 0
      %2024 = vmatpush2.bf16.xpose.msra.mxu0 0
      %2025 = vmatprep.mubr.bf16.mxu0 0
      %2026 = vmatmul.mubr.bf16.gmra.mxu0 %v1982
      %v2027 = vpop.f32.mrf.mxu0
      %v2028 = vadd.f32 0.0, %v2027
      %v2029 = vpop.f32.mrf.mxu0
      %v2030 = vpop.f32.mrf.mxu0
      %v2031 = vadd.f32 0.0, %v2030
      %v2032 = vpop.f32.mrf.mxu0
      %2033 = vmatprep.mubr.bf16.mxu0 0
      %2034 = vmatmul.mubr.bf16.gmra.mxu0 %v1985
      %v2035 = vpop.f32.mrf.mxu0
      %v2036 = vadd.f32 0.0, %v2035
      %v2037 = vpop.f32.mrf.mxu0
      %v2038 = vpop.f32.mrf.mxu0
      %v2039 = vadd.f32 0.0, %v2038
      %v2040 = vpop.f32.mrf.mxu0
      %2041 = vdwg.mxu0
      %2044 = vrot.lane.b32.xlu0 %v1652, 96
      %v2045 = vpop.permute.xlu0 %2044
      %2046 = vrot.lane.b32.xlu0 %v1653, 96
      %v2047 = vpop.permute.xlu0 %2046
      %v2049 = vsel %vm1712, %v1652, 0
      %v2052 = vsel %vm1712, %v1653, 0
      %v2055 = vsel %vm1712, %v2045, 0
      %v2058 = vsel %vm1712, %v2047, 0
      %2060 = vmatprep.subr.bf16.mxu0 0
      %2061 = vmatpush1.bf16.xpose.msra.mxu0 0
      %2062 = vmatprep.subr.bf16.mxu0 0
      %2063 = vmatpush1.bf16.xpose.msra.mxu0 0
      %2064 = vmatprep.subr.bf16.mxu0 0
      %2065 = vmatpush1.bf16.xpose.msra.mxu0 0
      %2066 = vmatprep.subr.bf16.mxu0 0
      %2067 = vmatpush1.bf16.xpose.msra.mxu0 0
      %2068 = vmatprep.subr.bf16.mxu0 0
      %2069 = vmatpush1.bf16.xpose.msra.mxu0 0
      %2070 = vmatprep.subr.bf16.mxu0 0
      %2071 = vmatpush1.bf16.xpose.msra.mxu0 0
      %2072 = vmatprep.subr.bf16.mxu0 0
      %2073 = vmatpush1.bf16.xpose.msra.mxu0 %v2058
      %2074 = vmatprep.subr.bf16.mxu0 0
      %2075 = vmatpush1.bf16.xpose.msra.mxu0 %v2055
      %2076 = vmatprep.subr.bf16.mxu0 0
      %2077 = vmatpush2.bf16.xpose.msra.mxu0 0
      %2078 = vmatprep.subr.bf16.mxu0 0
      %2079 = vmatpush2.bf16.xpose.msra.mxu0 0
      %2080 = vmatprep.subr.bf16.mxu0 0
      %2081 = vmatpush2.bf16.xpose.msra.mxu0 0
      %2082 = vmatprep.subr.bf16.mxu0 0
      %2083 = vmatpush2.bf16.xpose.msra.mxu0 0
      %2084 = vmatprep.subr.bf16.mxu0 0
      %2085 = vmatpush2.bf16.xpose.msra.mxu0 0
      %2086 = vmatprep.subr.bf16.mxu0 0
      %2087 = vmatpush2.bf16.xpose.msra.mxu0 0
      %2088 = vmatprep.subr.bf16.mxu0 0
      %2089 = vmatpush2.bf16.xpose.msra.mxu0 0
      %2090 = vmatprep.subr.bf16.mxu0 0
      %2091 = vmatpush2.bf16.xpose.msra.mxu0 0
      %2092 = vmatprep.mubr.bf16.mxu0 0
      %2093 = vmatmul.mubr.bf16.gmra.mxu0 %v2049
      %v2094 = vpop.f32.mrf.mxu0
      %v2095 = vadd.f32 0.0, %v2094
      %v2096 = vpop.f32.mrf.mxu0
      %v2097 = vpop.f32.mrf.mxu0
      %v2098 = vadd.f32 0.0, %v2097
      %v2099 = vpop.f32.mrf.mxu0
      %2100 = vmatprep.mubr.bf16.mxu0 0
      %2101 = vmatmul.mubr.bf16.gmra.mxu0 %v2052
      %v2102 = vpop.f32.mrf.mxu0
      %v2103 = vadd.f32 0.0, %v2102
      %v2104 = vpop.f32.mrf.mxu0
      %v2105 = vpop.f32.mrf.mxu0
      %v2106 = vadd.f32 0.0, %v2105
      %v2107 = vpop.f32.mrf.mxu0
      %2108 = vdwg.mxu0
      %2111 = vrot.lane.b32.xlu0 %v1654, 96
      %v2112 = vpop.permute.xlu0 %2111
      %2113 = vrot.lane.b32.xlu0 %v1655, 96
      %v2114 = vpop.permute.xlu0 %2113
      %v2116 = vsel %vm1712, %v1654, 0
      %v2119 = vsel %vm1712, %v1655, 0
      %v2122 = vsel %vm1712, %v2112, 0
      %v2125 = vsel %vm1712, %v2114, 0
      %2127 = vmatprep.subr.bf16.mxu0 0
      %2128 = vmatpush1.bf16.xpose.msra.mxu0 0
      %2129 = vmatprep.subr.bf16.mxu0 0
      %2130 = vmatpush1.bf16.xpose.msra.mxu0 0
      %2131 = vmatprep.subr.bf16.mxu0 0
      %2132 = vmatpush1.bf16.xpose.msra.mxu0 0
      %2133 = vmatprep.subr.bf16.mxu0 0
      %2134 = vmatpush1.bf16.xpose.msra.mxu0 0
      %2135 = vmatprep.subr.bf16.mxu0 0
      %2136 = vmatpush1.bf16.xpose.msra.mxu0 0
      %2137 = vmatprep.subr.bf16.mxu0 0
      %2138 = vmatpush1.bf16.xpose.msra.mxu0 0
      %2139 = vmatprep.subr.bf16.mxu0 0
      %2140 = vmatpush1.bf16.xpose.msra.mxu0 %v2125
      %2141 = vmatprep.subr.bf16.mxu0 0
      %2142 = vmatpush1.bf16.xpose.msra.mxu0 %v2122
      %2143 = vmatprep.subr.bf16.mxu0 0
      %2144 = vmatpush2.bf16.xpose.msra.mxu0 0
      %2145 = vmatprep.subr.bf16.mxu0 0
      %2146 = vmatpush2.bf16.xpose.msra.mxu0 0
      %2147 = vmatprep.subr.bf16.mxu0 0
      %2148 = vmatpush2.bf16.xpose.msra.mxu0 0
      %2149 = vmatprep.subr.bf16.mxu0 0
      %2150 = vmatpush2.bf16.xpose.msra.mxu0 0
      %2151 = vmatprep.subr.bf16.mxu0 0
      %2152 = vmatpush2.bf16.xpose.msra.mxu0 0
      %2153 = vmatprep.subr.bf16.mxu0 0
      %2154 = vmatpush2.bf16.xpose.msra.mxu0 0
      %2155 = vmatprep.subr.bf16.mxu0 0
      %2156 = vmatpush2.bf16.xpose.msra.mxu0 0
      %2157 = vmatprep.subr.bf16.mxu0 0
      %2158 = vmatpush2.bf16.xpose.msra.mxu0 0
      %2159 = vmatprep.mubr.bf16.mxu0 0
      %2160 = vmatmul.mubr.bf16.gmra.mxu0 %v2116
      %v2161 = vpop.f32.mrf.mxu0
      %v2162 = vadd.f32 0.0, %v2161
      %v2163 = vpop.f32.mrf.mxu0
      %v2164 = vpop.f32.mrf.mxu0
      %v2165 = vadd.f32 0.0, %v2164
      %v2166 = vpop.f32.mrf.mxu0
      %2167 = vmatprep.mubr.bf16.mxu0 0
      %2168 = vmatmul.mubr.bf16.gmra.mxu0 %v2119
      %v2169 = vpop.f32.mrf.mxu0
      %v2170 = vadd.f32 0.0, %v2169
      %v2171 = vpop.f32.mrf.mxu0
      %v2172 = vpop.f32.mrf.mxu0
      %v2173 = vadd.f32 0.0, %v2172
      %v2174 = vpop.f32.mrf.mxu0
      %2175 = vdwg.mxu0
      %2178 = vrot.lane.b32.xlu0 %v1656, 96
      %v2179 = vpop.permute.xlu0 %2178
      %2180 = vrot.lane.b32.xlu0 %v1657, 96
      %v2181 = vpop.permute.xlu0 %2180
      %v2183 = vsel %vm1712, %v1656, 0
      %v2186 = vsel %vm1712, %v1657, 0
      %v2189 = vsel %vm1712, %v2179, 0
      %v2192 = vsel %vm1712, %v2181, 0
      %2194 = vmatprep.subr.bf16.mxu0 0
      %2195 = vmatpush1.bf16.xpose.msra.mxu0 0
      %2196 = vmatprep.subr.bf16.mxu0 0
      %2197 = vmatpush1.bf16.xpose.msra.mxu0 0
      %2198 = vmatprep.subr.bf16.mxu0 0
      %2199 = vmatpush1.bf16.xpose.msra.mxu0 0
      %2200 = vmatprep.subr.bf16.mxu0 0
      %2201 = vmatpush1.bf16.xpose.msra.mxu0 0
      %2202 = vmatprep.subr.bf16.mxu0 0
      %2203 = vmatpush1.bf16.xpose.msra.mxu0 0
      %2204 = vmatprep.subr.bf16.mxu0 0
      %2205 = vmatpush1.bf16.xpose.msra.mxu0 0
      %2206 = vmatprep.subr.bf16.mxu0 0
      %2207 = vmatpush1.bf16.xpose.msra.mxu0 %v2192
      %2208 = vmatprep.subr.bf16.mxu0 0
      %2209 = vmatpush1.bf16.xpose.msra.mxu0 %v2189
      %2210 = vmatprep.subr.bf16.mxu0 0
      %2211 = vmatpush2.bf16.xpose.msra.mxu0 0
      %2212 = vmatprep.subr.bf16.mxu0 0
      %2213 = vmatpush2.bf16.xpose.msra.mxu0 0
      %2214 = vmatprep.subr.bf16.mxu0 0
      %2215 = vmatpush2.bf16.xpose.msra.mxu0 0
      %2216 = vmatprep.subr.bf16.mxu0 0
      %2217 = vmatpush2.bf16.xpose.msra.mxu0 0
      %2218 = vmatprep.subr.bf16.mxu0 0
      %2219 = vmatpush2.bf16.xpose.msra.mxu0 0
      %2220 = vmatprep.subr.bf16.mxu0 0
      %2221 = vmatpush2.bf16.xpose.msra.mxu0 0
      %2222 = vmatprep.subr.bf16.mxu0 0
      %2223 = vmatpush2.bf16.xpose.msra.mxu0 0
      %2224 = vmatprep.subr.bf16.mxu0 0
      %2225 = vmatpush2.bf16.xpose.msra.mxu0 0
      %2226 = vmatprep.mubr.bf16.mxu0 0
      %2227 = vmatmul.mubr.bf16.gmra.mxu0 %v2183
      %v2228 = vpop.f32.mrf.mxu0
      %v2229 = vadd.f32 0.0, %v2228
      %v2230 = vpop.f32.mrf.mxu0
      %v2231 = vpop.f32.mrf.mxu0
      %v2232 = vadd.f32 0.0, %v2231
      %v2233 = vpop.f32.mrf.mxu0
      %2234 = vmatprep.mubr.bf16.mxu0 0
      %2235 = vmatmul.mubr.bf16.gmra.mxu0 %v2186
      %v2236 = vpop.f32.mrf.mxu0
      %v2237 = vadd.f32 0.0, %v2236
      %v2238 = vpop.f32.mrf.mxu0
      %v2239 = vpop.f32.mrf.mxu0
      %v2240 = vadd.f32 0.0, %v2239
      %v2241 = vpop.f32.mrf.mxu0
      %2242 = vdwg.mxu0
      %2245 = vrot.lane.b32.xlu0 %v1658, 96
      %v2246 = vpop.permute.xlu0 %2245
      %2247 = vrot.lane.b32.xlu0 %v1659, 96
      %v2248 = vpop.permute.xlu0 %2247
      %v2250 = vsel %vm1712, %v1658, 0
      %v2253 = vsel %vm1712, %v1659, 0
      %v2256 = vsel %vm1712, %v2246, 0
      %v2259 = vsel %vm1712, %v2248, 0
      %2261 = vmatprep.subr.bf16.mxu0 0
      %2262 = vmatpush1.bf16.xpose.msra.mxu0 0
      %2263 = vmatprep.subr.bf16.mxu0 0
      %2264 = vmatpush1.bf16.xpose.msra.mxu0 0
      %2265 = vmatprep.subr.bf16.mxu0 0
      %2266 = vmatpush1.bf16.xpose.msra.mxu0 0
      %2267 = vmatprep.subr.bf16.mxu0 0
      %2268 = vmatpush1.bf16.xpose.msra.mxu0 0
      %2269 = vmatprep.subr.bf16.mxu0 0
      %2270 = vmatpush1.bf16.xpose.msra.mxu0 0
      %2271 = vmatprep.subr.bf16.mxu0 0
      %2272 = vmatpush1.bf16.xpose.msra.mxu0 0
      %2273 = vmatprep.subr.bf16.mxu0 0
      %2274 = vmatpush1.bf16.xpose.msra.mxu0 %v2259
      %2275 = vmatprep.subr.bf16.mxu0 0
      %2276 = vmatpush1.bf16.xpose.msra.mxu0 %v2256
      %2277 = vmatprep.subr.bf16.mxu0 0
      %2278 = vmatpush2.bf16.xpose.msra.mxu0 0
      %2279 = vmatprep.subr.bf16.mxu0 0
      %2280 = vmatpush2.bf16.xpose.msra.mxu0 0
      %2281 = vmatprep.subr.bf16.mxu0 0
      %2282 = vmatpush2.bf16.xpose.msra.mxu0 0
      %2283 = vmatprep.subr.bf16.mxu0 0
      %2284 = vmatpush2.bf16.xpose.msra.mxu0 0
      %2285 = vmatprep.subr.bf16.mxu0 0
      %2286 = vmatpush2.bf16.xpose.msra.mxu0 0
      %2287 = vmatprep.subr.bf16.mxu0 0
      %2288 = vmatpush2.bf16.xpose.msra.mxu0 0
      %2289 = vmatprep.subr.bf16.mxu0 0
      %2290 = vmatpush2.bf16.xpose.msra.mxu0 0
      %2291 = vmatprep.subr.bf16.mxu0 0
      %2292 = vmatpush2.bf16.xpose.msra.mxu0 0
      %2293 = vmatprep.mubr.bf16.mxu0 0
      %2294 = vmatmul.mubr.bf16.gmra.mxu0 %v2250
      %v2295 = vpop.f32.mrf.mxu0
      %v2296 = vadd.f32 0.0, %v2295
      %v2297 = vpop.f32.mrf.mxu0
      %v2298 = vpop.f32.mrf.mxu0
      %v2299 = vadd.f32 0.0, %v2298
      %v2300 = vpop.f32.mrf.mxu0
      %2301 = vmatprep.mubr.bf16.mxu0 0
      %2302 = vmatmul.mubr.bf16.gmra.mxu0 %v2253
      %v2303 = vpop.f32.mrf.mxu0
      %v2304 = vadd.f32 0.0, %v2303
      %v2305 = vpop.f32.mrf.mxu0
      %v2306 = vpop.f32.mrf.mxu0
      %v2307 = vadd.f32 0.0, %v2306
      %v2308 = vpop.f32.mrf.mxu0
      %2309 = vdwg.mxu0
      %2312 = vrot.lane.b32.xlu0 %v1660, 96
      %v2313 = vpop.permute.xlu0 %2312
      %2314 = vrot.lane.b32.xlu0 %v1661, 96
      %v2315 = vpop.permute.xlu0 %2314
      %v2317 = vsel %vm1712, %v1660, 0
      %v2320 = vsel %vm1712, %v1661, 0
      %v2323 = vsel %vm1712, %v2313, 0
      %v2326 = vsel %vm1712, %v2315, 0
      %2328 = vmatprep.subr.bf16.mxu0 0
      %2329 = vmatpush1.bf16.xpose.msra.mxu0 0
      %2330 = vmatprep.subr.bf16.mxu0 0
      %2331 = vmatpush1.bf16.xpose.msra.mxu0 0
      %2332 = vmatprep.subr.bf16.mxu0 0
      %2333 = vmatpush1.bf16.xpose.msra.mxu0 0
      %2334 = vmatprep.subr.bf16.mxu0 0
      %2335 = vmatpush1.bf16.xpose.msra.mxu0 0
      %2336 = vmatprep.subr.bf16.mxu0 0
      %2337 = vmatpush1.bf16.xpose.msra.mxu0 0
      %2338 = vmatprep.subr.bf16.mxu0 0
      %2339 = vmatpush1.bf16.xpose.msra.mxu0 0
      %2340 = vmatprep.subr.bf16.mxu0 0
      %2341 = vmatpush1.bf16.xpose.msra.mxu0 %v2326
      %2342 = vmatprep.subr.bf16.mxu0 0
      %2343 = vmatpush1.bf16.xpose.msra.mxu0 %v2323
      %2344 = vmatprep.subr.bf16.mxu0 0
      %2345 = vmatpush2.bf16.xpose.msra.mxu0 0
      %2346 = vmatprep.subr.bf16.mxu0 0
      %2347 = vmatpush2.bf16.xpose.msra.mxu0 0
      %2348 = vmatprep.subr.bf16.mxu0 0
      %2349 = vmatpush2.bf16.xpose.msra.mxu0 0
      %2350 = vmatprep.subr.bf16.mxu0 0
      %2351 = vmatpush2.bf16.xpose.msra.mxu0 0
      %2352 = vmatprep.subr.bf16.mxu0 0
      %2353 = vmatpush2.bf16.xpose.msra.mxu0 0
      %2354 = vmatprep.subr.bf16.mxu0 0
      %2355 = vmatpush2.bf16.xpose.msra.mxu0 0
      %2356 = vmatprep.subr.bf16.mxu0 0
      %2357 = vmatpush2.bf16.xpose.msra.mxu0 0
      %2358 = vmatprep.subr.bf16.mxu0 0
      %2359 = vmatpush2.bf16.xpose.msra.mxu0 0
      %2360 = vmatprep.mubr.bf16.mxu0 0
      %2361 = vmatmul.mubr.bf16.gmra.mxu0 %v2317
      %v2362 = vpop.f32.mrf.mxu0
      %v2363 = vadd.f32 0.0, %v2362
      %v2364 = vpop.f32.mrf.mxu0
      %v2365 = vpop.f32.mrf.mxu0
      %v2366 = vadd.f32 0.0, %v2365
      %v2367 = vpop.f32.mrf.mxu0
      %2368 = vmatprep.mubr.bf16.mxu0 0
      %2369 = vmatmul.mubr.bf16.gmra.mxu0 %v2320
      %v2370 = vpop.f32.mrf.mxu0
      %v2371 = vadd.f32 0.0, %v2370
      %v2372 = vpop.f32.mrf.mxu0
      %v2373 = vpop.f32.mrf.mxu0
      %v2374 = vadd.f32 0.0, %v2373
      %v2375 = vpop.f32.mrf.mxu0
      %2376 = vdwg.mxu0
      %2379 = vrot.lane.b32.xlu0 %v1662, 96
      %v2380 = vpop.permute.xlu0 %2379
      %2381 = vrot.lane.b32.xlu0 %v1663, 96
      %v2382 = vpop.permute.xlu0 %2381
      %v2384 = vsel %vm1712, %v1662, 0
      %v2387 = vsel %vm1712, %v1663, 0
      %v2390 = vsel %vm1712, %v2380, 0
      %v2393 = vsel %vm1712, %v2382, 0
      %2395 = vmatprep.subr.bf16.mxu0 0
      %2396 = vmatpush1.bf16.xpose.msra.mxu0 0
      %2397 = vmatprep.subr.bf16.mxu0 0
      %2398 = vmatpush1.bf16.xpose.msra.mxu0 0
      %2399 = vmatprep.subr.bf16.mxu0 0
      %2400 = vmatpush1.bf16.xpose.msra.mxu0 0
      %2401 = vmatprep.subr.bf16.mxu0 0
      %2402 = vmatpush1.bf16.xpose.msra.mxu0 0
      %2403 = vmatprep.subr.bf16.mxu0 0
      %2404 = vmatpush1.bf16.xpose.msra.mxu0 0
      %2405 = vmatprep.subr.bf16.mxu0 0
      %2406 = vmatpush1.bf16.xpose.msra.mxu0 0
      %2407 = vmatprep.subr.bf16.mxu0 0
      %2408 = vmatpush1.bf16.xpose.msra.mxu0 %v2393
      %2409 = vmatprep.subr.bf16.mxu0 0
      %2410 = vmatpush1.bf16.xpose.msra.mxu0 %v2390
      %2411 = vmatprep.subr.bf16.mxu0 0
      %2412 = vmatpush2.bf16.xpose.msra.mxu0 0
      %2413 = vmatprep.subr.bf16.mxu0 0
      %2414 = vmatpush2.bf16.xpose.msra.mxu0 0
      %2415 = vmatprep.subr.bf16.mxu0 0
      %2416 = vmatpush2.bf16.xpose.msra.mxu0 0
      %2417 = vmatprep.subr.bf16.mxu0 0
      %2418 = vmatpush2.bf16.xpose.msra.mxu0 0
      %2419 = vmatprep.subr.bf16.mxu0 0
      %2420 = vmatpush2.bf16.xpose.msra.mxu0 0
      %2421 = vmatprep.subr.bf16.mxu0 0
      %2422 = vmatpush2.bf16.xpose.msra.mxu0 0
      %2423 = vmatprep.subr.bf16.mxu0 0
      %2424 = vmatpush2.bf16.xpose.msra.mxu0 0
      %2425 = vmatprep.subr.bf16.mxu0 0
      %2426 = vmatpush2.bf16.xpose.msra.mxu0 0
      %2427 = vmatprep.mubr.bf16.mxu0 0
      %2428 = vmatmul.mubr.bf16.gmra.mxu0 %v2384
      %v2429 = vpop.f32.mrf.mxu0
      %v2430 = vadd.f32 0.0, %v2429
      %v2431 = vpop.f32.mrf.mxu0
      %v2432 = vpop.f32.mrf.mxu0
      %v2433 = vadd.f32 0.0, %v2432
      %v2434 = vpop.f32.mrf.mxu0
      %2435 = vmatprep.mubr.bf16.mxu0 0
      %2436 = vmatmul.mubr.bf16.gmra.mxu0 %v2387
      %v2437 = vpop.f32.mrf.mxu0
      %v2438 = vadd.f32 0.0, %v2437
      %v2439 = vpop.f32.mrf.mxu0
      %v2440 = vpop.f32.mrf.mxu0
      %v2441 = vadd.f32 0.0, %v2440
      %v2442 = vpop.f32.mrf.mxu0
      %2443 = vdwg.mxu0
      %2446 = vrot.lane.b32.xlu0 %v1664, 96
      %v2447 = vpop.permute.xlu0 %2446
      %2448 = vrot.lane.b32.xlu0 %v1665, 96
      %v2449 = vpop.permute.xlu0 %2448
      %v2451 = vsel %vm1712, %v1664, 0
      %v2454 = vsel %vm1712, %v1665, 0
      %v2457 = vsel %vm1712, %v2447, 0
      %v2460 = vsel %vm1712, %v2449, 0
      %2462 = vmatprep.subr.bf16.mxu0 0
      %2463 = vmatpush1.bf16.xpose.msra.mxu0 0
      %2464 = vmatprep.subr.bf16.mxu0 0
      %2465 = vmatpush1.bf16.xpose.msra.mxu0 0
      %2466 = vmatprep.subr.bf16.mxu0 0
      %2467 = vmatpush1.bf16.xpose.msra.mxu0 0
      %2468 = vmatprep.subr.bf16.mxu0 0
      %2469 = vmatpush1.bf16.xpose.msra.mxu0 0
      %2470 = vmatprep.subr.bf16.mxu0 0
      %2471 = vmatpush1.bf16.xpose.msra.mxu0 0
      %2472 = vmatprep.subr.bf16.mxu0 0
      %2473 = vmatpush1.bf16.xpose.msra.mxu0 0
      %2474 = vmatprep.subr.bf16.mxu0 0
      %2475 = vmatpush1.bf16.xpose.msra.mxu0 %v2460
      %2476 = vmatprep.subr.bf16.mxu0 0
      %2477 = vmatpush1.bf16.xpose.msra.mxu0 %v2457
      %2478 = vmatprep.subr.bf16.mxu0 0
      %2479 = vmatpush2.bf16.xpose.msra.mxu0 0
      %2480 = vmatprep.subr.bf16.mxu0 0
      %2481 = vmatpush2.bf16.xpose.msra.mxu0 0
      %2482 = vmatprep.subr.bf16.mxu0 0
      %2483 = vmatpush2.bf16.xpose.msra.mxu0 0
      %2484 = vmatprep.subr.bf16.mxu0 0
      %2485 = vmatpush2.bf16.xpose.msra.mxu0 0
      %2486 = vmatprep.subr.bf16.mxu0 0
      %2487 = vmatpush2.bf16.xpose.msra.mxu0 0
      %2488 = vmatprep.subr.bf16.mxu0 0
      %2489 = vmatpush2.bf16.xpose.msra.mxu0 0
      %2490 = vmatprep.subr.bf16.mxu0 0
      %2491 = vmatpush2.bf16.xpose.msra.mxu0 0
      %2492 = vmatprep.subr.bf16.mxu0 0
      %2493 = vmatpush2.bf16.xpose.msra.mxu0 0
      %2494 = vmatprep.mubr.bf16.mxu0 0
      %2495 = vmatmul.mubr.bf16.gmra.mxu0 %v2451
      %v2496 = vpop.f32.mrf.mxu0
      %v2497 = vadd.f32 0.0, %v2496
      %v2498 = vpop.f32.mrf.mxu0
      %v2499 = vpop.f32.mrf.mxu0
      %v2500 = vadd.f32 0.0, %v2499
      %v2501 = vpop.f32.mrf.mxu0
      %2502 = vmatprep.mubr.bf16.mxu0 0
      %2503 = vmatmul.mubr.bf16.gmra.mxu0 %v2454
      %v2504 = vpop.f32.mrf.mxu0
      %v2505 = vadd.f32 0.0, %v2504
      %v2506 = vpop.f32.mrf.mxu0
      %v2507 = vpop.f32.mrf.mxu0
      %v2508 = vadd.f32 0.0, %v2507
      %v2509 = vpop.f32.mrf.mxu0
      %2510 = vdwg.mxu0
      %2513 = vrot.lane.b32.xlu0 %v1666, 96
      %v2514 = vpop.permute.xlu0 %2513
      %2515 = vrot.lane.b32.xlu0 %v1667, 96
      %v2516 = vpop.permute.xlu0 %2515
      %v2518 = vsel %vm1712, %v1666, 0
      %v2521 = vsel %vm1712, %v1667, 0
      %v2524 = vsel %vm1712, %v2514, 0
      %v2527 = vsel %vm1712, %v2516, 0
      %2529 = vmatprep.subr.bf16.mxu0 0
      %2530 = vmatpush1.bf16.xpose.msra.mxu0 0
      %2531 = vmatprep.subr.bf16.mxu0 0
      %2532 = vmatpush1.bf16.xpose.msra.mxu0 0
      %2533 = vmatprep.subr.bf16.mxu0 0
      %2534 = vmatpush1.bf16.xpose.msra.mxu0 0
      %2535 = vmatprep.subr.bf16.mxu0 0
      %2536 = vmatpush1.bf16.xpose.msra.mxu0 0
      %2537 = vmatprep.subr.bf16.mxu0 0
      %2538 = vmatpush1.bf16.xpose.msra.mxu0 0
      %2539 = vmatprep.subr.bf16.mxu0 0
      %2540 = vmatpush1.bf16.xpose.msra.mxu0 0
      %2541 = vmatprep.subr.bf16.mxu0 0
      %2542 = vmatpush1.bf16.xpose.msra.mxu0 %v2527
      %2543 = vmatprep.subr.bf16.mxu0 0
      %2544 = vmatpush1.bf16.xpose.msra.mxu0 %v2524
      %2545 = vmatprep.subr.bf16.mxu0 0
      %2546 = vmatpush2.bf16.xpose.msra.mxu0 0
      %2547 = vmatprep.subr.bf16.mxu0 0
      %2548 = vmatpush2.bf16.xpose.msra.mxu0 0
      %2549 = vmatprep.subr.bf16.mxu0 0
      %2550 = vmatpush2.bf16.xpose.msra.mxu0 0
      %2551 = vmatprep.subr.bf16.mxu0 0
      %2552 = vmatpush2.bf16.xpose.msra.mxu0 0
      %2553 = vmatprep.subr.bf16.mxu0 0
      %2554 = vmatpush2.bf16.xpose.msra.mxu0 0
      %2555 = vmatprep.subr.bf16.mxu0 0
      %2556 = vmatpush2.bf16.xpose.msra.mxu0 0
      %2557 = vmatprep.subr.bf16.mxu0 0
      %2558 = vmatpush2.bf16.xpose.msra.mxu0 0
      %2559 = vmatprep.subr.bf16.mxu0 0
      %2560 = vmatpush2.bf16.xpose.msra.mxu0 0
      %2561 = vmatprep.mubr.bf16.mxu0 0
      %2562 = vmatmul.mubr.bf16.gmra.mxu0 %v2518
      %v2563 = vpop.f32.mrf.mxu0
      %v2564 = vadd.f32 0.0, %v2563
      %v2565 = vpop.f32.mrf.mxu0
      %v2566 = vpop.f32.mrf.mxu0
      %v2567 = vadd.f32 0.0, %v2566
      %v2568 = vpop.f32.mrf.mxu0
      %2569 = vmatprep.mubr.bf16.mxu0 0
      %2570 = vmatmul.mubr.bf16.gmra.mxu0 %v2521
      %v2571 = vpop.f32.mrf.mxu0
      %v2572 = vadd.f32 0.0, %v2571
      %v2573 = vpop.f32.mrf.mxu0
      %v2574 = vpop.f32.mrf.mxu0
      %v2575 = vadd.f32 0.0, %v2574
      %v2576 = vpop.f32.mrf.mxu0
      %2577 = vdwg.mxu0
      %2580 = vrot.lane.b32.xlu0 %v1668, 96
      %v2581 = vpop.permute.xlu0 %2580
      %2582 = vrot.lane.b32.xlu0 %v1669, 96
      %v2583 = vpop.permute.xlu0 %2582
      %v2585 = vsel %vm1712, %v1668, 0
      %v2588 = vsel %vm1712, %v1669, 0
      %v2591 = vsel %vm1712, %v2581, 0
      %v2594 = vsel %vm1712, %v2583, 0
      %2596 = vmatprep.subr.bf16.mxu0 0
      %2597 = vmatpush1.bf16.xpose.msra.mxu0 0
      %2598 = vmatprep.subr.bf16.mxu0 0
      %2599 = vmatpush1.bf16.xpose.msra.mxu0 0
      %2600 = vmatprep.subr.bf16.mxu0 0
      %2601 = vmatpush1.bf16.xpose.msra.mxu0 0
      %2602 = vmatprep.subr.bf16.mxu0 0
      %2603 = vmatpush1.bf16.xpose.msra.mxu0 0
      %2604 = vmatprep.subr.bf16.mxu0 0
      %2605 = vmatpush1.bf16.xpose.msra.mxu0 0
      %2606 = vmatprep.subr.bf16.mxu0 0
      %2607 = vmatpush1.bf16.xpose.msra.mxu0 0
      %2608 = vmatprep.subr.bf16.mxu0 0
      %2609 = vmatpush1.bf16.xpose.msra.mxu0 %v2594
      %2610 = vmatprep.subr.bf16.mxu0 0
      %2611 = vmatpush1.bf16.xpose.msra.mxu0 %v2591
      %2612 = vmatprep.subr.bf16.mxu0 0
      %2613 = vmatpush2.bf16.xpose.msra.mxu0 0
      %2614 = vmatprep.subr.bf16.mxu0 0
      %2615 = vmatpush2.bf16.xpose.msra.mxu0 0
      %2616 = vmatprep.subr.bf16.mxu0 0
      %2617 = vmatpush2.bf16.xpose.msra.mxu0 0
      %2618 = vmatprep.subr.bf16.mxu0 0
      %2619 = vmatpush2.bf16.xpose.msra.mxu0 0
      %2620 = vmatprep.subr.bf16.mxu0 0
      %2621 = vmatpush2.bf16.xpose.msra.mxu0 0
      %2622 = vmatprep.subr.bf16.mxu0 0
      %2623 = vmatpush2.bf16.xpose.msra.mxu0 0
      %2624 = vmatprep.subr.bf16.mxu0 0
      %2625 = vmatpush2.bf16.xpose.msra.mxu0 0
      %2626 = vmatprep.subr.bf16.mxu0 0
      %2627 = vmatpush2.bf16.xpose.msra.mxu0 0
      %2628 = vmatprep.mubr.bf16.mxu0 0
      %2629 = vmatmul.mubr.bf16.gmra.mxu0 %v2585
      %v2630 = vpop.f32.mrf.mxu0
      %v2631 = vadd.f32 0.0, %v2630
      %v2632 = vpop.f32.mrf.mxu0
      %v2633 = vpop.f32.mrf.mxu0
      %v2634 = vadd.f32 0.0, %v2633
      %v2635 = vpop.f32.mrf.mxu0
      %2636 = vmatprep.mubr.bf16.mxu0 0
      %2637 = vmatmul.mubr.bf16.gmra.mxu0 %v2588
      %v2638 = vpop.f32.mrf.mxu0
      %v2639 = vadd.f32 0.0, %v2638
      %v2640 = vpop.f32.mrf.mxu0
      %v2641 = vpop.f32.mrf.mxu0
      %v2642 = vadd.f32 0.0, %v2641
      %v2643 = vpop.f32.mrf.mxu0
      %2644 = vdwg.mxu0
      %2647 = vrot.lane.b32.xlu0 %v1670, 96
      %v2648 = vpop.permute.xlu0 %2647
      %2649 = vrot.lane.b32.xlu0 %v1671, 96
      %v2650 = vpop.permute.xlu0 %2649
      %v2652 = vsel %vm1712, %v1670, 0
      %v2655 = vsel %vm1712, %v1671, 0
      %v2658 = vsel %vm1712, %v2648, 0
      %v2661 = vsel %vm1712, %v2650, 0
      %2663 = vmatprep.subr.bf16.mxu0 0
      %2664 = vmatpush1.bf16.xpose.msra.mxu0 0
      %2665 = vmatprep.subr.bf16.mxu0 0
      %2666 = vmatpush1.bf16.xpose.msra.mxu0 0
      %2667 = vmatprep.subr.bf16.mxu0 0
      %2668 = vmatpush1.bf16.xpose.msra.mxu0 0
      %2669 = vmatprep.subr.bf16.mxu0 0
      %2670 = vmatpush1.bf16.xpose.msra.mxu0 0
      %2671 = vmatprep.subr.bf16.mxu0 0
      %2672 = vmatpush1.bf16.xpose.msra.mxu0 0
      %2673 = vmatprep.subr.bf16.mxu0 0
      %2674 = vmatpush1.bf16.xpose.msra.mxu0 0
      %2675 = vmatprep.subr.bf16.mxu0 0
      %2676 = vmatpush1.bf16.xpose.msra.mxu0 %v2661
      %2677 = vmatprep.subr.bf16.mxu0 0
      %2678 = vmatpush1.bf16.xpose.msra.mxu0 %v2658
      %2679 = vmatprep.subr.bf16.mxu0 0
      %2680 = vmatpush2.bf16.xpose.msra.mxu0 0
      %2681 = vmatprep.subr.bf16.mxu0 0
      %2682 = vmatpush2.bf16.xpose.msra.mxu0 0
      %2683 = vmatprep.subr.bf16.mxu0 0
      %2684 = vmatpush2.bf16.xpose.msra.mxu0 0
      %2685 = vmatprep.subr.bf16.mxu0 0
      %2686 = vmatpush2.bf16.xpose.msra.mxu0 0
      %2687 = vmatprep.subr.bf16.mxu0 0
      %2688 = vmatpush2.bf16.xpose.msra.mxu0 0
      %2689 = vmatprep.subr.bf16.mxu0 0
      %2690 = vmatpush2.bf16.xpose.msra.mxu0 0
      %2691 = vmatprep.subr.bf16.mxu0 0
      %2692 = vmatpush2.bf16.xpose.msra.mxu0 0
      %2693 = vmatprep.subr.bf16.mxu0 0
      %2694 = vmatpush2.bf16.xpose.msra.mxu0 0
      %2695 = vmatprep.mubr.bf16.mxu0 0
      %2696 = vmatmul.mubr.bf16.gmra.mxu0 %v2652
      %v2697 = vpop.f32.mrf.mxu0
      %v2698 = vadd.f32 0.0, %v2697
      %v2699 = vpop.f32.mrf.mxu0
      %v2700 = vpop.f32.mrf.mxu0
      %v2701 = vadd.f32 0.0, %v2700
      %v2702 = vpop.f32.mrf.mxu0
      %2703 = vmatprep.mubr.bf16.mxu0 0
      %2704 = vmatmul.mubr.bf16.gmra.mxu0 %v2655
      %v2705 = vpop.f32.mrf.mxu0
      %v2706 = vadd.f32 0.0, %v2705
      %v2707 = vpop.f32.mrf.mxu0
      %v2708 = vpop.f32.mrf.mxu0
      %v2709 = vadd.f32 0.0, %v2708
      %v2710 = vpop.f32.mrf.mxu0
      %2711 = vdwg.mxu0
      %2714 = vrot.lane.b32.xlu0 %v1672, 96
      %v2715 = vpop.permute.xlu0 %2714
      %2716 = vrot.lane.b32.xlu0 %v1673, 96
      %v2717 = vpop.permute.xlu0 %2716
      %v2719 = vsel %vm1712, %v1672, 0
      %v2722 = vsel %vm1712, %v1673, 0
      %v2725 = vsel %vm1712, %v2715, 0
      %v2728 = vsel %vm1712, %v2717, 0
      %2730 = vmatprep.subr.bf16.mxu0 0
      %2731 = vmatpush1.bf16.xpose.msra.mxu0 0
      %2732 = vmatprep.subr.bf16.mxu0 0
      %2733 = vmatpush1.bf16.xpose.msra.mxu0 0
      %2734 = vmatprep.subr.bf16.mxu0 0
      %2735 = vmatpush1.bf16.xpose.msra.mxu0 0
      %2736 = vmatprep.subr.bf16.mxu0 0
      %2737 = vmatpush1.bf16.xpose.msra.mxu0 0
      %2738 = vmatprep.subr.bf16.mxu0 0
      %2739 = vmatpush1.bf16.xpose.msra.mxu0 0
      %2740 = vmatprep.subr.bf16.mxu0 0
      %2741 = vmatpush1.bf16.xpose.msra.mxu0 0
      %2742 = vmatprep.subr.bf16.mxu0 0
      %2743 = vmatpush1.bf16.xpose.msra.mxu0 %v2728
      %2744 = vmatprep.subr.bf16.mxu0 0
      %2745 = vmatpush1.bf16.xpose.msra.mxu0 %v2725
      %2746 = vmatprep.subr.bf16.mxu0 0
      %2747 = vmatpush2.bf16.xpose.msra.mxu0 0
      %2748 = vmatprep.subr.bf16.mxu0 0
      %2749 = vmatpush2.bf16.xpose.msra.mxu0 0
      %2750 = vmatprep.subr.bf16.mxu0 0
      %2751 = vmatpush2.bf16.xpose.msra.mxu0 0
      %2752 = vmatprep.subr.bf16.mxu0 0
      %2753 = vmatpush2.bf16.xpose.msra.mxu0 0
      %2754 = vmatprep.subr.bf16.mxu0 0
      %2755 = vmatpush2.bf16.xpose.msra.mxu0 0
      %2756 = vmatprep.subr.bf16.mxu0 0
      %2757 = vmatpush2.bf16.xpose.msra.mxu0 0
      %2758 = vmatprep.subr.bf16.mxu0 0
      %2759 = vmatpush2.bf16.xpose.msra.mxu0 0
      %2760 = vmatprep.subr.bf16.mxu0 0
      %2761 = vmatpush2.bf16.xpose.msra.mxu0 0
      %2762 = vmatprep.mubr.bf16.mxu0 0
      %2763 = vmatmul.mubr.bf16.gmra.mxu0 %v2719
      %v2764 = vpop.f32.mrf.mxu0
      %v2765 = vadd.f32 0.0, %v2764
      %v2766 = vpop.f32.mrf.mxu0
      %v2767 = vpop.f32.mrf.mxu0
      %v2768 = vadd.f32 0.0, %v2767
      %v2769 = vpop.f32.mrf.mxu0
      %2770 = vmatprep.mubr.bf16.mxu0 0
      %2771 = vmatmul.mubr.bf16.gmra.mxu0 %v2722
      %v2772 = vpop.f32.mrf.mxu0
      %v2773 = vadd.f32 0.0, %v2772
      %v2774 = vpop.f32.mrf.mxu0
      %v2775 = vpop.f32.mrf.mxu0
      %v2776 = vadd.f32 0.0, %v2775
      %v2777 = vpop.f32.mrf.mxu0
      %2778 = vdwg.mxu0
      %2781 = vrot.lane.b32.xlu0 %v1674, 96
      %v2782 = vpop.permute.xlu0 %2781
      %2783 = vrot.lane.b32.xlu0 %v1675, 96
      %v2784 = vpop.permute.xlu0 %2783
      %v2786 = vsel %vm1712, %v1674, 0
      %v2789 = vsel %vm1712, %v1675, 0
      %v2792 = vsel %vm1712, %v2782, 0
      %v2795 = vsel %vm1712, %v2784, 0
      %2797 = vmatprep.subr.bf16.mxu0 0
      %2798 = vmatpush1.bf16.xpose.msra.mxu0 0
      %2799 = vmatprep.subr.bf16.mxu0 0
      %2800 = vmatpush1.bf16.xpose.msra.mxu0 0
      %2801 = vmatprep.subr.bf16.mxu0 0
      %2802 = vmatpush1.bf16.xpose.msra.mxu0 0
      %2803 = vmatprep.subr.bf16.mxu0 0
      %2804 = vmatpush1.bf16.xpose.msra.mxu0 0
      %2805 = vmatprep.subr.bf16.mxu0 0
      %2806 = vmatpush1.bf16.xpose.msra.mxu0 0
      %2807 = vmatprep.subr.bf16.mxu0 0
      %2808 = vmatpush1.bf16.xpose.msra.mxu0 0
      %2809 = vmatprep.subr.bf16.mxu0 0
      %2810 = vmatpush1.bf16.xpose.msra.mxu0 %v2795
      %2811 = vmatprep.subr.bf16.mxu0 0
      %2812 = vmatpush1.bf16.xpose.msra.mxu0 %v2792
      %2813 = vmatprep.subr.bf16.mxu0 0
      %2814 = vmatpush2.bf16.xpose.msra.mxu0 0
      %2815 = vmatprep.subr.bf16.mxu0 0
      %2816 = vmatpush2.bf16.xpose.msra.mxu0 0
      %2817 = vmatprep.subr.bf16.mxu0 0
      %2818 = vmatpush2.bf16.xpose.msra.mxu0 0
      %2819 = vmatprep.subr.bf16.mxu0 0
      %2820 = vmatpush2.bf16.xpose.msra.mxu0 0
      %2821 = vmatprep.subr.bf16.mxu0 0
      %2822 = vmatpush2.bf16.xpose.msra.mxu0 0
      %2823 = vmatprep.subr.bf16.mxu0 0
      %2824 = vmatpush2.bf16.xpose.msra.mxu0 0
      %2825 = vmatprep.subr.bf16.mxu0 0
      %2826 = vmatpush2.bf16.xpose.msra.mxu0 0
      %2827 = vmatprep.subr.bf16.mxu0 0
      %2828 = vmatpush2.bf16.xpose.msra.mxu0 0
      %2829 = vmatprep.mubr.bf16.mxu0 0
      %2830 = vmatmul.mubr.bf16.gmra.mxu0 %v2786
      %v2831 = vpop.f32.mrf.mxu0
      %v2832 = vadd.f32 0.0, %v2831
      %v2833 = vpop.f32.mrf.mxu0
      %v2834 = vpop.f32.mrf.mxu0
      %v2835 = vadd.f32 0.0, %v2834
      %v2836 = vpop.f32.mrf.mxu0
      %2837 = vmatprep.mubr.bf16.mxu0 0
      %2838 = vmatmul.mubr.bf16.gmra.mxu0 %v2789
      %v2839 = vpop.f32.mrf.mxu0
      %v2840 = vadd.f32 0.0, %v2839
      %v2841 = vpop.f32.mrf.mxu0
      %v2842 = vpop.f32.mrf.mxu0
      %v2843 = vadd.f32 0.0, %v2842
      %v2844 = vpop.f32.mrf.mxu0
      %2845 = vdwg.mxu0
      %2848 = vrot.lane.b32.xlu0 %v1676, 96
      %v2849 = vpop.permute.xlu0 %2848
      %2850 = vrot.lane.b32.xlu0 %v1677, 96
      %v2851 = vpop.permute.xlu0 %2850
      %v2853 = vsel %vm1712, %v1676, 0
      %v2856 = vsel %vm1712, %v1677, 0
      %v2859 = vsel %vm1712, %v2849, 0
      %v2862 = vsel %vm1712, %v2851, 0
      %2864 = vmatprep.subr.bf16.mxu0 0
      %2865 = vmatpush1.bf16.xpose.msra.mxu0 0
      %2866 = vmatprep.subr.bf16.mxu0 0
      %2867 = vmatpush1.bf16.xpose.msra.mxu0 0
      %2868 = vmatprep.subr.bf16.mxu0 0
      %2869 = vmatpush1.bf16.xpose.msra.mxu0 0
      %2870 = vmatprep.subr.bf16.mxu0 0
      %2871 = vmatpush1.bf16.xpose.msra.mxu0 0
      %2872 = vmatprep.subr.bf16.mxu0 0
      %2873 = vmatpush1.bf16.xpose.msra.mxu0 0
      %2874 = vmatprep.subr.bf16.mxu0 0
      %2875 = vmatpush1.bf16.xpose.msra.mxu0 0
      %2876 = vmatprep.subr.bf16.mxu0 0
      %2877 = vmatpush1.bf16.xpose.msra.mxu0 %v2862
      %2878 = vmatprep.subr.bf16.mxu0 0
      %2879 = vmatpush1.bf16.xpose.msra.mxu0 %v2859
      %2880 = vmatprep.subr.bf16.mxu0 0
      %2881 = vmatpush2.bf16.xpose.msra.mxu0 0
      %2882 = vmatprep.subr.bf16.mxu0 0
      %2883 = vmatpush2.bf16.xpose.msra.mxu0 0
      %2884 = vmatprep.subr.bf16.mxu0 0
      %2885 = vmatpush2.bf16.xpose.msra.mxu0 0
      %2886 = vmatprep.subr.bf16.mxu0 0
      %2887 = vmatpush2.bf16.xpose.msra.mxu0 0
      %2888 = vmatprep.subr.bf16.mxu0 0
      %2889 = vmatpush2.bf16.xpose.msra.mxu0 0
      %2890 = vmatprep.subr.bf16.mxu0 0
      %2891 = vmatpush2.bf16.xpose.msra.mxu0 0
      %2892 = vmatprep.subr.bf16.mxu0 0
      %2893 = vmatpush2.bf16.xpose.msra.mxu0 0
      %2894 = vmatprep.subr.bf16.mxu0 0
      %2895 = vmatpush2.bf16.xpose.msra.mxu0 0
      %2896 = vmatprep.mubr.bf16.mxu0 0
      %2897 = vmatmul.mubr.bf16.gmra.mxu0 %v2853
      %v2898 = vpop.f32.mrf.mxu0
      %v2899 = vadd.f32 0.0, %v2898
      %v2900 = vpop.f32.mrf.mxu0
      %v2901 = vpop.f32.mrf.mxu0
      %v2902 = vadd.f32 0.0, %v2901
      %v2903 = vpop.f32.mrf.mxu0
      %2904 = vmatprep.mubr.bf16.mxu0 0
      %2905 = vmatmul.mubr.bf16.gmra.mxu0 %v2856
      %v2906 = vpop.f32.mrf.mxu0
      %v2907 = vadd.f32 0.0, %v2906
      %v2908 = vpop.f32.mrf.mxu0
      %v2909 = vpop.f32.mrf.mxu0
      %v2910 = vadd.f32 0.0, %v2909
      %v2911 = vpop.f32.mrf.mxu0
      %2912 = vdwg.mxu0
      %2915 = vrot.lane.b32.xlu0 %v1678, 96
      %v2916 = vpop.permute.xlu0 %2915
      %2917 = vrot.lane.b32.xlu0 %v1679, 96
      %v2918 = vpop.permute.xlu0 %2917
      %v2920 = vsel %vm1712, %v1678, 0
      %v2923 = vsel %vm1712, %v1679, 0
      %v2926 = vsel %vm1712, %v2916, 0
      %v2929 = vsel %vm1712, %v2918, 0
      %2931 = vmatprep.subr.bf16.mxu0 0
      %2932 = vmatpush1.bf16.xpose.msra.mxu0 0
      %2933 = vmatprep.subr.bf16.mxu0 0
      %2934 = vmatpush1.bf16.xpose.msra.mxu0 0
      %2935 = vmatprep.subr.bf16.mxu0 0
      %2936 = vmatpush1.bf16.xpose.msra.mxu0 0
      %2937 = vmatprep.subr.bf16.mxu0 0
      %2938 = vmatpush1.bf16.xpose.msra.mxu0 0
      %2939 = vmatprep.subr.bf16.mxu0 0
      %2940 = vmatpush1.bf16.xpose.msra.mxu0 0
      %2941 = vmatprep.subr.bf16.mxu0 0
      %2942 = vmatpush1.bf16.xpose.msra.mxu0 0
      %2943 = vmatprep.subr.bf16.mxu0 0
      %2944 = vmatpush1.bf16.xpose.msra.mxu0 %v2929
      %2945 = vmatprep.subr.bf16.mxu0 0
      %2946 = vmatpush1.bf16.xpose.msra.mxu0 %v2926
      %2947 = vmatprep.subr.bf16.mxu0 0
      %2948 = vmatpush2.bf16.xpose.msra.mxu0 0
      %2949 = vmatprep.subr.bf16.mxu0 0
      %2950 = vmatpush2.bf16.xpose.msra.mxu0 0
      %2951 = vmatprep.subr.bf16.mxu0 0
      %2952 = vmatpush2.bf16.xpose.msra.mxu0 0
      %2953 = vmatprep.subr.bf16.mxu0 0
      %2954 = vmatpush2.bf16.xpose.msra.mxu0 0
      %2955 = vmatprep.subr.bf16.mxu0 0
      %2956 = vmatpush2.bf16.xpose.msra.mxu0 0
      %2957 = vmatprep.subr.bf16.mxu0 0
      %2958 = vmatpush2.bf16.xpose.msra.mxu0 0
      %2959 = vmatprep.subr.bf16.mxu0 0
      %2960 = vmatpush2.bf16.xpose.msra.mxu0 0
      %2961 = vmatprep.subr.bf16.mxu0 0
      %2962 = vmatpush2.bf16.xpose.msra.mxu0 0
      %2963 = vmatprep.mubr.bf16.mxu0 0
      %2964 = vmatmul.mubr.bf16.gmra.mxu0 %v2920
      %v2965 = vpop.f32.mrf.mxu0
      %v2966 = vadd.f32 0.0, %v2965
      %v2967 = vpop.f32.mrf.mxu0
      %v2968 = vpop.f32.mrf.mxu0
      %v2969 = vadd.f32 0.0, %v2968
      %v2970 = vpop.f32.mrf.mxu0
      %2971 = vmatprep.mubr.bf16.mxu0 0
      %2972 = vmatmul.mubr.bf16.gmra.mxu0 %v2923
      %v2973 = vpop.f32.mrf.mxu0
      %v2974 = vadd.f32 0.0, %v2973
      %v2975 = vpop.f32.mrf.mxu0
      %v2976 = vpop.f32.mrf.mxu0
      %v2977 = vadd.f32 0.0, %v2976
      %v2978 = vpop.f32.mrf.mxu0
      %2979 = vdwg.mxu0
      %2982 = vrot.lane.b32.xlu0 %v1680, 96
      %v2983 = vpop.permute.xlu0 %2982
      %2984 = vrot.lane.b32.xlu0 %v1681, 96
      %v2985 = vpop.permute.xlu0 %2984
      %v2987 = vsel %vm1712, %v1680, 0
      %v2990 = vsel %vm1712, %v1681, 0
      %v2993 = vsel %vm1712, %v2983, 0
      %v2996 = vsel %vm1712, %v2985, 0
      %2998 = vmatprep.subr.bf16.mxu0 0
      %2999 = vmatpush1.bf16.xpose.msra.mxu0 0
      %3000 = vmatprep.subr.bf16.mxu0 0
      %3001 = vmatpush1.bf16.xpose.msra.mxu0 0
      %3002 = vmatprep.subr.bf16.mxu0 0
      %3003 = vmatpush1.bf16.xpose.msra.mxu0 0
      %3004 = vmatprep.subr.bf16.mxu0 0
      %3005 = vmatpush1.bf16.xpose.msra.mxu0 0
      %3006 = vmatprep.subr.bf16.mxu0 0
      %3007 = vmatpush1.bf16.xpose.msra.mxu0 0
      %3008 = vmatprep.subr.bf16.mxu0 0
      %3009 = vmatpush1.bf16.xpose.msra.mxu0 0
      %3010 = vmatprep.subr.bf16.mxu0 0
      %3011 = vmatpush1.bf16.xpose.msra.mxu0 %v2996
      %3012 = vmatprep.subr.bf16.mxu0 0
      %3013 = vmatpush1.bf16.xpose.msra.mxu0 %v2993
      %3014 = vmatprep.subr.bf16.mxu0 0
      %3015 = vmatpush2.bf16.xpose.msra.mxu0 0
      %3016 = vmatprep.subr.bf16.mxu0 0
      %3017 = vmatpush2.bf16.xpose.msra.mxu0 0
      %3018 = vmatprep.subr.bf16.mxu0 0
      %3019 = vmatpush2.bf16.xpose.msra.mxu0 0
      %3020 = vmatprep.subr.bf16.mxu0 0
      %3021 = vmatpush2.bf16.xpose.msra.mxu0 0
      %3022 = vmatprep.subr.bf16.mxu0 0
      %3023 = vmatpush2.bf16.xpose.msra.mxu0 0
      %3024 = vmatprep.subr.bf16.mxu0 0
      %3025 = vmatpush2.bf16.xpose.msra.mxu0 0
      %3026 = vmatprep.subr.bf16.mxu0 0
      %3027 = vmatpush2.bf16.xpose.msra.mxu0 0
      %3028 = vmatprep.subr.bf16.mxu0 0
      %3029 = vmatpush2.bf16.xpose.msra.mxu0 0
      %3030 = vmatprep.mubr.bf16.mxu0 0
      %3031 = vmatmul.mubr.bf16.gmra.mxu0 %v2987
      %v3032 = vpop.f32.mrf.mxu0
      %v3033 = vadd.f32 0.0, %v3032
      %v3034 = vpop.f32.mrf.mxu0
      %v3035 = vpop.f32.mrf.mxu0
      %v3036 = vadd.f32 0.0, %v3035
      %v3037 = vpop.f32.mrf.mxu0
      %3038 = vmatprep.mubr.bf16.mxu0 0
      %3039 = vmatmul.mubr.bf16.gmra.mxu0 %v2990
      %v3040 = vpop.f32.mrf.mxu0
      %v3041 = vadd.f32 0.0, %v3040
      %v3042 = vpop.f32.mrf.mxu0
      %v3043 = vpop.f32.mrf.mxu0
      %v3044 = vadd.f32 0.0, %v3043
      %v3045 = vpop.f32.mrf.mxu0
      %3046 = vdwg.mxu0
      %3049 = vrot.lane.b32.xlu0 %v1682, 96
      %v3050 = vpop.permute.xlu0 %3049
      %3051 = vrot.lane.b32.xlu0 %v1683, 96
      %v3052 = vpop.permute.xlu0 %3051
      %v3054 = vsel %vm1712, %v1682, 0
      %v3057 = vsel %vm1712, %v1683, 0
      %v3060 = vsel %vm1712, %v3050, 0
      %v3063 = vsel %vm1712, %v3052, 0
      %3065 = vmatprep.subr.bf16.mxu0 0
      %3066 = vmatpush1.bf16.xpose.msra.mxu0 0
      %3067 = vmatprep.subr.bf16.mxu0 0
      %3068 = vmatpush1.bf16.xpose.msra.mxu0 0
      %3069 = vmatprep.subr.bf16.mxu0 0
      %3070 = vmatpush1.bf16.xpose.msra.mxu0 0
      %3071 = vmatprep.subr.bf16.mxu0 0
      %3072 = vmatpush1.bf16.xpose.msra.mxu0 0
      %3073 = vmatprep.subr.bf16.mxu0 0
      %3074 = vmatpush1.bf16.xpose.msra.mxu0 0
      %3075 = vmatprep.subr.bf16.mxu0 0
      %3076 = vmatpush1.bf16.xpose.msra.mxu0 0
      %3077 = vmatprep.subr.bf16.mxu0 0
      %3078 = vmatpush1.bf16.xpose.msra.mxu0 %v3063
      %3079 = vmatprep.subr.bf16.mxu0 0
      %3080 = vmatpush1.bf16.xpose.msra.mxu0 %v3060
      %3081 = vmatprep.subr.bf16.mxu0 0
      %3082 = vmatpush2.bf16.xpose.msra.mxu0 0
      %3083 = vmatprep.subr.bf16.mxu0 0
      %3084 = vmatpush2.bf16.xpose.msra.mxu0 0
      %3085 = vmatprep.subr.bf16.mxu0 0
      %3086 = vmatpush2.bf16.xpose.msra.mxu0 0
      %3087 = vmatprep.subr.bf16.mxu0 0
      %3088 = vmatpush2.bf16.xpose.msra.mxu0 0
      %3089 = vmatprep.subr.bf16.mxu0 0
      %3090 = vmatpush2.bf16.xpose.msra.mxu0 0
      %3091 = vmatprep.subr.bf16.mxu0 0
      %3092 = vmatpush2.bf16.xpose.msra.mxu0 0
      %3093 = vmatprep.subr.bf16.mxu0 0
      %3094 = vmatpush2.bf16.xpose.msra.mxu0 0
      %3095 = vmatprep.subr.bf16.mxu0 0
      %3096 = vmatpush2.bf16.xpose.msra.mxu0 0
      %3097 = vmatprep.mubr.bf16.mxu0 0
      %3098 = vmatmul.mubr.bf16.gmra.mxu0 %v3054
      %v3099 = vpop.f32.mrf.mxu0
      %v3100 = vadd.f32 0.0, %v3099
      %v3101 = vpop.f32.mrf.mxu0
      %v3102 = vpop.f32.mrf.mxu0
      %v3103 = vadd.f32 0.0, %v3102
      %v3104 = vpop.f32.mrf.mxu0
      %3105 = vmatprep.mubr.bf16.mxu0 0
      %3106 = vmatmul.mubr.bf16.gmra.mxu0 %v3057
      %v3107 = vpop.f32.mrf.mxu0
      %v3108 = vadd.f32 0.0, %v3107
      %v3109 = vpop.f32.mrf.mxu0
      %v3110 = vpop.f32.mrf.mxu0
      %v3111 = vadd.f32 0.0, %v3110
      %v3112 = vpop.f32.mrf.mxu0
      %3113 = vdwg.mxu0
      %3116 = vrot.lane.b32.xlu0 %v1684, 96
      %v3117 = vpop.permute.xlu0 %3116
      %3118 = vrot.lane.b32.xlu0 %v1685, 96
      %v3119 = vpop.permute.xlu0 %3118
      %v3121 = vsel %vm1712, %v1684, 0
      %v3124 = vsel %vm1712, %v1685, 0
      %v3127 = vsel %vm1712, %v3117, 0
      %v3130 = vsel %vm1712, %v3119, 0
      %3132 = vmatprep.subr.bf16.mxu0 0
      %3133 = vmatpush1.bf16.xpose.msra.mxu0 0
      %3134 = vmatprep.subr.bf16.mxu0 0
      %3135 = vmatpush1.bf16.xpose.msra.mxu0 0
      %3136 = vmatprep.subr.bf16.mxu0 0
      %3137 = vmatpush1.bf16.xpose.msra.mxu0 0
      %3138 = vmatprep.subr.bf16.mxu0 0
      %3139 = vmatpush1.bf16.xpose.msra.mxu0 0
      %3140 = vmatprep.subr.bf16.mxu0 0
      %3141 = vmatpush1.bf16.xpose.msra.mxu0 0
      %3142 = vmatprep.subr.bf16.mxu0 0
      %3143 = vmatpush1.bf16.xpose.msra.mxu0 0
      %3144 = vmatprep.subr.bf16.mxu0 0
      %3145 = vmatpush1.bf16.xpose.msra.mxu0 %v3130
      %3146 = vmatprep.subr.bf16.mxu0 0
      %3147 = vmatpush1.bf16.xpose.msra.mxu0 %v3127
      %3148 = vmatprep.subr.bf16.mxu0 0
      %3149 = vmatpush2.bf16.xpose.msra.mxu0 0
      %3150 = vmatprep.subr.bf16.mxu0 0
      %3151 = vmatpush2.bf16.xpose.msra.mxu0 0
      %3152 = vmatprep.subr.bf16.mxu0 0
      %3153 = vmatpush2.bf16.xpose.msra.mxu0 0
      %3154 = vmatprep.subr.bf16.mxu0 0
      %3155 = vmatpush2.bf16.xpose.msra.mxu0 0
      %3156 = vmatprep.subr.bf16.mxu0 0
      %3157 = vmatpush2.bf16.xpose.msra.mxu0 0
      %3158 = vmatprep.subr.bf16.mxu0 0
      %3159 = vmatpush2.bf16.xpose.msra.mxu0 0
      %3160 = vmatprep.subr.bf16.mxu0 0
      %3161 = vmatpush2.bf16.xpose.msra.mxu0 0
      %3162 = vmatprep.subr.bf16.mxu0 0
      %3163 = vmatpush2.bf16.xpose.msra.mxu0 0
      %3164 = vmatprep.mubr.bf16.mxu0 0
      %3165 = vmatmul.mubr.bf16.gmra.mxu0 %v3121
      %v3166 = vpop.f32.mrf.mxu0
      %v3167 = vadd.f32 0.0, %v3166
      %v3168 = vpop.f32.mrf.mxu0
      %v3169 = vpop.f32.mrf.mxu0
      %v3170 = vadd.f32 0.0, %v3169
      %v3171 = vpop.f32.mrf.mxu0
      %3172 = vmatprep.mubr.bf16.mxu0 0
      %3173 = vmatmul.mubr.bf16.gmra.mxu0 %v3124
      %v3174 = vpop.f32.mrf.mxu0
      %v3175 = vadd.f32 0.0, %v3174
      %v3176 = vpop.f32.mrf.mxu0
      %v3177 = vpop.f32.mrf.mxu0
      %v3178 = vadd.f32 0.0, %v3177
      %v3179 = vpop.f32.mrf.mxu0
      %3180 = vdwg.mxu0
      %3183 = vrot.lane.b32.xlu0 %v1686, 96
      %v3184 = vpop.permute.xlu0 %3183
      %3185 = vrot.lane.b32.xlu0 %v1687, 96
      %v3186 = vpop.permute.xlu0 %3185
      %v3188 = vsel %vm1712, %v1686, 0
      %v3191 = vsel %vm1712, %v1687, 0
      %v3194 = vsel %vm1712, %v3184, 0
      %v3197 = vsel %vm1712, %v3186, 0
      %3199 = vmatprep.subr.bf16.mxu0 0
      %3200 = vmatpush1.bf16.xpose.msra.mxu0 0
      %3201 = vmatprep.subr.bf16.mxu0 0
      %3202 = vmatpush1.bf16.xpose.msra.mxu0 0
      %3203 = vmatprep.subr.bf16.mxu0 0
      %3204 = vmatpush1.bf16.xpose.msra.mxu0 0
      %3205 = vmatprep.subr.bf16.mxu0 0
      %3206 = vmatpush1.bf16.xpose.msra.mxu0 0
      %3207 = vmatprep.subr.bf16.mxu0 0
      %3208 = vmatpush1.bf16.xpose.msra.mxu0 0
      %3209 = vmatprep.subr.bf16.mxu0 0
      %3210 = vmatpush1.bf16.xpose.msra.mxu0 0
      %3211 = vmatprep.subr.bf16.mxu0 0
      %3212 = vmatpush1.bf16.xpose.msra.mxu0 %v3197
      %3213 = vmatprep.subr.bf16.mxu0 0
      %3214 = vmatpush1.bf16.xpose.msra.mxu0 %v3194
      %3215 = vmatprep.subr.bf16.mxu0 0
      %3216 = vmatpush2.bf16.xpose.msra.mxu0 0
      %3217 = vmatprep.subr.bf16.mxu0 0
      %3218 = vmatpush2.bf16.xpose.msra.mxu0 0
      %3219 = vmatprep.subr.bf16.mxu0 0
      %3220 = vmatpush2.bf16.xpose.msra.mxu0 0
      %3221 = vmatprep.subr.bf16.mxu0 0
      %3222 = vmatpush2.bf16.xpose.msra.mxu0 0
      %3223 = vmatprep.subr.bf16.mxu0 0
      %3224 = vmatpush2.bf16.xpose.msra.mxu0 0
      %3225 = vmatprep.subr.bf16.mxu0 0
      %3226 = vmatpush2.bf16.xpose.msra.mxu0 0
      %3227 = vmatprep.subr.bf16.mxu0 0
      %3228 = vmatpush2.bf16.xpose.msra.mxu0 0
      %3229 = vmatprep.subr.bf16.mxu0 0
      %3230 = vmatpush2.bf16.xpose.msra.mxu0 0
      %3231 = vmatprep.mubr.bf16.mxu0 0
      %3232 = vmatmul.mubr.bf16.gmra.mxu0 %v3188
      %v3233 = vpop.f32.mrf.mxu0
      %v3234 = vadd.f32 0.0, %v3233
      %v3235 = vpop.f32.mrf.mxu0
      %v3236 = vpop.f32.mrf.mxu0
      %v3237 = vadd.f32 0.0, %v3236
      %v3238 = vpop.f32.mrf.mxu0
      %3239 = vmatprep.mubr.bf16.mxu0 0
      %3240 = vmatmul.mubr.bf16.gmra.mxu0 %v3191
      %v3241 = vpop.f32.mrf.mxu0
      %v3242 = vadd.f32 0.0, %v3241
      %v3243 = vpop.f32.mrf.mxu0
      %v3244 = vpop.f32.mrf.mxu0
      %v3245 = vadd.f32 0.0, %v3244
      %v3246 = vpop.f32.mrf.mxu0
      %3247 = vdwg.mxu0
      %3250 = vrot.lane.b32.xlu0 %v1688, 96
      %v3251 = vpop.permute.xlu0 %3250
      %3252 = vrot.lane.b32.xlu0 %v1689, 96
      %v3253 = vpop.permute.xlu0 %3252
      %v3255 = vsel %vm1712, %v1688, 0
      %v3258 = vsel %vm1712, %v1689, 0
      %v3261 = vsel %vm1712, %v3251, 0
      %v3264 = vsel %vm1712, %v3253, 0
      %3266 = vmatprep.subr.bf16.mxu0 0
      %3267 = vmatpush1.bf16.xpose.msra.mxu0 0
      %3268 = vmatprep.subr.bf16.mxu0 0
      %3269 = vmatpush1.bf16.xpose.msra.mxu0 0
      %3270 = vmatprep.subr.bf16.mxu0 0
      %3271 = vmatpush1.bf16.xpose.msra.mxu0 0
      %3272 = vmatprep.subr.bf16.mxu0 0
      %3273 = vmatpush1.bf16.xpose.msra.mxu0 0
      %3274 = vmatprep.subr.bf16.mxu0 0
      %3275 = vmatpush1.bf16.xpose.msra.mxu0 0
      %3276 = vmatprep.subr.bf16.mxu0 0
      %3277 = vmatpush1.bf16.xpose.msra.mxu0 0
      %3278 = vmatprep.subr.bf16.mxu0 0
      %3279 = vmatpush1.bf16.xpose.msra.mxu0 %v3264
      %3280 = vmatprep.subr.bf16.mxu0 0
      %3281 = vmatpush1.bf16.xpose.msra.mxu0 %v3261
      %3282 = vmatprep.subr.bf16.mxu0 0
      %3283 = vmatpush2.bf16.xpose.msra.mxu0 0
      %3284 = vmatprep.subr.bf16.mxu0 0
      %3285 = vmatpush2.bf16.xpose.msra.mxu0 0
      %3286 = vmatprep.subr.bf16.mxu0 0
      %3287 = vmatpush2.bf16.xpose.msra.mxu0 0
      %3288 = vmatprep.subr.bf16.mxu0 0
      %3289 = vmatpush2.bf16.xpose.msra.mxu0 0
      %3290 = vmatprep.subr.bf16.mxu0 0
      %3291 = vmatpush2.bf16.xpose.msra.mxu0 0
      %3292 = vmatprep.subr.bf16.mxu0 0
      %3293 = vmatpush2.bf16.xpose.msra.mxu0 0
      %3294 = vmatprep.subr.bf16.mxu0 0
      %3295 = vmatpush2.bf16.xpose.msra.mxu0 0
      %3296 = vmatprep.subr.bf16.mxu0 0
      %3297 = vmatpush2.bf16.xpose.msra.mxu0 0
      %3298 = vmatprep.mubr.bf16.mxu0 0
      %3299 = vmatmul.mubr.bf16.gmra.mxu0 %v3255
      %v3300 = vpop.f32.mrf.mxu0
      %v3301 = vadd.f32 0.0, %v3300
      %v3302 = vpop.f32.mrf.mxu0
      %v3303 = vpop.f32.mrf.mxu0
      %v3304 = vadd.f32 0.0, %v3303
      %v3305 = vpop.f32.mrf.mxu0
      %3306 = vmatprep.mubr.bf16.mxu0 0
      %3307 = vmatmul.mubr.bf16.gmra.mxu0 %v3258
      %v3308 = vpop.f32.mrf.mxu0
      %v3309 = vadd.f32 0.0, %v3308
      %v3310 = vpop.f32.mrf.mxu0
      %v3311 = vpop.f32.mrf.mxu0
      %v3312 = vadd.f32 0.0, %v3311
      %v3313 = vpop.f32.mrf.mxu0
      %3314 = vdwg.mxu0
      %3317 = vrot.lane.b32.xlu0 %v1690, 96
      %v3318 = vpop.permute.xlu0 %3317
      %3319 = vrot.lane.b32.xlu0 %v1691, 96
      %v3320 = vpop.permute.xlu0 %3319
      %v3322 = vsel %vm1712, %v1690, 0
      %v3325 = vsel %vm1712, %v1691, 0
      %v3328 = vsel %vm1712, %v3318, 0
      %v3331 = vsel %vm1712, %v3320, 0
      %3333 = vmatprep.subr.bf16.mxu0 0
      %3334 = vmatpush1.bf16.xpose.msra.mxu0 0
      %3335 = vmatprep.subr.bf16.mxu0 0
      %3336 = vmatpush1.bf16.xpose.msra.mxu0 0
      %3337 = vmatprep.subr.bf16.mxu0 0
      %3338 = vmatpush1.bf16.xpose.msra.mxu0 0
      %3339 = vmatprep.subr.bf16.mxu0 0
      %3340 = vmatpush1.bf16.xpose.msra.mxu0 0
      %3341 = vmatprep.subr.bf16.mxu0 0
      %3342 = vmatpush1.bf16.xpose.msra.mxu0 0
      %3343 = vmatprep.subr.bf16.mxu0 0
      %3344 = vmatpush1.bf16.xpose.msra.mxu0 0
      %3345 = vmatprep.subr.bf16.mxu0 0
      %3346 = vmatpush1.bf16.xpose.msra.mxu0 %v3331
      %3347 = vmatprep.subr.bf16.mxu0 0
      %3348 = vmatpush1.bf16.xpose.msra.mxu0 %v3328
      %3349 = vmatprep.subr.bf16.mxu0 0
      %3350 = vmatpush2.bf16.xpose.msra.mxu0 0
      %3351 = vmatprep.subr.bf16.mxu0 0
      %3352 = vmatpush2.bf16.xpose.msra.mxu0 0
      %3353 = vmatprep.subr.bf16.mxu0 0
      %3354 = vmatpush2.bf16.xpose.msra.mxu0 0
      %3355 = vmatprep.subr.bf16.mxu0 0
      %3356 = vmatpush2.bf16.xpose.msra.mxu0 0
      %3357 = vmatprep.subr.bf16.mxu0 0
      %3358 = vmatpush2.bf16.xpose.msra.mxu0 0
      %3359 = vmatprep.subr.bf16.mxu0 0
      %3360 = vmatpush2.bf16.xpose.msra.mxu0 0
      %3361 = vmatprep.subr.bf16.mxu0 0
      %3362 = vmatpush2.bf16.xpose.msra.mxu0 0
      %3363 = vmatprep.subr.bf16.mxu0 0
      %3364 = vmatpush2.bf16.xpose.msra.mxu0 0
      %3365 = vmatprep.mubr.bf16.mxu0 0
      %3366 = vmatmul.mubr.bf16.gmra.mxu0 %v3322
      %v3367 = vpop.f32.mrf.mxu0
      %v3368 = vadd.f32 0.0, %v3367
      %v3369 = vpop.f32.mrf.mxu0
      %v3370 = vpop.f32.mrf.mxu0
      %v3371 = vadd.f32 0.0, %v3370
      %v3372 = vpop.f32.mrf.mxu0
      %3373 = vmatprep.mubr.bf16.mxu0 0
      %3374 = vmatmul.mubr.bf16.gmra.mxu0 %v3325
      %v3375 = vpop.f32.mrf.mxu0
      %v3376 = vadd.f32 0.0, %v3375
      %v3377 = vpop.f32.mrf.mxu0
      %v3378 = vpop.f32.mrf.mxu0
      %v3379 = vadd.f32 0.0, %v3378
      %v3380 = vpop.f32.mrf.mxu0
      %3381 = vdwg.mxu0
      %3384 = vrot.lane.b32.xlu0 %v1692, 96
      %v3385 = vpop.permute.xlu0 %3384
      %3386 = vrot.lane.b32.xlu0 %v1693, 96
      %v3387 = vpop.permute.xlu0 %3386
      %v3389 = vsel %vm1712, %v1692, 0
      %v3392 = vsel %vm1712, %v1693, 0
      %v3395 = vsel %vm1712, %v3385, 0
      %v3398 = vsel %vm1712, %v3387, 0
      %3400 = vmatprep.subr.bf16.mxu0 0
      %3401 = vmatpush1.bf16.xpose.msra.mxu0 0
      %3402 = vmatprep.subr.bf16.mxu0 0
      %3403 = vmatpush1.bf16.xpose.msra.mxu0 0
      %3404 = vmatprep.subr.bf16.mxu0 0
      %3405 = vmatpush1.bf16.xpose.msra.mxu0 0
      %3406 = vmatprep.subr.bf16.mxu0 0
      %3407 = vmatpush1.bf16.xpose.msra.mxu0 0
      %3408 = vmatprep.subr.bf16.mxu0 0
      %3409 = vmatpush1.bf16.xpose.msra.mxu0 0
      %3410 = vmatprep.subr.bf16.mxu0 0
      %3411 = vmatpush1.bf16.xpose.msra.mxu0 0
      %3412 = vmatprep.subr.bf16.mxu0 0
      %3413 = vmatpush1.bf16.xpose.msra.mxu0 %v3398
      %3414 = vmatprep.subr.bf16.mxu0 0
      %3415 = vmatpush1.bf16.xpose.msra.mxu0 %v3395
      %3416 = vmatprep.subr.bf16.mxu0 0
      %3417 = vmatpush2.bf16.xpose.msra.mxu0 0
      %3418 = vmatprep.subr.bf16.mxu0 0
      %3419 = vmatpush2.bf16.xpose.msra.mxu0 0
      %3420 = vmatprep.subr.bf16.mxu0 0
      %3421 = vmatpush2.bf16.xpose.msra.mxu0 0
      %3422 = vmatprep.subr.bf16.mxu0 0
      %3423 = vmatpush2.bf16.xpose.msra.mxu0 0
      %3424 = vmatprep.subr.bf16.mxu0 0
      %3425 = vmatpush2.bf16.xpose.msra.mxu0 0
      %3426 = vmatprep.subr.bf16.mxu0 0
      %3427 = vmatpush2.bf16.xpose.msra.mxu0 0
      %3428 = vmatprep.subr.bf16.mxu0 0
      %3429 = vmatpush2.bf16.xpose.msra.mxu0 0
      %3430 = vmatprep.subr.bf16.mxu0 0
      %3431 = vmatpush2.bf16.xpose.msra.mxu0 0
      %3432 = vmatprep.mubr.bf16.mxu0 0
      %3433 = vmatmul.mubr.bf16.gmra.mxu0 %v3389
      %v3434 = vpop.f32.mrf.mxu0
      %v3435 = vadd.f32 0.0, %v3434
      %v3436 = vpop.f32.mrf.mxu0
      %v3437 = vpop.f32.mrf.mxu0
      %v3438 = vadd.f32 0.0, %v3437
      %v3439 = vpop.f32.mrf.mxu0
      %3440 = vmatprep.mubr.bf16.mxu0 0
      %3441 = vmatmul.mubr.bf16.gmra.mxu0 %v3392
      %v3442 = vpop.f32.mrf.mxu0
      %v3443 = vadd.f32 0.0, %v3442
      %v3444 = vpop.f32.mrf.mxu0
      %v3445 = vpop.f32.mrf.mxu0
      %v3446 = vadd.f32 0.0, %v3445
      %v3447 = vpop.f32.mrf.mxu0
      %3448 = vdwg.mxu0
      %3451 = vrot.lane.b32.xlu0 %v1694, 96
      %v3452 = vpop.permute.xlu0 %3451
      %3453 = vrot.lane.b32.xlu0 %v1695, 96
      %v3454 = vpop.permute.xlu0 %3453
      %v3456 = vsel %vm1712, %v1694, 0
      %v3459 = vsel %vm1712, %v1695, 0
      %v3462 = vsel %vm1712, %v3452, 0
      %v3465 = vsel %vm1712, %v3454, 0
      %3467 = vmatprep.subr.bf16.mxu0 0
      %3468 = vmatpush1.bf16.xpose.msra.mxu0 0
      %3469 = vmatprep.subr.bf16.mxu0 0
      %3470 = vmatpush1.bf16.xpose.msra.mxu0 0
      %3471 = vmatprep.subr.bf16.mxu0 0
      %3472 = vmatpush1.bf16.xpose.msra.mxu0 0
      %3473 = vmatprep.subr.bf16.mxu0 0
      %3474 = vmatpush1.bf16.xpose.msra.mxu0 0
      %3475 = vmatprep.subr.bf16.mxu0 0
      %3476 = vmatpush1.bf16.xpose.msra.mxu0 0
      %3477 = vmatprep.subr.bf16.mxu0 0
      %3478 = vmatpush1.bf16.xpose.msra.mxu0 0
      %3479 = vmatprep.subr.bf16.mxu0 0
      %3480 = vmatpush1.bf16.xpose.msra.mxu0 %v3465
      %3481 = vmatprep.subr.bf16.mxu0 0
      %3482 = vmatpush1.bf16.xpose.msra.mxu0 %v3462
      %3483 = vmatprep.subr.bf16.mxu0 0
      %3484 = vmatpush2.bf16.xpose.msra.mxu0 0
      %3485 = vmatprep.subr.bf16.mxu0 0
      %3486 = vmatpush2.bf16.xpose.msra.mxu0 0
      %3487 = vmatprep.subr.bf16.mxu0 0
      %3488 = vmatpush2.bf16.xpose.msra.mxu0 0
      %3489 = vmatprep.subr.bf16.mxu0 0
      %3490 = vmatpush2.bf16.xpose.msra.mxu0 0
      %3491 = vmatprep.subr.bf16.mxu0 0
      %3492 = vmatpush2.bf16.xpose.msra.mxu0 0
      %3493 = vmatprep.subr.bf16.mxu0 0
      %3494 = vmatpush2.bf16.xpose.msra.mxu0 0
      %3495 = vmatprep.subr.bf16.mxu0 0
      %3496 = vmatpush2.bf16.xpose.msra.mxu0 0
      %3497 = vmatprep.subr.bf16.mxu0 0
      %3498 = vmatpush2.bf16.xpose.msra.mxu0 0
      %3499 = vmatprep.mubr.bf16.mxu0 0
      %3500 = vmatmul.mubr.bf16.gmra.mxu0 %v3456
      %v3501 = vpop.f32.mrf.mxu0
      %v3502 = vadd.f32 0.0, %v3501
      %v3503 = vpop.f32.mrf.mxu0
      %v3504 = vpop.f32.mrf.mxu0
      %v3505 = vadd.f32 0.0, %v3504
      %v3506 = vpop.f32.mrf.mxu0
      %3507 = vmatprep.mubr.bf16.mxu0 0
      %3508 = vmatmul.mubr.bf16.gmra.mxu0 %v3459
      %v3509 = vpop.f32.mrf.mxu0
      %v3510 = vadd.f32 0.0, %v3509
      %v3511 = vpop.f32.mrf.mxu0
      %v3512 = vpop.f32.mrf.mxu0
      %v3513 = vadd.f32 0.0, %v3512
      %v3514 = vpop.f32.mrf.mxu0
      %3515 = vdwg.mxu0
      %3518 = vrot.lane.b32.xlu0 %v1696, 96
      %v3519 = vpop.permute.xlu0 %3518
      %3520 = vrot.lane.b32.xlu0 %v1697, 96
      %v3521 = vpop.permute.xlu0 %3520
      %v3523 = vsel %vm1712, %v1696, 0
      %v3526 = vsel %vm1712, %v1697, 0
      %v3529 = vsel %vm1712, %v3519, 0
      %v3532 = vsel %vm1712, %v3521, 0
      %3534 = vmatprep.subr.bf16.mxu0 0
      %3535 = vmatpush1.bf16.xpose.msra.mxu0 0
      %3536 = vmatprep.subr.bf16.mxu0 0
      %3537 = vmatpush1.bf16.xpose.msra.mxu0 0
      %3538 = vmatprep.subr.bf16.mxu0 0
      %3539 = vmatpush1.bf16.xpose.msra.mxu0 0
      %3540 = vmatprep.subr.bf16.mxu0 0
      %3541 = vmatpush1.bf16.xpose.msra.mxu0 0
      %3542 = vmatprep.subr.bf16.mxu0 0
      %3543 = vmatpush1.bf16.xpose.msra.mxu0 0
      %3544 = vmatprep.subr.bf16.mxu0 0
      %3545 = vmatpush1.bf16.xpose.msra.mxu0 0
      %3546 = vmatprep.subr.bf16.mxu0 0
      %3547 = vmatpush1.bf16.xpose.msra.mxu0 %v3532
      %3548 = vmatprep.subr.bf16.mxu0 0
      %3549 = vmatpush1.bf16.xpose.msra.mxu0 %v3529
      %3550 = vmatprep.subr.bf16.mxu0 0
      %3551 = vmatpush2.bf16.xpose.msra.mxu0 0
      %3552 = vmatprep.subr.bf16.mxu0 0
      %3553 = vmatpush2.bf16.xpose.msra.mxu0 0
      %3554 = vmatprep.subr.bf16.mxu0 0
      %3555 = vmatpush2.bf16.xpose.msra.mxu0 0
      %3556 = vmatprep.subr.bf16.mxu0 0
      %3557 = vmatpush2.bf16.xpose.msra.mxu0 0
      %3558 = vmatprep.subr.bf16.mxu0 0
      %3559 = vmatpush2.bf16.xpose.msra.mxu0 0
      %3560 = vmatprep.subr.bf16.mxu0 0
      %3561 = vmatpush2.bf16.xpose.msra.mxu0 0
      %3562 = vmatprep.subr.bf16.mxu0 0
      %3563 = vmatpush2.bf16.xpose.msra.mxu0 0
      %3564 = vmatprep.subr.bf16.mxu0 0
      %3565 = vmatpush2.bf16.xpose.msra.mxu0 0
      %3566 = vmatprep.mubr.bf16.mxu0 0
      %3567 = vmatmul.mubr.bf16.gmra.mxu0 %v3523
      %v3568 = vpop.f32.mrf.mxu0
      %v3569 = vadd.f32 0.0, %v3568
      %v3570 = vpop.f32.mrf.mxu0
      %v3571 = vpop.f32.mrf.mxu0
      %v3572 = vadd.f32 0.0, %v3571
      %v3573 = vpop.f32.mrf.mxu0
      %3574 = vmatprep.mubr.bf16.mxu0 0
      %3575 = vmatmul.mubr.bf16.gmra.mxu0 %v3526
      %v3576 = vpop.f32.mrf.mxu0
      %v3577 = vadd.f32 0.0, %v3576
      %v3578 = vpop.f32.mrf.mxu0
      %v3579 = vpop.f32.mrf.mxu0
      %v3580 = vadd.f32 0.0, %v3579
      %v3581 = vpop.f32.mrf.mxu0
      %3582 = vdwg.mxu0
      %3585 = vrot.lane.b32.xlu0 %v1698, 96
      %v3586 = vpop.permute.xlu0 %3585
      %3587 = vrot.lane.b32.xlu0 %v1699, 96
      %v3588 = vpop.permute.xlu0 %3587
      %v3590 = vsel %vm1712, %v1698, 0
      %v3593 = vsel %vm1712, %v1699, 0
      %v3596 = vsel %vm1712, %v3586, 0
      %v3599 = vsel %vm1712, %v3588, 0
      %3601 = vmatprep.subr.bf16.mxu0 0
      %3602 = vmatpush1.bf16.xpose.msra.mxu0 0
      %3603 = vmatprep.subr.bf16.mxu0 0
      %3604 = vmatpush1.bf16.xpose.msra.mxu0 0
      %3605 = vmatprep.subr.bf16.mxu0 0
      %3606 = vmatpush1.bf16.xpose.msra.mxu0 0
      %3607 = vmatprep.subr.bf16.mxu0 0
      %3608 = vmatpush1.bf16.xpose.msra.mxu0 0
      %3609 = vmatprep.subr.bf16.mxu0 0
      %3610 = vmatpush1.bf16.xpose.msra.mxu0 0
      %3611 = vmatprep.subr.bf16.mxu0 0
      %3612 = vmatpush1.bf16.xpose.msra.mxu0 0
      %3613 = vmatprep.subr.bf16.mxu0 0
      %3614 = vmatpush1.bf16.xpose.msra.mxu0 %v3599
      %3615 = vmatprep.subr.bf16.mxu0 0
      %3616 = vmatpush1.bf16.xpose.msra.mxu0 %v3596
      %3617 = vmatprep.subr.bf16.mxu0 0
      %3618 = vmatpush2.bf16.xpose.msra.mxu0 0
      %3619 = vmatprep.subr.bf16.mxu0 0
      %3620 = vmatpush2.bf16.xpose.msra.mxu0 0
      %3621 = vmatprep.subr.bf16.mxu0 0
      %3622 = vmatpush2.bf16.xpose.msra.mxu0 0
      %3623 = vmatprep.subr.bf16.mxu0 0
      %3624 = vmatpush2.bf16.xpose.msra.mxu0 0
      %3625 = vmatprep.subr.bf16.mxu0 0
      %3626 = vmatpush2.bf16.xpose.msra.mxu0 0
      %3627 = vmatprep.subr.bf16.mxu0 0
      %3628 = vmatpush2.bf16.xpose.msra.mxu0 0
      %3629 = vmatprep.subr.bf16.mxu0 0
      %3630 = vmatpush2.bf16.xpose.msra.mxu0 0
      %3631 = vmatprep.subr.bf16.mxu0 0
      %3632 = vmatpush2.bf16.xpose.msra.mxu0 0
      %3633 = vmatprep.mubr.bf16.mxu0 0
      %3634 = vmatmul.mubr.bf16.gmra.mxu0 %v3590
      %v3635 = vpop.f32.mrf.mxu0
      %v3636 = vadd.f32 0.0, %v3635
      %v3637 = vpop.f32.mrf.mxu0
      %v3638 = vpop.f32.mrf.mxu0
      %v3639 = vadd.f32 0.0, %v3638
      %v3640 = vpop.f32.mrf.mxu0
      %3641 = vmatprep.mubr.bf16.mxu0 0
      %3642 = vmatmul.mubr.bf16.gmra.mxu0 %v3593
      %v3643 = vpop.f32.mrf.mxu0
      %v3644 = vadd.f32 0.0, %v3643
      %v3645 = vpop.f32.mrf.mxu0
      %v3646 = vpop.f32.mrf.mxu0
      %v3647 = vadd.f32 0.0, %v3646
      %v3648 = vpop.f32.mrf.mxu0
      %3649 = vdwg.mxu0
      %3652 = vrot.lane.b32.xlu0 %v1700, 96
      %v3653 = vpop.permute.xlu0 %3652
      %3654 = vrot.lane.b32.xlu0 %v1701, 96
      %v3655 = vpop.permute.xlu0 %3654
      %v3657 = vsel %vm1712, %v1700, 0
      %v3660 = vsel %vm1712, %v1701, 0
      %v3663 = vsel %vm1712, %v3653, 0
      %v3666 = vsel %vm1712, %v3655, 0
      %3668 = vmatprep.subr.bf16.mxu0 0
      %3669 = vmatpush1.bf16.xpose.msra.mxu0 0
      %3670 = vmatprep.subr.bf16.mxu0 0
      %3671 = vmatpush1.bf16.xpose.msra.mxu0 0
      %3672 = vmatprep.subr.bf16.mxu0 0
      %3673 = vmatpush1.bf16.xpose.msra.mxu0 0
      %3674 = vmatprep.subr.bf16.mxu0 0
      %3675 = vmatpush1.bf16.xpose.msra.mxu0 0
      %3676 = vmatprep.subr.bf16.mxu0 0
      %3677 = vmatpush1.bf16.xpose.msra.mxu0 0
      %3678 = vmatprep.subr.bf16.mxu0 0
      %3679 = vmatpush1.bf16.xpose.msra.mxu0 0
      %3680 = vmatprep.subr.bf16.mxu0 0
      %3681 = vmatpush1.bf16.xpose.msra.mxu0 %v3666
      %3682 = vmatprep.subr.bf16.mxu0 0
      %3683 = vmatpush1.bf16.xpose.msra.mxu0 %v3663
      %3684 = vmatprep.subr.bf16.mxu0 0
      %3685 = vmatpush2.bf16.xpose.msra.mxu0 0
      %3686 = vmatprep.subr.bf16.mxu0 0
      %3687 = vmatpush2.bf16.xpose.msra.mxu0 0
      %3688 = vmatprep.subr.bf16.mxu0 0
      %3689 = vmatpush2.bf16.xpose.msra.mxu0 0
      %3690 = vmatprep.subr.bf16.mxu0 0
      %3691 = vmatpush2.bf16.xpose.msra.mxu0 0
      %3692 = vmatprep.subr.bf16.mxu0 0
      %3693 = vmatpush2.bf16.xpose.msra.mxu0 0
      %3694 = vmatprep.subr.bf16.mxu0 0
      %3695 = vmatpush2.bf16.xpose.msra.mxu0 0
      %3696 = vmatprep.subr.bf16.mxu0 0
      %3697 = vmatpush2.bf16.xpose.msra.mxu0 0
      %3698 = vmatprep.subr.bf16.mxu0 0
      %3699 = vmatpush2.bf16.xpose.msra.mxu0 0
      %3700 = vmatprep.mubr.bf16.mxu0 0
      %3701 = vmatmul.mubr.bf16.gmra.mxu0 %v3657
      %v3702 = vpop.f32.mrf.mxu0
      %v3703 = vadd.f32 0.0, %v3702
      %v3704 = vpop.f32.mrf.mxu0
      %v3705 = vpop.f32.mrf.mxu0
      %v3706 = vadd.f32 0.0, %v3705
      %v3707 = vpop.f32.mrf.mxu0
      %3708 = vmatprep.mubr.bf16.mxu0 0
      %3709 = vmatmul.mubr.bf16.gmra.mxu0 %v3660
      %v3710 = vpop.f32.mrf.mxu0
      %v3711 = vadd.f32 0.0, %v3710
      %v3712 = vpop.f32.mrf.mxu0
      %v3713 = vpop.f32.mrf.mxu0
      %v3714 = vadd.f32 0.0, %v3713
      %v3715 = vpop.f32.mrf.mxu0
      %3716 = vdwg.mxu0
      %3719 = vrot.lane.b32.xlu0 %v1702, 96
      %v3720 = vpop.permute.xlu0 %3719
      %3721 = vrot.lane.b32.xlu0 %v1703, 96
      %v3722 = vpop.permute.xlu0 %3721
      %v3724 = vsel %vm1712, %v1702, 0
      %v3727 = vsel %vm1712, %v1703, 0
      %v3730 = vsel %vm1712, %v3720, 0
      %v3733 = vsel %vm1712, %v3722, 0
      %3735 = vmatprep.subr.bf16.mxu0 0
      %3736 = vmatpush1.bf16.xpose.msra.mxu0 0
      %3737 = vmatprep.subr.bf16.mxu0 0
      %3738 = vmatpush1.bf16.xpose.msra.mxu0 0
      %3739 = vmatprep.subr.bf16.mxu0 0
      %3740 = vmatpush1.bf16.xpose.msra.mxu0 0
      %3741 = vmatprep.subr.bf16.mxu0 0
      %3742 = vmatpush1.bf16.xpose.msra.mxu0 0
      %3743 = vmatprep.subr.bf16.mxu0 0
      %3744 = vmatpush1.bf16.xpose.msra.mxu0 0
      %3745 = vmatprep.subr.bf16.mxu0 0
      %3746 = vmatpush1.bf16.xpose.msra.mxu0 0
      %3747 = vmatprep.subr.bf16.mxu0 0
      %3748 = vmatpush1.bf16.xpose.msra.mxu0 %v3733
      %3749 = vmatprep.subr.bf16.mxu0 0
      %3750 = vmatpush1.bf16.xpose.msra.mxu0 %v3730
      %3751 = vmatprep.subr.bf16.mxu0 0
      %3752 = vmatpush2.bf16.xpose.msra.mxu0 0
      %3753 = vmatprep.subr.bf16.mxu0 0
      %3754 = vmatpush2.bf16.xpose.msra.mxu0 0
      %3755 = vmatprep.subr.bf16.mxu0 0
      %3756 = vmatpush2.bf16.xpose.msra.mxu0 0
      %3757 = vmatprep.subr.bf16.mxu0 0
      %3758 = vmatpush2.bf16.xpose.msra.mxu0 0
      %3759 = vmatprep.subr.bf16.mxu0 0
      %3760 = vmatpush2.bf16.xpose.msra.mxu0 0
      %3761 = vmatprep.subr.bf16.mxu0 0
      %3762 = vmatpush2.bf16.xpose.msra.mxu0 0
      %3763 = vmatprep.subr.bf16.mxu0 0
      %3764 = vmatpush2.bf16.xpose.msra.mxu0 0
      %3765 = vmatprep.subr.bf16.mxu0 0
      %3766 = vmatpush2.bf16.xpose.msra.mxu0 0
      %3767 = vmatprep.mubr.bf16.mxu0 0
      %3768 = vmatmul.mubr.bf16.gmra.mxu0 %v3724
      %v3769 = vpop.f32.mrf.mxu0
      %v3770 = vadd.f32 0.0, %v3769
      %v3771 = vpop.f32.mrf.mxu0
      %v3772 = vpop.f32.mrf.mxu0
      %v3773 = vadd.f32 0.0, %v3772
      %v3774 = vpop.f32.mrf.mxu0
      %3775 = vmatprep.mubr.bf16.mxu0 0
      %3776 = vmatmul.mubr.bf16.gmra.mxu0 %v3727
      %v3777 = vpop.f32.mrf.mxu0
      %v3778 = vadd.f32 0.0, %v3777
      %v3779 = vpop.f32.mrf.mxu0
      %v3780 = vpop.f32.mrf.mxu0
      %v3781 = vadd.f32 0.0, %v3780
      %v3782 = vpop.f32.mrf.mxu0
      %3783 = vdwg.mxu0
      %3786 = vrot.lane.b32.xlu0 %v1704, 96
      %v3787 = vpop.permute.xlu0 %3786
      %3788 = vrot.lane.b32.xlu0 %v1705, 96
      %v3789 = vpop.permute.xlu0 %3788
      %v3791 = vsel %vm1712, %v1704, 0
      %v3794 = vsel %vm1712, %v1705, 0
      %v3797 = vsel %vm1712, %v3787, 0
      %v3800 = vsel %vm1712, %v3789, 0
      %3802 = vmatprep.subr.bf16.mxu0 0
      %3803 = vmatpush1.bf16.xpose.msra.mxu0 0
      %3804 = vmatprep.subr.bf16.mxu0 0
      %3805 = vmatpush1.bf16.xpose.msra.mxu0 0
      %3806 = vmatprep.subr.bf16.mxu0 0
      %3807 = vmatpush1.bf16.xpose.msra.mxu0 0
      %3808 = vmatprep.subr.bf16.mxu0 0
      %3809 = vmatpush1.bf16.xpose.msra.mxu0 0
      %3810 = vmatprep.subr.bf16.mxu0 0
      %3811 = vmatpush1.bf16.xpose.msra.mxu0 0
      %3812 = vmatprep.subr.bf16.mxu0 0
      %3813 = vmatpush1.bf16.xpose.msra.mxu0 0
      %3814 = vmatprep.subr.bf16.mxu0 0
      %3815 = vmatpush1.bf16.xpose.msra.mxu0 %v3800
      %3816 = vmatprep.subr.bf16.mxu0 0
      %3817 = vmatpush1.bf16.xpose.msra.mxu0 %v3797
      %3818 = vmatprep.subr.bf16.mxu0 0
      %3819 = vmatpush2.bf16.xpose.msra.mxu0 0
      %3820 = vmatprep.subr.bf16.mxu0 0
      %3821 = vmatpush2.bf16.xpose.msra.mxu0 0
      %3822 = vmatprep.subr.bf16.mxu0 0
      %3823 = vmatpush2.bf16.xpose.msra.mxu0 0
      %3824 = vmatprep.subr.bf16.mxu0 0
      %3825 = vmatpush2.bf16.xpose.msra.mxu0 0
      %3826 = vmatprep.subr.bf16.mxu0 0
      %3827 = vmatpush2.bf16.xpose.msra.mxu0 0
      %3828 = vmatprep.subr.bf16.mxu0 0
      %3829 = vmatpush2.bf16.xpose.msra.mxu0 0
      %3830 = vmatprep.subr.bf16.mxu0 0
      %3831 = vmatpush2.bf16.xpose.msra.mxu0 0
      %3832 = vmatprep.subr.bf16.mxu0 0
      %3833 = vmatpush2.bf16.xpose.msra.mxu0 0
      %3834 = vmatprep.mubr.bf16.mxu0 0
      %3835 = vmatmul.mubr.bf16.gmra.mxu0 %v3791
      %v3836 = vpop.f32.mrf.mxu0
      %v3837 = vadd.f32 0.0, %v3836
      %v3838 = vpop.f32.mrf.mxu0
      %v3839 = vpop.f32.mrf.mxu0
      %v3840 = vadd.f32 0.0, %v3839
      %v3841 = vpop.f32.mrf.mxu0
      %3842 = vmatprep.mubr.bf16.mxu0 0
      %3843 = vmatmul.mubr.bf16.gmra.mxu0 %v3794
      %v3844 = vpop.f32.mrf.mxu0
      %v3845 = vadd.f32 0.0, %v3844
      %v3846 = vpop.f32.mrf.mxu0
      %v3847 = vpop.f32.mrf.mxu0
      %v3848 = vadd.f32 0.0, %v3847
      %v3849 = vpop.f32.mrf.mxu0
      %3850 = vdwg.mxu0
      %v3851 = vlaneseq
      %v3852 = vand.u32 %v3851, 127
      %vm3853 = vcmp.lt.s32.totalorder %v3852, 25
      %v3854 = vsel %vm3853, %v1760, -1e+30
      %v3855 = vsel %vm3853, %v1763, -1e+30
      %v3856 = vsel %vm3853, %v1768, -1e+30
      %v3857 = vsel %vm3853, %v1771, -1e+30
      %v3858 = vsel %vm3853, %v1827, -1e+30
      %v3859 = vsel %vm3853, %v1830, -1e+30
      %v3860 = vsel %vm3853, %v1835, -1e+30
      %v3861 = vsel %vm3853, %v1838, -1e+30
      %v3862 = vsel %vm3853, %v1894, -1e+30
      %v3863 = vsel %vm3853, %v1897, -1e+30
      %v3864 = vsel %vm3853, %v1902, -1e+30
      %v3865 = vsel %vm3853, %v1905, -1e+30
      %v3866 = vsel %vm3853, %v1961, -1e+30
      %v3867 = vsel %vm3853, %v1964, -1e+30
      %v3868 = vsel %vm3853, %v1969, -1e+30
      %v3869 = vsel %vm3853, %v1972, -1e+30
      %v3870 = vsel %vm3853, %v2028, -1e+30
      %v3871 = vsel %vm3853, %v2031, -1e+30
      %v3872 = vsel %vm3853, %v2036, -1e+30
      %v3873 = vsel %vm3853, %v2039, -1e+30
      %v3874 = vsel %vm3853, %v2095, -1e+30
      %v3875 = vsel %vm3853, %v2098, -1e+30
      %v3876 = vsel %vm3853, %v2103, -1e+30
      %v3877 = vsel %vm3853, %v2106, -1e+30
      %v3878 = vsel %vm3853, %v2162, -1e+30
      %v3879 = vsel %vm3853, %v2165, -1e+30
      %v3880 = vsel %vm3853, %v2170, -1e+30
      %v3881 = vsel %vm3853, %v2173, -1e+30
      %v3882 = vsel %vm3853, %v2229, -1e+30
      %v3883 = vsel %vm3853, %v2232, -1e+30
      %v3884 = vsel %vm3853, %v2237, -1e+30
      %v3885 = vsel %vm3853, %v2240, -1e+30
      %v3886 = vsel %vm3853, %v2296, -1e+30
      %v3887 = vsel %vm3853, %v2299, -1e+30
      %v3888 = vsel %vm3853, %v2304, -1e+30
      %v3889 = vsel %vm3853, %v2307, -1e+30
      %v3890 = vsel %vm3853, %v2363, -1e+30
      %v3891 = vsel %vm3853, %v2366, -1e+30
      %v3892 = vsel %vm3853, %v2371, -1e+30
      %v3893 = vsel %vm3853, %v2374, -1e+30
      %v3894 = vsel %vm3853, %v2430, -1e+30
      %v3895 = vsel %vm3853, %v2433, -1e+30
      %v3896 = vsel %vm3853, %v2438, -1e+30
      %v3897 = vsel %vm3853, %v2441, -1e+30
      %v3898 = vsel %vm3853, %v2497, -1e+30
      %v3899 = vsel %vm3853, %v2500, -1e+30
      %v3900 = vsel %vm3853, %v2505, -1e+30
      %v3901 = vsel %vm3853, %v2508, -1e+30
      %v3902 = vsel %vm3853, %v2564, -1e+30
      %v3903 = vsel %vm3853, %v2567, -1e+30
      %v3904 = vsel %vm3853, %v2572, -1e+30
      %v3905 = vsel %vm3853, %v2575, -1e+30
      %v3906 = vsel %vm3853, %v2631, -1e+30
      %v3907 = vsel %vm3853, %v2634, -1e+30
      %v3908 = vsel %vm3853, %v2639, -1e+30
      %v3909 = vsel %vm3853, %v2642, -1e+30
      %v3910 = vsel %vm3853, %v2698, -1e+30
      %v3911 = vsel %vm3853, %v2701, -1e+30
      %v3912 = vsel %vm3853, %v2706, -1e+30
      %v3913 = vsel %vm3853, %v2709, -1e+30
      %v3914 = vsel %vm3853, %v2765, -1e+30
      %v3915 = vsel %vm3853, %v2768, -1e+30
      %v3916 = vsel %vm3853, %v2773, -1e+30
      %v3917 = vsel %vm3853, %v2776, -1e+30
      %v3918 = vsel %vm3853, %v2832, -1e+30
      %v3919 = vsel %vm3853, %v2835, -1e+30
      %v3920 = vsel %vm3853, %v2840, -1e+30
      %v3921 = vsel %vm3853, %v2843, -1e+30
      %v3922 = vsel %vm3853, %v2899, -1e+30
      %v3923 = vsel %vm3853, %v2902, -1e+30
      %v3924 = vsel %vm3853, %v2907, -1e+30
      %v3925 = vsel %vm3853, %v2910, -1e+30
      %v3926 = vsel %vm3853, %v2966, -1e+30
      %v3927 = vsel %vm3853, %v2969, -1e+30
      %v3928 = vsel %vm3853, %v2974, -1e+30
      %v3929 = vsel %vm3853, %v2977, -1e+30
      %v3930 = vsel %vm3853, %v3033, -1e+30
      %v3931 = vsel %vm3853, %v3036, -1e+30
      %v3932 = vsel %vm3853, %v3041, -1e+30
      %v3933 = vsel %vm3853, %v3044, -1e+30
      %v3934 = vsel %vm3853, %v3100, -1e+30
      %v3935 = vsel %vm3853, %v3103, -1e+30
      %v3936 = vsel %vm3853, %v3108, -1e+30
      %v3937 = vsel %vm3853, %v3111, -1e+30
      %v3938 = vsel %vm3853, %v3167, -1e+30
      %v3939 = vsel %vm3853, %v3170, -1e+30
      %v3940 = vsel %vm3853, %v3175, -1e+30
      %v3941 = vsel %vm3853, %v3178, -1e+30
      %v3942 = vsel %vm3853, %v3234, -1e+30
      %v3943 = vsel %vm3853, %v3237, -1e+30
      %v3944 = vsel %vm3853, %v3242, -1e+30
      %v3945 = vsel %vm3853, %v3245, -1e+30
      %v3946 = vsel %vm3853, %v3301, -1e+30
      %v3947 = vsel %vm3853, %v3304, -1e+30
      %v3948 = vsel %vm3853, %v3309, -1e+30
      %v3949 = vsel %vm3853, %v3312, -1e+30
      %v3950 = vsel %vm3853, %v3368, -1e+30
      %v3951 = vsel %vm3853, %v3371, -1e+30
      %v3952 = vsel %vm3853, %v3376, -1e+30
      %v3953 = vsel %vm3853, %v3379, -1e+30
      %v3954 = vsel %vm3853, %v3435, -1e+30
      %v3955 = vsel %vm3853, %v3438, -1e+30
      %v3956 = vsel %vm3853, %v3443, -1e+30
      %v3957 = vsel %vm3853, %v3446, -1e+30
      %v3958 = vsel %vm3853, %v3502, -1e+30
      %v3959 = vsel %vm3853, %v3505, -1e+30
      %v3960 = vsel %vm3853, %v3510, -1e+30
      %v3961 = vsel %vm3853, %v3513, -1e+30
      %v3962 = vsel %vm3853, %v3569, -1e+30
      %v3963 = vsel %vm3853, %v3572, -1e+30
      %v3964 = vsel %vm3853, %v3577, -1e+30
      %v3965 = vsel %vm3853, %v3580, -1e+30
      %v3966 = vsel %vm3853, %v3636, -1e+30
      %v3967 = vsel %vm3853, %v3639, -1e+30
      %v3968 = vsel %vm3853, %v3644, -1e+30
      %v3969 = vsel %vm3853, %v3647, -1e+30
      %v3970 = vsel %vm3853, %v3703, -1e+30
      %v3971 = vsel %vm3853, %v3706, -1e+30
      %v3972 = vsel %vm3853, %v3711, -1e+30
      %v3973 = vsel %vm3853, %v3714, -1e+30
      %v3974 = vsel %vm3853, %v3770, -1e+30
      %v3975 = vsel %vm3853, %v3773, -1e+30
      %v3976 = vsel %vm3853, %v3778, -1e+30
      %v3977 = vsel %vm3853, %v3781, -1e+30
      %v3978 = vsel %vm3853, %v3837, -1e+30
      %v3979 = vsel %vm3853, %v3840, -1e+30
      %v3980 = vsel %vm3853, %v3845, -1e+30
      %v3981 = vsel %vm3853, %v3848, -1e+30
      %v3982 = vsel %vm1712, %v3854, -inf
      %3983 = vmax.xlane.f32.xlu0 %v3982
      %v3984 = vpop.xlane.xlu0 %3983
      %v3985 = vsel %vm1712, %v3855, -inf
      %3986 = vmax.xlane.f32.xlu0 %v3985
      %v3987 = vpop.xlane.xlu0 %3986
      %v3988 = vsel %vm1712, %v3856, -inf
      %3989 = vmax.xlane.f32.xlu0 %v3988
      %v3990 = vpop.xlane.xlu0 %3989
      %v3991 = vsel %vm1712, %v3857, -inf
      %3992 = vmax.xlane.f32.xlu0 %v3991
      %v3993 = vpop.xlane.xlu0 %3992
      %v3994 = vsel %vm1712, %v3858, -inf
      %3995 = vmax.xlane.f32.xlu0 %v3994
      %v3996 = vpop.xlane.xlu0 %3995
      %v3997 = vsel %vm1712, %v3859, -inf
      %3998 = vmax.xlane.f32.xlu0 %v3997
      %v3999 = vpop.xlane.xlu0 %3998
      %v4000 = vsel %vm1712, %v3860, -inf
      %4001 = vmax.xlane.f32.xlu0 %v4000
      %v4002 = vpop.xlane.xlu0 %4001
      %v4003 = vsel %vm1712, %v3861, -inf
      %4004 = vmax.xlane.f32.xlu0 %v4003
      %v4005 = vpop.xlane.xlu0 %4004
      %v4006 = vsel %vm1712, %v3862, -inf
      %4007 = vmax.xlane.f32.xlu0 %v4006
      %v4008 = vpop.xlane.xlu0 %4007
      %v4009 = vsel %vm1712, %v3863, -inf
      %4010 = vmax.xlane.f32.xlu0 %v4009
      %v4011 = vpop.xlane.xlu0 %4010
      %v4012 = vsel %vm1712, %v3864, -inf
      %4013 = vmax.xlane.f32.xlu0 %v4012
      %v4014 = vpop.xlane.xlu0 %4013
      %v4015 = vsel %vm1712, %v3865, -inf
      %4016 = vmax.xlane.f32.xlu0 %v4015
      %v4017 = vpop.xlane.xlu0 %4016
      %v4018 = vsel %vm1712, %v3866, -inf
      %4019 = vmax.xlane.f32.xlu0 %v4018
      %v4020 = vpop.xlane.xlu0 %4019
      %v4021 = vsel %vm1712, %v3867, -inf
      %4022 = vmax.xlane.f32.xlu0 %v4021
      %v4023 = vpop.xlane.xlu0 %4022
      %v4024 = vsel %vm1712, %v3868, -inf
      %4025 = vmax.xlane.f32.xlu0 %v4024
      %v4026 = vpop.xlane.xlu0 %4025
      %v4027 = vsel %vm1712, %v3869, -inf
      %4028 = vmax.xlane.f32.xlu0 %v4027
      %v4029 = vpop.xlane.xlu0 %4028
      %v4030 = vsel %vm1712, %v3870, -inf
      %4031 = vmax.xlane.f32.xlu0 %v4030
      %v4032 = vpop.xlane.xlu0 %4031
      %v4033 = vsel %vm1712, %v3871, -inf
      %4034 = vmax.xlane.f32.xlu0 %v4033
      %v4035 = vpop.xlane.xlu0 %4034
      %v4036 = vsel %vm1712, %v3872, -inf
      %4037 = vmax.xlane.f32.xlu0 %v4036
      %v4038 = vpop.xlane.xlu0 %4037
      %v4039 = vsel %vm1712, %v3873, -inf
      %4040 = vmax.xlane.f32.xlu0 %v4039
      %v4041 = vpop.xlane.xlu0 %4040
      %v4042 = vsel %vm1712, %v3874, -inf
      %4043 = vmax.xlane.f32.xlu0 %v4042
      %v4044 = vpop.xlane.xlu0 %4043
      %v4045 = vsel %vm1712, %v3875, -inf
      %4046 = vmax.xlane.f32.xlu0 %v4045
      %v4047 = vpop.xlane.xlu0 %4046
      %v4048 = vsel %vm1712, %v3876, -inf
      %4049 = vmax.xlane.f32.xlu0 %v4048
      %v4050 = vpop.xlane.xlu0 %4049
      %v4051 = vsel %vm1712, %v3877, -inf
      %4052 = vmax.xlane.f32.xlu0 %v4051
      %v4053 = vpop.xlane.xlu0 %4052
      %v4054 = vsel %vm1712, %v3878, -inf
      %4055 = vmax.xlane.f32.xlu0 %v4054
      %v4056 = vpop.xlane.xlu0 %4055
      %v4057 = vsel %vm1712, %v3879, -inf
      %4058 = vmax.xlane.f32.xlu0 %v4057
      %v4059 = vpop.xlane.xlu0 %4058
      %v4060 = vsel %vm1712, %v3880, -inf
      %4061 = vmax.xlane.f32.xlu0 %v4060
      %v4062 = vpop.xlane.xlu0 %4061
      %v4063 = vsel %vm1712, %v3881, -inf
      %4064 = vmax.xlane.f32.xlu0 %v4063
      %v4065 = vpop.xlane.xlu0 %4064
      %v4066 = vsel %vm1712, %v3882, -inf
      %4067 = vmax.xlane.f32.xlu0 %v4066
      %v4068 = vpop.xlane.xlu0 %4067
      %v4069 = vsel %vm1712, %v3883, -inf
      %4070 = vmax.xlane.f32.xlu0 %v4069
      %v4071 = vpop.xlane.xlu0 %4070
      %v4072 = vsel %vm1712, %v3884, -inf
      %4073 = vmax.xlane.f32.xlu0 %v4072
      %v4074 = vpop.xlane.xlu0 %4073
      %v4075 = vsel %vm1712, %v3885, -inf
      %4076 = vmax.xlane.f32.xlu0 %v4075
      %v4077 = vpop.xlane.xlu0 %4076
      %v4078 = vsel %vm1712, %v3886, -inf
      %4079 = vmax.xlane.f32.xlu0 %v4078
      %v4080 = vpop.xlane.xlu0 %4079
      %v4081 = vsel %vm1712, %v3887, -inf
      %4082 = vmax.xlane.f32.xlu0 %v4081
      %v4083 = vpop.xlane.xlu0 %4082
      %v4084 = vsel %vm1712, %v3888, -inf
      %4085 = vmax.xlane.f32.xlu0 %v4084
      %v4086 = vpop.xlane.xlu0 %4085
      %v4087 = vsel %vm1712, %v3889, -inf
      %4088 = vmax.xlane.f32.xlu0 %v4087
      %v4089 = vpop.xlane.xlu0 %4088
      %v4090 = vsel %vm1712, %v3890, -inf
      %4091 = vmax.xlane.f32.xlu0 %v4090
      %v4092 = vpop.xlane.xlu0 %4091
      %v4093 = vsel %vm1712, %v3891, -inf
      %4094 = vmax.xlane.f32.xlu0 %v4093
      %v4095 = vpop.xlane.xlu0 %4094
      %v4096 = vsel %vm1712, %v3892, -inf
      %4097 = vmax.xlane.f32.xlu0 %v4096
      %v4098 = vpop.xlane.xlu0 %4097
      %v4099 = vsel %vm1712, %v3893, -inf
      %4100 = vmax.xlane.f32.xlu0 %v4099
      %v4101 = vpop.xlane.xlu0 %4100
      %v4102 = vsel %vm1712, %v3894, -inf
      %4103 = vmax.xlane.f32.xlu0 %v4102
      %v4104 = vpop.xlane.xlu0 %4103
      %v4105 = vsel %vm1712, %v3895, -inf
      %4106 = vmax.xlane.f32.xlu0 %v4105
      %v4107 = vpop.xlane.xlu0 %4106
      %v4108 = vsel %vm1712, %v3896, -inf
      %4109 = vmax.xlane.f32.xlu0 %v4108
      %v4110 = vpop.xlane.xlu0 %4109
      %v4111 = vsel %vm1712, %v3897, -inf
      %4112 = vmax.xlane.f32.xlu0 %v4111
      %v4113 = vpop.xlane.xlu0 %4112
      %v4114 = vsel %vm1712, %v3898, -inf
      %4115 = vmax.xlane.f32.xlu0 %v4114
      %v4116 = vpop.xlane.xlu0 %4115
      %v4117 = vsel %vm1712, %v3899, -inf
      %4118 = vmax.xlane.f32.xlu0 %v4117
      %v4119 = vpop.xlane.xlu0 %4118
      %v4120 = vsel %vm1712, %v3900, -inf
      %4121 = vmax.xlane.f32.xlu0 %v4120
      %v4122 = vpop.xlane.xlu0 %4121
      %v4123 = vsel %vm1712, %v3901, -inf
      %4124 = vmax.xlane.f32.xlu0 %v4123
      %v4125 = vpop.xlane.xlu0 %4124
      %v4126 = vsel %vm1712, %v3902, -inf
      %4127 = vmax.xlane.f32.xlu0 %v4126
      %v4128 = vpop.xlane.xlu0 %4127
      %v4129 = vsel %vm1712, %v3903, -inf
      %4130 = vmax.xlane.f32.xlu0 %v4129
      %v4131 = vpop.xlane.xlu0 %4130
      %v4132 = vsel %vm1712, %v3904, -inf
      %4133 = vmax.xlane.f32.xlu0 %v4132
      %v4134 = vpop.xlane.xlu0 %4133
      %v4135 = vsel %vm1712, %v3905, -inf
      %4136 = vmax.xlane.f32.xlu0 %v4135
      %v4137 = vpop.xlane.xlu0 %4136
      %v4138 = vsel %vm1712, %v3906, -inf
      %4139 = vmax.xlane.f32.xlu0 %v4138
      %v4140 = vpop.xlane.xlu0 %4139
      %v4141 = vsel %vm1712, %v3907, -inf
      %4142 = vmax.xlane.f32.xlu0 %v4141
      %v4143 = vpop.xlane.xlu0 %4142
      %v4144 = vsel %vm1712, %v3908, -inf
      %4145 = vmax.xlane.f32.xlu0 %v4144
      %v4146 = vpop.xlane.xlu0 %4145
      %v4147 = vsel %vm1712, %v3909, -inf
      %4148 = vmax.xlane.f32.xlu0 %v4147
      %v4149 = vpop.xlane.xlu0 %4148
      %v4150 = vsel %vm1712, %v3910, -inf
      %4151 = vmax.xlane.f32.xlu0 %v4150
      %v4152 = vpop.xlane.xlu0 %4151
      %v4153 = vsel %vm1712, %v3911, -inf
      %4154 = vmax.xlane.f32.xlu0 %v4153
      %v4155 = vpop.xlane.xlu0 %4154
      %v4156 = vsel %vm1712, %v3912, -inf
      %4157 = vmax.xlane.f32.xlu0 %v4156
      %v4158 = vpop.xlane.xlu0 %4157
      %v4159 = vsel %vm1712, %v3913, -inf
      %4160 = vmax.xlane.f32.xlu0 %v4159
      %v4161 = vpop.xlane.xlu0 %4160
      %v4162 = vsel %vm1712, %v3914, -inf
      %4163 = vmax.xlane.f32.xlu0 %v4162
      %v4164 = vpop.xlane.xlu0 %4163
      %v4165 = vsel %vm1712, %v3915, -inf
      %4166 = vmax.xlane.f32.xlu0 %v4165
      %v4167 = vpop.xlane.xlu0 %4166
      %v4168 = vsel %vm1712, %v3916, -inf
      %4169 = vmax.xlane.f32.xlu0 %v4168
      %v4170 = vpop.xlane.xlu0 %4169
      %v4171 = vsel %vm1712, %v3917, -inf
      %4172 = vmax.xlane.f32.xlu0 %v4171
      %v4173 = vpop.xlane.xlu0 %4172
      %v4174 = vsel %vm1712, %v3918, -inf
      %4175 = vmax.xlane.f32.xlu0 %v4174
      %v4176 = vpop.xlane.xlu0 %4175
      %v4177 = vsel %vm1712, %v3919, -inf
      %4178 = vmax.xlane.f32.xlu0 %v4177
      %v4179 = vpop.xlane.xlu0 %4178
      %v4180 = vsel %vm1712, %v3920, -inf
      %4181 = vmax.xlane.f32.xlu0 %v4180
      %v4182 = vpop.xlane.xlu0 %4181
      %v4183 = vsel %vm1712, %v3921, -inf
      %4184 = vmax.xlane.f32.xlu0 %v4183
      %v4185 = vpop.xlane.xlu0 %4184
      %v4186 = vsel %vm1712, %v3922, -inf
      %4187 = vmax.xlane.f32.xlu0 %v4186
      %v4188 = vpop.xlane.xlu0 %4187
      %v4189 = vsel %vm1712, %v3923, -inf
      %4190 = vmax.xlane.f32.xlu0 %v4189
      %v4191 = vpop.xlane.xlu0 %4190
      %v4192 = vsel %vm1712, %v3924, -inf
      %4193 = vmax.xlane.f32.xlu0 %v4192
      %v4194 = vpop.xlane.xlu0 %4193
      %v4195 = vsel %vm1712, %v3925, -inf
      %4196 = vmax.xlane.f32.xlu0 %v4195
      %v4197 = vpop.xlane.xlu0 %4196
      %v4198 = vsel %vm1712, %v3926, -inf
      %4199 = vmax.xlane.f32.xlu0 %v4198
      %v4200 = vpop.xlane.xlu0 %4199
      %v4201 = vsel %vm1712, %v3927, -inf
      %4202 = vmax.xlane.f32.xlu0 %v4201
      %v4203 = vpop.xlane.xlu0 %4202
      %v4204 = vsel %vm1712, %v3928, -inf
      %4205 = vmax.xlane.f32.xlu0 %v4204
      %v4206 = vpop.xlane.xlu0 %4205
      %v4207 = vsel %vm1712, %v3929, -inf
      %4208 = vmax.xlane.f32.xlu0 %v4207
      %v4209 = vpop.xlane.xlu0 %4208
      %v4210 = vsel %vm1712, %v3930, -inf
      %4211 = vmax.xlane.f32.xlu0 %v4210
      %v4212 = vpop.xlane.xlu0 %4211
      %v4213 = vsel %vm1712, %v3931, -inf
      %4214 = vmax.xlane.f32.xlu0 %v4213
      %v4215 = vpop.xlane.xlu0 %4214
      %v4216 = vsel %vm1712, %v3932, -inf
      %4217 = vmax.xlane.f32.xlu0 %v4216
      %v4218 = vpop.xlane.xlu0 %4217
      %v4219 = vsel %vm1712, %v3933, -inf
      %4220 = vmax.xlane.f32.xlu0 %v4219
      %v4221 = vpop.xlane.xlu0 %4220
      %v4222 = vsel %vm1712, %v3934, -inf
      %4223 = vmax.xlane.f32.xlu0 %v4222
      %v4224 = vpop.xlane.xlu0 %4223
      %v4225 = vsel %vm1712, %v3935, -inf
      %4226 = vmax.xlane.f32.xlu0 %v4225
      %v4227 = vpop.xlane.xlu0 %4226
      %v4228 = vsel %vm1712, %v3936, -inf
      %4229 = vmax.xlane.f32.xlu0 %v4228
      %v4230 = vpop.xlane.xlu0 %4229
      %v4231 = vsel %vm1712, %v3937, -inf
      %4232 = vmax.xlane.f32.xlu0 %v4231
      %v4233 = vpop.xlane.xlu0 %4232
      %v4234 = vsel %vm1712, %v3938, -inf
      %4235 = vmax.xlane.f32.xlu0 %v4234
      %v4236 = vpop.xlane.xlu0 %4235
      %v4237 = vsel %vm1712, %v3939, -inf
      %4238 = vmax.xlane.f32.xlu0 %v4237
      %v4239 = vpop.xlane.xlu0 %4238
      %v4240 = vsel %vm1712, %v3940, -inf
      %4241 = vmax.xlane.f32.xlu0 %v4240
      %v4242 = vpop.xlane.xlu0 %4241
      %v4243 = vsel %vm1712, %v3941, -inf
      %4244 = vmax.xlane.f32.xlu0 %v4243
      %v4245 = vpop.xlane.xlu0 %4244
      %v4246 = vsel %vm1712, %v3942, -inf
      %4247 = vmax.xlane.f32.xlu0 %v4246
      %v4248 = vpop.xlane.xlu0 %4247
      %v4249 = vsel %vm1712, %v3943, -inf
      %4250 = vmax.xlane.f32.xlu0 %v4249
      %v4251 = vpop.xlane.xlu0 %4250
      %v4252 = vsel %vm1712, %v3944, -inf
      %4253 = vmax.xlane.f32.xlu0 %v4252
      %v4254 = vpop.xlane.xlu0 %4253
      %v4255 = vsel %vm1712, %v3945, -inf
      %4256 = vmax.xlane.f32.xlu0 %v4255
      %v4257 = vpop.xlane.xlu0 %4256
      %v4258 = vsel %vm1712, %v3946, -inf
      %4259 = vmax.xlane.f32.xlu0 %v4258
      %v4260 = vpop.xlane.xlu0 %4259
      %v4261 = vsel %vm1712, %v3947, -inf
      %4262 = vmax.xlane.f32.xlu0 %v4261
      %v4263 = vpop.xlane.xlu0 %4262
      %v4264 = vsel %vm1712, %v3948, -inf
      %4265 = vmax.xlane.f32.xlu0 %v4264
      %v4266 = vpop.xlane.xlu0 %4265
      %v4267 = vsel %vm1712, %v3949, -inf
      %4268 = vmax.xlane.f32.xlu0 %v4267
      %v4269 = vpop.xlane.xlu0 %4268
      %v4270 = vsel %vm1712, %v3950, -inf
      %4271 = vmax.xlane.f32.xlu0 %v4270
      %v4272 = vpop.xlane.xlu0 %4271
      %v4273 = vsel %vm1712, %v3951, -inf
      %4274 = vmax.xlane.f32.xlu0 %v4273
      %v4275 = vpop.xlane.xlu0 %4274
      %v4276 = vsel %vm1712, %v3952, -inf
      %4277 = vmax.xlane.f32.xlu0 %v4276
      %v4278 = vpop.xlane.xlu0 %4277
      %v4279 = vsel %vm1712, %v3953, -inf
      %4280 = vmax.xlane.f32.xlu0 %v4279
      %v4281 = vpop.xlane.xlu0 %4280
      %v4282 = vsel %vm1712, %v3954, -inf
      %4283 = vmax.xlane.f32.xlu0 %v4282
      %v4284 = vpop.xlane.xlu0 %4283
      %v4285 = vsel %vm1712, %v3955, -inf
      %4286 = vmax.xlane.f32.xlu0 %v4285
      %v4287 = vpop.xlane.xlu0 %4286
      %v4288 = vsel %vm1712, %v3956, -inf
      %4289 = vmax.xlane.f32.xlu0 %v4288
      %v4290 = vpop.xlane.xlu0 %4289
      %v4291 = vsel %vm1712, %v3957, -inf
      %4292 = vmax.xlane.f32.xlu0 %v4291
      %v4293 = vpop.xlane.xlu0 %4292
      %v4294 = vsel %vm1712, %v3958, -inf
      %4295 = vmax.xlane.f32.xlu0 %v4294
      %v4296 = vpop.xlane.xlu0 %4295
      %v4297 = vsel %vm1712, %v3959, -inf
      %4298 = vmax.xlane.f32.xlu0 %v4297
      %v4299 = vpop.xlane.xlu0 %4298
      %v4300 = vsel %vm1712, %v3960, -inf
      %4301 = vmax.xlane.f32.xlu0 %v4300
      %v4302 = vpop.xlane.xlu0 %4301
      %v4303 = vsel %vm1712, %v3961, -inf
      %4304 = vmax.xlane.f32.xlu0 %v4303
      %v4305 = vpop.xlane.xlu0 %4304
      %v4306 = vsel %vm1712, %v3962, -inf
      %4307 = vmax.xlane.f32.xlu0 %v4306
      %v4308 = vpop.xlane.xlu0 %4307
      %v4309 = vsel %vm1712, %v3963, -inf
      %4310 = vmax.xlane.f32.xlu0 %v4309
      %v4311 = vpop.xlane.xlu0 %4310
      %v4312 = vsel %vm1712, %v3964, -inf
      %4313 = vmax.xlane.f32.xlu0 %v4312
      %v4314 = vpop.xlane.xlu0 %4313
      %v4315 = vsel %vm1712, %v3965, -inf
      %4316 = vmax.xlane.f32.xlu0 %v4315
      %v4317 = vpop.xlane.xlu0 %4316
      %v4318 = vsel %vm1712, %v3966, -inf
      %4319 = vmax.xlane.f32.xlu0 %v4318
      %v4320 = vpop.xlane.xlu0 %4319
      %v4321 = vsel %vm1712, %v3967, -inf
      %4322 = vmax.xlane.f32.xlu0 %v4321
      %v4323 = vpop.xlane.xlu0 %4322
      %v4324 = vsel %vm1712, %v3968, -inf
      %4325 = vmax.xlane.f32.xlu0 %v4324
      %v4326 = vpop.xlane.xlu0 %4325
      %v4327 = vsel %vm1712, %v3969, -inf
      %4328 = vmax.xlane.f32.xlu0 %v4327
      %v4329 = vpop.xlane.xlu0 %4328
      %v4330 = vsel %vm1712, %v3970, -inf
      %4331 = vmax.xlane.f32.xlu0 %v4330
      %v4332 = vpop.xlane.xlu0 %4331
      %v4333 = vsel %vm1712, %v3971, -inf
      %4334 = vmax.xlane.f32.xlu0 %v4333
      %v4335 = vpop.xlane.xlu0 %4334
      %v4336 = vsel %vm1712, %v3972, -inf
      %4337 = vmax.xlane.f32.xlu0 %v4336
      %v4338 = vpop.xlane.xlu0 %4337
      %v4339 = vsel %vm1712, %v3973, -inf
      %4340 = vmax.xlane.f32.xlu0 %v4339
      %v4341 = vpop.xlane.xlu0 %4340
      %v4342 = vsel %vm1712, %v3974, -inf
      %4343 = vmax.xlane.f32.xlu0 %v4342
      %v4344 = vpop.xlane.xlu0 %4343
      %v4345 = vsel %vm1712, %v3975, -inf
      %4346 = vmax.xlane.f32.xlu0 %v4345
      %v4347 = vpop.xlane.xlu0 %4346
      %v4348 = vsel %vm1712, %v3976, -inf
      %4349 = vmax.xlane.f32.xlu0 %v4348
      %v4350 = vpop.xlane.xlu0 %4349
      %v4351 = vsel %vm1712, %v3977, -inf
      %4352 = vmax.xlane.f32.xlu0 %v4351
      %v4353 = vpop.xlane.xlu0 %4352
      %v4354 = vsel %vm1712, %v3978, -inf
      %4355 = vmax.xlane.f32.xlu0 %v4354
      %v4356 = vpop.xlane.xlu0 %4355
      %v4357 = vsel %vm1712, %v3979, -inf
      %4358 = vmax.xlane.f32.xlu0 %v4357
      %v4359 = vpop.xlane.xlu0 %4358
      %v4360 = vsel %vm1712, %v3980, -inf
      %4361 = vmax.xlane.f32.xlu0 %v4360
      %v4362 = vpop.xlane.xlu0 %4361
      %v4363 = vsel %vm1712, %v3981, -inf
      %4364 = vmax.xlane.f32.xlu0 %v4363
      %v4365 = vpop.xlane.xlu0 %4364
      %v4366 = vsub.f32 %v3854, %v3984
      %v4367 = vsub.f32 %v3855, %v3987
      %v4368 = vsub.f32 %v3856, %v3990
      %v4369 = vsub.f32 %v3857, %v3993
      %v4370 = vsub.f32 %v3858, %v3996
      %v4371 = vsub.f32 %v3859, %v3999
      %v4372 = vsub.f32 %v3860, %v4002
      %v4373 = vsub.f32 %v3861, %v4005
      %v4374 = vsub.f32 %v3862, %v4008
      %v4375 = vsub.f32 %v3863, %v4011
      %v4376 = vsub.f32 %v3864, %v4014
      %v4377 = vsub.f32 %v3865, %v4017
      %v4378 = vsub.f32 %v3866, %v4020
      %v4379 = vsub.f32 %v3867, %v4023
      %v4380 = vsub.f32 %v3868, %v4026
      %v4381 = vsub.f32 %v3869, %v4029
      %v4382 = vsub.f32 %v3870, %v4032
      %v4383 = vsub.f32 %v3871, %v4035
      %v4384 = vsub.f32 %v3872, %v4038
      %v4385 = vsub.f32 %v3873, %v4041
      %v4386 = vsub.f32 %v3874, %v4044
      %v4387 = vsub.f32 %v3875, %v4047
      %v4388 = vsub.f32 %v3876, %v4050
      %v4389 = vsub.f32 %v3877, %v4053
      %v4390 = vsub.f32 %v3878, %v4056
      %v4391 = vsub.f32 %v3879, %v4059
      %v4392 = vsub.f32 %v3880, %v4062
      %v4393 = vsub.f32 %v3881, %v4065
      %v4394 = vsub.f32 %v3882, %v4068
      %v4395 = vsub.f32 %v3883, %v4071
      %v4396 = vsub.f32 %v3884, %v4074
      %v4397 = vsub.f32 %v3885, %v4077
      %v4398 = vsub.f32 %v3886, %v4080
      %v4399 = vsub.f32 %v3887, %v4083
      %v4400 = vsub.f32 %v3888, %v4086
      %v4401 = vsub.f32 %v3889, %v4089
      %v4402 = vsub.f32 %v3890, %v4092
      %v4403 = vsub.f32 %v3891, %v4095
      %v4404 = vsub.f32 %v3892, %v4098
      %v4405 = vsub.f32 %v3893, %v4101
      %v4406 = vsub.f32 %v3894, %v4104
      %v4407 = vsub.f32 %v3895, %v4107
      %v4408 = vsub.f32 %v3896, %v4110
      %v4409 = vsub.f32 %v3897, %v4113
      %v4410 = vsub.f32 %v3898, %v4116
      %v4411 = vsub.f32 %v3899, %v4119
      %v4412 = vsub.f32 %v3900, %v4122
      %v4413 = vsub.f32 %v3901, %v4125
      %v4414 = vsub.f32 %v3902, %v4128
      %v4415 = vsub.f32 %v3903, %v4131
      %v4416 = vsub.f32 %v3904, %v4134
      %v4417 = vsub.f32 %v3905, %v4137
      %v4418 = vsub.f32 %v3906, %v4140
      %v4419 = vsub.f32 %v3907, %v4143
      %v4420 = vsub.f32 %v3908, %v4146
      %v4421 = vsub.f32 %v3909, %v4149
      %v4422 = vsub.f32 %v3910, %v4152
      %v4423 = vsub.f32 %v3911, %v4155
      %v4424 = vsub.f32 %v3912, %v4158
      %v4425 = vsub.f32 %v3913, %v4161
      %v4426 = vsub.f32 %v3914, %v4164
      %v4427 = vsub.f32 %v3915, %v4167
      %v4428 = vsub.f32 %v3916, %v4170
      %v4429 = vsub.f32 %v3917, %v4173
      %v4430 = vsub.f32 %v3918, %v4176
      %v4431 = vsub.f32 %v3919, %v4179
      %v4432 = vsub.f32 %v3920, %v4182
      %v4433 = vsub.f32 %v3921, %v4185
      %v4434 = vsub.f32 %v3922, %v4188
      %v4435 = vsub.f32 %v3923, %v4191
      %v4436 = vsub.f32 %v3924, %v4194
      %v4437 = vsub.f32 %v3925, %v4197
      %v4438 = vsub.f32 %v3926, %v4200
      %v4439 = vsub.f32 %v3927, %v4203
      %v4440 = vsub.f32 %v3928, %v4206
      %v4441 = vsub.f32 %v3929, %v4209
      %v4442 = vsub.f32 %v3930, %v4212
      %v4443 = vsub.f32 %v3931, %v4215
      %v4444 = vsub.f32 %v3932, %v4218
      %v4445 = vsub.f32 %v3933, %v4221
      %v4446 = vsub.f32 %v3934, %v4224
      %v4447 = vsub.f32 %v3935, %v4227
      %v4448 = vsub.f32 %v3936, %v4230
      %v4449 = vsub.f32 %v3937, %v4233
      %v4450 = vsub.f32 %v3938, %v4236
      %v4451 = vsub.f32 %v3939, %v4239
      %v4452 = vsub.f32 %v3940, %v4242
      %v4453 = vsub.f32 %v3941, %v4245
      %v4454 = vsub.f32 %v3942, %v4248
      %v4455 = vsub.f32 %v3943, %v4251
      %v4456 = vsub.f32 %v3944, %v4254
      %v4457 = vsub.f32 %v3945, %v4257
      %v4458 = vsub.f32 %v3946, %v4260
      %v4459 = vsub.f32 %v3947, %v4263
      %v4460 = vsub.f32 %v3948, %v4266
      %v4461 = vsub.f32 %v3949, %v4269
      %v4462 = vsub.f32 %v3950, %v4272
      %v4463 = vsub.f32 %v3951, %v4275
      %v4464 = vsub.f32 %v3952, %v4278
      %v4465 = vsub.f32 %v3953, %v4281
      %v4466 = vsub.f32 %v3954, %v4284
      %v4467 = vsub.f32 %v3955, %v4287
      %v4468 = vsub.f32 %v3956, %v4290
      %v4469 = vsub.f32 %v3957, %v4293
      %v4470 = vsub.f32 %v3958, %v4296
      %v4471 = vsub.f32 %v3959, %v4299
      %v4472 = vsub.f32 %v3960, %v4302
      %v4473 = vsub.f32 %v3961, %v4305
      %v4474 = vsub.f32 %v3962, %v4308
      %v4475 = vsub.f32 %v3963, %v4311
      %v4476 = vsub.f32 %v3964, %v4314
      %v4477 = vsub.f32 %v3965, %v4317
      %v4478 = vsub.f32 %v3966, %v4320
      %v4479 = vsub.f32 %v3967, %v4323
      %v4480 = vsub.f32 %v3968, %v4326
      %v4481 = vsub.f32 %v3969, %v4329
      %v4482 = vsub.f32 %v3970, %v4332
      %v4483 = vsub.f32 %v3971, %v4335
      %v4484 = vsub.f32 %v3972, %v4338
      %v4485 = vsub.f32 %v3973, %v4341
      %v4486 = vsub.f32 %v3974, %v4344
      %v4487 = vsub.f32 %v3975, %v4347
      %v4488 = vsub.f32 %v3976, %v4350
      %v4489 = vsub.f32 %v3977, %v4353
      %v4490 = vsub.f32 %v3978, %v4356
      %v4491 = vsub.f32 %v3979, %v4359
      %v4492 = vsub.f32 %v3980, %v4362
      %v4493 = vsub.f32 %v3981, %v4365
      %v4494 = vmul.f32 %v4366, 1.442695
      %v4495 = vpow.pop %v4494
      %v4496 = vmul.f32 %v4367, 1.442695
      %v4497 = vpow.pop %v4496
      %v4498 = vmul.f32 %v4368, 1.442695
      %v4499 = vpow.pop %v4498
      %v4500 = vmul.f32 %v4369, 1.442695
      %v4501 = vpow.pop %v4500
      %v4502 = vmul.f32 %v4370, 1.442695
      %v4503 = vpow.pop %v4502
      %v4504 = vmul.f32 %v4371, 1.442695
      %v4505 = vpow.pop %v4504
      %v4506 = vmul.f32 %v4372, 1.442695
      %v4507 = vpow.pop %v4506
      %v4508 = vmul.f32 %v4373, 1.442695
      %v4509 = vpow.pop %v4508
      %v4510 = vmul.f32 %v4374, 1.442695
      %v4511 = vpow.pop %v4510
      %v4512 = vmul.f32 %v4375, 1.442695
      %v4513 = vpow.pop %v4512
      %v4514 = vmul.f32 %v4376, 1.442695
      %v4515 = vpow.pop %v4514
      %v4516 = vmul.f32 %v4377, 1.442695
      %v4517 = vpow.pop %v4516
      %v4518 = vmul.f32 %v4378, 1.442695
      %v4519 = vpow.pop %v4518
      %v4520 = vmul.f32 %v4379, 1.442695
      %v4521 = vpow.pop %v4520
      %v4522 = vmul.f32 %v4380, 1.442695
      %v4523 = vpow.pop %v4522
      %v4524 = vmul.f32 %v4381, 1.442695
      %v4525 = vpow.pop %v4524
      %v4526 = vmul.f32 %v4382, 1.442695
      %v4527 = vpow.pop %v4526
      %v4528 = vmul.f32 %v4383, 1.442695
      %v4529 = vpow.pop %v4528
      %v4530 = vmul.f32 %v4384, 1.442695
      %v4531 = vpow.pop %v4530
      %v4532 = vmul.f32 %v4385, 1.442695
      %v4533 = vpow.pop %v4532
      %v4534 = vmul.f32 %v4386, 1.442695
      %v4535 = vpow.pop %v4534
      %v4536 = vmul.f32 %v4387, 1.442695
      %v4537 = vpow.pop %v4536
      %v4538 = vmul.f32 %v4388, 1.442695
      %v4539 = vpow.pop %v4538
      %v4540 = vmul.f32 %v4389, 1.442695
      %v4541 = vpow.pop %v4540
      %v4542 = vmul.f32 %v4390, 1.442695
      %v4543 = vpow.pop %v4542
      %v4544 = vmul.f32 %v4391, 1.442695
      %v4545 = vpow.pop %v4544
      %v4546 = vmul.f32 %v4392, 1.442695
      %v4547 = vpow.pop %v4546
      %v4548 = vmul.f32 %v4393, 1.442695
      %v4549 = vpow.pop %v4548
      %v4550 = vmul.f32 %v4394, 1.442695
      %v4551 = vpow.pop %v4550
      %v4552 = vmul.f32 %v4395, 1.442695
      %v4553 = vpow.pop %v4552
      %v4554 = vmul.f32 %v4396, 1.442695
      %v4555 = vpow.pop %v4554
      %v4556 = vmul.f32 %v4397, 1.442695
      %v4557 = vpow.pop %v4556
      %v4558 = vmul.f32 %v4398, 1.442695
      %v4559 = vpow.pop %v4558
      %v4560 = vmul.f32 %v4399, 1.442695
      %v4561 = vpow.pop %v4560
      %v4562 = vmul.f32 %v4400, 1.442695
      %v4563 = vpow.pop %v4562
      %v4564 = vmul.f32 %v4401, 1.442695
      %v4565 = vpow.pop %v4564
      %v4566 = vmul.f32 %v4402, 1.442695
      %v4567 = vpow.pop %v4566
      %v4568 = vmul.f32 %v4403, 1.442695
      %v4569 = vpow.pop %v4568
      %v4570 = vmul.f32 %v4404, 1.442695
      %v4571 = vpow.pop %v4570
      %v4572 = vmul.f32 %v4405, 1.442695
      %v4573 = vpow.pop %v4572
      %v4574 = vmul.f32 %v4406, 1.442695
      %v4575 = vpow.pop %v4574
      %v4576 = vmul.f32 %v4407, 1.442695
      %v4577 = vpow.pop %v4576
      %v4578 = vmul.f32 %v4408, 1.442695
      %v4579 = vpow.pop %v4578
      %v4580 = vmul.f32 %v4409, 1.442695
      %v4581 = vpow.pop %v4580
      %v4582 = vmul.f32 %v4410, 1.442695
      %v4583 = vpow.pop %v4582
      %v4584 = vmul.f32 %v4411, 1.442695
      %v4585 = vpow.pop %v4584
      %v4586 = vmul.f32 %v4412, 1.442695
      %v4587 = vpow.pop %v4586
      %v4588 = vmul.f32 %v4413, 1.442695
      %v4589 = vpow.pop %v4588
      %v4590 = vmul.f32 %v4414, 1.442695
      %v4591 = vpow.pop %v4590
      %v4592 = vmul.f32 %v4415, 1.442695
      %v4593 = vpow.pop %v4592
      %v4594 = vmul.f32 %v4416, 1.442695
      %v4595 = vpow.pop %v4594
      %v4596 = vmul.f32 %v4417, 1.442695
      %v4597 = vpow.pop %v4596
      %v4598 = vmul.f32 %v4418, 1.442695
      %v4599 = vpow.pop %v4598
      %v4600 = vmul.f32 %v4419, 1.442695
      %v4601 = vpow.pop %v4600
      %v4602 = vmul.f32 %v4420, 1.442695
      %v4603 = vpow.pop %v4602
      %v4604 = vmul.f32 %v4421, 1.442695
      %v4605 = vpow.pop %v4604
      %v4606 = vmul.f32 %v4422, 1.442695
      %v4607 = vpow.pop %v4606
      %v4608 = vmul.f32 %v4423, 1.442695
      %v4609 = vpow.pop %v4608
      %v4610 = vmul.f32 %v4424, 1.442695
      %v4611 = vpow.pop %v4610
      %v4612 = vmul.f32 %v4425, 1.442695
      %v4613 = vpow.pop %v4612
      %v4614 = vmul.f32 %v4426, 1.442695
      %v4615 = vpow.pop %v4614
      %v4616 = vmul.f32 %v4427, 1.442695
      %v4617 = vpow.pop %v4616
      %v4618 = vmul.f32 %v4428, 1.442695
      %v4619 = vpow.pop %v4618
      %v4620 = vmul.f32 %v4429, 1.442695
      %v4621 = vpow.pop %v4620
      %v4622 = vmul.f32 %v4430, 1.442695
      %v4623 = vpow.pop %v4622
      %v4624 = vmul.f32 %v4431, 1.442695
      %v4625 = vpow.pop %v4624
      %v4626 = vmul.f32 %v4432, 1.442695
      %v4627 = vpow.pop %v4626
      %v4628 = vmul.f32 %v4433, 1.442695
      %v4629 = vpow.pop %v4628
      %v4630 = vmul.f32 %v4434, 1.442695
      %v4631 = vpow.pop %v4630
      %v4632 = vmul.f32 %v4435, 1.442695
      %v4633 = vpow.pop %v4632
      %v4634 = vmul.f32 %v4436, 1.442695
      %v4635 = vpow.pop %v4634
      %v4636 = vmul.f32 %v4437, 1.442695
      %v4637 = vpow.pop %v4636
      %v4638 = vmul.f32 %v4438, 1.442695
      %v4639 = vpow.pop %v4638
      %v4640 = vmul.f32 %v4439, 1.442695
      %v4641 = vpow.pop %v4640
      %v4642 = vmul.f32 %v4440, 1.442695
      %v4643 = vpow.pop %v4642
      %v4644 = vmul.f32 %v4441, 1.442695
      %v4645 = vpow.pop %v4644
      %v4646 = vmul.f32 %v4442, 1.442695
      %v4647 = vpow.pop %v4646
      %v4648 = vmul.f32 %v4443, 1.442695
      %v4649 = vpow.pop %v4648
      %v4650 = vmul.f32 %v4444, 1.442695
      %v4651 = vpow.pop %v4650
      %v4652 = vmul.f32 %v4445, 1.442695
      %v4653 = vpow.pop %v4652
      %v4654 = vmul.f32 %v4446, 1.442695
      %v4655 = vpow.pop %v4654
      %v4656 = vmul.f32 %v4447, 1.442695
      %v4657 = vpow.pop %v4656
      %v4658 = vmul.f32 %v4448, 1.442695
      %v4659 = vpow.pop %v4658
      %v4660 = vmul.f32 %v4449, 1.442695
      %v4661 = vpow.pop %v4660
      %v4662 = vmul.f32 %v4450, 1.442695
      %v4663 = vpow.pop %v4662
      %v4664 = vmul.f32 %v4451, 1.442695
      %v4665 = vpow.pop %v4664
      %v4666 = vmul.f32 %v4452, 1.442695
      %v4667 = vpow.pop %v4666
      %v4668 = vmul.f32 %v4453, 1.442695
      %v4669 = vpow.pop %v4668
      %v4670 = vmul.f32 %v4454, 1.442695
      %v4671 = vpow.pop %v4670
      %v4672 = vmul.f32 %v4455, 1.442695
      %v4673 = vpow.pop %v4672
      %v4674 = vmul.f32 %v4456, 1.442695
      %v4675 = vpow.pop %v4674
      %v4676 = vmul.f32 %v4457, 1.442695
      %v4677 = vpow.pop %v4676
      %v4678 = vmul.f32 %v4458, 1.442695
      %v4679 = vpow.pop %v4678
      %v4680 = vmul.f32 %v4459, 1.442695
      %v4681 = vpow.pop %v4680
      %v4682 = vmul.f32 %v4460, 1.442695
      %v4683 = vpow.pop %v4682
      %v4684 = vmul.f32 %v4461, 1.442695
      %v4685 = vpow.pop %v4684
      %v4686 = vmul.f32 %v4462, 1.442695
      %v4687 = vpow.pop %v4686
      %v4688 = vmul.f32 %v4463, 1.442695
      %v4689 = vpow.pop %v4688
      %v4690 = vmul.f32 %v4464, 1.442695
      %v4691 = vpow.pop %v4690
      %v4692 = vmul.f32 %v4465, 1.442695
      %v4693 = vpow.pop %v4692
      %v4694 = vmul.f32 %v4466, 1.442695
      %v4695 = vpow.pop %v4694
      %v4696 = vmul.f32 %v4467, 1.442695
      %v4697 = vpow.pop %v4696
      %v4698 = vmul.f32 %v4468, 1.442695
      %v4699 = vpow.pop %v4698
      %v4700 = vmul.f32 %v4469, 1.442695
      %v4701 = vpow.pop %v4700
      %v4702 = vmul.f32 %v4470, 1.442695
      %v4703 = vpow.pop %v4702
      %v4704 = vmul.f32 %v4471, 1.442695
      %v4705 = vpow.pop %v4704
      %v4706 = vmul.f32 %v4472, 1.442695
      %v4707 = vpow.pop %v4706
      %v4708 = vmul.f32 %v4473, 1.442695
      %v4709 = vpow.pop %v4708
      %v4710 = vmul.f32 %v4474, 1.442695
      %v4711 = vpow.pop %v4710
      %v4712 = vmul.f32 %v4475, 1.442695
      %v4713 = vpow.pop %v4712
      %v4714 = vmul.f32 %v4476, 1.442695
      %v4715 = vpow.pop %v4714
      %v4716 = vmul.f32 %v4477, 1.442695
      %v4717 = vpow.pop %v4716
      %v4718 = vmul.f32 %v4478, 1.442695
      %v4719 = vpow.pop %v4718
      %v4720 = vmul.f32 %v4479, 1.442695
      %v4721 = vpow.pop %v4720
      %v4722 = vmul.f32 %v4480, 1.442695
      %v4723 = vpow.pop %v4722
      %v4724 = vmul.f32 %v4481, 1.442695
      %v4725 = vpow.pop %v4724
      %v4726 = vmul.f32 %v4482, 1.442695
      %v4727 = vpow.pop %v4726
      %v4728 = vmul.f32 %v4483, 1.442695
      %v4729 = vpow.pop %v4728
      %v4730 = vmul.f32 %v4484, 1.442695
      %v4731 = vpow.pop %v4730
      %v4732 = vmul.f32 %v4485, 1.442695
      %v4733 = vpow.pop %v4732
      %v4734 = vmul.f32 %v4486, 1.442695
      %v4735 = vpow.pop %v4734
      %v4736 = vmul.f32 %v4487, 1.442695
      %v4737 = vpow.pop %v4736
      %v4738 = vmul.f32 %v4488, 1.442695
      %v4739 = vpow.pop %v4738
      %v4740 = vmul.f32 %v4489, 1.442695
      %v4741 = vpow.pop %v4740
      %v4742 = vmul.f32 %v4490, 1.442695
      %v4743 = vpow.pop %v4742
      %v4744 = vmul.f32 %v4491, 1.442695
      %v4745 = vpow.pop %v4744
      %v4746 = vmul.f32 %v4492, 1.442695
      %v4747 = vpow.pop %v4746
      %v4748 = vmul.f32 %v4493, 1.442695
      %v4749 = vpow.pop %v4748
      %v4750 = vsel %vm1712, %v4495, 0.0
      %4751 = vadd.xlane.f32.xlu0 %v4750
      %v4752 = vpop.xlane.xlu0 %4751
      %v4753 = vsel %vm1712, %v4497, 0.0
      %4754 = vadd.xlane.f32.xlu0 %v4753
      %v4755 = vpop.xlane.xlu0 %4754
      %v4756 = vsel %vm1712, %v4499, 0.0
      %4757 = vadd.xlane.f32.xlu0 %v4756
      %v4758 = vpop.xlane.xlu0 %4757
      %v4759 = vsel %vm1712, %v4501, 0.0
      %4760 = vadd.xlane.f32.xlu0 %v4759
      %v4761 = vpop.xlane.xlu0 %4760
      %v4762 = vsel %vm1712, %v4503, 0.0
      %4763 = vadd.xlane.f32.xlu0 %v4762
      %v4764 = vpop.xlane.xlu0 %4763
      %v4765 = vsel %vm1712, %v4505, 0.0
      %4766 = vadd.xlane.f32.xlu0 %v4765
      %v4767 = vpop.xlane.xlu0 %4766
      %v4768 = vsel %vm1712, %v4507, 0.0
      %4769 = vadd.xlane.f32.xlu0 %v4768
      %v4770 = vpop.xlane.xlu0 %4769
      %v4771 = vsel %vm1712, %v4509, 0.0
      %4772 = vadd.xlane.f32.xlu0 %v4771
      %v4773 = vpop.xlane.xlu0 %4772
      %v4774 = vsel %vm1712, %v4511, 0.0
      %4775 = vadd.xlane.f32.xlu0 %v4774
      %v4776 = vpop.xlane.xlu0 %4775
      %v4777 = vsel %vm1712, %v4513, 0.0
      %4778 = vadd.xlane.f32.xlu0 %v4777
      %v4779 = vpop.xlane.xlu0 %4778
      %v4780 = vsel %vm1712, %v4515, 0.0
      %4781 = vadd.xlane.f32.xlu0 %v4780
      %v4782 = vpop.xlane.xlu0 %4781
      %v4783 = vsel %vm1712, %v4517, 0.0
      %4784 = vadd.xlane.f32.xlu0 %v4783
      %v4785 = vpop.xlane.xlu0 %4784
      %v4786 = vsel %vm1712, %v4519, 0.0
      %4787 = vadd.xlane.f32.xlu0 %v4786
      %v4788 = vpop.xlane.xlu0 %4787
      %v4789 = vsel %vm1712, %v4521, 0.0
      %4790 = vadd.xlane.f32.xlu0 %v4789
      %v4791 = vpop.xlane.xlu0 %4790
      %v4792 = vsel %vm1712, %v4523, 0.0
      %4793 = vadd.xlane.f32.xlu0 %v4792
      %v4794 = vpop.xlane.xlu0 %4793
      %v4795 = vsel %vm1712, %v4525, 0.0
      %4796 = vadd.xlane.f32.xlu0 %v4795
      %v4797 = vpop.xlane.xlu0 %4796
      %v4798 = vsel %vm1712, %v4527, 0.0
      %4799 = vadd.xlane.f32.xlu0 %v4798
      %v4800 = vpop.xlane.xlu0 %4799
      %v4801 = vsel %vm1712, %v4529, 0.0
      %4802 = vadd.xlane.f32.xlu0 %v4801
      %v4803 = vpop.xlane.xlu0 %4802
      %v4804 = vsel %vm1712, %v4531, 0.0
      %4805 = vadd.xlane.f32.xlu0 %v4804
      %v4806 = vpop.xlane.xlu0 %4805
      %v4807 = vsel %vm1712, %v4533, 0.0
      %4808 = vadd.xlane.f32.xlu0 %v4807
      %v4809 = vpop.xlane.xlu0 %4808
      %v4810 = vsel %vm1712, %v4535, 0.0
      %4811 = vadd.xlane.f32.xlu0 %v4810
      %v4812 = vpop.xlane.xlu0 %4811
      %v4813 = vsel %vm1712, %v4537, 0.0
      %4814 = vadd.xlane.f32.xlu0 %v4813
      %v4815 = vpop.xlane.xlu0 %4814
      %v4816 = vsel %vm1712, %v4539, 0.0
      %4817 = vadd.xlane.f32.xlu0 %v4816
      %v4818 = vpop.xlane.xlu0 %4817
      %v4819 = vsel %vm1712, %v4541, 0.0
      %4820 = vadd.xlane.f32.xlu0 %v4819
      %v4821 = vpop.xlane.xlu0 %4820
      %v4822 = vsel %vm1712, %v4543, 0.0
      %4823 = vadd.xlane.f32.xlu0 %v4822
      %v4824 = vpop.xlane.xlu0 %4823
      %v4825 = vsel %vm1712, %v4545, 0.0
      %4826 = vadd.xlane.f32.xlu0 %v4825
      %v4827 = vpop.xlane.xlu0 %4826
      %v4828 = vsel %vm1712, %v4547, 0.0
      %4829 = vadd.xlane.f32.xlu0 %v4828
      %v4830 = vpop.xlane.xlu0 %4829
      %v4831 = vsel %vm1712, %v4549, 0.0
      %4832 = vadd.xlane.f32.xlu0 %v4831
      %v4833 = vpop.xlane.xlu0 %4832
      %v4834 = vsel %vm1712, %v4551, 0.0
      %4835 = vadd.xlane.f32.xlu0 %v4834
      %v4836 = vpop.xlane.xlu0 %4835
      %v4837 = vsel %vm1712, %v4553, 0.0
      %4838 = vadd.xlane.f32.xlu0 %v4837
      %v4839 = vpop.xlane.xlu0 %4838
      %v4840 = vsel %vm1712, %v4555, 0.0
      %4841 = vadd.xlane.f32.xlu0 %v4840
      %v4842 = vpop.xlane.xlu0 %4841
      %v4843 = vsel %vm1712, %v4557, 0.0
      %4844 = vadd.xlane.f32.xlu0 %v4843
      %v4845 = vpop.xlane.xlu0 %4844
      %v4846 = vsel %vm1712, %v4559, 0.0
      %4847 = vadd.xlane.f32.xlu0 %v4846
      %v4848 = vpop.xlane.xlu0 %4847
      %v4849 = vsel %vm1712, %v4561, 0.0
      %4850 = vadd.xlane.f32.xlu0 %v4849
      %v4851 = vpop.xlane.xlu0 %4850
      %v4852 = vsel %vm1712, %v4563, 0.0
      %4853 = vadd.xlane.f32.xlu0 %v4852
      %v4854 = vpop.xlane.xlu0 %4853
      %v4855 = vsel %vm1712, %v4565, 0.0
      %4856 = vadd.xlane.f32.xlu0 %v4855
      %v4857 = vpop.xlane.xlu0 %4856
      %v4858 = vsel %vm1712, %v4567, 0.0
      %4859 = vadd.xlane.f32.xlu0 %v4858
      %v4860 = vpop.xlane.xlu0 %4859
      %v4861 = vsel %vm1712, %v4569, 0.0
      %4862 = vadd.xlane.f32.xlu0 %v4861
      %v4863 = vpop.xlane.xlu0 %4862
      %v4864 = vsel %vm1712, %v4571, 0.0
      %4865 = vadd.xlane.f32.xlu0 %v4864
      %v4866 = vpop.xlane.xlu0 %4865
      %v4867 = vsel %vm1712, %v4573, 0.0
      %4868 = vadd.xlane.f32.xlu0 %v4867
      %v4869 = vpop.xlane.xlu0 %4868
      %v4870 = vsel %vm1712, %v4575, 0.0
      %4871 = vadd.xlane.f32.xlu0 %v4870
      %v4872 = vpop.xlane.xlu0 %4871
      %v4873 = vsel %vm1712, %v4577, 0.0
      %4874 = vadd.xlane.f32.xlu0 %v4873
      %v4875 = vpop.xlane.xlu0 %4874
      %v4876 = vsel %vm1712, %v4579, 0.0
      %4877 = vadd.xlane.f32.xlu0 %v4876
      %v4878 = vpop.xlane.xlu0 %4877
      %v4879 = vsel %vm1712, %v4581, 0.0
      %4880 = vadd.xlane.f32.xlu0 %v4879
      %v4881 = vpop.xlane.xlu0 %4880
      %v4882 = vsel %vm1712, %v4583, 0.0
      %4883 = vadd.xlane.f32.xlu0 %v4882
      %v4884 = vpop.xlane.xlu0 %4883
      %v4885 = vsel %vm1712, %v4585, 0.0
      %4886 = vadd.xlane.f32.xlu0 %v4885
      %v4887 = vpop.xlane.xlu0 %4886
      %v4888 = vsel %vm1712, %v4587, 0.0
      %4889 = vadd.xlane.f32.xlu0 %v4888
      %v4890 = vpop.xlane.xlu0 %4889
      %v4891 = vsel %vm1712, %v4589, 0.0
      %4892 = vadd.xlane.f32.xlu0 %v4891
      %v4893 = vpop.xlane.xlu0 %4892
      %v4894 = vsel %vm1712, %v4591, 0.0
      %4895 = vadd.xlane.f32.xlu0 %v4894
      %v4896 = vpop.xlane.xlu0 %4895
      %v4897 = vsel %vm1712, %v4593, 0.0
      %4898 = vadd.xlane.f32.xlu0 %v4897
      %v4899 = vpop.xlane.xlu0 %4898
      %v4900 = vsel %vm1712, %v4595, 0.0
      %4901 = vadd.xlane.f32.xlu0 %v4900
      %v4902 = vpop.xlane.xlu0 %4901
      %v4903 = vsel %vm1712, %v4597, 0.0
      %4904 = vadd.xlane.f32.xlu0 %v4903
      %v4905 = vpop.xlane.xlu0 %4904
      %v4906 = vsel %vm1712, %v4599, 0.0
      %4907 = vadd.xlane.f32.xlu0 %v4906
      %v4908 = vpop.xlane.xlu0 %4907
      %v4909 = vsel %vm1712, %v4601, 0.0
      %4910 = vadd.xlane.f32.xlu0 %v4909
      %v4911 = vpop.xlane.xlu0 %4910
      %v4912 = vsel %vm1712, %v4603, 0.0
      %4913 = vadd.xlane.f32.xlu0 %v4912
      %v4914 = vpop.xlane.xlu0 %4913
      %v4915 = vsel %vm1712, %v4605, 0.0
      %4916 = vadd.xlane.f32.xlu0 %v4915
      %v4917 = vpop.xlane.xlu0 %4916
      %v4918 = vsel %vm1712, %v4607, 0.0
      %4919 = vadd.xlane.f32.xlu0 %v4918
      %v4920 = vpop.xlane.xlu0 %4919
      %v4921 = vsel %vm1712, %v4609, 0.0
      %4922 = vadd.xlane.f32.xlu0 %v4921
      %v4923 = vpop.xlane.xlu0 %4922
      %v4924 = vsel %vm1712, %v4611, 0.0
      %4925 = vadd.xlane.f32.xlu0 %v4924
      %v4926 = vpop.xlane.xlu0 %4925
      %v4927 = vsel %vm1712, %v4613, 0.0
      %4928 = vadd.xlane.f32.xlu0 %v4927
      %v4929 = vpop.xlane.xlu0 %4928
      %v4930 = vsel %vm1712, %v4615, 0.0
      %4931 = vadd.xlane.f32.xlu0 %v4930
      %v4932 = vpop.xlane.xlu0 %4931
      %v4933 = vsel %vm1712, %v4617, 0.0
      %4934 = vadd.xlane.f32.xlu0 %v4933
      %v4935 = vpop.xlane.xlu0 %4934
      %v4936 = vsel %vm1712, %v4619, 0.0
      %4937 = vadd.xlane.f32.xlu0 %v4936
      %v4938 = vpop.xlane.xlu0 %4937
      %v4939 = vsel %vm1712, %v4621, 0.0
      %4940 = vadd.xlane.f32.xlu0 %v4939
      %v4941 = vpop.xlane.xlu0 %4940
      %v4942 = vsel %vm1712, %v4623, 0.0
      %4943 = vadd.xlane.f32.xlu0 %v4942
      %v4944 = vpop.xlane.xlu0 %4943
      %v4945 = vsel %vm1712, %v4625, 0.0
      %4946 = vadd.xlane.f32.xlu0 %v4945
      %v4947 = vpop.xlane.xlu0 %4946
      %v4948 = vsel %vm1712, %v4627, 0.0
      %4949 = vadd.xlane.f32.xlu0 %v4948
      %v4950 = vpop.xlane.xlu0 %4949
      %v4951 = vsel %vm1712, %v4629, 0.0
      %4952 = vadd.xlane.f32.xlu0 %v4951
      %v4953 = vpop.xlane.xlu0 %4952
      %v4954 = vsel %vm1712, %v4631, 0.0
      %4955 = vadd.xlane.f32.xlu0 %v4954
      %v4956 = vpop.xlane.xlu0 %4955
      %v4957 = vsel %vm1712, %v4633, 0.0
      %4958 = vadd.xlane.f32.xlu0 %v4957
      %v4959 = vpop.xlane.xlu0 %4958
      %v4960 = vsel %vm1712, %v4635, 0.0
      %4961 = vadd.xlane.f32.xlu0 %v4960
      %v4962 = vpop.xlane.xlu0 %4961
      %v4963 = vsel %vm1712, %v4637, 0.0
      %4964 = vadd.xlane.f32.xlu0 %v4963
      %v4965 = vpop.xlane.xlu0 %4964
      %v4966 = vsel %vm1712, %v4639, 0.0
      %4967 = vadd.xlane.f32.xlu0 %v4966
      %v4968 = vpop.xlane.xlu0 %4967
      %v4969 = vsel %vm1712, %v4641, 0.0
      %4970 = vadd.xlane.f32.xlu0 %v4969
      %v4971 = vpop.xlane.xlu0 %4970
      %v4972 = vsel %vm1712, %v4643, 0.0
      %4973 = vadd.xlane.f32.xlu0 %v4972
      %v4974 = vpop.xlane.xlu0 %4973
      %v4975 = vsel %vm1712, %v4645, 0.0
      %4976 = vadd.xlane.f32.xlu0 %v4975
      %v4977 = vpop.xlane.xlu0 %4976
      %v4978 = vsel %vm1712, %v4647, 0.0
      %4979 = vadd.xlane.f32.xlu0 %v4978
      %v4980 = vpop.xlane.xlu0 %4979
      %v4981 = vsel %vm1712, %v4649, 0.0
      %4982 = vadd.xlane.f32.xlu0 %v4981
      %v4983 = vpop.xlane.xlu0 %4982
      %v4984 = vsel %vm1712, %v4651, 0.0
      %4985 = vadd.xlane.f32.xlu0 %v4984
      %v4986 = vpop.xlane.xlu0 %4985
      %v4987 = vsel %vm1712, %v4653, 0.0
      %4988 = vadd.xlane.f32.xlu0 %v4987
      %v4989 = vpop.xlane.xlu0 %4988
      %v4990 = vsel %vm1712, %v4655, 0.0
      %4991 = vadd.xlane.f32.xlu0 %v4990
      %v4992 = vpop.xlane.xlu0 %4991
      %v4993 = vsel %vm1712, %v4657, 0.0
      %4994 = vadd.xlane.f32.xlu0 %v4993
      %v4995 = vpop.xlane.xlu0 %4994
      %v4996 = vsel %vm1712, %v4659, 0.0
      %4997 = vadd.xlane.f32.xlu0 %v4996
      %v4998 = vpop.xlane.xlu0 %4997
      %v4999 = vsel %vm1712, %v4661, 0.0
      %5000 = vadd.xlane.f32.xlu0 %v4999
      %v5001 = vpop.xlane.xlu0 %5000
      %v5002 = vsel %vm1712, %v4663, 0.0
      %5003 = vadd.xlane.f32.xlu0 %v5002
      %v5004 = vpop.xlane.xlu0 %5003
      %v5005 = vsel %vm1712, %v4665, 0.0
      %5006 = vadd.xlane.f32.xlu0 %v5005
      %v5007 = vpop.xlane.xlu0 %5006
      %v5008 = vsel %vm1712, %v4667, 0.0
      %5009 = vadd.xlane.f32.xlu0 %v5008
      %v5010 = vpop.xlane.xlu0 %5009
      %v5011 = vsel %vm1712, %v4669, 0.0
      %5012 = vadd.xlane.f32.xlu0 %v5011
      %v5013 = vpop.xlane.xlu0 %5012
      %v5014 = vsel %vm1712, %v4671, 0.0
      %5015 = vadd.xlane.f32.xlu0 %v5014
      %v5016 = vpop.xlane.xlu0 %5015
      %v5017 = vsel %vm1712, %v4673, 0.0
      %5018 = vadd.xlane.f32.xlu0 %v5017
      %v5019 = vpop.xlane.xlu0 %5018
      %v5020 = vsel %vm1712, %v4675, 0.0
      %5021 = vadd.xlane.f32.xlu0 %v5020
      %v5022 = vpop.xlane.xlu0 %5021
      %v5023 = vsel %vm1712, %v4677, 0.0
      %5024 = vadd.xlane.f32.xlu0 %v5023
      %v5025 = vpop.xlane.xlu0 %5024
      %v5026 = vsel %vm1712, %v4679, 0.0
      %5027 = vadd.xlane.f32.xlu0 %v5026
      %v5028 = vpop.xlane.xlu0 %5027
      %v5029 = vsel %vm1712, %v4681, 0.0
      %5030 = vadd.xlane.f32.xlu0 %v5029
      %v5031 = vpop.xlane.xlu0 %5030
      %v5032 = vsel %vm1712, %v4683, 0.0
      %5033 = vadd.xlane.f32.xlu0 %v5032
      %v5034 = vpop.xlane.xlu0 %5033
      %v5035 = vsel %vm1712, %v4685, 0.0
      %5036 = vadd.xlane.f32.xlu0 %v5035
      %v5037 = vpop.xlane.xlu0 %5036
      %v5038 = vsel %vm1712, %v4687, 0.0
      %5039 = vadd.xlane.f32.xlu0 %v5038
      %v5040 = vpop.xlane.xlu0 %5039
      %v5041 = vsel %vm1712, %v4689, 0.0
      %5042 = vadd.xlane.f32.xlu0 %v5041
      %v5043 = vpop.xlane.xlu0 %5042
      %v5044 = vsel %vm1712, %v4691, 0.0
      %5045 = vadd.xlane.f32.xlu0 %v5044
      %v5046 = vpop.xlane.xlu0 %5045
      %v5047 = vsel %vm1712, %v4693, 0.0
      %5048 = vadd.xlane.f32.xlu0 %v5047
      %v5049 = vpop.xlane.xlu0 %5048
      %v5050 = vsel %vm1712, %v4695, 0.0
      %5051 = vadd.xlane.f32.xlu0 %v5050
      %v5052 = vpop.xlane.xlu0 %5051
      %v5053 = vsel %vm1712, %v4697, 0.0
      %5054 = vadd.xlane.f32.xlu0 %v5053
      %v5055 = vpop.xlane.xlu0 %5054
      %v5056 = vsel %vm1712, %v4699, 0.0
      %5057 = vadd.xlane.f32.xlu0 %v5056
      %v5058 = vpop.xlane.xlu0 %5057
      %v5059 = vsel %vm1712, %v4701, 0.0
      %5060 = vadd.xlane.f32.xlu0 %v5059
      %v5061 = vpop.xlane.xlu0 %5060
      %v5062 = vsel %vm1712, %v4703, 0.0
      %5063 = vadd.xlane.f32.xlu0 %v5062
      %v5064 = vpop.xlane.xlu0 %5063
      %v5065 = vsel %vm1712, %v4705, 0.0
      %5066 = vadd.xlane.f32.xlu0 %v5065
      %v5067 = vpop.xlane.xlu0 %5066
      %v5068 = vsel %vm1712, %v4707, 0.0
      %5069 = vadd.xlane.f32.xlu0 %v5068
      %v5070 = vpop.xlane.xlu0 %5069
      %v5071 = vsel %vm1712, %v4709, 0.0
      %5072 = vadd.xlane.f32.xlu0 %v5071
      %v5073 = vpop.xlane.xlu0 %5072
      %v5074 = vsel %vm1712, %v4711, 0.0
      %5075 = vadd.xlane.f32.xlu0 %v5074
      %v5076 = vpop.xlane.xlu0 %5075
      %v5077 = vsel %vm1712, %v4713, 0.0
      %5078 = vadd.xlane.f32.xlu0 %v5077
      %v5079 = vpop.xlane.xlu0 %5078
      %v5080 = vsel %vm1712, %v4715, 0.0
      %5081 = vadd.xlane.f32.xlu0 %v5080
      %v5082 = vpop.xlane.xlu0 %5081
      %v5083 = vsel %vm1712, %v4717, 0.0
      %5084 = vadd.xlane.f32.xlu0 %v5083
      %v5085 = vpop.xlane.xlu0 %5084
      %v5086 = vsel %vm1712, %v4719, 0.0
      %5087 = vadd.xlane.f32.xlu0 %v5086
      %v5088 = vpop.xlane.xlu0 %5087
      %v5089 = vsel %vm1712, %v4721, 0.0
      %5090 = vadd.xlane.f32.xlu0 %v5089
      %v5091 = vpop.xlane.xlu0 %5090
      %v5092 = vsel %vm1712, %v4723, 0.0
      %5093 = vadd.xlane.f32.xlu0 %v5092
      %v5094 = vpop.xlane.xlu0 %5093
      %v5095 = vsel %vm1712, %v4725, 0.0
      %5096 = vadd.xlane.f32.xlu0 %v5095
      %v5097 = vpop.xlane.xlu0 %5096
      %v5098 = vsel %vm1712, %v4727, 0.0
      %5099 = vadd.xlane.f32.xlu0 %v5098
      %v5100 = vpop.xlane.xlu0 %5099
      %v5101 = vsel %vm1712, %v4729, 0.0
      %5102 = vadd.xlane.f32.xlu0 %v5101
      %v5103 = vpop.xlane.xlu0 %5102
      %v5104 = vsel %vm1712, %v4731, 0.0
      %5105 = vadd.xlane.f32.xlu0 %v5104
      %v5106 = vpop.xlane.xlu0 %5105
      %v5107 = vsel %vm1712, %v4733, 0.0
      %5108 = vadd.xlane.f32.xlu0 %v5107
      %v5109 = vpop.xlane.xlu0 %5108
      %v5110 = vsel %vm1712, %v4735, 0.0
      %5111 = vadd.xlane.f32.xlu0 %v5110
      %v5112 = vpop.xlane.xlu0 %5111
      %v5113 = vsel %vm1712, %v4737, 0.0
      %5114 = vadd.xlane.f32.xlu0 %v5113
      %v5115 = vpop.xlane.xlu0 %5114
      %v5116 = vsel %vm1712, %v4739, 0.0
      %5117 = vadd.xlane.f32.xlu0 %v5116
      %v5118 = vpop.xlane.xlu0 %5117
      %v5119 = vsel %vm1712, %v4741, 0.0
      %5120 = vadd.xlane.f32.xlu0 %v5119
      %v5121 = vpop.xlane.xlu0 %5120
      %v5122 = vsel %vm1712, %v4743, 0.0
      %5123 = vadd.xlane.f32.xlu0 %v5122
      %v5124 = vpop.xlane.xlu0 %5123
      %v5125 = vsel %vm1712, %v4745, 0.0
      %5126 = vadd.xlane.f32.xlu0 %v5125
      %v5127 = vpop.xlane.xlu0 %5126
      %v5128 = vsel %vm1712, %v4747, 0.0
      %5129 = vadd.xlane.f32.xlu0 %v5128
      %v5130 = vpop.xlane.xlu0 %5129
      %v5131 = vsel %vm1712, %v4749, 0.0
      %5132 = vadd.xlane.f32.xlu0 %v5131
      %v5133 = vpop.xlane.xlu0 %5132
      %v5134 = vrcp.pop %v4752
      %v5135 = vrcp.pop %v4755
      %v5136 = vrcp.pop %v4758
      %v5137 = vrcp.pop %v4761
      %v5138 = vrcp.pop %v4764
      %v5139 = vrcp.pop %v4767
      %v5140 = vrcp.pop %v4770
      %v5141 = vrcp.pop %v4773
      %v5142 = vrcp.pop %v4776
      %v5143 = vrcp.pop %v4779
      %v5144 = vrcp.pop %v4782
      %v5145 = vrcp.pop %v4785
      %v5146 = vrcp.pop %v4788
      %v5147 = vrcp.pop %v4791
      %v5148 = vrcp.pop %v4794
      %v5149 = vrcp.pop %v4797
      %v5150 = vrcp.pop %v4800
      %v5151 = vrcp.pop %v4803
      %v5152 = vrcp.pop %v4806
      %v5153 = vrcp.pop %v4809
      %v5154 = vrcp.pop %v4812
      %v5155 = vrcp.pop %v4815
      %v5156 = vrcp.pop %v4818
      %v5157 = vrcp.pop %v4821
      %v5158 = vrcp.pop %v4824
      %v5159 = vrcp.pop %v4827
      %v5160 = vrcp.pop %v4830
      %v5161 = vrcp.pop %v4833
      %v5162 = vrcp.pop %v4836
      %v5163 = vrcp.pop %v4839
      %v5164 = vrcp.pop %v4842
      %v5165 = vrcp.pop %v4845
      %v5166 = vrcp.pop %v4848
      %v5167 = vrcp.pop %v4851
      %v5168 = vrcp.pop %v4854
      %v5169 = vrcp.pop %v4857
      %v5170 = vrcp.pop %v4860
      %v5171 = vrcp.pop %v4863
      %v5172 = vrcp.pop %v4866
      %v5173 = vrcp.pop %v4869
      %v5174 = vrcp.pop %v4872
      %v5175 = vrcp.pop %v4875
      %v5176 = vrcp.pop %v4878
      %v5177 = vrcp.pop %v4881
      %v5178 = vrcp.pop %v4884
      %v5179 = vrcp.pop %v4887
      %v5180 = vrcp.pop %v4890
      %v5181 = vrcp.pop %v4893
      %v5182 = vrcp.pop %v4896
      %v5183 = vrcp.pop %v4899
      %v5184 = vrcp.pop %v4902
      %v5185 = vrcp.pop %v4905
      %v5186 = vrcp.pop %v4908
      %v5187 = vrcp.pop %v4911
      %v5188 = vrcp.pop %v4914
      %v5189 = vrcp.pop %v4917
      %v5190 = vrcp.pop %v4920
      %v5191 = vrcp.pop %v4923
      %v5192 = vrcp.pop %v4926
      %v5193 = vrcp.pop %v4929
      %v5194 = vrcp.pop %v4932
      %v5195 = vrcp.pop %v4935
      %v5196 = vrcp.pop %v4938
      %v5197 = vrcp.pop %v4941
      %v5198 = vrcp.pop %v4944
      %v5199 = vrcp.pop %v4947
      %v5200 = vrcp.pop %v4950
      %v5201 = vrcp.pop %v4953
      %v5202 = vrcp.pop %v4956
      %v5203 = vrcp.pop %v4959
      %v5204 = vrcp.pop %v4962
      %v5205 = vrcp.pop %v4965
      %v5206 = vrcp.pop %v4968
      %v5207 = vrcp.pop %v4971
      %v5208 = vrcp.pop %v4974
      %v5209 = vrcp.pop %v4977
      %v5210 = vrcp.pop %v4980
      %v5211 = vrcp.pop %v4983
      %v5212 = vrcp.pop %v4986
      %v5213 = vrcp.pop %v4989
      %v5214 = vrcp.pop %v4992
      %v5215 = vrcp.pop %v4995
      %v5216 = vrcp.pop %v4998
      %v5217 = vrcp.pop %v5001
      %v5218 = vrcp.pop %v5004
      %v5219 = vrcp.pop %v5007
      %v5220 = vrcp.pop %v5010
      %v5221 = vrcp.pop %v5013
      %v5222 = vrcp.pop %v5016
      %v5223 = vrcp.pop %v5019
      %v5224 = vrcp.pop %v5022
      %v5225 = vrcp.pop %v5025
      %v5226 = vrcp.pop %v5028
      %v5227 = vrcp.pop %v5031
      %v5228 = vrcp.pop %v5034
      %v5229 = vrcp.pop %v5037
      %v5230 = vrcp.pop %v5040
      %v5231 = vrcp.pop %v5043
      %v5232 = vrcp.pop %v5046
      %v5233 = vrcp.pop %v5049
      %v5234 = vrcp.pop %v5052
      %v5235 = vrcp.pop %v5055
      %v5236 = vrcp.pop %v5058
      %v5237 = vrcp.pop %v5061
      %v5238 = vrcp.pop %v5064
      %v5239 = vrcp.pop %v5067
      %v5240 = vrcp.pop %v5070
      %v5241 = vrcp.pop %v5073
      %v5242 = vrcp.pop %v5076
      %v5243 = vrcp.pop %v5079
      %v5244 = vrcp.pop %v5082
      %v5245 = vrcp.pop %v5085
      %v5246 = vrcp.pop %v5088
      %v5247 = vrcp.pop %v5091
      %v5248 = vrcp.pop %v5094
      %v5249 = vrcp.pop %v5097
      %v5250 = vrcp.pop %v5100
      %v5251 = vrcp.pop %v5103
      %v5252 = vrcp.pop %v5106
      %v5253 = vrcp.pop %v5109
      %v5254 = vrcp.pop %v5112
      %v5255 = vrcp.pop %v5115
      %v5256 = vrcp.pop %v5118
      %v5257 = vrcp.pop %v5121
      %v5258 = vrcp.pop %v5124
      %v5259 = vrcp.pop %v5127
      %v5260 = vrcp.pop %v5130
      %v5261 = vrcp.pop %v5133
      %v5262 = vmul.f32 %v4495, %v5134
      %v5263 = vmul.f32 %v4497, %v5135
      %v5264 = vmul.f32 %v4499, %v5136
      %v5265 = vmul.f32 %v4501, %v5137
      %v5266 = vmul.f32 %v4503, %v5138
      %v5267 = vmul.f32 %v4505, %v5139
      %v5268 = vmul.f32 %v4507, %v5140
      %v5269 = vmul.f32 %v4509, %v5141
      %v5270 = vmul.f32 %v4511, %v5142
      %v5271 = vmul.f32 %v4513, %v5143
      %v5272 = vmul.f32 %v4515, %v5144
      %v5273 = vmul.f32 %v4517, %v5145
      %v5274 = vmul.f32 %v4519, %v5146
      %v5275 = vmul.f32 %v4521, %v5147
      %v5276 = vmul.f32 %v4523, %v5148
      %v5277 = vmul.f32 %v4525, %v5149
      %v5278 = vmul.f32 %v4527, %v5150
      %v5279 = vmul.f32 %v4529, %v5151
      %v5280 = vmul.f32 %v4531, %v5152
      %v5281 = vmul.f32 %v4533, %v5153
      %v5282 = vmul.f32 %v4535, %v5154
      %v5283 = vmul.f32 %v4537, %v5155
      %v5284 = vmul.f32 %v4539, %v5156
      %v5285 = vmul.f32 %v4541, %v5157
      %v5286 = vmul.f32 %v4543, %v5158
      %v5287 = vmul.f32 %v4545, %v5159
      %v5288 = vmul.f32 %v4547, %v5160
      %v5289 = vmul.f32 %v4549, %v5161
      %v5290 = vmul.f32 %v4551, %v5162
      %v5291 = vmul.f32 %v4553, %v5163
      %v5292 = vmul.f32 %v4555, %v5164
      %v5293 = vmul.f32 %v4557, %v5165
      %v5294 = vmul.f32 %v4559, %v5166
      %v5295 = vmul.f32 %v4561, %v5167
      %v5296 = vmul.f32 %v4563, %v5168
      %v5297 = vmul.f32 %v4565, %v5169
      %v5298 = vmul.f32 %v4567, %v5170
      %v5299 = vmul.f32 %v4569, %v5171
      %v5300 = vmul.f32 %v4571, %v5172
      %v5301 = vmul.f32 %v4573, %v5173
      %v5302 = vmul.f32 %v4575, %v5174
      %v5303 = vmul.f32 %v4577, %v5175
      %v5304 = vmul.f32 %v4579, %v5176
      %v5305 = vmul.f32 %v4581, %v5177
      %v5306 = vmul.f32 %v4583, %v5178
      %v5307 = vmul.f32 %v4585, %v5179
      %v5308 = vmul.f32 %v4587, %v5180
      %v5309 = vmul.f32 %v4589, %v5181
      %v5310 = vmul.f32 %v4591, %v5182
      %v5311 = vmul.f32 %v4593, %v5183
      %v5312 = vmul.f32 %v4595, %v5184
      %v5313 = vmul.f32 %v4597, %v5185
      %v5314 = vmul.f32 %v4599, %v5186
      %v5315 = vmul.f32 %v4601, %v5187
      %v5316 = vmul.f32 %v4603, %v5188
      %v5317 = vmul.f32 %v4605, %v5189
      %v5318 = vmul.f32 %v4607, %v5190
      %v5319 = vmul.f32 %v4609, %v5191
      %v5320 = vmul.f32 %v4611, %v5192
      %v5321 = vmul.f32 %v4613, %v5193
      %v5322 = vmul.f32 %v4615, %v5194
      %v5323 = vmul.f32 %v4617, %v5195
      %v5324 = vmul.f32 %v4619, %v5196
      %v5325 = vmul.f32 %v4621, %v5197
      %v5326 = vmul.f32 %v4623, %v5198
      %v5327 = vmul.f32 %v4625, %v5199
      %v5328 = vmul.f32 %v4627, %v5200
      %v5329 = vmul.f32 %v4629, %v5201
      %v5330 = vmul.f32 %v4631, %v5202
      %v5331 = vmul.f32 %v4633, %v5203
      %v5332 = vmul.f32 %v4635, %v5204
      %v5333 = vmul.f32 %v4637, %v5205
      %v5334 = vmul.f32 %v4639, %v5206
      %v5335 = vmul.f32 %v4641, %v5207
      %v5336 = vmul.f32 %v4643, %v5208
      %v5337 = vmul.f32 %v4645, %v5209
      %v5338 = vmul.f32 %v4647, %v5210
      %v5339 = vmul.f32 %v4649, %v5211
      %v5340 = vmul.f32 %v4651, %v5212
      %v5341 = vmul.f32 %v4653, %v5213
      %v5342 = vmul.f32 %v4655, %v5214
      %v5343 = vmul.f32 %v4657, %v5215
      %v5344 = vmul.f32 %v4659, %v5216
      %v5345 = vmul.f32 %v4661, %v5217
      %v5346 = vmul.f32 %v4663, %v5218
      %v5347 = vmul.f32 %v4665, %v5219
      %v5348 = vmul.f32 %v4667, %v5220
      %v5349 = vmul.f32 %v4669, %v5221
      %v5350 = vmul.f32 %v4671, %v5222
      %v5351 = vmul.f32 %v4673, %v5223
      %v5352 = vmul.f32 %v4675, %v5224
      %v5353 = vmul.f32 %v4677, %v5225
      %v5354 = vmul.f32 %v4679, %v5226
      %v5355 = vmul.f32 %v4681, %v5227
      %v5356 = vmul.f32 %v4683, %v5228
      %v5357 = vmul.f32 %v4685, %v5229
      %v5358 = vmul.f32 %v4687, %v5230
      %v5359 = vmul.f32 %v4689, %v5231
      %v5360 = vmul.f32 %v4691, %v5232
      %v5361 = vmul.f32 %v4693, %v5233
      %v5362 = vmul.f32 %v4695, %v5234
      %v5363 = vmul.f32 %v4697, %v5235
      %v5364 = vmul.f32 %v4699, %v5236
      %v5365 = vmul.f32 %v4701, %v5237
      %v5366 = vmul.f32 %v4703, %v5238
      %v5367 = vmul.f32 %v4705, %v5239
      %v5368 = vmul.f32 %v4707, %v5240
      %v5369 = vmul.f32 %v4709, %v5241
      %v5370 = vmul.f32 %v4711, %v5242
      %v5371 = vmul.f32 %v4713, %v5243
      %v5372 = vmul.f32 %v4715, %v5244
      %v5373 = vmul.f32 %v4717, %v5245
      %v5374 = vmul.f32 %v4719, %v5246
      %v5375 = vmul.f32 %v4721, %v5247
      %v5376 = vmul.f32 %v4723, %v5248
      %v5377 = vmul.f32 %v4725, %v5249
      %v5378 = vmul.f32 %v4727, %v5250
      %v5379 = vmul.f32 %v4729, %v5251
      %v5380 = vmul.f32 %v4731, %v5252
      %v5381 = vmul.f32 %v4733, %v5253
      %v5382 = vmul.f32 %v4735, %v5254
      %v5383 = vmul.f32 %v4737, %v5255
      %v5384 = vmul.f32 %v4739, %v5256
      %v5385 = vmul.f32 %v4741, %v5257
      %v5386 = vmul.f32 %v4743, %v5258
      %v5387 = vmul.f32 %v4745, %v5259
      %v5388 = vmul.f32 %v4747, %v5260
      %v5389 = vmul.f32 %v4749, %v5261
      %v5390 = vpack.c.bf16 %v5263, %v5262
      %v5391 = vpack.c.bf16 %v5265, %v5264
      %v5392 = vpack.c.bf16 %v5267, %v5266
      %v5393 = vpack.c.bf16 %v5269, %v5268
      %v5394 = vpack.c.bf16 %v5271, %v5270
      %v5395 = vpack.c.bf16 %v5273, %v5272
      %v5396 = vpack.c.bf16 %v5275, %v5274
      %v5397 = vpack.c.bf16 %v5277, %v5276
      %v5398 = vpack.c.bf16 %v5279, %v5278
      %v5399 = vpack.c.bf16 %v5281, %v5280
      %v5400 = vpack.c.bf16 %v5283, %v5282
      %v5401 = vpack.c.bf16 %v5285, %v5284
      %v5402 = vpack.c.bf16 %v5287, %v5286
      %v5403 = vpack.c.bf16 %v5289, %v5288
      %v5404 = vpack.c.bf16 %v5291, %v5290
      %v5405 = vpack.c.bf16 %v5293, %v5292
      %v5406 = vpack.c.bf16 %v5295, %v5294
      %v5407 = vpack.c.bf16 %v5297, %v5296
      %v5408 = vpack.c.bf16 %v5299, %v5298
      %v5409 = vpack.c.bf16 %v5301, %v5300
      %v5410 = vpack.c.bf16 %v5303, %v5302
      %v5411 = vpack.c.bf16 %v5305, %v5304
      %v5412 = vpack.c.bf16 %v5307, %v5306
      %v5413 = vpack.c.bf16 %v5309, %v5308
      %v5414 = vpack.c.bf16 %v5311, %v5310
      %v5415 = vpack.c.bf16 %v5313, %v5312
      %v5416 = vpack.c.bf16 %v5315, %v5314
      %v5417 = vpack.c.bf16 %v5317, %v5316
      %v5418 = vpack.c.bf16 %v5319, %v5318
      %v5419 = vpack.c.bf16 %v5321, %v5320
      %v5420 = vpack.c.bf16 %v5323, %v5322
      %v5421 = vpack.c.bf16 %v5325, %v5324
      %v5422 = vpack.c.bf16 %v5327, %v5326
      %v5423 = vpack.c.bf16 %v5329, %v5328
      %v5424 = vpack.c.bf16 %v5331, %v5330
      %v5425 = vpack.c.bf16 %v5333, %v5332
      %v5426 = vpack.c.bf16 %v5335, %v5334
      %v5427 = vpack.c.bf16 %v5337, %v5336
      %v5428 = vpack.c.bf16 %v5339, %v5338
      %v5429 = vpack.c.bf16 %v5341, %v5340
      %v5430 = vpack.c.bf16 %v5343, %v5342
      %v5431 = vpack.c.bf16 %v5345, %v5344
      %v5432 = vpack.c.bf16 %v5347, %v5346
      %v5433 = vpack.c.bf16 %v5349, %v5348
      %v5434 = vpack.c.bf16 %v5351, %v5350
      %v5435 = vpack.c.bf16 %v5353, %v5352
      %v5436 = vpack.c.bf16 %v5355, %v5354
      %v5437 = vpack.c.bf16 %v5357, %v5356
      %v5438 = vpack.c.bf16 %v5359, %v5358
      %v5439 = vpack.c.bf16 %v5361, %v5360
      %v5440 = vpack.c.bf16 %v5363, %v5362
      %v5441 = vpack.c.bf16 %v5365, %v5364
      %v5442 = vpack.c.bf16 %v5367, %v5366
      %v5443 = vpack.c.bf16 %v5369, %v5368
      %v5444 = vpack.c.bf16 %v5371, %v5370
      %v5445 = vpack.c.bf16 %v5373, %v5372
      %v5446 = vpack.c.bf16 %v5375, %v5374
      %v5447 = vpack.c.bf16 %v5377, %v5376
      %v5448 = vpack.c.bf16 %v5379, %v5378
      %v5449 = vpack.c.bf16 %v5381, %v5380
      %v5450 = vpack.c.bf16 %v5383, %v5382
      %v5451 = vpack.c.bf16 %v5385, %v5384
      %v5452 = vpack.c.bf16 %v5387, %v5386
      %v5453 = vpack.c.bf16 %v5389, %v5388
      %5454 = vrot.lane.b32.xlu0 %v1642, 32
      %v5455 = vpop.permute.xlu0 %5454
      %5456 = vrot.lane.b32.xlu0 %v1643, 32
      %v5457 = vpop.permute.xlu0 %5456
      %5464 = vrot.lane.b32.xlu0 %v1514, 64
      %v5465 = vpop.permute.xlu0 %5464
      %5466 = vrot.lane.b32.xlu0 %v1515, 64
      %v5467 = vpop.permute.xlu0 %5466
      %5468 = vrot.lane.b32.xlu0 %v1516, 64
      %v5469 = vpop.permute.xlu0 %5468
      %5470 = vrot.lane.b32.xlu0 %v1517, 64
      %v5471 = vpop.permute.xlu0 %5470
      %v5477 = vsel %vm1712, %v5390, 0
      %v5480 = vsel %vm1712, %v5391, 0
      %5482 = vmatprep.subr.bf16.mxu0 0
      %5483 = vmatpush1.bf16.msra.mxu0 0
      %5484 = vmatprep.subr.bf16.mxu0 0
      %5485 = vmatpush1.bf16.msra.mxu0 0
      %5486 = vmatprep.subr.bf16.mxu0 0
      %5487 = vmatpush1.bf16.msra.mxu0 0
      %5488 = vmatprep.subr.bf16.mxu0 0
      %5489 = vmatpush1.bf16.msra.mxu0 0
      %5490 = vmatprep.subr.bf16.mxu0 0
      %5491 = vmatpush1.bf16.msra.mxu0 0
      %5492 = vmatprep.subr.bf16.mxu0 0
      %5493 = vmatpush1.bf16.msra.mxu0 0
      %5494 = vmatprep.subr.bf16.mxu0 0
      %5495 = vmatpush1.bf16.msra.mxu0 %v5457
      %5496 = vmatprep.subr.bf16.mxu0 0
      %5497 = vmatpush1.bf16.msra.mxu0 %v5455
      %5498 = vmatprep.subr.bf16.mxu0 0
      %5499 = vmatpush2.bf16.msra.mxu0 0
      %5500 = vmatprep.subr.bf16.mxu0 0
      %5501 = vmatpush2.bf16.msra.mxu0 0
      %5502 = vmatprep.subr.bf16.mxu0 0
      %5503 = vmatpush2.bf16.msra.mxu0 0
      %5504 = vmatprep.subr.bf16.mxu0 0
      %5505 = vmatpush2.bf16.msra.mxu0 0
      %5506 = vmatprep.subr.bf16.mxu0 0
      %5507 = vmatpush2.bf16.msra.mxu0 0
      %5508 = vmatprep.subr.bf16.mxu0 0
      %5509 = vmatpush2.bf16.msra.mxu0 0
      %5510 = vmatprep.subr.bf16.mxu0 0
      %5511 = vmatpush2.bf16.msra.mxu0 0
      %5512 = vmatprep.subr.bf16.mxu0 0
      %5513 = vmatpush2.bf16.msra.mxu0 0
      %5514 = vmatprep.mubr.bf16.mxu0 0
      %5515 = vmatmul.mubr.bf16.gmra.mxu0 %v5477
      %v5516 = vpop.f32.mrf.mxu0
      %v5517 = vadd.f32 %v5465, %v5516
      %v5518 = vpop.f32.mrf.mxu0
      %v5519 = vpop.f32.mrf.mxu0
      %v5520 = vadd.f32 %v5467, %v5519
      %v5521 = vpop.f32.mrf.mxu0
      %5522 = vmatprep.mubr.bf16.mxu0 0
      %5523 = vmatmul.mubr.bf16.gmra.mxu0 %v5480
      %v5524 = vpop.f32.mrf.mxu0
      %v5525 = vadd.f32 %v5469, %v5524
      %v5526 = vpop.f32.mrf.mxu0
      %v5527 = vpop.f32.mrf.mxu0
      %v5528 = vadd.f32 %v5471, %v5527
      %v5529 = vpop.f32.mrf.mxu0
      %5530 = vdwg.mxu0
      %5531 = vrot.lane.b32.xlu0 %v1644, 32
      %v5532 = vpop.permute.xlu0 %5531
      %5533 = vrot.lane.b32.xlu0 %v1645, 32
      %v5534 = vpop.permute.xlu0 %5533
      %5541 = vrot.lane.b32.xlu0 %v1518, 64
      %v5542 = vpop.permute.xlu0 %5541
      %5543 = vrot.lane.b32.xlu0 %v1519, 64
      %v5544 = vpop.permute.xlu0 %5543
      %5545 = vrot.lane.b32.xlu0 %v1520, 64
      %v5546 = vpop.permute.xlu0 %5545
      %5547 = vrot.lane.b32.xlu0 %v1521, 64
      %v5548 = vpop.permute.xlu0 %5547
      %v5554 = vsel %vm1712, %v5392, 0
      %v5557 = vsel %vm1712, %v5393, 0
      %5559 = vmatprep.subr.bf16.mxu0 0
      %5560 = vmatpush1.bf16.msra.mxu0 0
      %5561 = vmatprep.subr.bf16.mxu0 0
      %5562 = vmatpush1.bf16.msra.mxu0 0
      %5563 = vmatprep.subr.bf16.mxu0 0
      %5564 = vmatpush1.bf16.msra.mxu0 0
      %5565 = vmatprep.subr.bf16.mxu0 0
      %5566 = vmatpush1.bf16.msra.mxu0 0
      %5567 = vmatprep.subr.bf16.mxu0 0
      %5568 = vmatpush1.bf16.msra.mxu0 0
      %5569 = vmatprep.subr.bf16.mxu0 0
      %5570 = vmatpush1.bf16.msra.mxu0 0
      %5571 = vmatprep.subr.bf16.mxu0 0
      %5572 = vmatpush1.bf16.msra.mxu0 %v5534
      %5573 = vmatprep.subr.bf16.mxu0 0
      %5574 = vmatpush1.bf16.msra.mxu0 %v5532
      %5575 = vmatprep.subr.bf16.mxu0 0
      %5576 = vmatpush2.bf16.msra.mxu0 0
      %5577 = vmatprep.subr.bf16.mxu0 0
      %5578 = vmatpush2.bf16.msra.mxu0 0
      %5579 = vmatprep.subr.bf16.mxu0 0
      %5580 = vmatpush2.bf16.msra.mxu0 0
      %5581 = vmatprep.subr.bf16.mxu0 0
      %5582 = vmatpush2.bf16.msra.mxu0 0
      %5583 = vmatprep.subr.bf16.mxu0 0
      %5584 = vmatpush2.bf16.msra.mxu0 0
      %5585 = vmatprep.subr.bf16.mxu0 0
      %5586 = vmatpush2.bf16.msra.mxu0 0
      %5587 = vmatprep.subr.bf16.mxu0 0
      %5588 = vmatpush2.bf16.msra.mxu0 0
      %5589 = vmatprep.subr.bf16.mxu0 0
      %5590 = vmatpush2.bf16.msra.mxu0 0
      %5591 = vmatprep.mubr.bf16.mxu0 0
      %5592 = vmatmul.mubr.bf16.gmra.mxu0 %v5554
      %v5593 = vpop.f32.mrf.mxu0
      %v5594 = vadd.f32 %v5542, %v5593
      %v5595 = vpop.f32.mrf.mxu0
      %v5596 = vpop.f32.mrf.mxu0
      %v5597 = vadd.f32 %v5544, %v5596
      %v5598 = vpop.f32.mrf.mxu0
      %5599 = vmatprep.mubr.bf16.mxu0 0
      %5600 = vmatmul.mubr.bf16.gmra.mxu0 %v5557
      %v5601 = vpop.f32.mrf.mxu0
      %v5602 = vadd.f32 %v5546, %v5601
      %v5603 = vpop.f32.mrf.mxu0
      %v5604 = vpop.f32.mrf.mxu0
      %v5605 = vadd.f32 %v5548, %v5604
      %v5606 = vpop.f32.mrf.mxu0
      %5607 = vdwg.mxu0
      %5608 = vrot.lane.b32.xlu0 %v1646, 32
      %v5609 = vpop.permute.xlu0 %5608
      %5610 = vrot.lane.b32.xlu0 %v1647, 32
      %v5611 = vpop.permute.xlu0 %5610
      %5618 = vrot.lane.b32.xlu0 %v1522, 64
      %v5619 = vpop.permute.xlu0 %5618
      %5620 = vrot.lane.b32.xlu0 %v1523, 64
      %v5621 = vpop.permute.xlu0 %5620
      %5622 = vrot.lane.b32.xlu0 %v1524, 64
      %v5623 = vpop.permute.xlu0 %5622
      %5624 = vrot.lane.b32.xlu0 %v1525, 64
      %v5625 = vpop.permute.xlu0 %5624
      %v5631 = vsel %vm1712, %v5394, 0
      %v5634 = vsel %vm1712, %v5395, 0
      %5636 = vmatprep.subr.bf16.mxu0 0
      %5637 = vmatpush1.bf16.msra.mxu0 0
      %5638 = vmatprep.subr.bf16.mxu0 0
      %5639 = vmatpush1.bf16.msra.mxu0 0
      %5640 = vmatprep.subr.bf16.mxu0 0
      %5641 = vmatpush1.bf16.msra.mxu0 0
      %5642 = vmatprep.subr.bf16.mxu0 0
      %5643 = vmatpush1.bf16.msra.mxu0 0
      %5644 = vmatprep.subr.bf16.mxu0 0
      %5645 = vmatpush1.bf16.msra.mxu0 0
      %5646 = vmatprep.subr.bf16.mxu0 0
      %5647 = vmatpush1.bf16.msra.mxu0 0
      %5648 = vmatprep.subr.bf16.mxu0 0
      %5649 = vmatpush1.bf16.msra.mxu0 %v5611
      %5650 = vmatprep.subr.bf16.mxu0 0
      %5651 = vmatpush1.bf16.msra.mxu0 %v5609
      %5652 = vmatprep.subr.bf16.mxu0 0
      %5653 = vmatpush2.bf16.msra.mxu0 0
      %5654 = vmatprep.subr.bf16.mxu0 0
      %5655 = vmatpush2.bf16.msra.mxu0 0
      %5656 = vmatprep.subr.bf16.mxu0 0
      %5657 = vmatpush2.bf16.msra.mxu0 0
      %5658 = vmatprep.subr.bf16.mxu0 0
      %5659 = vmatpush2.bf16.msra.mxu0 0
      %5660 = vmatprep.subr.bf16.mxu0 0
      %5661 = vmatpush2.bf16.msra.mxu0 0
      %5662 = vmatprep.subr.bf16.mxu0 0
      %5663 = vmatpush2.bf16.msra.mxu0 0
      %5664 = vmatprep.subr.bf16.mxu0 0
      %5665 = vmatpush2.bf16.msra.mxu0 0
      %5666 = vmatprep.subr.bf16.mxu0 0
      %5667 = vmatpush2.bf16.msra.mxu0 0
      %5668 = vmatprep.mubr.bf16.mxu0 0
      %5669 = vmatmul.mubr.bf16.gmra.mxu0 %v5631
      %v5670 = vpop.f32.mrf.mxu0
      %v5671 = vadd.f32 %v5619, %v5670
      %v5672 = vpop.f32.mrf.mxu0
      %v5673 = vpop.f32.mrf.mxu0
      %v5674 = vadd.f32 %v5621, %v5673
      %v5675 = vpop.f32.mrf.mxu0
      %5676 = vmatprep.mubr.bf16.mxu0 0
      %5677 = vmatmul.mubr.bf16.gmra.mxu0 %v5634
      %v5678 = vpop.f32.mrf.mxu0
      %v5679 = vadd.f32 %v5623, %v5678
      %v5680 = vpop.f32.mrf.mxu0
      %v5681 = vpop.f32.mrf.mxu0
      %v5682 = vadd.f32 %v5625, %v5681
      %v5683 = vpop.f32.mrf.mxu0
      %5684 = vdwg.mxu0
      %5685 = vrot.lane.b32.xlu0 %v1648, 32
      %v5686 = vpop.permute.xlu0 %5685
      %5687 = vrot.lane.b32.xlu0 %v1649, 32
      %v5688 = vpop.permute.xlu0 %5687
      %5695 = vrot.lane.b32.xlu0 %v1526, 64
      %v5696 = vpop.permute.xlu0 %5695
      %5697 = vrot.lane.b32.xlu0 %v1527, 64
      %v5698 = vpop.permute.xlu0 %5697
      %5699 = vrot.lane.b32.xlu0 %v1528, 64
      %v5700 = vpop.permute.xlu0 %5699
      %5701 = vrot.lane.b32.xlu0 %v1529, 64
      %v5702 = vpop.permute.xlu0 %5701
      %v5708 = vsel %vm1712, %v5396, 0
      %v5711 = vsel %vm1712, %v5397, 0
      %5713 = vmatprep.subr.bf16.mxu0 0
      %5714 = vmatpush1.bf16.msra.mxu0 0
      %5715 = vmatprep.subr.bf16.mxu0 0
      %5716 = vmatpush1.bf16.msra.mxu0 0
      %5717 = vmatprep.subr.bf16.mxu0 0
      %5718 = vmatpush1.bf16.msra.mxu0 0
      %5719 = vmatprep.subr.bf16.mxu0 0
      %5720 = vmatpush1.bf16.msra.mxu0 0
      %5721 = vmatprep.subr.bf16.mxu0 0
      %5722 = vmatpush1.bf16.msra.mxu0 0
      %5723 = vmatprep.subr.bf16.mxu0 0
      %5724 = vmatpush1.bf16.msra.mxu0 0
      %5725 = vmatprep.subr.bf16.mxu0 0
      %5726 = vmatpush1.bf16.msra.mxu0 %v5688
      %5727 = vmatprep.subr.bf16.mxu0 0
      %5728 = vmatpush1.bf16.msra.mxu0 %v5686
      %5729 = vmatprep.subr.bf16.mxu0 0
      %5730 = vmatpush2.bf16.msra.mxu0 0
      %5731 = vmatprep.subr.bf16.mxu0 0
      %5732 = vmatpush2.bf16.msra.mxu0 0
      %5733 = vmatprep.subr.bf16.mxu0 0
      %5734 = vmatpush2.bf16.msra.mxu0 0
      %5735 = vmatprep.subr.bf16.mxu0 0
      %5736 = vmatpush2.bf16.msra.mxu0 0
      %5737 = vmatprep.subr.bf16.mxu0 0
      %5738 = vmatpush2.bf16.msra.mxu0 0
      %5739 = vmatprep.subr.bf16.mxu0 0
      %5740 = vmatpush2.bf16.msra.mxu0 0
      %5741 = vmatprep.subr.bf16.mxu0 0
      %5742 = vmatpush2.bf16.msra.mxu0 0
      %5743 = vmatprep.subr.bf16.mxu0 0
      %5744 = vmatpush2.bf16.msra.mxu0 0
      %5745 = vmatprep.mubr.bf16.mxu0 0
      %5746 = vmatmul.mubr.bf16.gmra.mxu0 %v5708
      %v5747 = vpop.f32.mrf.mxu0
      %v5748 = vadd.f32 %v5696, %v5747
      %v5749 = vpop.f32.mrf.mxu0
      %v5750 = vpop.f32.mrf.mxu0
      %v5751 = vadd.f32 %v5698, %v5750
      %v5752 = vpop.f32.mrf.mxu0
      %5753 = vmatprep.mubr.bf16.mxu0 0
      %5754 = vmatmul.mubr.bf16.gmra.mxu0 %v5711
      %v5755 = vpop.f32.mrf.mxu0
      %v5756 = vadd.f32 %v5700, %v5755
      %v5757 = vpop.f32.mrf.mxu0
      %v5758 = vpop.f32.mrf.mxu0
      %v5759 = vadd.f32 %v5702, %v5758
      %v5760 = vpop.f32.mrf.mxu0
      %5761 = vdwg.mxu0
      %5762 = vrot.lane.b32.xlu0 %v1650, 32
      %v5763 = vpop.permute.xlu0 %5762
      %5764 = vrot.lane.b32.xlu0 %v1651, 32
      %v5765 = vpop.permute.xlu0 %5764
      %5772 = vrot.lane.b32.xlu0 %v1530, 64
      %v5773 = vpop.permute.xlu0 %5772
      %5774 = vrot.lane.b32.xlu0 %v1531, 64
      %v5775 = vpop.permute.xlu0 %5774
      %5776 = vrot.lane.b32.xlu0 %v1532, 64
      %v5777 = vpop.permute.xlu0 %5776
      %5778 = vrot.lane.b32.xlu0 %v1533, 64
      %v5779 = vpop.permute.xlu0 %5778
      %v5785 = vsel %vm1712, %v5398, 0
      %v5788 = vsel %vm1712, %v5399, 0
      %5790 = vmatprep.subr.bf16.mxu0 0
      %5791 = vmatpush1.bf16.msra.mxu0 0
      %5792 = vmatprep.subr.bf16.mxu0 0
      %5793 = vmatpush1.bf16.msra.mxu0 0
      %5794 = vmatprep.subr.bf16.mxu0 0
      %5795 = vmatpush1.bf16.msra.mxu0 0
      %5796 = vmatprep.subr.bf16.mxu0 0
      %5797 = vmatpush1.bf16.msra.mxu0 0
      %5798 = vmatprep.subr.bf16.mxu0 0
      %5799 = vmatpush1.bf16.msra.mxu0 0
      %5800 = vmatprep.subr.bf16.mxu0 0
      %5801 = vmatpush1.bf16.msra.mxu0 0
      %5802 = vmatprep.subr.bf16.mxu0 0
      %5803 = vmatpush1.bf16.msra.mxu0 %v5765
      %5804 = vmatprep.subr.bf16.mxu0 0
      %5805 = vmatpush1.bf16.msra.mxu0 %v5763
      %5806 = vmatprep.subr.bf16.mxu0 0
      %5807 = vmatpush2.bf16.msra.mxu0 0
      %5808 = vmatprep.subr.bf16.mxu0 0
      %5809 = vmatpush2.bf16.msra.mxu0 0
      %5810 = vmatprep.subr.bf16.mxu0 0
      %5811 = vmatpush2.bf16.msra.mxu0 0
      %5812 = vmatprep.subr.bf16.mxu0 0
      %5813 = vmatpush2.bf16.msra.mxu0 0
      %5814 = vmatprep.subr.bf16.mxu0 0
      %5815 = vmatpush2.bf16.msra.mxu0 0
      %5816 = vmatprep.subr.bf16.mxu0 0
      %5817 = vmatpush2.bf16.msra.mxu0 0
      %5818 = vmatprep.subr.bf16.mxu0 0
      %5819 = vmatpush2.bf16.msra.mxu0 0
      %5820 = vmatprep.subr.bf16.mxu0 0
      %5821 = vmatpush2.bf16.msra.mxu0 0
      %5822 = vmatprep.mubr.bf16.mxu0 0
      %5823 = vmatmul.mubr.bf16.gmra.mxu0 %v5785
      %v5824 = vpop.f32.mrf.mxu0
      %v5825 = vadd.f32 %v5773, %v5824
      %v5826 = vpop.f32.mrf.mxu0
      %v5827 = vpop.f32.mrf.mxu0
      %v5828 = vadd.f32 %v5775, %v5827
      %v5829 = vpop.f32.mrf.mxu0
      %5830 = vmatprep.mubr.bf16.mxu0 0
      %5831 = vmatmul.mubr.bf16.gmra.mxu0 %v5788
      %v5832 = vpop.f32.mrf.mxu0
      %v5833 = vadd.f32 %v5777, %v5832
      %v5834 = vpop.f32.mrf.mxu0
      %v5835 = vpop.f32.mrf.mxu0
      %v5836 = vadd.f32 %v5779, %v5835
      %v5837 = vpop.f32.mrf.mxu0
      %5838 = vdwg.mxu0
      %5839 = vrot.lane.b32.xlu0 %v1652, 32
      %v5840 = vpop.permute.xlu0 %5839
      %5841 = vrot.lane.b32.xlu0 %v1653, 32
      %v5842 = vpop.permute.xlu0 %5841
      %5849 = vrot.lane.b32.xlu0 %v1534, 64
      %v5850 = vpop.permute.xlu0 %5849
      %5851 = vrot.lane.b32.xlu0 %v1535, 64
      %v5852 = vpop.permute.xlu0 %5851
      %5853 = vrot.lane.b32.xlu0 %v1536, 64
      %v5854 = vpop.permute.xlu0 %5853
      %5855 = vrot.lane.b32.xlu0 %v1537, 64
      %v5856 = vpop.permute.xlu0 %5855
      %v5862 = vsel %vm1712, %v5400, 0
      %v5865 = vsel %vm1712, %v5401, 0
      %5867 = vmatprep.subr.bf16.mxu0 0
      %5868 = vmatpush1.bf16.msra.mxu0 0
      %5869 = vmatprep.subr.bf16.mxu0 0
      %5870 = vmatpush1.bf16.msra.mxu0 0
      %5871 = vmatprep.subr.bf16.mxu0 0
      %5872 = vmatpush1.bf16.msra.mxu0 0
      %5873 = vmatprep.subr.bf16.mxu0 0
      %5874 = vmatpush1.bf16.msra.mxu0 0
      %5875 = vmatprep.subr.bf16.mxu0 0
      %5876 = vmatpush1.bf16.msra.mxu0 0
      %5877 = vmatprep.subr.bf16.mxu0 0
      %5878 = vmatpush1.bf16.msra.mxu0 0
      %5879 = vmatprep.subr.bf16.mxu0 0
      %5880 = vmatpush1.bf16.msra.mxu0 %v5842
      %5881 = vmatprep.subr.bf16.mxu0 0
      %5882 = vmatpush1.bf16.msra.mxu0 %v5840
      %5883 = vmatprep.subr.bf16.mxu0 0
      %5884 = vmatpush2.bf16.msra.mxu0 0
      %5885 = vmatprep.subr.bf16.mxu0 0
      %5886 = vmatpush2.bf16.msra.mxu0 0
      %5887 = vmatprep.subr.bf16.mxu0 0
      %5888 = vmatpush2.bf16.msra.mxu0 0
      %5889 = vmatprep.subr.bf16.mxu0 0
      %5890 = vmatpush2.bf16.msra.mxu0 0
      %5891 = vmatprep.subr.bf16.mxu0 0
      %5892 = vmatpush2.bf16.msra.mxu0 0
      %5893 = vmatprep.subr.bf16.mxu0 0
      %5894 = vmatpush2.bf16.msra.mxu0 0
      %5895 = vmatprep.subr.bf16.mxu0 0
      %5896 = vmatpush2.bf16.msra.mxu0 0
      %5897 = vmatprep.subr.bf16.mxu0 0
      %5898 = vmatpush2.bf16.msra.mxu0 0
      %5899 = vmatprep.mubr.bf16.mxu0 0
      %5900 = vmatmul.mubr.bf16.gmra.mxu0 %v5862
      %v5901 = vpop.f32.mrf.mxu0
      %v5902 = vadd.f32 %v5850, %v5901
      %v5903 = vpop.f32.mrf.mxu0
      %v5904 = vpop.f32.mrf.mxu0
      %v5905 = vadd.f32 %v5852, %v5904
      %v5906 = vpop.f32.mrf.mxu0
      %5907 = vmatprep.mubr.bf16.mxu0 0
      %5908 = vmatmul.mubr.bf16.gmra.mxu0 %v5865
      %v5909 = vpop.f32.mrf.mxu0
      %v5910 = vadd.f32 %v5854, %v5909
      %v5911 = vpop.f32.mrf.mxu0
      %v5912 = vpop.f32.mrf.mxu0
      %v5913 = vadd.f32 %v5856, %v5912
      %v5914 = vpop.f32.mrf.mxu0
      %5915 = vdwg.mxu0
      %5916 = vrot.lane.b32.xlu0 %v1654, 32
      %v5917 = vpop.permute.xlu0 %5916
      %5918 = vrot.lane.b32.xlu0 %v1655, 32
      %v5919 = vpop.permute.xlu0 %5918
      %5926 = vrot.lane.b32.xlu0 %v1538, 64
      %v5927 = vpop.permute.xlu0 %5926
      %5928 = vrot.lane.b32.xlu0 %v1539, 64
      %v5929 = vpop.permute.xlu0 %5928
      %5930 = vrot.lane.b32.xlu0 %v1540, 64
      %v5931 = vpop.permute.xlu0 %5930
      %5932 = vrot.lane.b32.xlu0 %v1541, 64
      %v5933 = vpop.permute.xlu0 %5932
      %v5939 = vsel %vm1712, %v5402, 0
      %v5942 = vsel %vm1712, %v5403, 0
      %5944 = vmatprep.subr.bf16.mxu0 0
      %5945 = vmatpush1.bf16.msra.mxu0 0
      %5946 = vmatprep.subr.bf16.mxu0 0
      %5947 = vmatpush1.bf16.msra.mxu0 0
      %5948 = vmatprep.subr.bf16.mxu0 0
      %5949 = vmatpush1.bf16.msra.mxu0 0
      %5950 = vmatprep.subr.bf16.mxu0 0
      %5951 = vmatpush1.bf16.msra.mxu0 0
      %5952 = vmatprep.subr.bf16.mxu0 0
      %5953 = vmatpush1.bf16.msra.mxu0 0
      %5954 = vmatprep.subr.bf16.mxu0 0
      %5955 = vmatpush1.bf16.msra.mxu0 0
      %5956 = vmatprep.subr.bf16.mxu0 0
      %5957 = vmatpush1.bf16.msra.mxu0 %v5919
      %5958 = vmatprep.subr.bf16.mxu0 0
      %5959 = vmatpush1.bf16.msra.mxu0 %v5917
      %5960 = vmatprep.subr.bf16.mxu0 0
      %5961 = vmatpush2.bf16.msra.mxu0 0
      %5962 = vmatprep.subr.bf16.mxu0 0
      %5963 = vmatpush2.bf16.msra.mxu0 0
      %5964 = vmatprep.subr.bf16.mxu0 0
      %5965 = vmatpush2.bf16.msra.mxu0 0
      %5966 = vmatprep.subr.bf16.mxu0 0
      %5967 = vmatpush2.bf16.msra.mxu0 0
      %5968 = vmatprep.subr.bf16.mxu0 0
      %5969 = vmatpush2.bf16.msra.mxu0 0
      %5970 = vmatprep.subr.bf16.mxu0 0
      %5971 = vmatpush2.bf16.msra.mxu0 0
      %5972 = vmatprep.subr.bf16.mxu0 0
      %5973 = vmatpush2.bf16.msra.mxu0 0
      %5974 = vmatprep.subr.bf16.mxu0 0
      %5975 = vmatpush2.bf16.msra.mxu0 0
      %5976 = vmatprep.mubr.bf16.mxu0 0
      %5977 = vmatmul.mubr.bf16.gmra.mxu0 %v5939
      %v5978 = vpop.f32.mrf.mxu0
      %v5979 = vadd.f32 %v5927, %v5978
      %v5980 = vpop.f32.mrf.mxu0
      %v5981 = vpop.f32.mrf.mxu0
      %v5982 = vadd.f32 %v5929, %v5981
      %v5983 = vpop.f32.mrf.mxu0
      %5984 = vmatprep.mubr.bf16.mxu0 0
      %5985 = vmatmul.mubr.bf16.gmra.mxu0 %v5942
      %v5986 = vpop.f32.mrf.mxu0
      %v5987 = vadd.f32 %v5931, %v5986
      %v5988 = vpop.f32.mrf.mxu0
      %v5989 = vpop.f32.mrf.mxu0
      %v5990 = vadd.f32 %v5933, %v5989
      %v5991 = vpop.f32.mrf.mxu0
      %5992 = vdwg.mxu0
      %5993 = vrot.lane.b32.xlu0 %v1656, 32
      %v5994 = vpop.permute.xlu0 %5993
      %5995 = vrot.lane.b32.xlu0 %v1657, 32
      %v5996 = vpop.permute.xlu0 %5995
      %6003 = vrot.lane.b32.xlu0 %v1542, 64
      %v6004 = vpop.permute.xlu0 %6003
      %6005 = vrot.lane.b32.xlu0 %v1543, 64
      %v6006 = vpop.permute.xlu0 %6005
      %6007 = vrot.lane.b32.xlu0 %v1544, 64
      %v6008 = vpop.permute.xlu0 %6007
      %6009 = vrot.lane.b32.xlu0 %v1545, 64
      %v6010 = vpop.permute.xlu0 %6009
      %v6016 = vsel %vm1712, %v5404, 0
      %v6019 = vsel %vm1712, %v5405, 0
      %6021 = vmatprep.subr.bf16.mxu0 0
      %6022 = vmatpush1.bf16.msra.mxu0 0
      %6023 = vmatprep.subr.bf16.mxu0 0
      %6024 = vmatpush1.bf16.msra.mxu0 0
      %6025 = vmatprep.subr.bf16.mxu0 0
      %6026 = vmatpush1.bf16.msra.mxu0 0
      %6027 = vmatprep.subr.bf16.mxu0 0
      %6028 = vmatpush1.bf16.msra.mxu0 0
      %6029 = vmatprep.subr.bf16.mxu0 0
      %6030 = vmatpush1.bf16.msra.mxu0 0
      %6031 = vmatprep.subr.bf16.mxu0 0
      %6032 = vmatpush1.bf16.msra.mxu0 0
      %6033 = vmatprep.subr.bf16.mxu0 0
      %6034 = vmatpush1.bf16.msra.mxu0 %v5996
      %6035 = vmatprep.subr.bf16.mxu0 0
      %6036 = vmatpush1.bf16.msra.mxu0 %v5994
      %6037 = vmatprep.subr.bf16.mxu0 0
      %6038 = vmatpush2.bf16.msra.mxu0 0
      %6039 = vmatprep.subr.bf16.mxu0 0
      %6040 = vmatpush2.bf16.msra.mxu0 0
      %6041 = vmatprep.subr.bf16.mxu0 0
      %6042 = vmatpush2.bf16.msra.mxu0 0
      %6043 = vmatprep.subr.bf16.mxu0 0
      %6044 = vmatpush2.bf16.msra.mxu0 0
      %6045 = vmatprep.subr.bf16.mxu0 0
      %6046 = vmatpush2.bf16.msra.mxu0 0
      %6047 = vmatprep.subr.bf16.mxu0 0
      %6048 = vmatpush2.bf16.msra.mxu0 0
      %6049 = vmatprep.subr.bf16.mxu0 0
      %6050 = vmatpush2.bf16.msra.mxu0 0
      %6051 = vmatprep.subr.bf16.mxu0 0
      %6052 = vmatpush2.bf16.msra.mxu0 0
      %6053 = vmatprep.mubr.bf16.mxu0 0
      %6054 = vmatmul.mubr.bf16.gmra.mxu0 %v6016
      %v6055 = vpop.f32.mrf.mxu0
      %v6056 = vadd.f32 %v6004, %v6055
      %v6057 = vpop.f32.mrf.mxu0
      %v6058 = vpop.f32.mrf.mxu0
      %v6059 = vadd.f32 %v6006, %v6058
      %v6060 = vpop.f32.mrf.mxu0
      %6061 = vmatprep.mubr.bf16.mxu0 0
      %6062 = vmatmul.mubr.bf16.gmra.mxu0 %v6019
      %v6063 = vpop.f32.mrf.mxu0
      %v6064 = vadd.f32 %v6008, %v6063
      %v6065 = vpop.f32.mrf.mxu0
      %v6066 = vpop.f32.mrf.mxu0
      %v6067 = vadd.f32 %v6010, %v6066
      %v6068 = vpop.f32.mrf.mxu0
      %6069 = vdwg.mxu0
      %6070 = vrot.lane.b32.xlu0 %v1658, 32
      %v6071 = vpop.permute.xlu0 %6070
      %6072 = vrot.lane.b32.xlu0 %v1659, 32
      %v6073 = vpop.permute.xlu0 %6072
      %6080 = vrot.lane.b32.xlu0 %v1546, 64
      %v6081 = vpop.permute.xlu0 %6080
      %6082 = vrot.lane.b32.xlu0 %v1547, 64
      %v6083 = vpop.permute.xlu0 %6082
      %6084 = vrot.lane.b32.xlu0 %v1548, 64
      %v6085 = vpop.permute.xlu0 %6084
      %6086 = vrot.lane.b32.xlu0 %v1549, 64
      %v6087 = vpop.permute.xlu0 %6086
      %v6093 = vsel %vm1712, %v5406, 0
      %v6096 = vsel %vm1712, %v5407, 0
      %6098 = vmatprep.subr.bf16.mxu0 0
      %6099 = vmatpush1.bf16.msra.mxu0 0
      %6100 = vmatprep.subr.bf16.mxu0 0
      %6101 = vmatpush1.bf16.msra.mxu0 0
      %6102 = vmatprep.subr.bf16.mxu0 0
      %6103 = vmatpush1.bf16.msra.mxu0 0
      %6104 = vmatprep.subr.bf16.mxu0 0
      %6105 = vmatpush1.bf16.msra.mxu0 0
      %6106 = vmatprep.subr.bf16.mxu0 0
      %6107 = vmatpush1.bf16.msra.mxu0 0
      %6108 = vmatprep.subr.bf16.mxu0 0
      %6109 = vmatpush1.bf16.msra.mxu0 0
      %6110 = vmatprep.subr.bf16.mxu0 0
      %6111 = vmatpush1.bf16.msra.mxu0 %v6073
      %6112 = vmatprep.subr.bf16.mxu0 0
      %6113 = vmatpush1.bf16.msra.mxu0 %v6071
      %6114 = vmatprep.subr.bf16.mxu0 0
      %6115 = vmatpush2.bf16.msra.mxu0 0
      %6116 = vmatprep.subr.bf16.mxu0 0
      %6117 = vmatpush2.bf16.msra.mxu0 0
      %6118 = vmatprep.subr.bf16.mxu0 0
      %6119 = vmatpush2.bf16.msra.mxu0 0
      %6120 = vmatprep.subr.bf16.mxu0 0
      %6121 = vmatpush2.bf16.msra.mxu0 0
      %6122 = vmatprep.subr.bf16.mxu0 0
      %6123 = vmatpush2.bf16.msra.mxu0 0
      %6124 = vmatprep.subr.bf16.mxu0 0
      %6125 = vmatpush2.bf16.msra.mxu0 0
      %6126 = vmatprep.subr.bf16.mxu0 0
      %6127 = vmatpush2.bf16.msra.mxu0 0
      %6128 = vmatprep.subr.bf16.mxu0 0
      %6129 = vmatpush2.bf16.msra.mxu0 0
      %6130 = vmatprep.mubr.bf16.mxu0 0
      %6131 = vmatmul.mubr.bf16.gmra.mxu0 %v6093
      %v6132 = vpop.f32.mrf.mxu0
      %v6133 = vadd.f32 %v6081, %v6132
      %v6134 = vpop.f32.mrf.mxu0
      %v6135 = vpop.f32.mrf.mxu0
      %v6136 = vadd.f32 %v6083, %v6135
      %v6137 = vpop.f32.mrf.mxu0
      %6138 = vmatprep.mubr.bf16.mxu0 0
      %6139 = vmatmul.mubr.bf16.gmra.mxu0 %v6096
      %v6140 = vpop.f32.mrf.mxu0
      %v6141 = vadd.f32 %v6085, %v6140
      %v6142 = vpop.f32.mrf.mxu0
      %v6143 = vpop.f32.mrf.mxu0
      %v6144 = vadd.f32 %v6087, %v6143
      %v6145 = vpop.f32.mrf.mxu0
      %6146 = vdwg.mxu0
      %6147 = vrot.lane.b32.xlu0 %v1660, 32
      %v6148 = vpop.permute.xlu0 %6147
      %6149 = vrot.lane.b32.xlu0 %v1661, 32
      %v6150 = vpop.permute.xlu0 %6149
      %6157 = vrot.lane.b32.xlu0 %v1550, 64
      %v6158 = vpop.permute.xlu0 %6157
      %6159 = vrot.lane.b32.xlu0 %v1551, 64
      %v6160 = vpop.permute.xlu0 %6159
      %6161 = vrot.lane.b32.xlu0 %v1552, 64
      %v6162 = vpop.permute.xlu0 %6161
      %6163 = vrot.lane.b32.xlu0 %v1553, 64
      %v6164 = vpop.permute.xlu0 %6163
      %v6170 = vsel %vm1712, %v5408, 0
      %v6173 = vsel %vm1712, %v5409, 0
      %6175 = vmatprep.subr.bf16.mxu0 0
      %6176 = vmatpush1.bf16.msra.mxu0 0
      %6177 = vmatprep.subr.bf16.mxu0 0
      %6178 = vmatpush1.bf16.msra.mxu0 0
      %6179 = vmatprep.subr.bf16.mxu0 0
      %6180 = vmatpush1.bf16.msra.mxu0 0
      %6181 = vmatprep.subr.bf16.mxu0 0
      %6182 = vmatpush1.bf16.msra.mxu0 0
      %6183 = vmatprep.subr.bf16.mxu0 0
      %6184 = vmatpush1.bf16.msra.mxu0 0
      %6185 = vmatprep.subr.bf16.mxu0 0
      %6186 = vmatpush1.bf16.msra.mxu0 0
      %6187 = vmatprep.subr.bf16.mxu0 0
      %6188 = vmatpush1.bf16.msra.mxu0 %v6150
      %6189 = vmatprep.subr.bf16.mxu0 0
      %6190 = vmatpush1.bf16.msra.mxu0 %v6148
      %6191 = vmatprep.subr.bf16.mxu0 0
      %6192 = vmatpush2.bf16.msra.mxu0 0
      %6193 = vmatprep.subr.bf16.mxu0 0
      %6194 = vmatpush2.bf16.msra.mxu0 0
      %6195 = vmatprep.subr.bf16.mxu0 0
      %6196 = vmatpush2.bf16.msra.mxu0 0
      %6197 = vmatprep.subr.bf16.mxu0 0
      %6198 = vmatpush2.bf16.msra.mxu0 0
      %6199 = vmatprep.subr.bf16.mxu0 0
      %6200 = vmatpush2.bf16.msra.mxu0 0
      %6201 = vmatprep.subr.bf16.mxu0 0
      %6202 = vmatpush2.bf16.msra.mxu0 0
      %6203 = vmatprep.subr.bf16.mxu0 0
      %6204 = vmatpush2.bf16.msra.mxu0 0
      %6205 = vmatprep.subr.bf16.mxu0 0
      %6206 = vmatpush2.bf16.msra.mxu0 0
      %6207 = vmatprep.mubr.bf16.mxu0 0
      %6208 = vmatmul.mubr.bf16.gmra.mxu0 %v6170
      %v6209 = vpop.f32.mrf.mxu0
      %v6210 = vadd.f32 %v6158, %v6209
      %v6211 = vpop.f32.mrf.mxu0
      %v6212 = vpop.f32.mrf.mxu0
      %v6213 = vadd.f32 %v6160, %v6212
      %v6214 = vpop.f32.mrf.mxu0
      %6215 = vmatprep.mubr.bf16.mxu0 0
      %6216 = vmatmul.mubr.bf16.gmra.mxu0 %v6173
      %v6217 = vpop.f32.mrf.mxu0
      %v6218 = vadd.f32 %v6162, %v6217
      %v6219 = vpop.f32.mrf.mxu0
      %v6220 = vpop.f32.mrf.mxu0
      %v6221 = vadd.f32 %v6164, %v6220
      %v6222 = vpop.f32.mrf.mxu0
      %6223 = vdwg.mxu0
      %6224 = vrot.lane.b32.xlu0 %v1662, 32
      %v6225 = vpop.permute.xlu0 %6224
      %6226 = vrot.lane.b32.xlu0 %v1663, 32
      %v6227 = vpop.permute.xlu0 %6226
      %6234 = vrot.lane.b32.xlu0 %v1554, 64
      %v6235 = vpop.permute.xlu0 %6234
      %6236 = vrot.lane.b32.xlu0 %v1555, 64
      %v6237 = vpop.permute.xlu0 %6236
      %6238 = vrot.lane.b32.xlu0 %v1556, 64
      %v6239 = vpop.permute.xlu0 %6238
      %6240 = vrot.lane.b32.xlu0 %v1557, 64
      %v6241 = vpop.permute.xlu0 %6240
      %v6247 = vsel %vm1712, %v5410, 0
      %v6250 = vsel %vm1712, %v5411, 0
      %6252 = vmatprep.subr.bf16.mxu0 0
      %6253 = vmatpush1.bf16.msra.mxu0 0
      %6254 = vmatprep.subr.bf16.mxu0 0
      %6255 = vmatpush1.bf16.msra.mxu0 0
      %6256 = vmatprep.subr.bf16.mxu0 0
      %6257 = vmatpush1.bf16.msra.mxu0 0
      %6258 = vmatprep.subr.bf16.mxu0 0
      %6259 = vmatpush1.bf16.msra.mxu0 0
      %6260 = vmatprep.subr.bf16.mxu0 0
      %6261 = vmatpush1.bf16.msra.mxu0 0
      %6262 = vmatprep.subr.bf16.mxu0 0
      %6263 = vmatpush1.bf16.msra.mxu0 0
      %6264 = vmatprep.subr.bf16.mxu0 0
      %6265 = vmatpush1.bf16.msra.mxu0 %v6227
      %6266 = vmatprep.subr.bf16.mxu0 0
      %6267 = vmatpush1.bf16.msra.mxu0 %v6225
      %6268 = vmatprep.subr.bf16.mxu0 0
      %6269 = vmatpush2.bf16.msra.mxu0 0
      %6270 = vmatprep.subr.bf16.mxu0 0
      %6271 = vmatpush2.bf16.msra.mxu0 0
      %6272 = vmatprep.subr.bf16.mxu0 0
      %6273 = vmatpush2.bf16.msra.mxu0 0
      %6274 = vmatprep.subr.bf16.mxu0 0
      %6275 = vmatpush2.bf16.msra.mxu0 0
      %6276 = vmatprep.subr.bf16.mxu0 0
      %6277 = vmatpush2.bf16.msra.mxu0 0
      %6278 = vmatprep.subr.bf16.mxu0 0
      %6279 = vmatpush2.bf16.msra.mxu0 0
      %6280 = vmatprep.subr.bf16.mxu0 0
      %6281 = vmatpush2.bf16.msra.mxu0 0
      %6282 = vmatprep.subr.bf16.mxu0 0
      %6283 = vmatpush2.bf16.msra.mxu0 0
      %6284 = vmatprep.mubr.bf16.mxu0 0
      %6285 = vmatmul.mubr.bf16.gmra.mxu0 %v6247
      %v6286 = vpop.f32.mrf.mxu0
      %v6287 = vadd.f32 %v6235, %v6286
      %v6288 = vpop.f32.mrf.mxu0
      %v6289 = vpop.f32.mrf.mxu0
      %v6290 = vadd.f32 %v6237, %v6289
      %v6291 = vpop.f32.mrf.mxu0
      %6292 = vmatprep.mubr.bf16.mxu0 0
      %6293 = vmatmul.mubr.bf16.gmra.mxu0 %v6250
      %v6294 = vpop.f32.mrf.mxu0
      %v6295 = vadd.f32 %v6239, %v6294
      %v6296 = vpop.f32.mrf.mxu0
      %v6297 = vpop.f32.mrf.mxu0
      %v6298 = vadd.f32 %v6241, %v6297
      %v6299 = vpop.f32.mrf.mxu0
      %6300 = vdwg.mxu0
      %6301 = vrot.lane.b32.xlu0 %v1664, 32
      %v6302 = vpop.permute.xlu0 %6301
      %6303 = vrot.lane.b32.xlu0 %v1665, 32
      %v6304 = vpop.permute.xlu0 %6303
      %6311 = vrot.lane.b32.xlu0 %v1558, 64
      %v6312 = vpop.permute.xlu0 %6311
      %6313 = vrot.lane.b32.xlu0 %v1559, 64
      %v6314 = vpop.permute.xlu0 %6313
      %6315 = vrot.lane.b32.xlu0 %v1560, 64
      %v6316 = vpop.permute.xlu0 %6315
      %6317 = vrot.lane.b32.xlu0 %v1561, 64
      %v6318 = vpop.permute.xlu0 %6317
      %v6324 = vsel %vm1712, %v5412, 0
      %v6327 = vsel %vm1712, %v5413, 0
      %6329 = vmatprep.subr.bf16.mxu0 0
      %6330 = vmatpush1.bf16.msra.mxu0 0
      %6331 = vmatprep.subr.bf16.mxu0 0
      %6332 = vmatpush1.bf16.msra.mxu0 0
      %6333 = vmatprep.subr.bf16.mxu0 0
      %6334 = vmatpush1.bf16.msra.mxu0 0
      %6335 = vmatprep.subr.bf16.mxu0 0
      %6336 = vmatpush1.bf16.msra.mxu0 0
      %6337 = vmatprep.subr.bf16.mxu0 0
      %6338 = vmatpush1.bf16.msra.mxu0 0
      %6339 = vmatprep.subr.bf16.mxu0 0
      %6340 = vmatpush1.bf16.msra.mxu0 0
      %6341 = vmatprep.subr.bf16.mxu0 0
      %6342 = vmatpush1.bf16.msra.mxu0 %v6304
      %6343 = vmatprep.subr.bf16.mxu0 0
      %6344 = vmatpush1.bf16.msra.mxu0 %v6302
      %6345 = vmatprep.subr.bf16.mxu0 0
      %6346 = vmatpush2.bf16.msra.mxu0 0
      %6347 = vmatprep.subr.bf16.mxu0 0
      %6348 = vmatpush2.bf16.msra.mxu0 0
      %6349 = vmatprep.subr.bf16.mxu0 0
      %6350 = vmatpush2.bf16.msra.mxu0 0
      %6351 = vmatprep.subr.bf16.mxu0 0
      %6352 = vmatpush2.bf16.msra.mxu0 0
      %6353 = vmatprep.subr.bf16.mxu0 0
      %6354 = vmatpush2.bf16.msra.mxu0 0
      %6355 = vmatprep.subr.bf16.mxu0 0
      %6356 = vmatpush2.bf16.msra.mxu0 0
      %6357 = vmatprep.subr.bf16.mxu0 0
      %6358 = vmatpush2.bf16.msra.mxu0 0
      %6359 = vmatprep.subr.bf16.mxu0 0
      %6360 = vmatpush2.bf16.msra.mxu0 0
      %6361 = vmatprep.mubr.bf16.mxu0 0
      %6362 = vmatmul.mubr.bf16.gmra.mxu0 %v6324
      %v6363 = vpop.f32.mrf.mxu0
      %v6364 = vadd.f32 %v6312, %v6363
      %v6365 = vpop.f32.mrf.mxu0
      %v6366 = vpop.f32.mrf.mxu0
      %v6367 = vadd.f32 %v6314, %v6366
      %v6368 = vpop.f32.mrf.mxu0
      %6369 = vmatprep.mubr.bf16.mxu0 0
      %6370 = vmatmul.mubr.bf16.gmra.mxu0 %v6327
      %v6371 = vpop.f32.mrf.mxu0
      %v6372 = vadd.f32 %v6316, %v6371
      %v6373 = vpop.f32.mrf.mxu0
      %v6374 = vpop.f32.mrf.mxu0
      %v6375 = vadd.f32 %v6318, %v6374
      %v6376 = vpop.f32.mrf.mxu0
      %6377 = vdwg.mxu0
      %6378 = vrot.lane.b32.xlu0 %v1666, 32
      %v6379 = vpop.permute.xlu0 %6378
      %6380 = vrot.lane.b32.xlu0 %v1667, 32
      %v6381 = vpop.permute.xlu0 %6380
      %6388 = vrot.lane.b32.xlu0 %v1562, 64
      %v6389 = vpop.permute.xlu0 %6388
      %6390 = vrot.lane.b32.xlu0 %v1563, 64
      %v6391 = vpop.permute.xlu0 %6390
      %6392 = vrot.lane.b32.xlu0 %v1564, 64
      %v6393 = vpop.permute.xlu0 %6392
      %6394 = vrot.lane.b32.xlu0 %v1565, 64
      %v6395 = vpop.permute.xlu0 %6394
      %v6401 = vsel %vm1712, %v5414, 0
      %v6404 = vsel %vm1712, %v5415, 0
      %6406 = vmatprep.subr.bf16.mxu0 0
      %6407 = vmatpush1.bf16.msra.mxu0 0
      %6408 = vmatprep.subr.bf16.mxu0 0
      %6409 = vmatpush1.bf16.msra.mxu0 0
      %6410 = vmatprep.subr.bf16.mxu0 0
      %6411 = vmatpush1.bf16.msra.mxu0 0
      %6412 = vmatprep.subr.bf16.mxu0 0
      %6413 = vmatpush1.bf16.msra.mxu0 0
      %6414 = vmatprep.subr.bf16.mxu0 0
      %6415 = vmatpush1.bf16.msra.mxu0 0
      %6416 = vmatprep.subr.bf16.mxu0 0
      %6417 = vmatpush1.bf16.msra.mxu0 0
      %6418 = vmatprep.subr.bf16.mxu0 0
      %6419 = vmatpush1.bf16.msra.mxu0 %v6381
      %6420 = vmatprep.subr.bf16.mxu0 0
      %6421 = vmatpush1.bf16.msra.mxu0 %v6379
      %6422 = vmatprep.subr.bf16.mxu0 0
      %6423 = vmatpush2.bf16.msra.mxu0 0
      %6424 = vmatprep.subr.bf16.mxu0 0
      %6425 = vmatpush2.bf16.msra.mxu0 0
      %6426 = vmatprep.subr.bf16.mxu0 0
      %6427 = vmatpush2.bf16.msra.mxu0 0
      %6428 = vmatprep.subr.bf16.mxu0 0
      %6429 = vmatpush2.bf16.msra.mxu0 0
      %6430 = vmatprep.subr.bf16.mxu0 0
      %6431 = vmatpush2.bf16.msra.mxu0 0
      %6432 = vmatprep.subr.bf16.mxu0 0
      %6433 = vmatpush2.bf16.msra.mxu0 0
      %6434 = vmatprep.subr.bf16.mxu0 0
      %6435 = vmatpush2.bf16.msra.mxu0 0
      %6436 = vmatprep.subr.bf16.mxu0 0
      %6437 = vmatpush2.bf16.msra.mxu0 0
      %6438 = vmatprep.mubr.bf16.mxu0 0
      %6439 = vmatmul.mubr.bf16.gmra.mxu0 %v6401
      %v6440 = vpop.f32.mrf.mxu0
      %v6441 = vadd.f32 %v6389, %v6440
      %v6442 = vpop.f32.mrf.mxu0
      %v6443 = vpop.f32.mrf.mxu0
      %v6444 = vadd.f32 %v6391, %v6443
      %v6445 = vpop.f32.mrf.mxu0
      %6446 = vmatprep.mubr.bf16.mxu0 0
      %6447 = vmatmul.mubr.bf16.gmra.mxu0 %v6404
      %v6448 = vpop.f32.mrf.mxu0
      %v6449 = vadd.f32 %v6393, %v6448
      %v6450 = vpop.f32.mrf.mxu0
      %v6451 = vpop.f32.mrf.mxu0
      %v6452 = vadd.f32 %v6395, %v6451
      %v6453 = vpop.f32.mrf.mxu0
      %6454 = vdwg.mxu0
      %6455 = vrot.lane.b32.xlu0 %v1668, 32
      %v6456 = vpop.permute.xlu0 %6455
      %6457 = vrot.lane.b32.xlu0 %v1669, 32
      %v6458 = vpop.permute.xlu0 %6457
      %6465 = vrot.lane.b32.xlu0 %v1566, 64
      %v6466 = vpop.permute.xlu0 %6465
      %6467 = vrot.lane.b32.xlu0 %v1567, 64
      %v6468 = vpop.permute.xlu0 %6467
      %6469 = vrot.lane.b32.xlu0 %v1568, 64
      %v6470 = vpop.permute.xlu0 %6469
      %6471 = vrot.lane.b32.xlu0 %v1569, 64
      %v6472 = vpop.permute.xlu0 %6471
      %v6478 = vsel %vm1712, %v5416, 0
      %v6481 = vsel %vm1712, %v5417, 0
      %6483 = vmatprep.subr.bf16.mxu0 0
      %6484 = vmatpush1.bf16.msra.mxu0 0
      %6485 = vmatprep.subr.bf16.mxu0 0
      %6486 = vmatpush1.bf16.msra.mxu0 0
      %6487 = vmatprep.subr.bf16.mxu0 0
      %6488 = vmatpush1.bf16.msra.mxu0 0
      %6489 = vmatprep.subr.bf16.mxu0 0
      %6490 = vmatpush1.bf16.msra.mxu0 0
      %6491 = vmatprep.subr.bf16.mxu0 0
      %6492 = vmatpush1.bf16.msra.mxu0 0
      %6493 = vmatprep.subr.bf16.mxu0 0
      %6494 = vmatpush1.bf16.msra.mxu0 0
      %6495 = vmatprep.subr.bf16.mxu0 0
      %6496 = vmatpush1.bf16.msra.mxu0 %v6458
      %6497 = vmatprep.subr.bf16.mxu0 0
      %6498 = vmatpush1.bf16.msra.mxu0 %v6456
      %6499 = vmatprep.subr.bf16.mxu0 0
      %6500 = vmatpush2.bf16.msra.mxu0 0
      %6501 = vmatprep.subr.bf16.mxu0 0
      %6502 = vmatpush2.bf16.msra.mxu0 0
      %6503 = vmatprep.subr.bf16.mxu0 0
      %6504 = vmatpush2.bf16.msra.mxu0 0
      %6505 = vmatprep.subr.bf16.mxu0 0
      %6506 = vmatpush2.bf16.msra.mxu0 0
      %6507 = vmatprep.subr.bf16.mxu0 0
      %6508 = vmatpush2.bf16.msra.mxu0 0
      %6509 = vmatprep.subr.bf16.mxu0 0
      %6510 = vmatpush2.bf16.msra.mxu0 0
      %6511 = vmatprep.subr.bf16.mxu0 0
      %6512 = vmatpush2.bf16.msra.mxu0 0
      %6513 = vmatprep.subr.bf16.mxu0 0
      %6514 = vmatpush2.bf16.msra.mxu0 0
      %6515 = vmatprep.mubr.bf16.mxu0 0
      %6516 = vmatmul.mubr.bf16.gmra.mxu0 %v6478
      %v6517 = vpop.f32.mrf.mxu0
      %v6518 = vadd.f32 %v6466, %v6517
      %v6519 = vpop.f32.mrf.mxu0
      %v6520 = vpop.f32.mrf.mxu0
      %v6521 = vadd.f32 %v6468, %v6520
      %v6522 = vpop.f32.mrf.mxu0
      %6523 = vmatprep.mubr.bf16.mxu0 0
      %6524 = vmatmul.mubr.bf16.gmra.mxu0 %v6481
      %v6525 = vpop.f32.mrf.mxu0
      %v6526 = vadd.f32 %v6470, %v6525
      %v6527 = vpop.f32.mrf.mxu0
      %v6528 = vpop.f32.mrf.mxu0
      %v6529 = vadd.f32 %v6472, %v6528
      %v6530 = vpop.f32.mrf.mxu0
      %6531 = vdwg.mxu0
      %6532 = vrot.lane.b32.xlu0 %v1670, 32
      %v6533 = vpop.permute.xlu0 %6532
      %6534 = vrot.lane.b32.xlu0 %v1671, 32
      %v6535 = vpop.permute.xlu0 %6534
      %6542 = vrot.lane.b32.xlu0 %v1570, 64
      %v6543 = vpop.permute.xlu0 %6542
      %6544 = vrot.lane.b32.xlu0 %v1571, 64
      %v6545 = vpop.permute.xlu0 %6544
      %6546 = vrot.lane.b32.xlu0 %v1572, 64
      %v6547 = vpop.permute.xlu0 %6546
      %6548 = vrot.lane.b32.xlu0 %v1573, 64
      %v6549 = vpop.permute.xlu0 %6548
      %v6555 = vsel %vm1712, %v5418, 0
      %v6558 = vsel %vm1712, %v5419, 0
      %6560 = vmatprep.subr.bf16.mxu0 0
      %6561 = vmatpush1.bf16.msra.mxu0 0
      %6562 = vmatprep.subr.bf16.mxu0 0
      %6563 = vmatpush1.bf16.msra.mxu0 0
      %6564 = vmatprep.subr.bf16.mxu0 0
      %6565 = vmatpush1.bf16.msra.mxu0 0
      %6566 = vmatprep.subr.bf16.mxu0 0
      %6567 = vmatpush1.bf16.msra.mxu0 0
      %6568 = vmatprep.subr.bf16.mxu0 0
      %6569 = vmatpush1.bf16.msra.mxu0 0
      %6570 = vmatprep.subr.bf16.mxu0 0
      %6571 = vmatpush1.bf16.msra.mxu0 0
      %6572 = vmatprep.subr.bf16.mxu0 0
      %6573 = vmatpush1.bf16.msra.mxu0 %v6535
      %6574 = vmatprep.subr.bf16.mxu0 0
      %6575 = vmatpush1.bf16.msra.mxu0 %v6533
      %6576 = vmatprep.subr.bf16.mxu0 0
      %6577 = vmatpush2.bf16.msra.mxu0 0
      %6578 = vmatprep.subr.bf16.mxu0 0
      %6579 = vmatpush2.bf16.msra.mxu0 0
      %6580 = vmatprep.subr.bf16.mxu0 0
      %6581 = vmatpush2.bf16.msra.mxu0 0
      %6582 = vmatprep.subr.bf16.mxu0 0
      %6583 = vmatpush2.bf16.msra.mxu0 0
      %6584 = vmatprep.subr.bf16.mxu0 0
      %6585 = vmatpush2.bf16.msra.mxu0 0
      %6586 = vmatprep.subr.bf16.mxu0 0
      %6587 = vmatpush2.bf16.msra.mxu0 0
      %6588 = vmatprep.subr.bf16.mxu0 0
      %6589 = vmatpush2.bf16.msra.mxu0 0
      %6590 = vmatprep.subr.bf16.mxu0 0
      %6591 = vmatpush2.bf16.msra.mxu0 0
      %6592 = vmatprep.mubr.bf16.mxu0 0
      %6593 = vmatmul.mubr.bf16.gmra.mxu0 %v6555
      %v6594 = vpop.f32.mrf.mxu0
      %v6595 = vadd.f32 %v6543, %v6594
      %v6596 = vpop.f32.mrf.mxu0
      %v6597 = vpop.f32.mrf.mxu0
      %v6598 = vadd.f32 %v6545, %v6597
      %v6599 = vpop.f32.mrf.mxu0
      %6600 = vmatprep.mubr.bf16.mxu0 0
      %6601 = vmatmul.mubr.bf16.gmra.mxu0 %v6558
      %v6602 = vpop.f32.mrf.mxu0
      %v6603 = vadd.f32 %v6547, %v6602
      %v6604 = vpop.f32.mrf.mxu0
      %v6605 = vpop.f32.mrf.mxu0
      %v6606 = vadd.f32 %v6549, %v6605
      %v6607 = vpop.f32.mrf.mxu0
      %6608 = vdwg.mxu0
      %6609 = vrot.lane.b32.xlu0 %v1672, 32
      %v6610 = vpop.permute.xlu0 %6609
      %6611 = vrot.lane.b32.xlu0 %v1673, 32
      %v6612 = vpop.permute.xlu0 %6611
      %6619 = vrot.lane.b32.xlu0 %v1574, 64
      %v6620 = vpop.permute.xlu0 %6619
      %6621 = vrot.lane.b32.xlu0 %v1575, 64
      %v6622 = vpop.permute.xlu0 %6621
      %6623 = vrot.lane.b32.xlu0 %v1576, 64
      %v6624 = vpop.permute.xlu0 %6623
      %6625 = vrot.lane.b32.xlu0 %v1577, 64
      %v6626 = vpop.permute.xlu0 %6625
      %v6632 = vsel %vm1712, %v5420, 0
      %v6635 = vsel %vm1712, %v5421, 0
      %6637 = vmatprep.subr.bf16.mxu0 0
      %6638 = vmatpush1.bf16.msra.mxu0 0
      %6639 = vmatprep.subr.bf16.mxu0 0
      %6640 = vmatpush1.bf16.msra.mxu0 0
      %6641 = vmatprep.subr.bf16.mxu0 0
      %6642 = vmatpush1.bf16.msra.mxu0 0
      %6643 = vmatprep.subr.bf16.mxu0 0
      %6644 = vmatpush1.bf16.msra.mxu0 0
      %6645 = vmatprep.subr.bf16.mxu0 0
      %6646 = vmatpush1.bf16.msra.mxu0 0
      %6647 = vmatprep.subr.bf16.mxu0 0
      %6648 = vmatpush1.bf16.msra.mxu0 0
      %6649 = vmatprep.subr.bf16.mxu0 0
      %6650 = vmatpush1.bf16.msra.mxu0 %v6612
      %6651 = vmatprep.subr.bf16.mxu0 0
      %6652 = vmatpush1.bf16.msra.mxu0 %v6610
      %6653 = vmatprep.subr.bf16.mxu0 0
      %6654 = vmatpush2.bf16.msra.mxu0 0
      %6655 = vmatprep.subr.bf16.mxu0 0
      %6656 = vmatpush2.bf16.msra.mxu0 0
      %6657 = vmatprep.subr.bf16.mxu0 0
      %6658 = vmatpush2.bf16.msra.mxu0 0
      %6659 = vmatprep.subr.bf16.mxu0 0
      %6660 = vmatpush2.bf16.msra.mxu0 0
      %6661 = vmatprep.subr.bf16.mxu0 0
      %6662 = vmatpush2.bf16.msra.mxu0 0
      %6663 = vmatprep.subr.bf16.mxu0 0
      %6664 = vmatpush2.bf16.msra.mxu0 0
      %6665 = vmatprep.subr.bf16.mxu0 0
      %6666 = vmatpush2.bf16.msra.mxu0 0
      %6667 = vmatprep.subr.bf16.mxu0 0
      %6668 = vmatpush2.bf16.msra.mxu0 0
      %6669 = vmatprep.mubr.bf16.mxu0 0
      %6670 = vmatmul.mubr.bf16.gmra.mxu0 %v6632
      %v6671 = vpop.f32.mrf.mxu0
      %v6672 = vadd.f32 %v6620, %v6671
      %v6673 = vpop.f32.mrf.mxu0
      %v6674 = vpop.f32.mrf.mxu0
      %v6675 = vadd.f32 %v6622, %v6674
      %v6676 = vpop.f32.mrf.mxu0
      %6677 = vmatprep.mubr.bf16.mxu0 0
      %6678 = vmatmul.mubr.bf16.gmra.mxu0 %v6635
      %v6679 = vpop.f32.mrf.mxu0
      %v6680 = vadd.f32 %v6624, %v6679
      %v6681 = vpop.f32.mrf.mxu0
      %v6682 = vpop.f32.mrf.mxu0
      %v6683 = vadd.f32 %v6626, %v6682
      %v6684 = vpop.f32.mrf.mxu0
      %6685 = vdwg.mxu0
      %6686 = vrot.lane.b32.xlu0 %v1674, 32
      %v6687 = vpop.permute.xlu0 %6686
      %6688 = vrot.lane.b32.xlu0 %v1675, 32
      %v6689 = vpop.permute.xlu0 %6688
      %6696 = vrot.lane.b32.xlu0 %v1578, 64
      %v6697 = vpop.permute.xlu0 %6696
      %6698 = vrot.lane.b32.xlu0 %v1579, 64
      %v6699 = vpop.permute.xlu0 %6698
      %6700 = vrot.lane.b32.xlu0 %v1580, 64
      %v6701 = vpop.permute.xlu0 %6700
      %6702 = vrot.lane.b32.xlu0 %v1581, 64
      %v6703 = vpop.permute.xlu0 %6702
      %v6709 = vsel %vm1712, %v5422, 0
      %v6712 = vsel %vm1712, %v5423, 0
      %6714 = vmatprep.subr.bf16.mxu0 0
      %6715 = vmatpush1.bf16.msra.mxu0 0
      %6716 = vmatprep.subr.bf16.mxu0 0
      %6717 = vmatpush1.bf16.msra.mxu0 0
      %6718 = vmatprep.subr.bf16.mxu0 0
      %6719 = vmatpush1.bf16.msra.mxu0 0
      %6720 = vmatprep.subr.bf16.mxu0 0
      %6721 = vmatpush1.bf16.msra.mxu0 0
      %6722 = vmatprep.subr.bf16.mxu0 0
      %6723 = vmatpush1.bf16.msra.mxu0 0
      %6724 = vmatprep.subr.bf16.mxu0 0
      %6725 = vmatpush1.bf16.msra.mxu0 0
      %6726 = vmatprep.subr.bf16.mxu0 0
      %6727 = vmatpush1.bf16.msra.mxu0 %v6689
      %6728 = vmatprep.subr.bf16.mxu0 0
      %6729 = vmatpush1.bf16.msra.mxu0 %v6687
      %6730 = vmatprep.subr.bf16.mxu0 0
      %6731 = vmatpush2.bf16.msra.mxu0 0
      %6732 = vmatprep.subr.bf16.mxu0 0
      %6733 = vmatpush2.bf16.msra.mxu0 0
      %6734 = vmatprep.subr.bf16.mxu0 0
      %6735 = vmatpush2.bf16.msra.mxu0 0
      %6736 = vmatprep.subr.bf16.mxu0 0
      %6737 = vmatpush2.bf16.msra.mxu0 0
      %6738 = vmatprep.subr.bf16.mxu0 0
      %6739 = vmatpush2.bf16.msra.mxu0 0
      %6740 = vmatprep.subr.bf16.mxu0 0
      %6741 = vmatpush2.bf16.msra.mxu0 0
      %6742 = vmatprep.subr.bf16.mxu0 0
      %6743 = vmatpush2.bf16.msra.mxu0 0
      %6744 = vmatprep.subr.bf16.mxu0 0
      %6745 = vmatpush2.bf16.msra.mxu0 0
      %6746 = vmatprep.mubr.bf16.mxu0 0
      %6747 = vmatmul.mubr.bf16.gmra.mxu0 %v6709
      %v6748 = vpop.f32.mrf.mxu0
      %v6749 = vadd.f32 %v6697, %v6748
      %v6750 = vpop.f32.mrf.mxu0
      %v6751 = vpop.f32.mrf.mxu0
      %v6752 = vadd.f32 %v6699, %v6751
      %v6753 = vpop.f32.mrf.mxu0
      %6754 = vmatprep.mubr.bf16.mxu0 0
      %6755 = vmatmul.mubr.bf16.gmra.mxu0 %v6712
      %v6756 = vpop.f32.mrf.mxu0
      %v6757 = vadd.f32 %v6701, %v6756
      %v6758 = vpop.f32.mrf.mxu0
      %v6759 = vpop.f32.mrf.mxu0
      %v6760 = vadd.f32 %v6703, %v6759
      %v6761 = vpop.f32.mrf.mxu0
      %6762 = vdwg.mxu0
      %6763 = vrot.lane.b32.xlu0 %v1676, 32
      %v6764 = vpop.permute.xlu0 %6763
      %6765 = vrot.lane.b32.xlu0 %v1677, 32
      %v6766 = vpop.permute.xlu0 %6765
      %6773 = vrot.lane.b32.xlu0 %v1582, 64
      %v6774 = vpop.permute.xlu0 %6773
      %6775 = vrot.lane.b32.xlu0 %v1583, 64
      %v6776 = vpop.permute.xlu0 %6775
      %6777 = vrot.lane.b32.xlu0 %v1584, 64
      %v6778 = vpop.permute.xlu0 %6777
      %6779 = vrot.lane.b32.xlu0 %v1585, 64
      %v6780 = vpop.permute.xlu0 %6779
      %v6786 = vsel %vm1712, %v5424, 0
      %v6789 = vsel %vm1712, %v5425, 0
      %6791 = vmatprep.subr.bf16.mxu0 0
      %6792 = vmatpush1.bf16.msra.mxu0 0
      %6793 = vmatprep.subr.bf16.mxu0 0
      %6794 = vmatpush1.bf16.msra.mxu0 0
      %6795 = vmatprep.subr.bf16.mxu0 0
      %6796 = vmatpush1.bf16.msra.mxu0 0
      %6797 = vmatprep.subr.bf16.mxu0 0
      %6798 = vmatpush1.bf16.msra.mxu0 0
      %6799 = vmatprep.subr.bf16.mxu0 0
      %6800 = vmatpush1.bf16.msra.mxu0 0
      %6801 = vmatprep.subr.bf16.mxu0 0
      %6802 = vmatpush1.bf16.msra.mxu0 0
      %6803 = vmatprep.subr.bf16.mxu0 0
      %6804 = vmatpush1.bf16.msra.mxu0 %v6766
      %6805 = vmatprep.subr.bf16.mxu0 0
      %6806 = vmatpush1.bf16.msra.mxu0 %v6764
      %6807 = vmatprep.subr.bf16.mxu0 0
      %6808 = vmatpush2.bf16.msra.mxu0 0
      %6809 = vmatprep.subr.bf16.mxu0 0
      %6810 = vmatpush2.bf16.msra.mxu0 0
      %6811 = vmatprep.subr.bf16.mxu0 0
      %6812 = vmatpush2.bf16.msra.mxu0 0
      %6813 = vmatprep.subr.bf16.mxu0 0
      %6814 = vmatpush2.bf16.msra.mxu0 0
      %6815 = vmatprep.subr.bf16.mxu0 0
      %6816 = vmatpush2.bf16.msra.mxu0 0
      %6817 = vmatprep.subr.bf16.mxu0 0
      %6818 = vmatpush2.bf16.msra.mxu0 0
      %6819 = vmatprep.subr.bf16.mxu0 0
      %6820 = vmatpush2.bf16.msra.mxu0 0
      %6821 = vmatprep.subr.bf16.mxu0 0
      %6822 = vmatpush2.bf16.msra.mxu0 0
      %6823 = vmatprep.mubr.bf16.mxu0 0
      %6824 = vmatmul.mubr.bf16.gmra.mxu0 %v6786
      %v6825 = vpop.f32.mrf.mxu0
      %v6826 = vadd.f32 %v6774, %v6825
      %v6827 = vpop.f32.mrf.mxu0
      %v6828 = vpop.f32.mrf.mxu0
      %v6829 = vadd.f32 %v6776, %v6828
      %v6830 = vpop.f32.mrf.mxu0
      %6831 = vmatprep.mubr.bf16.mxu0 0
      %6832 = vmatmul.mubr.bf16.gmra.mxu0 %v6789
      %v6833 = vpop.f32.mrf.mxu0
      %v6834 = vadd.f32 %v6778, %v6833
      %v6835 = vpop.f32.mrf.mxu0
      %v6836 = vpop.f32.mrf.mxu0
      %v6837 = vadd.f32 %v6780, %v6836
      %v6838 = vpop.f32.mrf.mxu0
      %6839 = vdwg.mxu0
      %6840 = vrot.lane.b32.xlu0 %v1678, 32
      %v6841 = vpop.permute.xlu0 %6840
      %6842 = vrot.lane.b32.xlu0 %v1679, 32
      %v6843 = vpop.permute.xlu0 %6842
      %6850 = vrot.lane.b32.xlu0 %v1586, 64
      %v6851 = vpop.permute.xlu0 %6850
      %6852 = vrot.lane.b32.xlu0 %v1587, 64
      %v6853 = vpop.permute.xlu0 %6852
      %6854 = vrot.lane.b32.xlu0 %v1588, 64
      %v6855 = vpop.permute.xlu0 %6854
      %6856 = vrot.lane.b32.xlu0 %v1589, 64
      %v6857 = vpop.permute.xlu0 %6856
      %v6863 = vsel %vm1712, %v5426, 0
      %v6866 = vsel %vm1712, %v5427, 0
      %6868 = vmatprep.subr.bf16.mxu0 0
      %6869 = vmatpush1.bf16.msra.mxu0 0
      %6870 = vmatprep.subr.bf16.mxu0 0
      %6871 = vmatpush1.bf16.msra.mxu0 0
      %6872 = vmatprep.subr.bf16.mxu0 0
      %6873 = vmatpush1.bf16.msra.mxu0 0
      %6874 = vmatprep.subr.bf16.mxu0 0
      %6875 = vmatpush1.bf16.msra.mxu0 0
      %6876 = vmatprep.subr.bf16.mxu0 0
      %6877 = vmatpush1.bf16.msra.mxu0 0
      %6878 = vmatprep.subr.bf16.mxu0 0
      %6879 = vmatpush1.bf16.msra.mxu0 0
      %6880 = vmatprep.subr.bf16.mxu0 0
      %6881 = vmatpush1.bf16.msra.mxu0 %v6843
      %6882 = vmatprep.subr.bf16.mxu0 0
      %6883 = vmatpush1.bf16.msra.mxu0 %v6841
      %6884 = vmatprep.subr.bf16.mxu0 0
      %6885 = vmatpush2.bf16.msra.mxu0 0
      %6886 = vmatprep.subr.bf16.mxu0 0
      %6887 = vmatpush2.bf16.msra.mxu0 0
      %6888 = vmatprep.subr.bf16.mxu0 0
      %6889 = vmatpush2.bf16.msra.mxu0 0
      %6890 = vmatprep.subr.bf16.mxu0 0
      %6891 = vmatpush2.bf16.msra.mxu0 0
      %6892 = vmatprep.subr.bf16.mxu0 0
      %6893 = vmatpush2.bf16.msra.mxu0 0
      %6894 = vmatprep.subr.bf16.mxu0 0
      %6895 = vmatpush2.bf16.msra.mxu0 0
      %6896 = vmatprep.subr.bf16.mxu0 0
      %6897 = vmatpush2.bf16.msra.mxu0 0
      %6898 = vmatprep.subr.bf16.mxu0 0
      %6899 = vmatpush2.bf16.msra.mxu0 0
      %6900 = vmatprep.mubr.bf16.mxu0 0
      %6901 = vmatmul.mubr.bf16.gmra.mxu0 %v6863
      %v6902 = vpop.f32.mrf.mxu0
      %v6903 = vadd.f32 %v6851, %v6902
      %v6904 = vpop.f32.mrf.mxu0
      %v6905 = vpop.f32.mrf.mxu0
      %v6906 = vadd.f32 %v6853, %v6905
      %v6907 = vpop.f32.mrf.mxu0
      %6908 = vmatprep.mubr.bf16.mxu0 0
      %6909 = vmatmul.mubr.bf16.gmra.mxu0 %v6866
      %v6910 = vpop.f32.mrf.mxu0
      %v6911 = vadd.f32 %v6855, %v6910
      %v6912 = vpop.f32.mrf.mxu0
      %v6913 = vpop.f32.mrf.mxu0
      %v6914 = vadd.f32 %v6857, %v6913
      %v6915 = vpop.f32.mrf.mxu0
      %6916 = vdwg.mxu0
      %6917 = vrot.lane.b32.xlu0 %v1680, 32
      %v6918 = vpop.permute.xlu0 %6917
      %6919 = vrot.lane.b32.xlu0 %v1681, 32
      %v6920 = vpop.permute.xlu0 %6919
      %6927 = vrot.lane.b32.xlu0 %v1590, 64
      %v6928 = vpop.permute.xlu0 %6927
      %6929 = vrot.lane.b32.xlu0 %v1591, 64
      %v6930 = vpop.permute.xlu0 %6929
      %6931 = vrot.lane.b32.xlu0 %v1592, 64
      %v6932 = vpop.permute.xlu0 %6931
      %6933 = vrot.lane.b32.xlu0 %v1593, 64
      %v6934 = vpop.permute.xlu0 %6933
      %v6940 = vsel %vm1712, %v5428, 0
      %v6943 = vsel %vm1712, %v5429, 0
      %6945 = vmatprep.subr.bf16.mxu0 0
      %6946 = vmatpush1.bf16.msra.mxu0 0
      %6947 = vmatprep.subr.bf16.mxu0 0
      %6948 = vmatpush1.bf16.msra.mxu0 0
      %6949 = vmatprep.subr.bf16.mxu0 0
      %6950 = vmatpush1.bf16.msra.mxu0 0
      %6951 = vmatprep.subr.bf16.mxu0 0
      %6952 = vmatpush1.bf16.msra.mxu0 0
      %6953 = vmatprep.subr.bf16.mxu0 0
      %6954 = vmatpush1.bf16.msra.mxu0 0
      %6955 = vmatprep.subr.bf16.mxu0 0
      %6956 = vmatpush1.bf16.msra.mxu0 0
      %6957 = vmatprep.subr.bf16.mxu0 0
      %6958 = vmatpush1.bf16.msra.mxu0 %v6920
      %6959 = vmatprep.subr.bf16.mxu0 0
      %6960 = vmatpush1.bf16.msra.mxu0 %v6918
      %6961 = vmatprep.subr.bf16.mxu0 0
      %6962 = vmatpush2.bf16.msra.mxu0 0
      %6963 = vmatprep.subr.bf16.mxu0 0
      %6964 = vmatpush2.bf16.msra.mxu0 0
      %6965 = vmatprep.subr.bf16.mxu0 0
      %6966 = vmatpush2.bf16.msra.mxu0 0
      %6967 = vmatprep.subr.bf16.mxu0 0
      %6968 = vmatpush2.bf16.msra.mxu0 0
      %6969 = vmatprep.subr.bf16.mxu0 0
      %6970 = vmatpush2.bf16.msra.mxu0 0
      %6971 = vmatprep.subr.bf16.mxu0 0
      %6972 = vmatpush2.bf16.msra.mxu0 0
      %6973 = vmatprep.subr.bf16.mxu0 0
      %6974 = vmatpush2.bf16.msra.mxu0 0
      %6975 = vmatprep.subr.bf16.mxu0 0
      %6976 = vmatpush2.bf16.msra.mxu0 0
      %6977 = vmatprep.mubr.bf16.mxu0 0
      %6978 = vmatmul.mubr.bf16.gmra.mxu0 %v6940
      %v6979 = vpop.f32.mrf.mxu0
      %v6980 = vadd.f32 %v6928, %v6979
      %v6981 = vpop.f32.mrf.mxu0
      %v6982 = vpop.f32.mrf.mxu0
      %v6983 = vadd.f32 %v6930, %v6982
      %v6984 = vpop.f32.mrf.mxu0
      %6985 = vmatprep.mubr.bf16.mxu0 0
      %6986 = vmatmul.mubr.bf16.gmra.mxu0 %v6943
      %v6987 = vpop.f32.mrf.mxu0
      %v6988 = vadd.f32 %v6932, %v6987
      %v6989 = vpop.f32.mrf.mxu0
      %v6990 = vpop.f32.mrf.mxu0
      %v6991 = vadd.f32 %v6934, %v6990
      %v6992 = vpop.f32.mrf.mxu0
      %6993 = vdwg.mxu0
      %6994 = vrot.lane.b32.xlu0 %v1682, 32
      %v6995 = vpop.permute.xlu0 %6994
      %6996 = vrot.lane.b32.xlu0 %v1683, 32
      %v6997 = vpop.permute.xlu0 %6996
      %7004 = vrot.lane.b32.xlu0 %v1594, 64
      %v7005 = vpop.permute.xlu0 %7004
      %7006 = vrot.lane.b32.xlu0 %v1595, 64
      %v7007 = vpop.permute.xlu0 %7006
      %7008 = vrot.lane.b32.xlu0 %v1596, 64
      %v7009 = vpop.permute.xlu0 %7008
      %7010 = vrot.lane.b32.xlu0 %v1597, 64
      %v7011 = vpop.permute.xlu0 %7010
      %v7017 = vsel %vm1712, %v5430, 0
      %v7020 = vsel %vm1712, %v5431, 0
      %7022 = vmatprep.subr.bf16.mxu0 0
      %7023 = vmatpush1.bf16.msra.mxu0 0
      %7024 = vmatprep.subr.bf16.mxu0 0
      %7025 = vmatpush1.bf16.msra.mxu0 0
      %7026 = vmatprep.subr.bf16.mxu0 0
      %7027 = vmatpush1.bf16.msra.mxu0 0
      %7028 = vmatprep.subr.bf16.mxu0 0
      %7029 = vmatpush1.bf16.msra.mxu0 0
      %7030 = vmatprep.subr.bf16.mxu0 0
      %7031 = vmatpush1.bf16.msra.mxu0 0
      %7032 = vmatprep.subr.bf16.mxu0 0
      %7033 = vmatpush1.bf16.msra.mxu0 0
      %7034 = vmatprep.subr.bf16.mxu0 0
      %7035 = vmatpush1.bf16.msra.mxu0 %v6997
      %7036 = vmatprep.subr.bf16.mxu0 0
      %7037 = vmatpush1.bf16.msra.mxu0 %v6995
      %7038 = vmatprep.subr.bf16.mxu0 0
      %7039 = vmatpush2.bf16.msra.mxu0 0
      %7040 = vmatprep.subr.bf16.mxu0 0
      %7041 = vmatpush2.bf16.msra.mxu0 0
      %7042 = vmatprep.subr.bf16.mxu0 0
      %7043 = vmatpush2.bf16.msra.mxu0 0
      %7044 = vmatprep.subr.bf16.mxu0 0
      %7045 = vmatpush2.bf16.msra.mxu0 0
      %7046 = vmatprep.subr.bf16.mxu0 0
      %7047 = vmatpush2.bf16.msra.mxu0 0
      %7048 = vmatprep.subr.bf16.mxu0 0
      %7049 = vmatpush2.bf16.msra.mxu0 0
      %7050 = vmatprep.subr.bf16.mxu0 0
      %7051 = vmatpush2.bf16.msra.mxu0 0
      %7052 = vmatprep.subr.bf16.mxu0 0
      %7053 = vmatpush2.bf16.msra.mxu0 0
      %7054 = vmatprep.mubr.bf16.mxu0 0
      %7055 = vmatmul.mubr.bf16.gmra.mxu0 %v7017
      %v7056 = vpop.f32.mrf.mxu0
      %v7057 = vadd.f32 %v7005, %v7056
      %v7058 = vpop.f32.mrf.mxu0
      %v7059 = vpop.f32.mrf.mxu0
      %v7060 = vadd.f32 %v7007, %v7059
      %v7061 = vpop.f32.mrf.mxu0
      %7062 = vmatprep.mubr.bf16.mxu0 0
      %7063 = vmatmul.mubr.bf16.gmra.mxu0 %v7020
      %v7064 = vpop.f32.mrf.mxu0
      %v7065 = vadd.f32 %v7009, %v7064
      %v7066 = vpop.f32.mrf.mxu0
      %v7067 = vpop.f32.mrf.mxu0
      %v7068 = vadd.f32 %v7011, %v7067
      %v7069 = vpop.f32.mrf.mxu0
      %7070 = vdwg.mxu0
      %7071 = vrot.lane.b32.xlu0 %v1684, 32
      %v7072 = vpop.permute.xlu0 %7071
      %7073 = vrot.lane.b32.xlu0 %v1685, 32
      %v7074 = vpop.permute.xlu0 %7073
      %7081 = vrot.lane.b32.xlu0 %v1598, 64
      %v7082 = vpop.permute.xlu0 %7081
      %7083 = vrot.lane.b32.xlu0 %v1599, 64
      %v7084 = vpop.permute.xlu0 %7083
      %7085 = vrot.lane.b32.xlu0 %v1600, 64
      %v7086 = vpop.permute.xlu0 %7085
      %7087 = vrot.lane.b32.xlu0 %v1601, 64
      %v7088 = vpop.permute.xlu0 %7087
      %v7094 = vsel %vm1712, %v5432, 0
      %v7097 = vsel %vm1712, %v5433, 0
      %7099 = vmatprep.subr.bf16.mxu0 0
      %7100 = vmatpush1.bf16.msra.mxu0 0
      %7101 = vmatprep.subr.bf16.mxu0 0
      %7102 = vmatpush1.bf16.msra.mxu0 0
      %7103 = vmatprep.subr.bf16.mxu0 0
      %7104 = vmatpush1.bf16.msra.mxu0 0
      %7105 = vmatprep.subr.bf16.mxu0 0
      %7106 = vmatpush1.bf16.msra.mxu0 0
      %7107 = vmatprep.subr.bf16.mxu0 0
      %7108 = vmatpush1.bf16.msra.mxu0 0
      %7109 = vmatprep.subr.bf16.mxu0 0
      %7110 = vmatpush1.bf16.msra.mxu0 0
      %7111 = vmatprep.subr.bf16.mxu0 0
      %7112 = vmatpush1.bf16.msra.mxu0 %v7074
      %7113 = vmatprep.subr.bf16.mxu0 0
      %7114 = vmatpush1.bf16.msra.mxu0 %v7072
      %7115 = vmatprep.subr.bf16.mxu0 0
      %7116 = vmatpush2.bf16.msra.mxu0 0
      %7117 = vmatprep.subr.bf16.mxu0 0
      %7118 = vmatpush2.bf16.msra.mxu0 0
      %7119 = vmatprep.subr.bf16.mxu0 0
      %7120 = vmatpush2.bf16.msra.mxu0 0
      %7121 = vmatprep.subr.bf16.mxu0 0
      %7122 = vmatpush2.bf16.msra.mxu0 0
      %7123 = vmatprep.subr.bf16.mxu0 0
      %7124 = vmatpush2.bf16.msra.mxu0 0
      %7125 = vmatprep.subr.bf16.mxu0 0
      %7126 = vmatpush2.bf16.msra.mxu0 0
      %7127 = vmatprep.subr.bf16.mxu0 0
      %7128 = vmatpush2.bf16.msra.mxu0 0
      %7129 = vmatprep.subr.bf16.mxu0 0
      %7130 = vmatpush2.bf16.msra.mxu0 0
      %7131 = vmatprep.mubr.bf16.mxu0 0
      %7132 = vmatmul.mubr.bf16.gmra.mxu0 %v7094
      %v7133 = vpop.f32.mrf.mxu0
      %v7134 = vadd.f32 %v7082, %v7133
      %v7135 = vpop.f32.mrf.mxu0
      %v7136 = vpop.f32.mrf.mxu0
      %v7137 = vadd.f32 %v7084, %v7136
      %v7138 = vpop.f32.mrf.mxu0
      %7139 = vmatprep.mubr.bf16.mxu0 0
      %7140 = vmatmul.mubr.bf16.gmra.mxu0 %v7097
      %v7141 = vpop.f32.mrf.mxu0
      %v7142 = vadd.f32 %v7086, %v7141
      %v7143 = vpop.f32.mrf.mxu0
      %v7144 = vpop.f32.mrf.mxu0
      %v7145 = vadd.f32 %v7088, %v7144
      %v7146 = vpop.f32.mrf.mxu0
      %7147 = vdwg.mxu0
      %7148 = vrot.lane.b32.xlu0 %v1686, 32
      %v7149 = vpop.permute.xlu0 %7148
      %7150 = vrot.lane.b32.xlu0 %v1687, 32
      %v7151 = vpop.permute.xlu0 %7150
      %7158 = vrot.lane.b32.xlu0 %v1602, 64
      %v7159 = vpop.permute.xlu0 %7158
      %7160 = vrot.lane.b32.xlu0 %v1603, 64
      %v7161 = vpop.permute.xlu0 %7160
      %7162 = vrot.lane.b32.xlu0 %v1604, 64
      %v7163 = vpop.permute.xlu0 %7162
      %7164 = vrot.lane.b32.xlu0 %v1605, 64
      %v7165 = vpop.permute.xlu0 %7164
      %v7171 = vsel %vm1712, %v5434, 0
      %v7174 = vsel %vm1712, %v5435, 0
      %7176 = vmatprep.subr.bf16.mxu0 0
      %7177 = vmatpush1.bf16.msra.mxu0 0
      %7178 = vmatprep.subr.bf16.mxu0 0
      %7179 = vmatpush1.bf16.msra.mxu0 0
      %7180 = vmatprep.subr.bf16.mxu0 0
      %7181 = vmatpush1.bf16.msra.mxu0 0
      %7182 = vmatprep.subr.bf16.mxu0 0
      %7183 = vmatpush1.bf16.msra.mxu0 0
      %7184 = vmatprep.subr.bf16.mxu0 0
      %7185 = vmatpush1.bf16.msra.mxu0 0
      %7186 = vmatprep.subr.bf16.mxu0 0
      %7187 = vmatpush1.bf16.msra.mxu0 0
      %7188 = vmatprep.subr.bf16.mxu0 0
      %7189 = vmatpush1.bf16.msra.mxu0 %v7151
      %7190 = vmatprep.subr.bf16.mxu0 0
      %7191 = vmatpush1.bf16.msra.mxu0 %v7149
      %7192 = vmatprep.subr.bf16.mxu0 0
      %7193 = vmatpush2.bf16.msra.mxu0 0
      %7194 = vmatprep.subr.bf16.mxu0 0
      %7195 = vmatpush2.bf16.msra.mxu0 0
      %7196 = vmatprep.subr.bf16.mxu0 0
      %7197 = vmatpush2.bf16.msra.mxu0 0
      %7198 = vmatprep.subr.bf16.mxu0 0
      %7199 = vmatpush2.bf16.msra.mxu0 0
      %7200 = vmatprep.subr.bf16.mxu0 0
      %7201 = vmatpush2.bf16.msra.mxu0 0
      %7202 = vmatprep.subr.bf16.mxu0 0
      %7203 = vmatpush2.bf16.msra.mxu0 0
      %7204 = vmatprep.subr.bf16.mxu0 0
      %7205 = vmatpush2.bf16.msra.mxu0 0
      %7206 = vmatprep.subr.bf16.mxu0 0
      %7207 = vmatpush2.bf16.msra.mxu0 0
      %7208 = vmatprep.mubr.bf16.mxu0 0
      %7209 = vmatmul.mubr.bf16.gmra.mxu0 %v7171
      %v7210 = vpop.f32.mrf.mxu0
      %v7211 = vadd.f32 %v7159, %v7210
      %v7212 = vpop.f32.mrf.mxu0
      %v7213 = vpop.f32.mrf.mxu0
      %v7214 = vadd.f32 %v7161, %v7213
      %v7215 = vpop.f32.mrf.mxu0
      %7216 = vmatprep.mubr.bf16.mxu0 0
      %7217 = vmatmul.mubr.bf16.gmra.mxu0 %v7174
      %v7218 = vpop.f32.mrf.mxu0
      %v7219 = vadd.f32 %v7163, %v7218
      %v7220 = vpop.f32.mrf.mxu0
      %v7221 = vpop.f32.mrf.mxu0
      %v7222 = vadd.f32 %v7165, %v7221
      %v7223 = vpop.f32.mrf.mxu0
      %7224 = vdwg.mxu0
      %7225 = vrot.lane.b32.xlu0 %v1688, 32
      %v7226 = vpop.permute.xlu0 %7225
      %7227 = vrot.lane.b32.xlu0 %v1689, 32
      %v7228 = vpop.permute.xlu0 %7227
      %7235 = vrot.lane.b32.xlu0 %v1606, 64
      %v7236 = vpop.permute.xlu0 %7235
      %7237 = vrot.lane.b32.xlu0 %v1607, 64
      %v7238 = vpop.permute.xlu0 %7237
      %7239 = vrot.lane.b32.xlu0 %v1608, 64
      %v7240 = vpop.permute.xlu0 %7239
      %7241 = vrot.lane.b32.xlu0 %v1609, 64
      %v7242 = vpop.permute.xlu0 %7241
      %v7248 = vsel %vm1712, %v5436, 0
      %v7251 = vsel %vm1712, %v5437, 0
      %7253 = vmatprep.subr.bf16.mxu0 0
      %7254 = vmatpush1.bf16.msra.mxu0 0
      %7255 = vmatprep.subr.bf16.mxu0 0
      %7256 = vmatpush1.bf16.msra.mxu0 0
      %7257 = vmatprep.subr.bf16.mxu0 0
      %7258 = vmatpush1.bf16.msra.mxu0 0
      %7259 = vmatprep.subr.bf16.mxu0 0
      %7260 = vmatpush1.bf16.msra.mxu0 0
      %7261 = vmatprep.subr.bf16.mxu0 0
      %7262 = vmatpush1.bf16.msra.mxu0 0
      %7263 = vmatprep.subr.bf16.mxu0 0
      %7264 = vmatpush1.bf16.msra.mxu0 0
      %7265 = vmatprep.subr.bf16.mxu0 0
      %7266 = vmatpush1.bf16.msra.mxu0 %v7228
      %7267 = vmatprep.subr.bf16.mxu0 0
      %7268 = vmatpush1.bf16.msra.mxu0 %v7226
      %7269 = vmatprep.subr.bf16.mxu0 0
      %7270 = vmatpush2.bf16.msra.mxu0 0
      %7271 = vmatprep.subr.bf16.mxu0 0
      %7272 = vmatpush2.bf16.msra.mxu0 0
      %7273 = vmatprep.subr.bf16.mxu0 0
      %7274 = vmatpush2.bf16.msra.mxu0 0
      %7275 = vmatprep.subr.bf16.mxu0 0
      %7276 = vmatpush2.bf16.msra.mxu0 0
      %7277 = vmatprep.subr.bf16.mxu0 0
      %7278 = vmatpush2.bf16.msra.mxu0 0
      %7279 = vmatprep.subr.bf16.mxu0 0
      %7280 = vmatpush2.bf16.msra.mxu0 0
      %7281 = vmatprep.subr.bf16.mxu0 0
      %7282 = vmatpush2.bf16.msra.mxu0 0
      %7283 = vmatprep.subr.bf16.mxu0 0
      %7284 = vmatpush2.bf16.msra.mxu0 0
      %7285 = vmatprep.mubr.bf16.mxu0 0
      %7286 = vmatmul.mubr.bf16.gmra.mxu0 %v7248
      %v7287 = vpop.f32.mrf.mxu0
      %v7288 = vadd.f32 %v7236, %v7287
      %v7289 = vpop.f32.mrf.mxu0
      %v7290 = vpop.f32.mrf.mxu0
      %v7291 = vadd.f32 %v7238, %v7290
      %v7292 = vpop.f32.mrf.mxu0
      %7293 = vmatprep.mubr.bf16.mxu0 0
      %7294 = vmatmul.mubr.bf16.gmra.mxu0 %v7251
      %v7295 = vpop.f32.mrf.mxu0
      %v7296 = vadd.f32 %v7240, %v7295
      %v7297 = vpop.f32.mrf.mxu0
      %v7298 = vpop.f32.mrf.mxu0
      %v7299 = vadd.f32 %v7242, %v7298
      %v7300 = vpop.f32.mrf.mxu0
      %7301 = vdwg.mxu0
      %7302 = vrot.lane.b32.xlu0 %v1690, 32
      %v7303 = vpop.permute.xlu0 %7302
      %7304 = vrot.lane.b32.xlu0 %v1691, 32
      %v7305 = vpop.permute.xlu0 %7304
      %7312 = vrot.lane.b32.xlu0 %v1610, 64
      %v7313 = vpop.permute.xlu0 %7312
      %7314 = vrot.lane.b32.xlu0 %v1611, 64
      %v7315 = vpop.permute.xlu0 %7314
      %7316 = vrot.lane.b32.xlu0 %v1612, 64
      %v7317 = vpop.permute.xlu0 %7316
      %7318 = vrot.lane.b32.xlu0 %v1613, 64
      %v7319 = vpop.permute.xlu0 %7318
      %v7325 = vsel %vm1712, %v5438, 0
      %v7328 = vsel %vm1712, %v5439, 0
      %7330 = vmatprep.subr.bf16.mxu0 0
      %7331 = vmatpush1.bf16.msra.mxu0 0
      %7332 = vmatprep.subr.bf16.mxu0 0
      %7333 = vmatpush1.bf16.msra.mxu0 0
      %7334 = vmatprep.subr.bf16.mxu0 0
      %7335 = vmatpush1.bf16.msra.mxu0 0
      %7336 = vmatprep.subr.bf16.mxu0 0
      %7337 = vmatpush1.bf16.msra.mxu0 0
      %7338 = vmatprep.subr.bf16.mxu0 0
      %7339 = vmatpush1.bf16.msra.mxu0 0
      %7340 = vmatprep.subr.bf16.mxu0 0
      %7341 = vmatpush1.bf16.msra.mxu0 0
      %7342 = vmatprep.subr.bf16.mxu0 0
      %7343 = vmatpush1.bf16.msra.mxu0 %v7305
      %7344 = vmatprep.subr.bf16.mxu0 0
      %7345 = vmatpush1.bf16.msra.mxu0 %v7303
      %7346 = vmatprep.subr.bf16.mxu0 0
      %7347 = vmatpush2.bf16.msra.mxu0 0
      %7348 = vmatprep.subr.bf16.mxu0 0
      %7349 = vmatpush2.bf16.msra.mxu0 0
      %7350 = vmatprep.subr.bf16.mxu0 0
      %7351 = vmatpush2.bf16.msra.mxu0 0
      %7352 = vmatprep.subr.bf16.mxu0 0
      %7353 = vmatpush2.bf16.msra.mxu0 0
      %7354 = vmatprep.subr.bf16.mxu0 0
      %7355 = vmatpush2.bf16.msra.mxu0 0
      %7356 = vmatprep.subr.bf16.mxu0 0
      %7357 = vmatpush2.bf16.msra.mxu0 0
      %7358 = vmatprep.subr.bf16.mxu0 0
      %7359 = vmatpush2.bf16.msra.mxu0 0
      %7360 = vmatprep.subr.bf16.mxu0 0
      %7361 = vmatpush2.bf16.msra.mxu0 0
      %7362 = vmatprep.mubr.bf16.mxu0 0
      %7363 = vmatmul.mubr.bf16.gmra.mxu0 %v7325
      %v7364 = vpop.f32.mrf.mxu0
      %v7365 = vadd.f32 %v7313, %v7364
      %v7366 = vpop.f32.mrf.mxu0
      %v7367 = vpop.f32.mrf.mxu0
      %v7368 = vadd.f32 %v7315, %v7367
      %v7369 = vpop.f32.mrf.mxu0
      %7370 = vmatprep.mubr.bf16.mxu0 0
      %7371 = vmatmul.mubr.bf16.gmra.mxu0 %v7328
      %v7372 = vpop.f32.mrf.mxu0
      %v7373 = vadd.f32 %v7317, %v7372
      %v7374 = vpop.f32.mrf.mxu0
      %v7375 = vpop.f32.mrf.mxu0
      %v7376 = vadd.f32 %v7319, %v7375
      %v7377 = vpop.f32.mrf.mxu0
      %7378 = vdwg.mxu0
      %7379 = vrot.lane.b32.xlu0 %v1692, 32
      %v7380 = vpop.permute.xlu0 %7379
      %7381 = vrot.lane.b32.xlu0 %v1693, 32
      %v7382 = vpop.permute.xlu0 %7381
      %7389 = vrot.lane.b32.xlu0 %v1614, 64
      %v7390 = vpop.permute.xlu0 %7389
      %7391 = vrot.lane.b32.xlu0 %v1615, 64
      %v7392 = vpop.permute.xlu0 %7391
      %7393 = vrot.lane.b32.xlu0 %v1616, 64
      %v7394 = vpop.permute.xlu0 %7393
      %7395 = vrot.lane.b32.xlu0 %v1617, 64
      %v7396 = vpop.permute.xlu0 %7395
      %v7402 = vsel %vm1712, %v5440, 0
      %v7405 = vsel %vm1712, %v5441, 0
      %7407 = vmatprep.subr.bf16.mxu0 0
      %7408 = vmatpush1.bf16.msra.mxu0 0
      %7409 = vmatprep.subr.bf16.mxu0 0
      %7410 = vmatpush1.bf16.msra.mxu0 0
      %7411 = vmatprep.subr.bf16.mxu0 0
      %7412 = vmatpush1.bf16.msra.mxu0 0
      %7413 = vmatprep.subr.bf16.mxu0 0
      %7414 = vmatpush1.bf16.msra.mxu0 0
      %7415 = vmatprep.subr.bf16.mxu0 0
      %7416 = vmatpush1.bf16.msra.mxu0 0
      %7417 = vmatprep.subr.bf16.mxu0 0
      %7418 = vmatpush1.bf16.msra.mxu0 0
      %7419 = vmatprep.subr.bf16.mxu0 0
      %7420 = vmatpush1.bf16.msra.mxu0 %v7382
      %7421 = vmatprep.subr.bf16.mxu0 0
      %7422 = vmatpush1.bf16.msra.mxu0 %v7380
      %7423 = vmatprep.subr.bf16.mxu0 0
      %7424 = vmatpush2.bf16.msra.mxu0 0
      %7425 = vmatprep.subr.bf16.mxu0 0
      %7426 = vmatpush2.bf16.msra.mxu0 0
      %7427 = vmatprep.subr.bf16.mxu0 0
      %7428 = vmatpush2.bf16.msra.mxu0 0
      %7429 = vmatprep.subr.bf16.mxu0 0
      %7430 = vmatpush2.bf16.msra.mxu0 0
      %7431 = vmatprep.subr.bf16.mxu0 0
      %7432 = vmatpush2.bf16.msra.mxu0 0
      %7433 = vmatprep.subr.bf16.mxu0 0
      %7434 = vmatpush2.bf16.msra.mxu0 0
      %7435 = vmatprep.subr.bf16.mxu0 0
      %7436 = vmatpush2.bf16.msra.mxu0 0
      %7437 = vmatprep.subr.bf16.mxu0 0
      %7438 = vmatpush2.bf16.msra.mxu0 0
      %7439 = vmatprep.mubr.bf16.mxu0 0
      %7440 = vmatmul.mubr.bf16.gmra.mxu0 %v7402
      %v7441 = vpop.f32.mrf.mxu0
      %v7442 = vadd.f32 %v7390, %v7441
      %v7443 = vpop.f32.mrf.mxu0
      %v7444 = vpop.f32.mrf.mxu0
      %v7445 = vadd.f32 %v7392, %v7444
      %v7446 = vpop.f32.mrf.mxu0
      %7447 = vmatprep.mubr.bf16.mxu0 0
      %7448 = vmatmul.mubr.bf16.gmra.mxu0 %v7405
      %v7449 = vpop.f32.mrf.mxu0
      %v7450 = vadd.f32 %v7394, %v7449
      %v7451 = vpop.f32.mrf.mxu0
      %v7452 = vpop.f32.mrf.mxu0
      %v7453 = vadd.f32 %v7396, %v7452
      %v7454 = vpop.f32.mrf.mxu0
      %7455 = vdwg.mxu0
      %7456 = vrot.lane.b32.xlu0 %v1694, 32
      %v7457 = vpop.permute.xlu0 %7456
      %7458 = vrot.lane.b32.xlu0 %v1695, 32
      %v7459 = vpop.permute.xlu0 %7458
      %7466 = vrot.lane.b32.xlu0 %v1618, 64
      %v7467 = vpop.permute.xlu0 %7466
      %7468 = vrot.lane.b32.xlu0 %v1619, 64
      %v7469 = vpop.permute.xlu0 %7468
      %7470 = vrot.lane.b32.xlu0 %v1620, 64
      %v7471 = vpop.permute.xlu0 %7470
      %7472 = vrot.lane.b32.xlu0 %v1621, 64
      %v7473 = vpop.permute.xlu0 %7472
      %v7479 = vsel %vm1712, %v5442, 0
      %v7482 = vsel %vm1712, %v5443, 0
      %7484 = vmatprep.subr.bf16.mxu0 0
      %7485 = vmatpush1.bf16.msra.mxu0 0
      %7486 = vmatprep.subr.bf16.mxu0 0
      %7487 = vmatpush1.bf16.msra.mxu0 0
      %7488 = vmatprep.subr.bf16.mxu0 0
      %7489 = vmatpush1.bf16.msra.mxu0 0
      %7490 = vmatprep.subr.bf16.mxu0 0
      %7491 = vmatpush1.bf16.msra.mxu0 0
      %7492 = vmatprep.subr.bf16.mxu0 0
      %7493 = vmatpush1.bf16.msra.mxu0 0
      %7494 = vmatprep.subr.bf16.mxu0 0
      %7495 = vmatpush1.bf16.msra.mxu0 0
      %7496 = vmatprep.subr.bf16.mxu0 0
      %7497 = vmatpush1.bf16.msra.mxu0 %v7459
      %7498 = vmatprep.subr.bf16.mxu0 0
      %7499 = vmatpush1.bf16.msra.mxu0 %v7457
      %7500 = vmatprep.subr.bf16.mxu0 0
      %7501 = vmatpush2.bf16.msra.mxu0 0
      %7502 = vmatprep.subr.bf16.mxu0 0
      %7503 = vmatpush2.bf16.msra.mxu0 0
      %7504 = vmatprep.subr.bf16.mxu0 0
      %7505 = vmatpush2.bf16.msra.mxu0 0
      %7506 = vmatprep.subr.bf16.mxu0 0
      %7507 = vmatpush2.bf16.msra.mxu0 0
      %7508 = vmatprep.subr.bf16.mxu0 0
      %7509 = vmatpush2.bf16.msra.mxu0 0
      %7510 = vmatprep.subr.bf16.mxu0 0
      %7511 = vmatpush2.bf16.msra.mxu0 0
      %7512 = vmatprep.subr.bf16.mxu0 0
      %7513 = vmatpush2.bf16.msra.mxu0 0
      %7514 = vmatprep.subr.bf16.mxu0 0
      %7515 = vmatpush2.bf16.msra.mxu0 0
      %7516 = vmatprep.mubr.bf16.mxu0 0
      %7517 = vmatmul.mubr.bf16.gmra.mxu0 %v7479
      %v7518 = vpop.f32.mrf.mxu0
      %v7519 = vadd.f32 %v7467, %v7518
      %v7520 = vpop.f32.mrf.mxu0
      %v7521 = vpop.f32.mrf.mxu0
      %v7522 = vadd.f32 %v7469, %v7521
      %v7523 = vpop.f32.mrf.mxu0
      %7524 = vmatprep.mubr.bf16.mxu0 0
      %7525 = vmatmul.mubr.bf16.gmra.mxu0 %v7482
      %v7526 = vpop.f32.mrf.mxu0
      %v7527 = vadd.f32 %v7471, %v7526
      %v7528 = vpop.f32.mrf.mxu0
      %v7529 = vpop.f32.mrf.mxu0
      %v7530 = vadd.f32 %v7473, %v7529
      %v7531 = vpop.f32.mrf.mxu0
      %7532 = vdwg.mxu0
      %7533 = vrot.lane.b32.xlu0 %v1696, 32
      %v7534 = vpop.permute.xlu0 %7533
      %7535 = vrot.lane.b32.xlu0 %v1697, 32
      %v7536 = vpop.permute.xlu0 %7535
      %7543 = vrot.lane.b32.xlu0 %v1622, 64
      %v7544 = vpop.permute.xlu0 %7543
      %7545 = vrot.lane.b32.xlu0 %v1623, 64
      %v7546 = vpop.permute.xlu0 %7545
      %7547 = vrot.lane.b32.xlu0 %v1624, 64
      %v7548 = vpop.permute.xlu0 %7547
      %7549 = vrot.lane.b32.xlu0 %v1625, 64
      %v7550 = vpop.permute.xlu0 %7549
      %v7556 = vsel %vm1712, %v5444, 0
      %v7559 = vsel %vm1712, %v5445, 0
      %7561 = vmatprep.subr.bf16.mxu0 0
      %7562 = vmatpush1.bf16.msra.mxu0 0
      %7563 = vmatprep.subr.bf16.mxu0 0
      %7564 = vmatpush1.bf16.msra.mxu0 0
      %7565 = vmatprep.subr.bf16.mxu0 0
      %7566 = vmatpush1.bf16.msra.mxu0 0
      %7567 = vmatprep.subr.bf16.mxu0 0
      %7568 = vmatpush1.bf16.msra.mxu0 0
      %7569 = vmatprep.subr.bf16.mxu0 0
      %7570 = vmatpush1.bf16.msra.mxu0 0
      %7571 = vmatprep.subr.bf16.mxu0 0
      %7572 = vmatpush1.bf16.msra.mxu0 0
      %7573 = vmatprep.subr.bf16.mxu0 0
      %7574 = vmatpush1.bf16.msra.mxu0 %v7536
      %7575 = vmatprep.subr.bf16.mxu0 0
      %7576 = vmatpush1.bf16.msra.mxu0 %v7534
      %7577 = vmatprep.subr.bf16.mxu0 0
      %7578 = vmatpush2.bf16.msra.mxu0 0
      %7579 = vmatprep.subr.bf16.mxu0 0
      %7580 = vmatpush2.bf16.msra.mxu0 0
      %7581 = vmatprep.subr.bf16.mxu0 0
      %7582 = vmatpush2.bf16.msra.mxu0 0
      %7583 = vmatprep.subr.bf16.mxu0 0
      %7584 = vmatpush2.bf16.msra.mxu0 0
      %7585 = vmatprep.subr.bf16.mxu0 0
      %7586 = vmatpush2.bf16.msra.mxu0 0
      %7587 = vmatprep.subr.bf16.mxu0 0
      %7588 = vmatpush2.bf16.msra.mxu0 0
      %7589 = vmatprep.subr.bf16.mxu0 0
      %7590 = vmatpush2.bf16.msra.mxu0 0
      %7591 = vmatprep.subr.bf16.mxu0 0
      %7592 = vmatpush2.bf16.msra.mxu0 0
      %7593 = vmatprep.mubr.bf16.mxu0 0
      %7594 = vmatmul.mubr.bf16.gmra.mxu0 %v7556
      %v7595 = vpop.f32.mrf.mxu0
      %v7596 = vadd.f32 %v7544, %v7595
      %v7597 = vpop.f32.mrf.mxu0
      %v7598 = vpop.f32.mrf.mxu0
      %v7599 = vadd.f32 %v7546, %v7598
      %v7600 = vpop.f32.mrf.mxu0
      %7601 = vmatprep.mubr.bf16.mxu0 0
      %7602 = vmatmul.mubr.bf16.gmra.mxu0 %v7559
      %v7603 = vpop.f32.mrf.mxu0
      %v7604 = vadd.f32 %v7548, %v7603
      %v7605 = vpop.f32.mrf.mxu0
      %v7606 = vpop.f32.mrf.mxu0
      %v7607 = vadd.f32 %v7550, %v7606
      %v7608 = vpop.f32.mrf.mxu0
      %7609 = vdwg.mxu0
      %7610 = vrot.lane.b32.xlu0 %v1698, 32
      %v7611 = vpop.permute.xlu0 %7610
      %7612 = vrot.lane.b32.xlu0 %v1699, 32
      %v7613 = vpop.permute.xlu0 %7612
      %7620 = vrot.lane.b32.xlu0 %v1626, 64
      %v7621 = vpop.permute.xlu0 %7620
      %7622 = vrot.lane.b32.xlu0 %v1627, 64
      %v7623 = vpop.permute.xlu0 %7622
      %7624 = vrot.lane.b32.xlu0 %v1628, 64
      %v7625 = vpop.permute.xlu0 %7624
      %7626 = vrot.lane.b32.xlu0 %v1629, 64
      %v7627 = vpop.permute.xlu0 %7626
      %v7633 = vsel %vm1712, %v5446, 0
      %v7636 = vsel %vm1712, %v5447, 0
      %7638 = vmatprep.subr.bf16.mxu0 0
      %7639 = vmatpush1.bf16.msra.mxu0 0
      %7640 = vmatprep.subr.bf16.mxu0 0
      %7641 = vmatpush1.bf16.msra.mxu0 0
      %7642 = vmatprep.subr.bf16.mxu0 0
      %7643 = vmatpush1.bf16.msra.mxu0 0
      %7644 = vmatprep.subr.bf16.mxu0 0
      %7645 = vmatpush1.bf16.msra.mxu0 0
      %7646 = vmatprep.subr.bf16.mxu0 0
      %7647 = vmatpush1.bf16.msra.mxu0 0
      %7648 = vmatprep.subr.bf16.mxu0 0
      %7649 = vmatpush1.bf16.msra.mxu0 0
      %7650 = vmatprep.subr.bf16.mxu0 0
      %7651 = vmatpush1.bf16.msra.mxu0 %v7613
      %7652 = vmatprep.subr.bf16.mxu0 0
      %7653 = vmatpush1.bf16.msra.mxu0 %v7611
      %7654 = vmatprep.subr.bf16.mxu0 0
      %7655 = vmatpush2.bf16.msra.mxu0 0
      %7656 = vmatprep.subr.bf16.mxu0 0
      %7657 = vmatpush2.bf16.msra.mxu0 0
      %7658 = vmatprep.subr.bf16.mxu0 0
      %7659 = vmatpush2.bf16.msra.mxu0 0
      %7660 = vmatprep.subr.bf16.mxu0 0
      %7661 = vmatpush2.bf16.msra.mxu0 0
      %7662 = vmatprep.subr.bf16.mxu0 0
      %7663 = vmatpush2.bf16.msra.mxu0 0
      %7664 = vmatprep.subr.bf16.mxu0 0
      %7665 = vmatpush2.bf16.msra.mxu0 0
      %7666 = vmatprep.subr.bf16.mxu0 0
      %7667 = vmatpush2.bf16.msra.mxu0 0
      %7668 = vmatprep.subr.bf16.mxu0 0
      %7669 = vmatpush2.bf16.msra.mxu0 0
      %7670 = vmatprep.mubr.bf16.mxu0 0
      %7671 = vmatmul.mubr.bf16.gmra.mxu0 %v7633
      %v7672 = vpop.f32.mrf.mxu0
      %v7673 = vadd.f32 %v7621, %v7672
      %v7674 = vpop.f32.mrf.mxu0
      %v7675 = vpop.f32.mrf.mxu0
      %v7676 = vadd.f32 %v7623, %v7675
      %v7677 = vpop.f32.mrf.mxu0
      %7678 = vmatprep.mubr.bf16.mxu0 0
      %7679 = vmatmul.mubr.bf16.gmra.mxu0 %v7636
      %v7680 = vpop.f32.mrf.mxu0
      %v7681 = vadd.f32 %v7625, %v7680
      %v7682 = vpop.f32.mrf.mxu0
      %v7683 = vpop.f32.mrf.mxu0
      %v7684 = vadd.f32 %v7627, %v7683
      %v7685 = vpop.f32.mrf.mxu0
      %7686 = vdwg.mxu0
      %7687 = vrot.lane.b32.xlu0 %v1700, 32
      %v7688 = vpop.permute.xlu0 %7687
      %7689 = vrot.lane.b32.xlu0 %v1701, 32
      %v7690 = vpop.permute.xlu0 %7689
      %7697 = vrot.lane.b32.xlu0 %v1630, 64
      %v7698 = vpop.permute.xlu0 %7697
      %7699 = vrot.lane.b32.xlu0 %v1631, 64
      %v7700 = vpop.permute.xlu0 %7699
      %7701 = vrot.lane.b32.xlu0 %v1632, 64
      %v7702 = vpop.permute.xlu0 %7701
      %7703 = vrot.lane.b32.xlu0 %v1633, 64
      %v7704 = vpop.permute.xlu0 %7703
      %v7710 = vsel %vm1712, %v5448, 0
      %v7713 = vsel %vm1712, %v5449, 0
      %7715 = vmatprep.subr.bf16.mxu0 0
      %7716 = vmatpush1.bf16.msra.mxu0 0
      %7717 = vmatprep.subr.bf16.mxu0 0
      %7718 = vmatpush1.bf16.msra.mxu0 0
      %7719 = vmatprep.subr.bf16.mxu0 0
      %7720 = vmatpush1.bf16.msra.mxu0 0
      %7721 = vmatprep.subr.bf16.mxu0 0
      %7722 = vmatpush1.bf16.msra.mxu0 0
      %7723 = vmatprep.subr.bf16.mxu0 0
      %7724 = vmatpush1.bf16.msra.mxu0 0
      %7725 = vmatprep.subr.bf16.mxu0 0
      %7726 = vmatpush1.bf16.msra.mxu0 0
      %7727 = vmatprep.subr.bf16.mxu0 0
      %7728 = vmatpush1.bf16.msra.mxu0 %v7690
      %7729 = vmatprep.subr.bf16.mxu0 0
      %7730 = vmatpush1.bf16.msra.mxu0 %v7688
      %7731 = vmatprep.subr.bf16.mxu0 0
      %7732 = vmatpush2.bf16.msra.mxu0 0
      %7733 = vmatprep.subr.bf16.mxu0 0
      %7734 = vmatpush2.bf16.msra.mxu0 0
      %7735 = vmatprep.subr.bf16.mxu0 0
      %7736 = vmatpush2.bf16.msra.mxu0 0
      %7737 = vmatprep.subr.bf16.mxu0 0
      %7738 = vmatpush2.bf16.msra.mxu0 0
      %7739 = vmatprep.subr.bf16.mxu0 0
      %7740 = vmatpush2.bf16.msra.mxu0 0
      %7741 = vmatprep.subr.bf16.mxu0 0
      %7742 = vmatpush2.bf16.msra.mxu0 0
      %7743 = vmatprep.subr.bf16.mxu0 0
      %7744 = vmatpush2.bf16.msra.mxu0 0
      %7745 = vmatprep.subr.bf16.mxu0 0
      %7746 = vmatpush2.bf16.msra.mxu0 0
      %7747 = vmatprep.mubr.bf16.mxu0 0
      %7748 = vmatmul.mubr.bf16.gmra.mxu0 %v7710
      %v7749 = vpop.f32.mrf.mxu0
      %v7750 = vadd.f32 %v7698, %v7749
      %v7751 = vpop.f32.mrf.mxu0
      %v7752 = vpop.f32.mrf.mxu0
      %v7753 = vadd.f32 %v7700, %v7752
      %v7754 = vpop.f32.mrf.mxu0
      %7755 = vmatprep.mubr.bf16.mxu0 0
      %7756 = vmatmul.mubr.bf16.gmra.mxu0 %v7713
      %v7757 = vpop.f32.mrf.mxu0
      %v7758 = vadd.f32 %v7702, %v7757
      %v7759 = vpop.f32.mrf.mxu0
      %v7760 = vpop.f32.mrf.mxu0
      %v7761 = vadd.f32 %v7704, %v7760
      %v7762 = vpop.f32.mrf.mxu0
      %7763 = vdwg.mxu0
      %7764 = vrot.lane.b32.xlu0 %v1702, 32
      %v7765 = vpop.permute.xlu0 %7764
      %7766 = vrot.lane.b32.xlu0 %v1703, 32
      %v7767 = vpop.permute.xlu0 %7766
      %7774 = vrot.lane.b32.xlu0 %v1634, 64
      %v7775 = vpop.permute.xlu0 %7774
      %7776 = vrot.lane.b32.xlu0 %v1635, 64
      %v7777 = vpop.permute.xlu0 %7776
      %7778 = vrot.lane.b32.xlu0 %v1636, 64
      %v7779 = vpop.permute.xlu0 %7778
      %7780 = vrot.lane.b32.xlu0 %v1637, 64
      %v7781 = vpop.permute.xlu0 %7780
      %v7787 = vsel %vm1712, %v5450, 0
      %v7790 = vsel %vm1712, %v5451, 0
      %7792 = vmatprep.subr.bf16.mxu0 0
      %7793 = vmatpush1.bf16.msra.mxu0 0
      %7794 = vmatprep.subr.bf16.mxu0 0
      %7795 = vmatpush1.bf16.msra.mxu0 0
      %7796 = vmatprep.subr.bf16.mxu0 0
      %7797 = vmatpush1.bf16.msra.mxu0 0
      %7798 = vmatprep.subr.bf16.mxu0 0
      %7799 = vmatpush1.bf16.msra.mxu0 0
      %7800 = vmatprep.subr.bf16.mxu0 0
      %7801 = vmatpush1.bf16.msra.mxu0 0
      %7802 = vmatprep.subr.bf16.mxu0 0
      %7803 = vmatpush1.bf16.msra.mxu0 0
      %7804 = vmatprep.subr.bf16.mxu0 0
      %7805 = vmatpush1.bf16.msra.mxu0 %v7767
      %7806 = vmatprep.subr.bf16.mxu0 0
      %7807 = vmatpush1.bf16.msra.mxu0 %v7765
      %7808 = vmatprep.subr.bf16.mxu0 0
      %7809 = vmatpush2.bf16.msra.mxu0 0
      %7810 = vmatprep.subr.bf16.mxu0 0
      %7811 = vmatpush2.bf16.msra.mxu0 0
      %7812 = vmatprep.subr.bf16.mxu0 0
      %7813 = vmatpush2.bf16.msra.mxu0 0
      %7814 = vmatprep.subr.bf16.mxu0 0
      %7815 = vmatpush2.bf16.msra.mxu0 0
      %7816 = vmatprep.subr.bf16.mxu0 0
      %7817 = vmatpush2.bf16.msra.mxu0 0
      %7818 = vmatprep.subr.bf16.mxu0 0
      %7819 = vmatpush2.bf16.msra.mxu0 0
      %7820 = vmatprep.subr.bf16.mxu0 0
      %7821 = vmatpush2.bf16.msra.mxu0 0
      %7822 = vmatprep.subr.bf16.mxu0 0
      %7823 = vmatpush2.bf16.msra.mxu0 0
      %7824 = vmatprep.mubr.bf16.mxu0 0
      %7825 = vmatmul.mubr.bf16.gmra.mxu0 %v7787
      %v7826 = vpop.f32.mrf.mxu0
      %v7827 = vadd.f32 %v7775, %v7826
      %v7828 = vpop.f32.mrf.mxu0
      %v7829 = vpop.f32.mrf.mxu0
      %v7830 = vadd.f32 %v7777, %v7829
      %v7831 = vpop.f32.mrf.mxu0
      %7832 = vmatprep.mubr.bf16.mxu0 0
      %7833 = vmatmul.mubr.bf16.gmra.mxu0 %v7790
      %v7834 = vpop.f32.mrf.mxu0
      %v7835 = vadd.f32 %v7779, %v7834
      %v7836 = vpop.f32.mrf.mxu0
      %v7837 = vpop.f32.mrf.mxu0
      %v7838 = vadd.f32 %v7781, %v7837
      %v7839 = vpop.f32.mrf.mxu0
      %7840 = vdwg.mxu0
      %7841 = vrot.lane.b32.xlu0 %v1704, 32
      %v7842 = vpop.permute.xlu0 %7841
      %7843 = vrot.lane.b32.xlu0 %v1705, 32
      %v7844 = vpop.permute.xlu0 %7843
      %7851 = vrot.lane.b32.xlu0 %v1638, 64
      %v7852 = vpop.permute.xlu0 %7851
      %7853 = vrot.lane.b32.xlu0 %v1639, 64
      %v7854 = vpop.permute.xlu0 %7853
      %7855 = vrot.lane.b32.xlu0 %v1640, 64
      %v7856 = vpop.permute.xlu0 %7855
      %7857 = vrot.lane.b32.xlu0 %v1641, 64
      %v7858 = vpop.permute.xlu0 %7857
      %v7864 = vsel %vm1712, %v5452, 0
      %v7867 = vsel %vm1712, %v5453, 0
      %7869 = vmatprep.subr.bf16.mxu0 0
      %7870 = vmatpush1.bf16.msra.mxu0 0
      %7871 = vmatprep.subr.bf16.mxu0 0
      %7872 = vmatpush1.bf16.msra.mxu0 0
      %7873 = vmatprep.subr.bf16.mxu0 0
      %7874 = vmatpush1.bf16.msra.mxu0 0
      %7875 = vmatprep.subr.bf16.mxu0 0
      %7876 = vmatpush1.bf16.msra.mxu0 0
      %7877 = vmatprep.subr.bf16.mxu0 0
      %7878 = vmatpush1.bf16.msra.mxu0 0
      %7879 = vmatprep.subr.bf16.mxu0 0
      %7880 = vmatpush1.bf16.msra.mxu0 0
      %7881 = vmatprep.subr.bf16.mxu0 0
      %7882 = vmatpush1.bf16.msra.mxu0 %v7844
      %7883 = vmatprep.subr.bf16.mxu0 0
      %7884 = vmatpush1.bf16.msra.mxu0 %v7842
      %7885 = vmatprep.subr.bf16.mxu0 0
      %7886 = vmatpush2.bf16.msra.mxu0 0
      %7887 = vmatprep.subr.bf16.mxu0 0
      %7888 = vmatpush2.bf16.msra.mxu0 0
      %7889 = vmatprep.subr.bf16.mxu0 0
      %7890 = vmatpush2.bf16.msra.mxu0 0
      %7891 = vmatprep.subr.bf16.mxu0 0
      %7892 = vmatpush2.bf16.msra.mxu0 0
      %7893 = vmatprep.subr.bf16.mxu0 0
      %7894 = vmatpush2.bf16.msra.mxu0 0
      %7895 = vmatprep.subr.bf16.mxu0 0
      %7896 = vmatpush2.bf16.msra.mxu0 0
      %7897 = vmatprep.subr.bf16.mxu0 0
      %7898 = vmatpush2.bf16.msra.mxu0 0
      %7899 = vmatprep.subr.bf16.mxu0 0
      %7900 = vmatpush2.bf16.msra.mxu0 0
      %7901 = vmatprep.mubr.bf16.mxu0 0
      %7902 = vmatmul.mubr.bf16.gmra.mxu0 %v7864
      %v7903 = vpop.f32.mrf.mxu0
      %v7904 = vadd.f32 %v7852, %v7903
      %v7905 = vpop.f32.mrf.mxu0
      %v7906 = vpop.f32.mrf.mxu0
      %v7907 = vadd.f32 %v7854, %v7906
      %v7908 = vpop.f32.mrf.mxu0
      %7909 = vmatprep.mubr.bf16.mxu0 0
      %7910 = vmatmul.mubr.bf16.gmra.mxu0 %v7867
      %v7911 = vpop.f32.mrf.mxu0
      %v7912 = vadd.f32 %v7856, %v7911
      %v7913 = vpop.f32.mrf.mxu0
      %v7914 = vpop.f32.mrf.mxu0
      %v7915 = vadd.f32 %v7858, %v7914
      %v7916 = vpop.f32.mrf.mxu0
      %7917 = vdwg.mxu0
      %v7918 = vld [vmem:[%s4] sm:$0x1]
      %v7920 = vlaneseq
      %v7921 = vshrl.u32 %v7920, 7
      %v7922 = vsub.s32 0, %v7921
      %v7923 = vrot.slane %v7918, %v7922
      %v7925 = vmul.f32 %v5517, %v7923
      %v7926 = vmul.f32 %v5520, %v7923
      %v7927 = vmul.f32 %v5525, %v7923
      %v7928 = vmul.f32 %v5528, %v7923
      %v7929 = vmul.f32 %v5594, %v7923
      %v7930 = vmul.f32 %v5597, %v7923
      %v7931 = vmul.f32 %v5602, %v7923
      %v7932 = vmul.f32 %v5605, %v7923
      %v7933 = vmul.f32 %v5671, %v7923
      %v7934 = vmul.f32 %v5674, %v7923
      %v7935 = vmul.f32 %v5679, %v7923
      %v7936 = vmul.f32 %v5682, %v7923
      %v7937 = vmul.f32 %v5748, %v7923
      %v7938 = vmul.f32 %v5751, %v7923
      %v7939 = vmul.f32 %v5756, %v7923
      %v7940 = vmul.f32 %v5759, %v7923
      %v7941 = vmul.f32 %v5825, %v7923
      %v7942 = vmul.f32 %v5828, %v7923
      %v7943 = vmul.f32 %v5833, %v7923
      %v7944 = vmul.f32 %v5836, %v7923
      %v7945 = vmul.f32 %v5902, %v7923
      %v7946 = vmul.f32 %v5905, %v7923
      %v7947 = vmul.f32 %v5910, %v7923
      %v7948 = vmul.f32 %v5913, %v7923
      %v7949 = vmul.f32 %v5979, %v7923
      %v7950 = vmul.f32 %v5982, %v7923
      %v7951 = vmul.f32 %v5987, %v7923
      %v7952 = vmul.f32 %v5990, %v7923
      %v7953 = vmul.f32 %v6056, %v7923
      %v7954 = vmul.f32 %v6059, %v7923
      %v7955 = vmul.f32 %v6064, %v7923
      %v7956 = vmul.f32 %v6067, %v7923
      %v7957 = vmul.f32 %v6133, %v7923
      %v7958 = vmul.f32 %v6136, %v7923
      %v7959 = vmul.f32 %v6141, %v7923
      %v7960 = vmul.f32 %v6144, %v7923
      %v7961 = vmul.f32 %v6210, %v7923
      %v7962 = vmul.f32 %v6213, %v7923
      %v7963 = vmul.f32 %v6218, %v7923
      %v7964 = vmul.f32 %v6221, %v7923
      %v7965 = vmul.f32 %v6287, %v7923
      %v7966 = vmul.f32 %v6290, %v7923
      %v7967 = vmul.f32 %v6295, %v7923
      %v7968 = vmul.f32 %v6298, %v7923
      %v7969 = vmul.f32 %v6364, %v7923
      %v7970 = vmul.f32 %v6367, %v7923
      %v7971 = vmul.f32 %v6372, %v7923
      %v7972 = vmul.f32 %v6375, %v7923
      %v7973 = vmul.f32 %v6441, %v7923
      %v7974 = vmul.f32 %v6444, %v7923
      %v7975 = vmul.f32 %v6449, %v7923
      %v7976 = vmul.f32 %v6452, %v7923
      %v7977 = vmul.f32 %v6518, %v7923
      %v7978 = vmul.f32 %v6521, %v7923
      %v7979 = vmul.f32 %v6526, %v7923
      %v7980 = vmul.f32 %v6529, %v7923
      %v7981 = vmul.f32 %v6595, %v7923
      %v7982 = vmul.f32 %v6598, %v7923
      %v7983 = vmul.f32 %v6603, %v7923
      %v7984 = vmul.f32 %v6606, %v7923
      %v7985 = vmul.f32 %v6672, %v7923
      %v7986 = vmul.f32 %v6675, %v7923
      %v7987 = vmul.f32 %v6680, %v7923
      %v7988 = vmul.f32 %v6683, %v7923
      %v7989 = vmul.f32 %v6749, %v7923
      %v7990 = vmul.f32 %v6752, %v7923
      %v7991 = vmul.f32 %v6757, %v7923
      %v7992 = vmul.f32 %v6760, %v7923
      %v7993 = vmul.f32 %v6826, %v7923
      %v7994 = vmul.f32 %v6829, %v7923
      %v7995 = vmul.f32 %v6834, %v7923
      %v7996 = vmul.f32 %v6837, %v7923
      %v7997 = vmul.f32 %v6903, %v7923
      %v7998 = vmul.f32 %v6906, %v7923
      %v7999 = vmul.f32 %v6911, %v7923
      %v8000 = vmul.f32 %v6914, %v7923
      %v8001 = vmul.f32 %v6980, %v7923
      %v8002 = vmul.f32 %v6983, %v7923
      %v8003 = vmul.f32 %v6988, %v7923
      %v8004 = vmul.f32 %v6991, %v7923
      %v8005 = vmul.f32 %v7057, %v7923
      %v8006 = vmul.f32 %v7060, %v7923
      %v8007 = vmul.f32 %v7065, %v7923
      %v8008 = vmul.f32 %v7068, %v7923
      %v8009 = vmul.f32 %v7134, %v7923
      %v8010 = vmul.f32 %v7137, %v7923
      %v8011 = vmul.f32 %v7142, %v7923
      %v8012 = vmul.f32 %v7145, %v7923
      %v8013 = vmul.f32 %v7211, %v7923
      %v8014 = vmul.f32 %v7214, %v7923
      %v8015 = vmul.f32 %v7219, %v7923
      %v8016 = vmul.f32 %v7222, %v7923
      %v8017 = vmul.f32 %v7288, %v7923
      %v8018 = vmul.f32 %v7291, %v7923
      %v8019 = vmul.f32 %v7296, %v7923
      %v8020 = vmul.f32 %v7299, %v7923
      %v8021 = vmul.f32 %v7365, %v7923
      %v8022 = vmul.f32 %v7368, %v7923
      %v8023 = vmul.f32 %v7373, %v7923
      %v8024 = vmul.f32 %v7376, %v7923
      %v8025 = vmul.f32 %v7442, %v7923
      %v8026 = vmul.f32 %v7445, %v7923
      %v8027 = vmul.f32 %v7450, %v7923
      %v8028 = vmul.f32 %v7453, %v7923
      %v8029 = vmul.f32 %v7519, %v7923
      %v8030 = vmul.f32 %v7522, %v7923
      %v8031 = vmul.f32 %v7527, %v7923
      %v8032 = vmul.f32 %v7530, %v7923
      %v8033 = vmul.f32 %v7596, %v7923
      %v8034 = vmul.f32 %v7599, %v7923
      %v8035 = vmul.f32 %v7604, %v7923
      %v8036 = vmul.f32 %v7607, %v7923
      %v8037 = vmul.f32 %v7673, %v7923
      %v8038 = vmul.f32 %v7676, %v7923
      %v8039 = vmul.f32 %v7681, %v7923
      %v8040 = vmul.f32 %v7684, %v7923
      %v8041 = vmul.f32 %v7750, %v7923
      %v8042 = vmul.f32 %v7753, %v7923
      %v8043 = vmul.f32 %v7758, %v7923
      %v8044 = vmul.f32 %v7761, %v7923
      %v8045 = vmul.f32 %v7827, %v7923
      %v8046 = vmul.f32 %v7830, %v7923
      %v8047 = vmul.f32 %v7835, %v7923
      %v8048 = vmul.f32 %v7838, %v7923
      %v8049 = vmul.f32 %v7904, %v7923
      %v8050 = vmul.f32 %v7907, %v7923
      %v8051 = vmul.f32 %v7912, %v7923
      %v8052 = vmul.f32 %v7915, %v7923
      %v8053 = vld [vmem:[%s5] sm:$0x1]
      %v8055 = vlaneseq
      %v8056 = vshrl.u32 %v8055, 7
      %v8057 = vsub.s32 0, %v8056
      %v8058 = vrot.slane %v8053, %v8057
      %v8060 = vadd.f32 %v7925, %v8058
      %v8061 = vadd.f32 %v7926, %v8058
      %v8062 = vadd.f32 %v7927, %v8058
      %v8063 = vadd.f32 %v7928, %v8058
      %v8064 = vadd.f32 %v7929, %v8058
      %v8065 = vadd.f32 %v7930, %v8058
      %v8066 = vadd.f32 %v7931, %v8058
      %v8067 = vadd.f32 %v7932, %v8058
      %v8068 = vadd.f32 %v7933, %v8058
      %v8069 = vadd.f32 %v7934, %v8058
      %v8070 = vadd.f32 %v7935, %v8058
      %v8071 = vadd.f32 %v7936, %v8058
      %v8072 = vadd.f32 %v7937, %v8058
      %v8073 = vadd.f32 %v7938, %v8058
      %v8074 = vadd.f32 %v7939, %v8058
      %v8075 = vadd.f32 %v7940, %v8058
      %v8076 = vadd.f32 %v7941, %v8058
      %v8077 = vadd.f32 %v7942, %v8058
      %v8078 = vadd.f32 %v7943, %v8058
      %v8079 = vadd.f32 %v7944, %v8058
      %v8080 = vadd.f32 %v7945, %v8058
      %v8081 = vadd.f32 %v7946, %v8058
      %v8082 = vadd.f32 %v7947, %v8058
      %v8083 = vadd.f32 %v7948, %v8058
      %v8084 = vadd.f32 %v7949, %v8058
      %v8085 = vadd.f32 %v7950, %v8058
      %v8086 = vadd.f32 %v7951, %v8058
      %v8087 = vadd.f32 %v7952, %v8058
      %v8088 = vadd.f32 %v7953, %v8058
      %v8089 = vadd.f32 %v7954, %v8058
      %v8090 = vadd.f32 %v7955, %v8058
      %v8091 = vadd.f32 %v7956, %v8058
      %v8092 = vadd.f32 %v7957, %v8058
      %v8093 = vadd.f32 %v7958, %v8058
      %v8094 = vadd.f32 %v7959, %v8058
      %v8095 = vadd.f32 %v7960, %v8058
      %v8096 = vadd.f32 %v7961, %v8058
      %v8097 = vadd.f32 %v7962, %v8058
      %v8098 = vadd.f32 %v7963, %v8058
      %v8099 = vadd.f32 %v7964, %v8058
      %v8100 = vadd.f32 %v7965, %v8058
      %v8101 = vadd.f32 %v7966, %v8058
      %v8102 = vadd.f32 %v7967, %v8058
      %v8103 = vadd.f32 %v7968, %v8058
      %v8104 = vadd.f32 %v7969, %v8058
      %v8105 = vadd.f32 %v7970, %v8058
      %v8106 = vadd.f32 %v7971, %v8058
      %v8107 = vadd.f32 %v7972, %v8058
      %v8108 = vadd.f32 %v7973, %v8058
      %v8109 = vadd.f32 %v7974, %v8058
      %v8110 = vadd.f32 %v7975, %v8058
      %v8111 = vadd.f32 %v7976, %v8058
      %v8112 = vadd.f32 %v7977, %v8058
      %v8113 = vadd.f32 %v7978, %v8058
      %v8114 = vadd.f32 %v7979, %v8058
      %v8115 = vadd.f32 %v7980, %v8058
      %v8116 = vadd.f32 %v7981, %v8058
      %v8117 = vadd.f32 %v7982, %v8058
      %v8118 = vadd.f32 %v7983, %v8058
      %v8119 = vadd.f32 %v7984, %v8058
      %v8120 = vadd.f32 %v7985, %v8058
      %v8121 = vadd.f32 %v7986, %v8058
      %v8122 = vadd.f32 %v7987, %v8058
      %v8123 = vadd.f32 %v7988, %v8058
      %v8124 = vadd.f32 %v7989, %v8058
      %v8125 = vadd.f32 %v7990, %v8058
      %v8126 = vadd.f32 %v7991, %v8058
      %v8127 = vadd.f32 %v7992, %v8058
      %v8128 = vadd.f32 %v7993, %v8058
      %v8129 = vadd.f32 %v7994, %v8058
      %v8130 = vadd.f32 %v7995, %v8058
      %v8131 = vadd.f32 %v7996, %v8058
      %v8132 = vadd.f32 %v7997, %v8058
      %v8133 = vadd.f32 %v7998, %v8058
      %v8134 = vadd.f32 %v7999, %v8058
      %v8135 = vadd.f32 %v8000, %v8058
      %v8136 = vadd.f32 %v8001, %v8058
      %v8137 = vadd.f32 %v8002, %v8058
      %v8138 = vadd.f32 %v8003, %v8058
      %v8139 = vadd.f32 %v8004, %v8058
      %v8140 = vadd.f32 %v8005, %v8058
      %v8141 = vadd.f32 %v8006, %v8058
      %v8142 = vadd.f32 %v8007, %v8058
      %v8143 = vadd.f32 %v8008, %v8058
      %v8144 = vadd.f32 %v8009, %v8058
      %v8145 = vadd.f32 %v8010, %v8058
      %v8146 = vadd.f32 %v8011, %v8058
      %v8147 = vadd.f32 %v8012, %v8058
      %v8148 = vadd.f32 %v8013, %v8058
      %v8149 = vadd.f32 %v8014, %v8058
      %v8150 = vadd.f32 %v8015, %v8058
      %v8151 = vadd.f32 %v8016, %v8058
      %v8152 = vadd.f32 %v8017, %v8058
      %v8153 = vadd.f32 %v8018, %v8058
      %v8154 = vadd.f32 %v8019, %v8058
      %v8155 = vadd.f32 %v8020, %v8058
      %v8156 = vadd.f32 %v8021, %v8058
      %v8157 = vadd.f32 %v8022, %v8058
      %v8158 = vadd.f32 %v8023, %v8058
      %v8159 = vadd.f32 %v8024, %v8058
      %v8160 = vadd.f32 %v8025, %v8058
      %v8161 = vadd.f32 %v8026, %v8058
      %v8162 = vadd.f32 %v8027, %v8058
      %v8163 = vadd.f32 %v8028, %v8058
      %v8164 = vadd.f32 %v8029, %v8058
      %v8165 = vadd.f32 %v8030, %v8058
      %v8166 = vadd.f32 %v8031, %v8058
      %v8167 = vadd.f32 %v8032, %v8058
      %v8168 = vadd.f32 %v8033, %v8058
      %v8169 = vadd.f32 %v8034, %v8058
      %v8170 = vadd.f32 %v8035, %v8058
      %v8171 = vadd.f32 %v8036, %v8058
      %v8172 = vadd.f32 %v8037, %v8058
      %v8173 = vadd.f32 %v8038, %v8058
      %v8174 = vadd.f32 %v8039, %v8058
      %v8175 = vadd.f32 %v8040, %v8058
      %v8176 = vadd.f32 %v8041, %v8058
      %v8177 = vadd.f32 %v8042, %v8058
      %v8178 = vadd.f32 %v8043, %v8058
      %v8179 = vadd.f32 %v8044, %v8058
      %v8180 = vadd.f32 %v8045, %v8058
      %v8181 = vadd.f32 %v8046, %v8058
      %v8182 = vadd.f32 %v8047, %v8058
      %v8183 = vadd.f32 %v8048, %v8058
      %v8184 = vadd.f32 %v8049, %v8058
      %v8185 = vadd.f32 %v8050, %v8058
      %v8186 = vadd.f32 %v8051, %v8058
      %v8187 = vadd.f32 %v8052, %v8058
      %v8188 = vmax.f32 %v8060, 0.0
      %v8189 = vmax.f32 %v8061, 0.0
      %v8190 = vmax.f32 %v8062, 0.0
      %v8191 = vmax.f32 %v8063, 0.0
      %v8192 = vmax.f32 %v8064, 0.0
      %v8193 = vmax.f32 %v8065, 0.0
      %v8194 = vmax.f32 %v8066, 0.0
      %v8195 = vmax.f32 %v8067, 0.0
      %v8196 = vmax.f32 %v8068, 0.0
      %v8197 = vmax.f32 %v8069, 0.0
      %v8198 = vmax.f32 %v8070, 0.0
      %v8199 = vmax.f32 %v8071, 0.0
      %v8200 = vmax.f32 %v8072, 0.0
      %v8201 = vmax.f32 %v8073, 0.0
      %v8202 = vmax.f32 %v8074, 0.0
      %v8203 = vmax.f32 %v8075, 0.0
      %v8204 = vmax.f32 %v8076, 0.0
      %v8205 = vmax.f32 %v8077, 0.0
      %v8206 = vmax.f32 %v8078, 0.0
      %v8207 = vmax.f32 %v8079, 0.0
      %v8208 = vmax.f32 %v8080, 0.0
      %v8209 = vmax.f32 %v8081, 0.0
      %v8210 = vmax.f32 %v8082, 0.0
      %v8211 = vmax.f32 %v8083, 0.0
      %v8212 = vmax.f32 %v8084, 0.0
      %v8213 = vmax.f32 %v8085, 0.0
      %v8214 = vmax.f32 %v8086, 0.0
      %v8215 = vmax.f32 %v8087, 0.0
      %v8216 = vmax.f32 %v8088, 0.0
      %v8217 = vmax.f32 %v8089, 0.0
      %v8218 = vmax.f32 %v8090, 0.0
      %v8219 = vmax.f32 %v8091, 0.0
      %v8220 = vmax.f32 %v8092, 0.0
      %v8221 = vmax.f32 %v8093, 0.0
      %v8222 = vmax.f32 %v8094, 0.0
      %v8223 = vmax.f32 %v8095, 0.0
      %v8224 = vmax.f32 %v8096, 0.0
      %v8225 = vmax.f32 %v8097, 0.0
      %v8226 = vmax.f32 %v8098, 0.0
      %v8227 = vmax.f32 %v8099, 0.0
      %v8228 = vmax.f32 %v8100, 0.0
      %v8229 = vmax.f32 %v8101, 0.0
      %v8230 = vmax.f32 %v8102, 0.0
      %v8231 = vmax.f32 %v8103, 0.0
      %v8232 = vmax.f32 %v8104, 0.0
      %v8233 = vmax.f32 %v8105, 0.0
      %v8234 = vmax.f32 %v8106, 0.0
      %v8235 = vmax.f32 %v8107, 0.0
      %v8236 = vmax.f32 %v8108, 0.0
      %v8237 = vmax.f32 %v8109, 0.0
      %v8238 = vmax.f32 %v8110, 0.0
      %v8239 = vmax.f32 %v8111, 0.0
      %v8240 = vmax.f32 %v8112, 0.0
      %v8241 = vmax.f32 %v8113, 0.0
      %v8242 = vmax.f32 %v8114, 0.0
      %v8243 = vmax.f32 %v8115, 0.0
      %v8244 = vmax.f32 %v8116, 0.0
      %v8245 = vmax.f32 %v8117, 0.0
      %v8246 = vmax.f32 %v8118, 0.0
      %v8247 = vmax.f32 %v8119, 0.0
      %v8248 = vmax.f32 %v8120, 0.0
      %v8249 = vmax.f32 %v8121, 0.0
      %v8250 = vmax.f32 %v8122, 0.0
      %v8251 = vmax.f32 %v8123, 0.0
      %v8252 = vmax.f32 %v8124, 0.0
      %v8253 = vmax.f32 %v8125, 0.0
      %v8254 = vmax.f32 %v8126, 0.0
      %v8255 = vmax.f32 %v8127, 0.0
      %v8256 = vmax.f32 %v8128, 0.0
      %v8257 = vmax.f32 %v8129, 0.0
      %v8258 = vmax.f32 %v8130, 0.0
      %v8259 = vmax.f32 %v8131, 0.0
      %v8260 = vmax.f32 %v8132, 0.0
      %v8261 = vmax.f32 %v8133, 0.0
      %v8262 = vmax.f32 %v8134, 0.0
      %v8263 = vmax.f32 %v8135, 0.0
      %v8264 = vmax.f32 %v8136, 0.0
      %v8265 = vmax.f32 %v8137, 0.0
      %v8266 = vmax.f32 %v8138, 0.0
      %v8267 = vmax.f32 %v8139, 0.0
      %v8268 = vmax.f32 %v8140, 0.0
      %v8269 = vmax.f32 %v8141, 0.0
      %v8270 = vmax.f32 %v8142, 0.0
      %v8271 = vmax.f32 %v8143, 0.0
      %v8272 = vmax.f32 %v8144, 0.0
      %v8273 = vmax.f32 %v8145, 0.0
      %v8274 = vmax.f32 %v8146, 0.0
      %v8275 = vmax.f32 %v8147, 0.0
      %v8276 = vmax.f32 %v8148, 0.0
      %v8277 = vmax.f32 %v8149, 0.0
      %v8278 = vmax.f32 %v8150, 0.0
      %v8279 = vmax.f32 %v8151, 0.0
      %v8280 = vmax.f32 %v8152, 0.0
      %v8281 = vmax.f32 %v8153, 0.0
      %v8282 = vmax.f32 %v8154, 0.0
      %v8283 = vmax.f32 %v8155, 0.0
      %v8284 = vmax.f32 %v8156, 0.0
      %v8285 = vmax.f32 %v8157, 0.0
      %v8286 = vmax.f32 %v8158, 0.0
      %v8287 = vmax.f32 %v8159, 0.0
      %v8288 = vmax.f32 %v8160, 0.0
      %v8289 = vmax.f32 %v8161, 0.0
      %v8290 = vmax.f32 %v8162, 0.0
      %v8291 = vmax.f32 %v8163, 0.0
      %v8292 = vmax.f32 %v8164, 0.0
      %v8293 = vmax.f32 %v8165, 0.0
      %v8294 = vmax.f32 %v8166, 0.0
      %v8295 = vmax.f32 %v8167, 0.0
      %v8296 = vmax.f32 %v8168, 0.0
      %v8297 = vmax.f32 %v8169, 0.0
      %v8298 = vmax.f32 %v8170, 0.0
      %v8299 = vmax.f32 %v8171, 0.0
      %v8300 = vmax.f32 %v8172, 0.0
      %v8301 = vmax.f32 %v8173, 0.0
      %v8302 = vmax.f32 %v8174, 0.0
      %v8303 = vmax.f32 %v8175, 0.0
      %v8304 = vmax.f32 %v8176, 0.0
      %v8305 = vmax.f32 %v8177, 0.0
      %v8306 = vmax.f32 %v8178, 0.0
      %v8307 = vmax.f32 %v8179, 0.0
      %v8308 = vmax.f32 %v8180, 0.0
      %v8309 = vmax.f32 %v8181, 0.0
      %v8310 = vmax.f32 %v8182, 0.0
      %v8311 = vmax.f32 %v8183, 0.0
      %v8312 = vmax.f32 %v8184, 0.0
      %v8313 = vmax.f32 %v8185, 0.0
      %v8314 = vmax.f32 %v8186, 0.0
      %v8315 = vmax.f32 %v8187, 0.0
      %v8316 = vld [vmem:[%s302] sm:$0x1]
      %v8317 = vld [vmem:[%s302 + $0x1] sm:$0x1]
      %v8318 = vld [vmem:[%s302 + $0x2] sm:$0x1]
      %v8319 = vld [vmem:[%s302 + $0x3] sm:$0x1]
      %v8320 = vld [vmem:[%s302 + $0x4] sm:$0x1]
      %v8321 = vld [vmem:[%s302 + $0x5] sm:$0x1]
      %v8322 = vld [vmem:[%s302 + $0x6] sm:$0x1]
      %v8323 = vld [vmem:[%s302 + $0x7] sm:$0x1]
      %v8324 = vld [vmem:[%s302 + $0x8] sm:$0x1]
      %v8325 = vld [vmem:[%s302 + $0x9] sm:$0x1]
      %v8326 = vld [vmem:[%s302 + $0xa] sm:$0x1]
      %v8327 = vld [vmem:[%s302 + $0xb] sm:$0x1]
      %v8328 = vld [vmem:[%s302 + $0xc] sm:$0x1]
      %v8329 = vld [vmem:[%s302 + $0xd] sm:$0x1]
      %v8330 = vld [vmem:[%s302 + $0xe] sm:$0x1]
      %v8331 = vld [vmem:[%s302 + $0xf] sm:$0x1]
      %v8332 = vld [vmem:[%s302 + $0x10] sm:$0x1]
      %v8333 = vld [vmem:[%s302 + $0x11] sm:$0x1]
      %v8334 = vld [vmem:[%s302 + $0x12] sm:$0x1]
      %v8335 = vld [vmem:[%s302 + $0x13] sm:$0x1]
      %v8336 = vld [vmem:[%s302 + $0x14] sm:$0x1]
      %v8337 = vld [vmem:[%s302 + $0x15] sm:$0x1]
      %v8338 = vld [vmem:[%s302 + $0x16] sm:$0x1]
      %v8339 = vld [vmem:[%s302 + $0x17] sm:$0x1]
      %v8340 = vld [vmem:[%s302 + $0x18] sm:$0x1]
      %v8341 = vld [vmem:[%s302 + $0x19] sm:$0x1]
      %v8342 = vld [vmem:[%s302 + $0x1a] sm:$0x1]
      %v8343 = vld [vmem:[%s302 + $0x1b] sm:$0x1]
      %v8344 = vld [vmem:[%s302 + $0x1c] sm:$0x1]
      %v8345 = vld [vmem:[%s302 + $0x1d] sm:$0x1]
      %v8346 = vld [vmem:[%s302 + $0x1e] sm:$0x1]
      %v8347 = vld [vmem:[%s302 + $0x1f] sm:$0x1]
      %v8380 = vlaneseq
      %v8381 = vshrl.u32 %v8380, 7
      %v8382 = vsub.s32 0, %v8381
      %v8383 = vrot.slane %v8316, %v8382
      %v8384 = vlaneseq
      %v8385 = vshrl.u32 %v8384, 7
      %v8386 = vsub.s32 0, %v8385
      %v8387 = vrot.slane %v8317, %v8386
      %v8388 = vlaneseq
      %v8389 = vshrl.u32 %v8388, 7
      %v8390 = vsub.s32 0, %v8389
      %v8391 = vrot.slane %v8318, %v8390
      %v8392 = vlaneseq
      %v8393 = vshrl.u32 %v8392, 7
      %v8394 = vsub.s32 0, %v8393
      %v8395 = vrot.slane %v8319, %v8394
      %v8396 = vlaneseq
      %v8397 = vshrl.u32 %v8396, 7
      %v8398 = vsub.s32 0, %v8397
      %v8399 = vrot.slane %v8320, %v8398
      %v8400 = vlaneseq
      %v8401 = vshrl.u32 %v8400, 7
      %v8402 = vsub.s32 0, %v8401
      %v8403 = vrot.slane %v8321, %v8402
      %v8404 = vlaneseq
      %v8405 = vshrl.u32 %v8404, 7
      %v8406 = vsub.s32 0, %v8405
      %v8407 = vrot.slane %v8322, %v8406
      %v8408 = vlaneseq
      %v8409 = vshrl.u32 %v8408, 7
      %v8410 = vsub.s32 0, %v8409
      %v8411 = vrot.slane %v8323, %v8410
      %v8412 = vlaneseq
      %v8413 = vshrl.u32 %v8412, 7
      %v8414 = vsub.s32 0, %v8413
      %v8415 = vrot.slane %v8324, %v8414
      %v8416 = vlaneseq
      %v8417 = vshrl.u32 %v8416, 7
      %v8418 = vsub.s32 0, %v8417
      %v8419 = vrot.slane %v8325, %v8418
      %v8420 = vlaneseq
      %v8421 = vshrl.u32 %v8420, 7
      %v8422 = vsub.s32 0, %v8421
      %v8423 = vrot.slane %v8326, %v8422
      %v8424 = vlaneseq
      %v8425 = vshrl.u32 %v8424, 7
      %v8426 = vsub.s32 0, %v8425
      %v8427 = vrot.slane %v8327, %v8426
      %v8428 = vlaneseq
      %v8429 = vshrl.u32 %v8428, 7
      %v8430 = vsub.s32 0, %v8429
      %v8431 = vrot.slane %v8328, %v8430
      %v8432 = vlaneseq
      %v8433 = vshrl.u32 %v8432, 7
      %v8434 = vsub.s32 0, %v8433
      %v8435 = vrot.slane %v8329, %v8434
      %v8436 = vlaneseq
      %v8437 = vshrl.u32 %v8436, 7
      %v8438 = vsub.s32 0, %v8437
      %v8439 = vrot.slane %v8330, %v8438
      %v8440 = vlaneseq
      %v8441 = vshrl.u32 %v8440, 7
      %v8442 = vsub.s32 0, %v8441
      %v8443 = vrot.slane %v8331, %v8442
      %v8444 = vlaneseq
      %v8445 = vshrl.u32 %v8444, 7
      %v8446 = vsub.s32 0, %v8445
      %v8447 = vrot.slane %v8332, %v8446
      %v8448 = vlaneseq
      %v8449 = vshrl.u32 %v8448, 7
      %v8450 = vsub.s32 0, %v8449
      %v8451 = vrot.slane %v8333, %v8450
      %v8452 = vlaneseq
      %v8453 = vshrl.u32 %v8452, 7
      %v8454 = vsub.s32 0, %v8453
      %v8455 = vrot.slane %v8334, %v8454
      %v8456 = vlaneseq
      %v8457 = vshrl.u32 %v8456, 7
      %v8458 = vsub.s32 0, %v8457
      %v8459 = vrot.slane %v8335, %v8458
      %v8460 = vlaneseq
      %v8461 = vshrl.u32 %v8460, 7
      %v8462 = vsub.s32 0, %v8461
      %v8463 = vrot.slane %v8336, %v8462
      %v8464 = vlaneseq
      %v8465 = vshrl.u32 %v8464, 7
      %v8466 = vsub.s32 0, %v8465
      %v8467 = vrot.slane %v8337, %v8466
      %v8468 = vlaneseq
      %v8469 = vshrl.u32 %v8468, 7
      %v8470 = vsub.s32 0, %v8469
      %v8471 = vrot.slane %v8338, %v8470
      %v8472 = vlaneseq
      %v8473 = vshrl.u32 %v8472, 7
      %v8474 = vsub.s32 0, %v8473
      %v8475 = vrot.slane %v8339, %v8474
      %v8476 = vlaneseq
      %v8477 = vshrl.u32 %v8476, 7
      %v8478 = vsub.s32 0, %v8477
      %v8479 = vrot.slane %v8340, %v8478
      %v8480 = vlaneseq
      %v8481 = vshrl.u32 %v8480, 7
      %v8482 = vsub.s32 0, %v8481
      %v8483 = vrot.slane %v8341, %v8482
      %v8484 = vlaneseq
      %v8485 = vshrl.u32 %v8484, 7
      %v8486 = vsub.s32 0, %v8485
      %v8487 = vrot.slane %v8342, %v8486
      %v8488 = vlaneseq
      %v8489 = vshrl.u32 %v8488, 7
      %v8490 = vsub.s32 0, %v8489
      %v8491 = vrot.slane %v8343, %v8490
      %v8492 = vlaneseq
      %v8493 = vshrl.u32 %v8492, 7
      %v8494 = vsub.s32 0, %v8493
      %v8495 = vrot.slane %v8344, %v8494
      %v8496 = vlaneseq
      %v8497 = vshrl.u32 %v8496, 7
      %v8498 = vsub.s32 0, %v8497
      %v8499 = vrot.slane %v8345, %v8498
      %v8500 = vlaneseq
      %v8501 = vshrl.u32 %v8500, 7
      %v8502 = vsub.s32 0, %v8501
      %v8503 = vrot.slane %v8346, %v8502
      %v8504 = vlaneseq
      %v8505 = vshrl.u32 %v8504, 7
      %v8506 = vsub.s32 0, %v8505
      %v8507 = vrot.slane %v8347, %v8506
      %v8540 = vadd.f32 %v8188, %v8383
      %v8541 = vadd.f32 %v8189, %v8383
      %v8542 = vadd.f32 %v8190, %v8383
      %v8543 = vadd.f32 %v8191, %v8383
      %v8544 = vadd.f32 %v8192, %v8387
      %v8545 = vadd.f32 %v8193, %v8387
      %v8546 = vadd.f32 %v8194, %v8387
      %v8547 = vadd.f32 %v8195, %v8387
      %v8548 = vadd.f32 %v8196, %v8391
      %v8549 = vadd.f32 %v8197, %v8391
      %v8550 = vadd.f32 %v8198, %v8391
      %v8551 = vadd.f32 %v8199, %v8391
      %v8552 = vadd.f32 %v8200, %v8395
      %v8553 = vadd.f32 %v8201, %v8395
      %v8554 = vadd.f32 %v8202, %v8395
      %v8555 = vadd.f32 %v8203, %v8395
      %v8556 = vadd.f32 %v8204, %v8399
      %v8557 = vadd.f32 %v8205, %v8399
      %v8558 = vadd.f32 %v8206, %v8399
      %v8559 = vadd.f32 %v8207, %v8399
      %v8560 = vadd.f32 %v8208, %v8403
      %v8561 = vadd.f32 %v8209, %v8403
      %v8562 = vadd.f32 %v8210, %v8403
      %v8563 = vadd.f32 %v8211, %v8403
      %v8564 = vadd.f32 %v8212, %v8407
      %v8565 = vadd.f32 %v8213, %v8407
      %v8566 = vadd.f32 %v8214, %v8407
      %v8567 = vadd.f32 %v8215, %v8407
      %v8568 = vadd.f32 %v8216, %v8411
      %v8569 = vadd.f32 %v8217, %v8411
      %v8570 = vadd.f32 %v8218, %v8411
      %v8571 = vadd.f32 %v8219, %v8411
      %v8572 = vadd.f32 %v8220, %v8415
      %v8573 = vadd.f32 %v8221, %v8415
      %v8574 = vadd.f32 %v8222, %v8415
      %v8575 = vadd.f32 %v8223, %v8415
      %v8576 = vadd.f32 %v8224, %v8419
      %v8577 = vadd.f32 %v8225, %v8419
      %v8578 = vadd.f32 %v8226, %v8419
      %v8579 = vadd.f32 %v8227, %v8419
      %v8580 = vadd.f32 %v8228, %v8423
      %v8581 = vadd.f32 %v8229, %v8423
      %v8582 = vadd.f32 %v8230, %v8423
      %v8583 = vadd.f32 %v8231, %v8423
      %v8584 = vadd.f32 %v8232, %v8427
      %v8585 = vadd.f32 %v8233, %v8427
      %v8586 = vadd.f32 %v8234, %v8427
      %v8587 = vadd.f32 %v8235, %v8427
      %v8588 = vadd.f32 %v8236, %v8431
      %v8589 = vadd.f32 %v8237, %v8431
      %v8590 = vadd.f32 %v8238, %v8431
      %v8591 = vadd.f32 %v8239, %v8431
      %v8592 = vadd.f32 %v8240, %v8435
      %v8593 = vadd.f32 %v8241, %v8435
      %v8594 = vadd.f32 %v8242, %v8435
      %v8595 = vadd.f32 %v8243, %v8435
      %v8596 = vadd.f32 %v8244, %v8439
      %v8597 = vadd.f32 %v8245, %v8439
      %v8598 = vadd.f32 %v8246, %v8439
      %v8599 = vadd.f32 %v8247, %v8439
      %v8600 = vadd.f32 %v8248, %v8443
      %v8601 = vadd.f32 %v8249, %v8443
      %v8602 = vadd.f32 %v8250, %v8443
      %v8603 = vadd.f32 %v8251, %v8443
      %v8604 = vadd.f32 %v8252, %v8447
      %v8605 = vadd.f32 %v8253, %v8447
      %v8606 = vadd.f32 %v8254, %v8447
      %v8607 = vadd.f32 %v8255, %v8447
      %v8608 = vadd.f32 %v8256, %v8451
      %v8609 = vadd.f32 %v8257, %v8451
      %v8610 = vadd.f32 %v8258, %v8451
      %v8611 = vadd.f32 %v8259, %v8451
      %v8612 = vadd.f32 %v8260, %v8455
      %v8613 = vadd.f32 %v8261, %v8455
      %v8614 = vadd.f32 %v8262, %v8455
      %v8615 = vadd.f32 %v8263, %v8455
      %v8616 = vadd.f32 %v8264, %v8459
      %v8617 = vadd.f32 %v8265, %v8459
      %v8618 = vadd.f32 %v8266, %v8459
      %v8619 = vadd.f32 %v8267, %v8459
      %v8620 = vadd.f32 %v8268, %v8463
      %v8621 = vadd.f32 %v8269, %v8463
      %v8622 = vadd.f32 %v8270, %v8463
      %v8623 = vadd.f32 %v8271, %v8463
      %v8624 = vadd.f32 %v8272, %v8467
      %v8625 = vadd.f32 %v8273, %v8467
      %v8626 = vadd.f32 %v8274, %v8467
      %v8627 = vadd.f32 %v8275, %v8467
      %v8628 = vadd.f32 %v8276, %v8471
      %v8629 = vadd.f32 %v8277, %v8471
      %v8630 = vadd.f32 %v8278, %v8471
      %v8631 = vadd.f32 %v8279, %v8471
      %v8632 = vadd.f32 %v8280, %v8475
      %v8633 = vadd.f32 %v8281, %v8475
      %v8634 = vadd.f32 %v8282, %v8475
      %v8635 = vadd.f32 %v8283, %v8475
      %v8636 = vadd.f32 %v8284, %v8479
      %v8637 = vadd.f32 %v8285, %v8479
      %v8638 = vadd.f32 %v8286, %v8479
      %v8639 = vadd.f32 %v8287, %v8479
      %v8640 = vadd.f32 %v8288, %v8483
      %v8641 = vadd.f32 %v8289, %v8483
      %v8642 = vadd.f32 %v8290, %v8483
      %v8643 = vadd.f32 %v8291, %v8483
      %v8644 = vadd.f32 %v8292, %v8487
      %v8645 = vadd.f32 %v8293, %v8487
      %v8646 = vadd.f32 %v8294, %v8487
      %v8647 = vadd.f32 %v8295, %v8487
      %v8648 = vadd.f32 %v8296, %v8491
      %v8649 = vadd.f32 %v8297, %v8491
      %v8650 = vadd.f32 %v8298, %v8491
      %v8651 = vadd.f32 %v8299, %v8491
      %v8652 = vadd.f32 %v8300, %v8495
      %v8653 = vadd.f32 %v8301, %v8495
      %v8654 = vadd.f32 %v8302, %v8495
      %v8655 = vadd.f32 %v8303, %v8495
      %v8656 = vadd.f32 %v8304, %v8499
      %v8657 = vadd.f32 %v8305, %v8499
      %v8658 = vadd.f32 %v8306, %v8499
      %v8659 = vadd.f32 %v8307, %v8499
      %v8660 = vadd.f32 %v8308, %v8503
      %v8661 = vadd.f32 %v8309, %v8503
      %v8662 = vadd.f32 %v8310, %v8503
      %v8663 = vadd.f32 %v8311, %v8503
      %v8664 = vadd.f32 %v8312, %v8507
      %v8665 = vadd.f32 %v8313, %v8507
      %v8666 = vadd.f32 %v8314, %v8507
      %v8667 = vadd.f32 %v8315, %v8507
      %v8668 = vmax.f32 %v8540, %v8544
      %v8669 = vmax.f32 %v8541, %v8545
      %v8670 = vmax.f32 %v8542, %v8546
      %v8671 = vmax.f32 %v8543, %v8547
      %v8672 = vmax.f32 %v8548, %v8552
      %v8673 = vmax.f32 %v8549, %v8553
      %v8674 = vmax.f32 %v8550, %v8554
      %v8675 = vmax.f32 %v8551, %v8555
      %v8676 = vmax.f32 %v8556, %v8560
      %v8677 = vmax.f32 %v8557, %v8561
      %v8678 = vmax.f32 %v8558, %v8562
      %v8679 = vmax.f32 %v8559, %v8563
      %v8680 = vmax.f32 %v8564, %v8568
      %v8681 = vmax.f32 %v8565, %v8569
      %v8682 = vmax.f32 %v8566, %v8570
      %v8683 = vmax.f32 %v8567, %v8571
      %v8684 = vmax.f32 %v8572, %v8576
      %v8685 = vmax.f32 %v8573, %v8577
      %v8686 = vmax.f32 %v8574, %v8578
      %v8687 = vmax.f32 %v8575, %v8579
      %v8688 = vmax.f32 %v8580, %v8584
      %v8689 = vmax.f32 %v8581, %v8585
      %v8690 = vmax.f32 %v8582, %v8586
      %v8691 = vmax.f32 %v8583, %v8587
      %v8692 = vmax.f32 %v8588, %v8592
      %v8693 = vmax.f32 %v8589, %v8593
      %v8694 = vmax.f32 %v8590, %v8594
      %v8695 = vmax.f32 %v8591, %v8595
      %v8696 = vmax.f32 %v8596, %v8600
      %v8697 = vmax.f32 %v8597, %v8601
      %v8698 = vmax.f32 %v8598, %v8602
      %v8699 = vmax.f32 %v8599, %v8603
      %v8700 = vmax.f32 %v8604, %v8608
      %v8701 = vmax.f32 %v8605, %v8609
      %v8702 = vmax.f32 %v8606, %v8610
      %v8703 = vmax.f32 %v8607, %v8611
      %v8704 = vmax.f32 %v8612, %v8616
      %v8705 = vmax.f32 %v8613, %v8617
      %v8706 = vmax.f32 %v8614, %v8618
      %v8707 = vmax.f32 %v8615, %v8619
      %v8708 = vmax.f32 %v8620, %v8624
      %v8709 = vmax.f32 %v8621, %v8625
      %v8710 = vmax.f32 %v8622, %v8626
      %v8711 = vmax.f32 %v8623, %v8627
      %v8712 = vmax.f32 %v8628, %v8632
      %v8713 = vmax.f32 %v8629, %v8633
      %v8714 = vmax.f32 %v8630, %v8634
      %v8715 = vmax.f32 %v8631, %v8635
      %v8716 = vmax.f32 %v8636, %v8640
      %v8717 = vmax.f32 %v8637, %v8641
      %v8718 = vmax.f32 %v8638, %v8642
      %v8719 = vmax.f32 %v8639, %v8643
      %v8720 = vmax.f32 %v8644, %v8648
      %v8721 = vmax.f32 %v8645, %v8649
      %v8722 = vmax.f32 %v8646, %v8650
      %v8723 = vmax.f32 %v8647, %v8651
      %v8724 = vmax.f32 %v8652, %v8656
      %v8725 = vmax.f32 %v8653, %v8657
      %v8726 = vmax.f32 %v8654, %v8658
      %v8727 = vmax.f32 %v8655, %v8659
      %v8728 = vmax.f32 %v8660, %v8664
      %v8729 = vmax.f32 %v8661, %v8665
      %v8730 = vmax.f32 %v8662, %v8666
      %v8731 = vmax.f32 %v8663, %v8667
      %v8732 = vpack.c.bf16 %v8669, %v8668
      %v8733 = vpack.c.bf16 %v8671, %v8670
      %v8734 = vpack.c.bf16 %v8673, %v8672
      %v8735 = vpack.c.bf16 %v8675, %v8674
      %v8736 = vpack.c.bf16 %v8677, %v8676
      %v8737 = vpack.c.bf16 %v8679, %v8678
      %v8738 = vpack.c.bf16 %v8681, %v8680
      %v8739 = vpack.c.bf16 %v8683, %v8682
      %v8740 = vpack.c.bf16 %v8685, %v8684
      %v8741 = vpack.c.bf16 %v8687, %v8686
      %v8742 = vpack.c.bf16 %v8689, %v8688
      %v8743 = vpack.c.bf16 %v8691, %v8690
      %v8744 = vpack.c.bf16 %v8693, %v8692
      %v8745 = vpack.c.bf16 %v8695, %v8694
      %v8746 = vpack.c.bf16 %v8697, %v8696
      %v8747 = vpack.c.bf16 %v8699, %v8698
      %v8748 = vpack.c.bf16 %v8701, %v8700
      %v8749 = vpack.c.bf16 %v8703, %v8702
      %v8750 = vpack.c.bf16 %v8705, %v8704
      %v8751 = vpack.c.bf16 %v8707, %v8706
      %v8752 = vpack.c.bf16 %v8709, %v8708
      %v8753 = vpack.c.bf16 %v8711, %v8710
      %v8754 = vpack.c.bf16 %v8713, %v8712
      %v8755 = vpack.c.bf16 %v8715, %v8714
      %v8756 = vpack.c.bf16 %v8717, %v8716
      %v8757 = vpack.c.bf16 %v8719, %v8718
      %v8758 = vpack.c.bf16 %v8721, %v8720
      %v8759 = vpack.c.bf16 %v8723, %v8722
      %v8760 = vpack.c.bf16 %v8725, %v8724
      %v8761 = vpack.c.bf16 %v8727, %v8726
      %v8762 = vpack.c.bf16 %v8729, %v8728
      %v8763 = vpack.c.bf16 %v8731, %v8730
      %v8796 = vunpack.c.l.b16 %v8732
      %v8797 = vunpack.c.h.b16 %v8732
      %v8798 = vunpack.c.l.b16 %v8733
      %v8799 = vunpack.c.h.b16 %v8733
      %v8800 = vunpack.c.l.b16 %v8734
      %v8801 = vunpack.c.h.b16 %v8734
      %v8802 = vunpack.c.l.b16 %v8735
      %v8803 = vunpack.c.h.b16 %v8735
      %v8804 = vunpack.c.l.b16 %v8736
      %v8805 = vunpack.c.h.b16 %v8736
      %v8806 = vunpack.c.l.b16 %v8737
      %v8807 = vunpack.c.h.b16 %v8737
      %v8808 = vunpack.c.l.b16 %v8738
      %v8809 = vunpack.c.h.b16 %v8738
      %v8810 = vunpack.c.l.b16 %v8739
      %v8811 = vunpack.c.h.b16 %v8739
      %v8812 = vunpack.c.l.b16 %v8740
      %v8813 = vunpack.c.h.b16 %v8740
      %v8814 = vunpack.c.l.b16 %v8741
      %v8815 = vunpack.c.h.b16 %v8741
      %v8816 = vunpack.c.l.b16 %v8742
      %v8817 = vunpack.c.h.b16 %v8742
      %v8818 = vunpack.c.l.b16 %v8743
      %v8819 = vunpack.c.h.b16 %v8743
      %v8820 = vunpack.c.l.b16 %v8744
      %v8821 = vunpack.c.h.b16 %v8744
      %v8822 = vunpack.c.l.b16 %v8745
      %v8823 = vunpack.c.h.b16 %v8745
      %v8824 = vunpack.c.l.b16 %v8746
      %v8825 = vunpack.c.h.b16 %v8746
      %v8826 = vunpack.c.l.b16 %v8747
      %v8827 = vunpack.c.h.b16 %v8747
      %v8828 = vunpack.c.l.b16 %v8748
      %v8829 = vunpack.c.h.b16 %v8748
      %v8830 = vunpack.c.l.b16 %v8749
      %v8831 = vunpack.c.h.b16 %v8749
      %v8832 = vunpack.c.l.b16 %v8750
      %v8833 = vunpack.c.h.b16 %v8750
      %v8834 = vunpack.c.l.b16 %v8751
      %v8835 = vunpack.c.h.b16 %v8751
      %v8836 = vunpack.c.l.b16 %v8752
      %v8837 = vunpack.c.h.b16 %v8752
      %v8838 = vunpack.c.l.b16 %v8753
      %v8839 = vunpack.c.h.b16 %v8753
      %v8840 = vunpack.c.l.b16 %v8754
      %v8841 = vunpack.c.h.b16 %v8754
      %v8842 = vunpack.c.l.b16 %v8755
      %v8843 = vunpack.c.h.b16 %v8755
      %v8844 = vunpack.c.l.b16 %v8756
      %v8845 = vunpack.c.h.b16 %v8756
      %v8846 = vunpack.c.l.b16 %v8757
      %v8847 = vunpack.c.h.b16 %v8757
      %v8848 = vunpack.c.l.b16 %v8758
      %v8849 = vunpack.c.h.b16 %v8758
      %v8850 = vunpack.c.l.b16 %v8759
      %v8851 = vunpack.c.h.b16 %v8759
      %v8852 = vunpack.c.l.b16 %v8760
      %v8853 = vunpack.c.h.b16 %v8760
      %v8854 = vunpack.c.l.b16 %v8761
      %v8855 = vunpack.c.h.b16 %v8761
      %v8856 = vunpack.c.l.b16 %v8762
      %v8857 = vunpack.c.h.b16 %v8762
      %v8858 = vunpack.c.l.b16 %v8763
      %v8859 = vunpack.c.h.b16 %v8763
      %v8860 = vpack.c.b16 %v8796, %v8796
      %v8861 = vpack.c.b16 %v8797, %v8797
      %v8862 = vpack.c.b16 %v8798, %v8798
      %v8863 = vpack.c.b16 %v8799, %v8799
      %v8864 = vpack.c.b16 %v8800, %v8800
      %v8865 = vpack.c.b16 %v8801, %v8801
      %v8866 = vpack.c.b16 %v8802, %v8802
      %v8867 = vpack.c.b16 %v8803, %v8803
      %v8868 = vpack.c.b16 %v8804, %v8804
      %v8869 = vpack.c.b16 %v8805, %v8805
      %v8870 = vpack.c.b16 %v8806, %v8806
      %v8871 = vpack.c.b16 %v8807, %v8807
      %v8872 = vpack.c.b16 %v8808, %v8808
      %v8873 = vpack.c.b16 %v8809, %v8809
      %v8874 = vpack.c.b16 %v8810, %v8810
      %v8875 = vpack.c.b16 %v8811, %v8811
      %v8876 = vpack.c.b16 %v8812, %v8812
      %v8877 = vpack.c.b16 %v8813, %v8813
      %v8878 = vpack.c.b16 %v8814, %v8814
      %v8879 = vpack.c.b16 %v8815, %v8815
      %v8880 = vpack.c.b16 %v8816, %v8816
      %v8881 = vpack.c.b16 %v8817, %v8817
      %v8882 = vpack.c.b16 %v8818, %v8818
      %v8883 = vpack.c.b16 %v8819, %v8819
      %v8884 = vpack.c.b16 %v8820, %v8820
      %v8885 = vpack.c.b16 %v8821, %v8821
      %v8886 = vpack.c.b16 %v8822, %v8822
      %v8887 = vpack.c.b16 %v8823, %v8823
      %v8888 = vpack.c.b16 %v8824, %v8824
      %v8889 = vpack.c.b16 %v8825, %v8825
      %v8890 = vpack.c.b16 %v8826, %v8826
      %v8891 = vpack.c.b16 %v8827, %v8827
      %v8892 = vpack.c.b16 %v8828, %v8828
      %v8893 = vpack.c.b16 %v8829, %v8829
      %v8894 = vpack.c.b16 %v8830, %v8830
      %v8895 = vpack.c.b16 %v8831, %v8831
      %v8896 = vpack.c.b16 %v8832, %v8832
      %v8897 = vpack.c.b16 %v8833, %v8833
      %v8898 = vpack.c.b16 %v8834, %v8834
      %v8899 = vpack.c.b16 %v8835, %v8835
      %v8900 = vpack.c.b16 %v8836, %v8836
      %v8901 = vpack.c.b16 %v8837, %v8837
      %v8902 = vpack.c.b16 %v8838, %v8838
      %v8903 = vpack.c.b16 %v8839, %v8839
      %v8904 = vpack.c.b16 %v8840, %v8840
      %v8905 = vpack.c.b16 %v8841, %v8841
      %v8906 = vpack.c.b16 %v8842, %v8842
      %v8907 = vpack.c.b16 %v8843, %v8843
      %v8908 = vpack.c.b16 %v8844, %v8844
      %v8909 = vpack.c.b16 %v8845, %v8845
      %v8910 = vpack.c.b16 %v8846, %v8846
      %v8911 = vpack.c.b16 %v8847, %v8847
      %v8912 = vpack.c.b16 %v8848, %v8848
      %v8913 = vpack.c.b16 %v8849, %v8849
      %v8914 = vpack.c.b16 %v8850, %v8850
      %v8915 = vpack.c.b16 %v8851, %v8851
      %v8916 = vpack.c.b16 %v8852, %v8852
      %v8917 = vpack.c.b16 %v8853, %v8853
      %v8918 = vpack.c.b16 %v8854, %v8854
      %v8919 = vpack.c.b16 %v8855, %v8855
      %v8920 = vpack.c.b16 %v8856, %v8856
      %v8921 = vpack.c.b16 %v8857, %v8857
      %v8922 = vpack.c.b16 %v8858, %v8858
      %v8923 = vpack.c.b16 %v8859, %v8859
      %vm8988 = vcmask 257024
      %8989 = vst.msk [vmem:[%s313] sm:$0xf] %vm8988, %v8860
      %8990 = vst.msk [vmem:[%s313 + $0x4] sm:$0xf] %vm8988, %v8861
      %8991 = vst.msk [vmem:[%s313 + $0x8] sm:$0xf] %vm8988, %v8862
      %8992 = vst.msk [vmem:[%s313 + $0xc] sm:$0xf] %vm8988, %v8863
      %8993 = vst.msk [vmem:[%s313 + $0x10] sm:$0xf] %vm8988, %v8864
      %8994 = vst.msk [vmem:[%s313 + $0x14] sm:$0xf] %vm8988, %v8865
      %8995 = vst.msk [vmem:[%s313 + $0x18] sm:$0xf] %vm8988, %v8866
      %8996 = vst.msk [vmem:[%s313 + $0x1c] sm:$0xf] %vm8988, %v8867
      %8997 = vst.msk [vmem:[%s313 + $0x20] sm:$0xf] %vm8988, %v8868
      %8998 = vst.msk [vmem:[%s313 + $0x24] sm:$0xf] %vm8988, %v8869
      %8999 = vst.msk [vmem:[%s313 + $0x28] sm:$0xf] %vm8988, %v8870
      %9000 = vst.msk [vmem:[%s313 + $0x2c] sm:$0xf] %vm8988, %v8871
      %9001 = vst.msk [vmem:[%s313 + $0x30] sm:$0xf] %vm8988, %v8872
      %9002 = vst.msk [vmem:[%s313 + $0x34] sm:$0xf] %vm8988, %v8873
      %9003 = vst.msk [vmem:[%s313 + $0x38] sm:$0xf] %vm8988, %v8874
      %9004 = vst.msk [vmem:[%s313 + $0x3c] sm:$0xf] %vm8988, %v8875
      %9005 = vst.msk [vmem:[%s313 + $0x40] sm:$0xf] %vm8988, %v8876
      %9006 = vst.msk [vmem:[%s313 + $0x44] sm:$0xf] %vm8988, %v8877
      %9007 = vst.msk [vmem:[%s313 + $0x48] sm:$0xf] %vm8988, %v8878
      %9008 = vst.msk [vmem:[%s313 + $0x4c] sm:$0xf] %vm8988, %v8879
      %9009 = vst.msk [vmem:[%s313 + $0x50] sm:$0xf] %vm8988, %v8880
      %9010 = vst.msk [vmem:[%s313 + $0x54] sm:$0xf] %vm8988, %v8881
      %9011 = vst.msk [vmem:[%s313 + $0x58] sm:$0xf] %vm8988, %v8882
      %9012 = vst.msk [vmem:[%s313 + $0x5c] sm:$0xf] %vm8988, %v8883
      %9013 = vst.msk [vmem:[%s313 + $0x60] sm:$0xf] %vm8988, %v8884
      %9014 = vst.msk [vmem:[%s313 + $0x64] sm:$0xf] %vm8988, %v8885
      %9015 = vst.msk [vmem:[%s313 + $0x68] sm:$0xf] %vm8988, %v8886
      %9016 = vst.msk [vmem:[%s313 + $0x6c] sm:$0xf] %vm8988, %v8887
      %9017 = vst.msk [vmem:[%s313 + $0x70] sm:$0xf] %vm8988, %v8888
      %9018 = vst.msk [vmem:[%s313 + $0x74] sm:$0xf] %vm8988, %v8889
      %9019 = vst.msk [vmem:[%s313 + $0x78] sm:$0xf] %vm8988, %v8890
      %9020 = vst.msk [vmem:[%s313 + $0x7c] sm:$0xf] %vm8988, %v8891
      %9021 = vst.msk [vmem:[%s313 + $0x80] sm:$0xf] %vm8988, %v8892
      %9022 = vst.msk [vmem:[%s313 + $0x84] sm:$0xf] %vm8988, %v8893
      %9023 = vst.msk [vmem:[%s313 + $0x88] sm:$0xf] %vm8988, %v8894
      %9024 = vst.msk [vmem:[%s313 + $0x8c] sm:$0xf] %vm8988, %v8895
      %9025 = vst.msk [vmem:[%s313 + $0x90] sm:$0xf] %vm8988, %v8896
      %9026 = vst.msk [vmem:[%s313 + $0x94] sm:$0xf] %vm8988, %v8897
      %9027 = vst.msk [vmem:[%s313 + $0x98] sm:$0xf] %vm8988, %v8898
      %9028 = vst.msk [vmem:[%s313 + $0x9c] sm:$0xf] %vm8988, %v8899
      %9029 = vst.msk [vmem:[%s313 + $0xa0] sm:$0xf] %vm8988, %v8900
      %9030 = vst.msk [vmem:[%s313 + $0xa4] sm:$0xf] %vm8988, %v8901
      %9031 = vst.msk [vmem:[%s313 + $0xa8] sm:$0xf] %vm8988, %v8902
      %9032 = vst.msk [vmem:[%s313 + $0xac] sm:$0xf] %vm8988, %v8903
      %9033 = vst.msk [vmem:[%s313 + $0xb0] sm:$0xf] %vm8988, %v8904
      %9034 = vst.msk [vmem:[%s313 + $0xb4] sm:$0xf] %vm8988, %v8905
      %9035 = vst.msk [vmem:[%s313 + $0xb8] sm:$0xf] %vm8988, %v8906
      %9036 = vst.msk [vmem:[%s313 + $0xbc] sm:$0xf] %vm8988, %v8907
      %9037 = vst.msk [vmem:[%s313 + $0xc0] sm:$0xf] %vm8988, %v8908
      %9038 = vst.msk [vmem:[%s313 + $0xc4] sm:$0xf] %vm8988, %v8909
      %9039 = vst.msk [vmem:[%s313 + $0xc8] sm:$0xf] %vm8988, %v8910
      %9040 = vst.msk [vmem:[%s313 + $0xcc] sm:$0xf] %vm8988, %v8911
      %9041 = vst.msk [vmem:[%s313 + $0xd0] sm:$0xf] %vm8988, %v8912
      %9042 = vst.msk [vmem:[%s313 + $0xd4] sm:$0xf] %vm8988, %v8913
      %9043 = vst.msk [vmem:[%s313 + $0xd8] sm:$0xf] %vm8988, %v8914
      %9044 = vst.msk [vmem:[%s313 + $0xdc] sm:$0xf] %vm8988, %v8915
      %9045 = vst.msk [vmem:[%s313 + $0xe0] sm:$0xf] %vm8988, %v8916
      %9046 = vst.msk [vmem:[%s313 + $0xe4] sm:$0xf] %vm8988, %v8917
      %9047 = vst.msk [vmem:[%s313 + $0xe8] sm:$0xf] %vm8988, %v8918
      %9048 = vst.msk [vmem:[%s313 + $0xec] sm:$0xf] %vm8988, %v8919
      %9049 = vst.msk [vmem:[%s313 + $0xf0] sm:$0xf] %vm8988, %v8920
      %9050 = vst.msk [vmem:[%s313 + $0xf4] sm:$0xf] %vm8988, %v8921
      %9051 = vst.msk [vmem:[%s313 + $0xf8] sm:$0xf] %vm8988, %v8922
      %9052 = vst.msk [vmem:[%s313 + $0xfc] sm:$0xf] %vm8988, %v8923
      %s9053 = smul.u32 16, %s22
      %p9054 = scmp.lt.s32.totalorder %s21, 1
      %s9055 = scalar_select %p9054, %s21, 1
      %p9056 = scmp.lt.s32.totalorder %s9053, 15
      %s9057 = scalar_select %p9056, %s9053, 15
      %s9058 = smul.addr %s9057, 4
      %s9059 = smul.addr %s9055, 64
      %s9060 = sadd.s32 %s9058, %s9059
      %s9061 = smul.addr %s9060, 4
      %s9062 = scalar_lea.vmem %s6, %s9061
      // Predicated region
      $region45: #{_lambda_.2} parent=43 // pred_check
        %p9063 = pneg %p187
      $region46: #{_lambda_.2} parent=43 // pred_check_branch
        %9065 = sbr.rel (%p9063) target = $region48
      $region47: #{_lambda_.2} parent=43 // pred_region
        %s9066 = smul.u32 16, %s22
      $region48: #{_lambda_.2} parent=43 // pred_fallthru
        _
    $region44: #{_lambda_.2} parent=5 // pred_fallthru
      _
    %p9067 = scmp.le.s32.totalorder 2, %s12
    // Predicated region
    $region49: #{_lambda_.2} parent=5 // pred_check
      %p9068 = pneg %p9067
    $region50: #{_lambda_.2} parent=5 // pred_check_branch
      %9070 = sbr.rel (%p9068) target = $region52
    $region51: #{_lambda_.2} parent=5 // pred_region
      %s9071 = ssub.s32 %s12, 2
      // Predicated region
      $region53: #{_lambda_.2} parent=51 // pred_check
        %p9072 = pneg %p193
      $region54: #{_lambda_.2} parent=51 // pred_check_branch
        %9074 = sbr.rel (%p9072) target = $region56
      $region55: #{_lambda_.2} parent=51 // pred_region
        %s9075 = smul.u32 16, %s24
        %p9076 = scmp.lt.s32.totalorder %s23, 1
        %s9077 = scalar_select %p9076, %s23, 1
        %p9078 = scmp.lt.s32.totalorder %s9075, 15
        %s9079 = scalar_select %p9078, %s9075, 15
        %s9080 = smul.addr %s9079, 4
        %s9081 = smul.addr %s9077, 64
        %s9082 = sadd.s32 %s9080, %s9081
        %s9083 = smul.addr %s9082, 4
        %s9084 = scalar_lea.vmem %s6, %s9083
      $region56: #{_lambda_.2} parent=51 // pred_fallthru
        _
    $region52: #{_lambda_.2} parent=5 // pred_fallthru
      _
  $region6: #{_lambda_.2} parent=0 // loop_footer
    %s16 = sadd.s32 1, %s12
  $region7: #{_lambda_.2} parent=0 // loop_footer_branch
    %11 = sbr.rel target = $region3
  $region8: #{_lambda_.2} parent=0 // loop_exit
    _

</llo_original>
